<compile_context>
chip_gen: v5e
topology: v5e:2x2
jax: 0.10.0
libtpu: 0.0.40
codegen_flags: <defaults>
</compile_context>

<pallas_src>
import functools
import math

import jax
import jax.numpy as jnp
from jax.experimental import pallas as pl
from jax.experimental.pallas import tpu as pltpu

LN_EPS = 1e-5  # nn.LayerNorm default


# ----------------------------- in-kernel helpers -----------------------------

def _layernorm(x, gamma, beta):
    mean = jnp.mean(x, axis=-1, keepdims=True)
    var = jnp.mean((x - mean) ** 2, axis=-1, keepdims=True)
    return (x - mean) * jax.lax.rsqrt(var + LN_EPS) * gamma + beta


def _gelu(x):
    c = math.sqrt(2.0 / math.pi)
    return 0.5 * x * (1.0 + jnp.tanh(c * (x + 0.044715 * x * x * x)))


def _mha(q, k, v, n_heads):
    """Multi-head attention with heads as a batch dim of one dot_general pair.

    q: (QL, D)  k, v: (KL, D)  -> (QL, D)
    """
    QL, D = q.shape
    KL = k.shape[0]
    hd = D // n_heads
    scale = 1.0 / math.sqrt(hd)

    qh = q.reshape(QL, n_heads, hd)
    kh = k.reshape(KL, n_heads, hd)
    vh = v.reshape(KL, n_heads, hd)

    # scores: contract head_dim directly (no explicit K transpose), heads batched
    s = jnp.einsum("qhd,khd->hqk", qh, kh,
                   preferred_element_type=jnp.float32) * scale
    s = s - jnp.max(s, axis=-1, keepdims=True)          # stable softmax
    p = jnp.exp(s)
    p = p * pl.reciprocal(jnp.sum(p, axis=-1, keepdims=True), approx=True)
    ctx = jnp.einsum("hqk,khd->qhd", p, vh, preferred_element_type=jnp.float32)
    return ctx.reshape(QL, D)


# --------------------------------- the kernel ---------------------------------

def _qformer_kernel(img_ref, qe_ref, w_in_ref, b_in_ref,
                    sa_g_ref, sa_b_ref, sa_wqkv_ref, sa_bqkv_ref, sa_wo_ref, sa_bo_ref,
                    ca_g_ref, ca_b_ref, ca_wq_ref, ca_bq_ref, ca_wkv_ref, ca_bkv_ref,
                    ca_wo_ref, ca_bo_ref,
                    ff_g_ref, ff_b_ref, ff_w1_ref, ff_b1_ref, ff_w2_ref, ff_b2_ref,
                    w_out_ref, b_out_ref,
                    o_ref, *, n_heads):
    D = qe_ref.shape[-1]
    num_layers = sa_wqkv_ref.shape[0]

    # input_linear: projected image features stay on-chip for all layers.
    img = jnp.dot(img_ref[...].astype(jnp.float32), w_in_ref[...],
                  preferred_element_type=jnp.float32) + b_in_ref[...]
    # learnable queries, shared across the batch
    x = qe_ref[...].astype(jnp.float32)                      # (NQ, D)

    for l in range(num_layers):  # static unroll; weights already resident in VMEM
        # ---- self-attention (pre-LN; Q = K = V = LN(x), as in the reference) ----
        xn = _layernorm(x, sa_g_ref[l], sa_b_ref[l])
        qkv = jnp.dot(xn, sa_wqkv_ref[l],
                      preferred_element_type=jnp.float32) + sa_bqkv_ref[l]
        ctx = _mha(qkv[:, :D], qkv[:, D:2 * D], qkv[:, 2 * D:], n_heads)
        x = x + jnp.dot(ctx, sa_wo_ref[l],
                        preferred_element_type=jnp.float32) + sa_bo_ref[l]

        # ---- cross-attention (K/V = projected image features, unnormalized) ----
        xn = _layernorm(x, ca_g_ref[l], ca_b_ref[l])
        q = jnp.dot(xn, ca_wq_ref[l],
                    preferred_element_type=jnp.float32) + ca_bq_ref[l]
        kv = jnp.dot(img, ca_wkv_ref[l],
                     preferred_element_type=jnp.float32) + ca_bkv_ref[l]
        ctx = _mha(q, kv[:, :D], kv[:, D:], n_heads)
        x = x + jnp.dot(ctx, ca_wo_ref[l],
                        preferred_element_type=jnp.float32) + ca_bo_ref[l]

        # ---- feed-forward ----
        xn = _layernorm(x, ff_g_ref[l], ff_b_ref[l])
        h = _gelu(jnp.dot(xn, ff_w1_ref[l],
                          preferred_element_type=jnp.float32) + ff_b1_ref[l])
        x = x + jnp.dot(h, ff_w2_ref[l],
                        preferred_element_type=jnp.float32) + ff_b2_ref[l]

    out = jnp.dot(x, w_out_ref[...],
                  preferred_element_type=jnp.float32) + b_out_ref[...]
    o_ref[...] = out.astype(o_ref.dtype)


# Per-layer parameter names, in the exact order the kernel expects them.
_LAYER_KEYS = ("sa_ln_g", "sa_ln_b", "sa_wqkv", "sa_bqkv", "sa_wo", "sa_bo",
               "ca_ln_g", "ca_ln_b", "ca_wq", "ca_bq", "ca_wkv", "ca_bkv",
               "ca_wo", "ca_bo",
               "ff_ln_g", "ff_ln_b", "ff_w1", "ff_b1", "ff_w2", "ff_b2")


def qformer_forward(params, image_feats, *, n_heads):
    B, S, Din = image_feats.shape
    qe = params["query_embeddings"]
    NQ, D = qe.shape
    Dout = params["w_out"].shape[-1]

    const_args = ([qe, params["w_in"], params["b_in"]]
                  + [params[k] for k in _LAYER_KEYS]
                  + [params["w_out"], params["b_out"]])

    def const_spec(a):
        nd = a.ndim
        return pl.BlockSpec(a.shape, lambda b, _n=nd: (0,) * _n)

    kernel = functools.partial(_qformer_kernel, n_heads=n_heads)
    return pl.pallas_call(
        kernel,
        out_shape=jax.ShapeDtypeStruct((B, NQ, Dout), image_feats.dtype),
        grid=(B,),
        in_specs=[pl.BlockSpec((None, S, Din), lambda b: (b, 0, 0))]
                 + [const_spec(a) for a in const_args],
        out_specs=pl.BlockSpec((None, NQ, Dout), lambda b: (b, 0, 0)),
        compiler_params=pltpu.CompilerParams(dimension_semantics=("parallel",)),
    )(image_feats, *const_args)


# ------------------------------ parameter setup -------------------------------

def init_qformer_params(key, *, num_queries, d_model, hidden_dim,
                        input_dim, output_dim, num_layers):
    def dense(k, d_in, d_out):
        kw, kb = jax.random.split(k)
        w = jax.random.normal(kw, (d_in, d_out), jnp.float32) * 0.02
        b = jax.random.normal(kb, (1, d_out), jnp.float32) * 0.02
        return w, b

    keys = jax.random.split(key, 3 + num_layers)
    params = {
        "query_embeddings": jax.random.normal(keys[0], (num_queries, d_model),
                                              jnp.float32),
    }
    params["w_in"], params["b_in"] = dense(keys[1], input_dim, d_model)
    params["w_out"], params["b_out"] = dense(keys[2], d_model, output_dim)

    per_layer = {k: [] for k in _LAYER_KEYS}
    ones = jnp.ones((1, d_model), jnp.float32)
    zeros = jnp.zeros((1, d_model), jnp.float32)
    for i in range(num_layers):
        lk = jax.random.split(keys[3 + i], 10)
        # self-attention: fuse Wq/Wk/Wv into one (D, 3D) weight
        wq, bq = dense(lk[0], d_model, d_model)
        wk, bk = dense(lk[1], d_model, d_model)
        wv, bv = dense(lk[2], d_model, d_model)
        wo, bo = dense(lk[3], d_model, d_model)
        per_layer["sa_ln_g"].append(ones); per_layer["sa_ln_b"].append(zeros)
        per_layer["sa_wqkv"].append(jnp.concatenate([wq, wk, wv], axis=1))
        per_layer["sa_bqkv"].append(jnp.concatenate([bq, bk, bv], axis=1))
        per_layer["sa_wo"].append(wo); per_layer["sa_bo"].append(bo)
        # cross-attention: fuse Wk/Wv into one (D, 2D) weight
        wq, bq = dense(lk[4], d_model, d_model)
        wk, bk = dense(lk[5], d_model, d_model)
        wv, bv = dense(lk[6], d_model, d_model)
        wo, bo = dense(lk[7], d_model, d_model)
        per_layer["ca_ln_g"].append(ones); per_layer["ca_ln_b"].append(zeros)
        per_layer["ca_wq"].append(wq); per_layer["ca_bq"].append(bq)
        per_layer["ca_wkv"].append(jnp.concatenate([wk, wv], axis=1))
        per_layer["ca_bkv"].append(jnp.concatenate([bk, bv], axis=1))
        per_layer["ca_wo"].append(wo); per_layer["ca_bo"].append(bo)
        # FFN
        w1, b1 = dense(lk[8], d_model, hidden_dim)
        w2, b2 = dense(lk[9], hidden_dim, d_model)
        per_layer["ff_ln_g"].append(ones); per_layer["ff_ln_b"].append(zeros)
        per_layer["ff_w1"].append(w1); per_layer["ff_b1"].append(b1)
        per_layer["ff_w2"].append(w2); per_layer["ff_b2"].append(b2)

    for k, v in per_layer.items():
        params[k] = jnp.stack(v, axis=0)   # leading num_layers axis
    return params


# ----------------------------------- main --------------------------------------

if __name__ == "__main__":
    # Small, TPU-friendly shapes consistent with the module's forward signature.
    B, S = 2, 16
    num_queries, d_model, n_heads = 8, 128, 8
    hidden_dim, input_dim, output_dim, num_layers = 256, 128, 128, 2

    key = jax.random.PRNGKey(0)
    kp, kx = jax.random.split(key)
    params = init_qformer_params(
        kp, num_queries=num_queries, d_model=d_model, hidden_dim=hidden_dim,
        input_dim=input_dim, output_dim=output_dim, num_layers=num_layers)

    image_feats = jax.random.normal(kx, (B, S, input_dim), dtype=jnp.float32)

    out = qformer_forward(params, image_feats, n_heads=n_heads)
    out = jax.block_until_ready(out)
    assert out.shape == (B, num_queries, output_dim), out.shape
    assert bool(jnp.all(jnp.isfinite(out)))
    print("KERNEL_OK")
</pallas_src>

<mosaic_0001>
module attributes {stable_mosaic.version = 11 : i64} {
  func.func @_qformer_kernel(%arg0: i32, %arg1: memref<1x16x128xf32, #tpu.memory_space<vmem>>, %arg2: memref<8x128xf32, #tpu.memory_space<vmem>>, %arg3: memref<128x128xf32, #tpu.memory_space<vmem>>, %arg4: memref<1x128xf32, #tpu.memory_space<vmem>>, %arg5: memref<2x1x128xf32, #tpu.memory_space<vmem>>, %arg6: memref<2x1x128xf32, #tpu.memory_space<vmem>>, %arg7: memref<2x128x384xf32, #tpu.memory_space<vmem>>, %arg8: memref<2x1x384xf32, #tpu.memory_space<vmem>>, %arg9: memref<2x128x128xf32, #tpu.memory_space<vmem>>, %arg10: memref<2x1x128xf32, #tpu.memory_space<vmem>>, %arg11: memref<2x1x128xf32, #tpu.memory_space<vmem>>, %arg12: memref<2x1x128xf32, #tpu.memory_space<vmem>>, %arg13: memref<2x128x128xf32, #tpu.memory_space<vmem>>, %arg14: memref<2x1x128xf32, #tpu.memory_space<vmem>>, %arg15: memref<2x128x256xf32, #tpu.memory_space<vmem>>, %arg16: memref<2x1x256xf32, #tpu.memory_space<vmem>>, %arg17: memref<2x128x128xf32, #tpu.memory_space<vmem>>, %arg18: memref<2x1x128xf32, #tpu.memory_space<vmem>>, %arg19: memref<2x1x128xf32, #tpu.memory_space<vmem>>, %arg20: memref<2x1x128xf32, #tpu.memory_space<vmem>>, %arg21: memref<2x128x256xf32, #tpu.memory_space<vmem>>, %arg22: memref<2x1x256xf32, #tpu.memory_space<vmem>>, %arg23: memref<2x256x128xf32, #tpu.memory_space<vmem>>, %arg24: memref<2x1x128xf32, #tpu.memory_space<vmem>>, %arg25: memref<128x128xf32, #tpu.memory_space<vmem>>, %arg26: memref<1x128xf32, #tpu.memory_space<vmem>>, %arg27: memref<1x8x128xf32, #tpu.memory_space<vmem>>) attributes {dimension_semantics = [#tpu.dimension_semantics<parallel>], iteration_bounds = array<i64: 2>, scalar_prefetch = 0 : i64, scratch_operands = 0 : i64, tpu.core_type = #tpu.core_type<tc>, window_params = [{transform_indices = @transform_0, window_bounds = array<i64: 1, 16, 128>}, {pipeline_mode = #tpu.pipeline_mode<synchronous>, transform_indices = @transform_1, window_bounds = array<i64: 8, 128>}, {pipeline_mode = #tpu.pipeline_mode<synchronous>, transform_indices = @transform_2, window_bounds = array<i64: 128, 128>}, {pipeline_mode = #tpu.pipeline_mode<synchronous>, transform_indices = @transform_3, window_bounds = array<i64: 1, 128>}, {pipeline_mode = #tpu.pipeline_mode<synchronous>, transform_indices = @transform_4, window_bounds = array<i64: 2, 1, 128>}, {pipeline_mode = #tpu.pipeline_mode<synchronous>, transform_indices = @transform_5, window_bounds = array<i64: 2, 1, 128>}, {pipeline_mode = #tpu.pipeline_mode<synchronous>, transform_indices = @transform_6, window_bounds = array<i64: 2, 128, 384>}, {pipeline_mode = #tpu.pipeline_mode<synchronous>, transform_indices = @transform_7, window_bounds = array<i64: 2, 1, 384>}, {pipeline_mode = #tpu.pipeline_mode<synchronous>, transform_indices = @transform_8, window_bounds = array<i64: 2, 128, 128>}, {pipeline_mode = #tpu.pipeline_mode<synchronous>, transform_indices = @transform_9, window_bounds = array<i64: 2, 1, 128>}, {pipeline_mode = #tpu.pipeline_mode<synchronous>, transform_indices = @transform_10, window_bounds = array<i64: 2, 1, 128>}, {pipeline_mode = #tpu.pipeline_mode<synchronous>, transform_indices = @transform_11, window_bounds = array<i64: 2, 1, 128>}, {pipeline_mode = #tpu.pipeline_mode<synchronous>, transform_indices = @transform_12, window_bounds = array<i64: 2, 128, 128>}, {pipeline_mode = #tpu.pipeline_mode<synchronous>, transform_indices = @transform_13, window_bounds = array<i64: 2, 1, 128>}, {pipeline_mode = #tpu.pipeline_mode<synchronous>, transform_indices = @transform_14, window_bounds = array<i64: 2, 128, 256>}, {pipeline_mode = #tpu.pipeline_mode<synchronous>, transform_indices = @transform_15, window_bounds = array<i64: 2, 1, 256>}, {pipeline_mode = #tpu.pipeline_mode<synchronous>, transform_indices = @transform_16, window_bounds = array<i64: 2, 128, 128>}, {pipeline_mode = #tpu.pipeline_mode<synchronous>, transform_indices = @transform_17, window_bounds = array<i64: 2, 1, 128>}, {pipeline_mode = #tpu.pipeline_mode<synchronous>, transform_indices = @transform_18, window_bounds = array<i64: 2, 1, 128>}, {pipeline_mode = #tpu.pipeline_mode<synchronous>, transform_indices = @transform_19, window_bounds = array<i64: 2, 1, 128>}, {pipeline_mode = #tpu.pipeline_mode<synchronous>, transform_indices = @transform_20, window_bounds = array<i64: 2, 128, 256>}, {pipeline_mode = #tpu.pipeline_mode<synchronous>, transform_indices = @transform_21, window_bounds = array<i64: 2, 1, 256>}, {pipeline_mode = #tpu.pipeline_mode<synchronous>, transform_indices = @transform_22, window_bounds = array<i64: 2, 256, 128>}, {pipeline_mode = #tpu.pipeline_mode<synchronous>, transform_indices = @transform_23, window_bounds = array<i64: 2, 1, 128>}, {pipeline_mode = #tpu.pipeline_mode<synchronous>, transform_indices = @transform_24, window_bounds = array<i64: 128, 128>}, {pipeline_mode = #tpu.pipeline_mode<synchronous>, transform_indices = @transform_25, window_bounds = array<i64: 1, 128>}, {transform_indices = @transform_26, window_bounds = array<i64: 1, 8, 128>}]} {
    %c0 = arith.constant 0 : index
    %c0_0 = arith.constant 0 : index
    %c0_1 = arith.constant 0 : index
    %0 = vector.load %arg1[%c0, %c0_0, %c0_1] : memref<1x16x128xf32, #tpu.memory_space<vmem>>, vector<1x16x128xf32>
    %1 = vector.shape_cast %0 : vector<1x16x128xf32> to vector<16x128xf32>
    %c0_2 = arith.constant 0 : index
    %c0_3 = arith.constant 0 : index
    %2 = vector.load %arg3[%c0_2, %c0_3] : memref<128x128xf32, #tpu.memory_space<vmem>>, vector<128x128xf32>
    %cst = arith.constant dense<0.000000e+00> : vector<16x128xf32>
    %3 = tpu.matmul %1, %2, %cst {dimension_numbers = #tpu.dot_dimension_numbers<[1], [0], [0], [1], [0, 0, 1, 1], [], []>} : vector<16x128xf32>, vector<128x128xf32>, vector<16x128xf32> -> vector<16x128xf32>
    %c0_4 = arith.constant 0 : index
    %c0_5 = arith.constant 0 : index
    %4 = vector.load %arg4[%c0_4, %c0_5] : memref<1x128xf32, #tpu.memory_space<vmem>>, vector<1x128xf32>
    %5 = vector.broadcast %4 : vector<1x128xf32> to vector<16x128xf32>
    %6 = arith.addf %3, %5 : vector<16x128xf32>
    %c0_6 = arith.constant 0 : index
    %c0_7 = arith.constant 0 : index
    %7 = vector.load %arg2[%c0_6, %c0_7] : memref<8x128xf32, #tpu.memory_space<vmem>>, vector<8x128xf32>
    %c0_8 = arith.constant 0 : index
    %c0_9 = arith.constant 0 : index
    %c0_10 = arith.constant 0 : index
    %8 = vector.load %arg5[%c0_8, %c0_9, %c0_10] : memref<2x1x128xf32, #tpu.memory_space<vmem>>, vector<1x1x128xf32>
    %9 = vector.shape_cast %8 : vector<1x1x128xf32> to vector<1x128xf32>
    %c0_11 = arith.constant 0 : index
    %c0_12 = arith.constant 0 : index
    %c0_13 = arith.constant 0 : index
    %10 = vector.load %arg6[%c0_11, %c0_12, %c0_13] : memref<2x1x128xf32, #tpu.memory_space<vmem>>, vector<1x1x128xf32>
    %11 = vector.shape_cast %10 : vector<1x1x128xf32> to vector<1x128xf32>
    %cst_14 = arith.constant dense<0.000000e+00> : vector<8xf32>
    %12 = vector.multi_reduction <add>, %7, %cst_14 [1] : vector<8x128xf32> to vector<8xf32>
    %13 = vector.shape_cast %12 : vector<8xf32> to vector<8x1xf32>
    %cst_15 = arith.constant 1.280000e+02 : f32
    %14 = vector.broadcast %cst_15 : f32 to vector<8x1xf32>
    %15 = arith.divf %13, %14 : vector<8x1xf32>
    %16 = vector.broadcast %15 : vector<8x1xf32> to vector<8x128xf32>
    %17 = arith.subf %7, %16 : vector<8x128xf32>
    %18 = arith.mulf %17, %17 : vector<8x128xf32>
    %cst_16 = arith.constant dense<0.000000e+00> : vector<8xf32>
    %19 = vector.multi_reduction <add>, %18, %cst_16 [1] : vector<8x128xf32> to vector<8xf32>
    %20 = vector.shape_cast %19 : vector<8xf32> to vector<8x1xf32>
    %cst_17 = arith.constant 1.280000e+02 : f32
    %21 = vector.broadcast %cst_17 : f32 to vector<8x1xf32>
    %22 = arith.divf %20, %21 : vector<8x1xf32>
    %23 = vector.broadcast %15 : vector<8x1xf32> to vector<8x128xf32>
    %24 = arith.subf %7, %23 : vector<8x128xf32>
    %cst_18 = arith.constant 9.99999974E-6 : f32
    %25 = vector.broadcast %cst_18 : f32 to vector<8x1xf32>
    %26 = arith.addf %22, %25 : vector<8x1xf32>
    %27 = math.rsqrt %26 : vector<8x1xf32>
    %28 = vector.broadcast %27 : vector<8x1xf32> to vector<8x128xf32>
    %29 = arith.mulf %24, %28 : vector<8x128xf32>
    %30 = vector.broadcast %9 : vector<1x128xf32> to vector<8x128xf32>
    %31 = arith.mulf %29, %30 : vector<8x128xf32>
    %32 = vector.broadcast %11 : vector<1x128xf32> to vector<8x128xf32>
    %33 = arith.addf %31, %32 : vector<8x128xf32>
    %c0_19 = arith.constant 0 : index
    %c0_20 = arith.constant 0 : index
    %c0_21 = arith.constant 0 : index
    %34 = vector.load %arg7[%c0_19, %c0_20, %c0_21] : memref<2x128x384xf32, #tpu.memory_space<vmem>>, vector<1x128x384xf32>
    %35 = vector.shape_cast %34 : vector<1x128x384xf32> to vector<128x384xf32>
    %cst_22 = arith.constant dense<0.000000e+00> : vector<8x384xf32>
    %36 = tpu.matmul %33, %35, %cst_22 {dimension_numbers = #tpu.dot_dimension_numbers<[1], [0], [0], [1], [0, 0, 1, 1], [], []>} : vector<8x128xf32>, vector<128x384xf32>, vector<8x384xf32> -> vector<8x384xf32>
    %c0_23 = arith.constant 0 : index
    %c0_24 = arith.constant 0 : index
    %c0_25 = arith.constant 0 : index
    %37 = vector.load %arg8[%c0_23, %c0_24, %c0_25] : memref<2x1x384xf32, #tpu.memory_space<vmem>>, vector<1x1x384xf32>
    %38 = vector.shape_cast %37 : vector<1x1x384xf32> to vector<1x384xf32>
    %39 = vector.broadcast %38 : vector<1x384xf32> to vector<8x384xf32>
    %40 = arith.addf %36, %39 : vector<8x384xf32>
    %41 = vector.extract_strided_slice %40 {offsets = [0, 0], sizes = [8, 128], strides = [1, 1]} : vector<8x384xf32> to vector<8x128xf32>
    %42 = vector.extract_strided_slice %40 {offsets = [0, 128], sizes = [8, 128], strides = [1, 1]} : vector<8x384xf32> to vector<8x128xf32>
    %43 = vector.extract_strided_slice %40 {offsets = [0, 256], sizes = [8, 128], strides = [1, 1]} : vector<8x384xf32> to vector<8x128xf32>
    %44 = vector.shape_cast %41 : vector<8x128xf32> to vector<8x8x16xf32>
    %45 = vector.shape_cast %42 : vector<8x128xf32> to vector<8x8x16xf32>
    %46 = vector.shape_cast %43 : vector<8x128xf32> to vector<8x8x16xf32>
    "tpu.trace_start"() <{level = 10 : i32, message = "qhd,khd->hqk"}> : () -> ()
    %cst_26 = arith.constant dense<0.000000e+00> : vector<8x8x8xf32>
    %47 = tpu.matmul %44, %45, %cst_26 {dimension_numbers = #tpu.dot_dimension_numbers<[2], [2], [0], [0], [0, 1, 0, 0, 1, 0], [1], [1]>} : vector<8x8x16xf32>, vector<8x8x16xf32>, vector<8x8x8xf32> -> vector<8x8x8xf32>
    "tpu.trace_stop"() : () -> ()
    %cst_27 = arith.constant 2.500000e-01 : f32
    %48 = vector.broadcast %cst_27 : f32 to vector<8x8x8xf32>
    %49 = arith.mulf %47, %48 : vector<8x8x8xf32>
    %cst_28 = arith.constant dense<0xFF800000> : vector<8x8xf32>
    %50 = vector.multi_reduction <maximumf>, %49, %cst_28 [2] : vector<8x8x8xf32> to vector<8x8xf32>
    %51 = vector.shape_cast %50 : vector<8x8xf32> to vector<8x8x1xf32>
    %52 = vector.broadcast %51 : vector<8x8x1xf32> to vector<8x8x8xf32>
    %53 = arith.subf %49, %52 : vector<8x8x8xf32>
    %54 = math.exp %53 : vector<8x8x8xf32>
    %cst_29 = arith.constant dense<0.000000e+00> : vector<8x8xf32>
    %55 = vector.multi_reduction <add>, %54, %cst_29 [2] : vector<8x8x8xf32> to vector<8x8xf32>
    %56 = vector.shape_cast %55 : vector<8x8xf32> to vector<8x8x1xf32>
    %57 = tpu.reciprocal %56 {approx = true} : vector<8x8x1xf32> -> vector<8x8x1xf32>
    %58 = vector.broadcast %57 : vector<8x8x1xf32> to vector<8x8x8xf32>
    %59 = arith.mulf %54, %58 : vector<8x8x8xf32>
    "tpu.trace_start"() <{level = 10 : i32, message = "hqk,khd->qhd"}> : () -> ()
    %cst_30 = arith.constant dense<0.000000e+00> : vector<8x16x8xf32>
    %60 = tpu.matmul %46, %59, %cst_30 {dimension_numbers = #tpu.dot_dimension_numbers<[0], [2], [2], [1], [0, 1, 0, 2, 1, 1], [1], [0]>} : vector<8x8x16xf32>, vector<8x8x8xf32>, vector<8x16x8xf32> -> vector<8x16x8xf32>
    %61 = tpu.transpose %60, [2, 0, 1] : vector<8x16x8xf32> -> vector<8x8x16xf32>
    "tpu.trace_stop"() : () -> ()
    %62 = vector.shape_cast %61 : vector<8x8x16xf32> to vector<8x128xf32>
    %c0_31 = arith.constant 0 : index
    %c0_32 = arith.constant 0 : index
    %c0_33 = arith.constant 0 : index
    %63 = vector.load %arg9[%c0_31, %c0_32, %c0_33] : memref<2x128x128xf32, #tpu.memory_space<vmem>>, vector<1x128x128xf32>
    %64 = vector.shape_cast %63 : vector<1x128x128xf32> to vector<128x128xf32>
    %cst_34 = arith.constant dense<0.000000e+00> : vector<8x128xf32>
    %65 = tpu.matmul %62, %64, %cst_34 {dimension_numbers = #tpu.dot_dimension_numbers<[1], [0], [0], [1], [0, 0, 1, 1], [], []>} : vector<8x128xf32>, vector<128x128xf32>, vector<8x128xf32> -> vector<8x128xf32>
    %66 = arith.addf %7, %65 : vector<8x128xf32>
    %c0_35 = arith.constant 0 : index
    %c0_36 = arith.constant 0 : index
    %c0_37 = arith.constant 0 : index
    %67 = vector.load %arg10[%c0_35, %c0_36, %c0_37] : memref<2x1x128xf32, #tpu.memory_space<vmem>>, vector<1x1x128xf32>
    %68 = vector.shape_cast %67 : vector<1x1x128xf32> to vector<1x128xf32>
    %69 = vector.broadcast %68 : vector<1x128xf32> to vector<8x128xf32>
    %70 = arith.addf %66, %69 : vector<8x128xf32>
    %c0_38 = arith.constant 0 : index
    %c0_39 = arith.constant 0 : index
    %c0_40 = arith.constant 0 : index
    %71 = vector.load %arg11[%c0_38, %c0_39, %c0_40] : memref<2x1x128xf32, #tpu.memory_space<vmem>>, vector<1x1x128xf32>
    %72 = vector.shape_cast %71 : vector<1x1x128xf32> to vector<1x128xf32>
    %c0_41 = arith.constant 0 : index
    %c0_42 = arith.constant 0 : index
    %c0_43 = arith.constant 0 : index
    %73 = vector.load %arg12[%c0_41, %c0_42, %c0_43] : memref<2x1x128xf32, #tpu.memory_space<vmem>>, vector<1x1x128xf32>
    %74 = vector.shape_cast %73 : vector<1x1x128xf32> to vector<1x128xf32>
    %cst_44 = arith.constant dense<0.000000e+00> : vector<8xf32>
    %75 = vector.multi_reduction <add>, %70, %cst_44 [1] : vector<8x128xf32> to vector<8xf32>
    %76 = vector.shape_cast %75 : vector<8xf32> to vector<8x1xf32>
    %cst_45 = arith.constant 1.280000e+02 : f32
    %77 = vector.broadcast %cst_45 : f32 to vector<8x1xf32>
    %78 = arith.divf %76, %77 : vector<8x1xf32>
    %79 = vector.broadcast %78 : vector<8x1xf32> to vector<8x128xf32>
    %80 = arith.subf %70, %79 : vector<8x128xf32>
    %81 = arith.mulf %80, %80 : vector<8x128xf32>
    %cst_46 = arith.constant dense<0.000000e+00> : vector<8xf32>
    %82 = vector.multi_reduction <add>, %81, %cst_46 [1] : vector<8x128xf32> to vector<8xf32>
    %83 = vector.shape_cast %82 : vector<8xf32> to vector<8x1xf32>
    %cst_47 = arith.constant 1.280000e+02 : f32
    %84 = vector.broadcast %cst_47 : f32 to vector<8x1xf32>
    %85 = arith.divf %83, %84 : vector<8x1xf32>
    %86 = vector.broadcast %78 : vector<8x1xf32> to vector<8x128xf32>
    %87 = arith.subf %70, %86 : vector<8x128xf32>
    %cst_48 = arith.constant 9.99999974E-6 : f32
    %88 = vector.broadcast %cst_48 : f32 to vector<8x1xf32>
    %89 = arith.addf %85, %88 : vector<8x1xf32>
    %90 = math.rsqrt %89 : vector<8x1xf32>
    %91 = vector.broadcast %90 : vector<8x1xf32> to vector<8x128xf32>
    %92 = arith.mulf %87, %91 : vector<8x128xf32>
    %93 = vector.broadcast %72 : vector<1x128xf32> to vector<8x128xf32>
    %94 = arith.mulf %92, %93 : vector<8x128xf32>
    %95 = vector.broadcast %74 : vector<1x128xf32> to vector<8x128xf32>
    %96 = arith.addf %94, %95 : vector<8x128xf32>
    %c0_49 = arith.constant 0 : index
    %c0_50 = arith.constant 0 : index
    %c0_51 = arith.constant 0 : index
    %97 = vector.load %arg13[%c0_49, %c0_50, %c0_51] : memref<2x128x128xf32, #tpu.memory_space<vmem>>, vector<1x128x128xf32>
    %98 = vector.shape_cast %97 : vector<1x128x128xf32> to vector<128x128xf32>
    %cst_52 = arith.constant dense<0.000000e+00> : vector<8x128xf32>
    %99 = tpu.matmul %96, %98, %cst_52 {dimension_numbers = #tpu.dot_dimension_numbers<[1], [0], [0], [1], [0, 0, 1, 1], [], []>} : vector<8x128xf32>, vector<128x128xf32>, vector<8x128xf32> -> vector<8x128xf32>
    %c0_53 = arith.constant 0 : index
    %c0_54 = arith.constant 0 : index
    %c0_55 = arith.constant 0 : index
    %100 = vector.load %arg14[%c0_53, %c0_54, %c0_55] : memref<2x1x128xf32, #tpu.memory_space<vmem>>, vector<1x1x128xf32>
    %101 = vector.shape_cast %100 : vector<1x1x128xf32> to vector<1x128xf32>
    %102 = vector.broadcast %101 : vector<1x128xf32> to vector<8x128xf32>
    %103 = arith.addf %99, %102 : vector<8x128xf32>
    %c0_56 = arith.constant 0 : index
    %c0_57 = arith.constant 0 : index
    %c0_58 = arith.constant 0 : index
    %104 = vector.load %arg15[%c0_56, %c0_57, %c0_58] : memref<2x128x256xf32, #tpu.memory_space<vmem>>, vector<1x128x256xf32>
    %105 = vector.shape_cast %104 : vector<1x128x256xf32> to vector<128x256xf32>
    %cst_59 = arith.constant dense<0.000000e+00> : vector<16x256xf32>
    %106 = tpu.matmul %6, %105, %cst_59 {dimension_numbers = #tpu.dot_dimension_numbers<[1], [0], [0], [1], [0, 0, 1, 1], [], []>} : vector<16x128xf32>, vector<128x256xf32>, vector<16x256xf32> -> vector<16x256xf32>
    %c0_60 = arith.constant 0 : index
    %c0_61 = arith.constant 0 : index
    %c0_62 = arith.constant 0 : index
    %107 = vector.load %arg16[%c0_60, %c0_61, %c0_62] : memref<2x1x256xf32, #tpu.memory_space<vmem>>, vector<1x1x256xf32>
    %108 = vector.shape_cast %107 : vector<1x1x256xf32> to vector<1x256xf32>
    %109 = vector.broadcast %108 : vector<1x256xf32> to vector<16x256xf32>
    %110 = arith.addf %106, %109 : vector<16x256xf32>
    %111 = vector.extract_strided_slice %110 {offsets = [0, 0], sizes = [16, 128], strides = [1, 1]} : vector<16x256xf32> to vector<16x128xf32>
    %112 = vector.extract_strided_slice %110 {offsets = [0, 128], sizes = [16, 128], strides = [1, 1]} : vector<16x256xf32> to vector<16x128xf32>
    %113 = vector.shape_cast %103 : vector<8x128xf32> to vector<8x8x16xf32>
    %114 = vector.shape_cast %111 : vector<16x128xf32> to vector<16x8x16xf32>
    %115 = vector.shape_cast %112 : vector<16x128xf32> to vector<16x8x16xf32>
    "tpu.trace_start"() <{level = 10 : i32, message = "qhd,khd->hqk"}> : () -> ()
    %cst_63 = arith.constant dense<0.000000e+00> : vector<8x8x16xf32>
    %116 = tpu.matmul %113, %114, %cst_63 {dimension_numbers = #tpu.dot_dimension_numbers<[2], [2], [0], [0], [0, 1, 0, 0, 1, 0], [1], [1]>} : vector<8x8x16xf32>, vector<16x8x16xf32>, vector<8x8x16xf32> -> vector<8x8x16xf32>
    "tpu.trace_stop"() : () -> ()
    %cst_64 = arith.constant 2.500000e-01 : f32
    %117 = vector.broadcast %cst_64 : f32 to vector<8x8x16xf32>
    %118 = arith.mulf %116, %117 : vector<8x8x16xf32>
    %cst_65 = arith.constant dense<0xFF800000> : vector<8x8xf32>
    %119 = vector.multi_reduction <maximumf>, %118, %cst_65 [2] : vector<8x8x16xf32> to vector<8x8xf32>
    %120 = vector.shape_cast %119 : vector<8x8xf32> to vector<8x8x1xf32>
    %121 = vector.broadcast %120 : vector<8x8x1xf32> to vector<8x8x16xf32>
    %122 = arith.subf %118, %121 : vector<8x8x16xf32>
    %123 = math.exp %122 : vector<8x8x16xf32>
    %cst_66 = arith.constant dense<0.000000e+00> : vector<8x8xf32>
    %124 = vector.multi_reduction <add>, %123, %cst_66 [2] : vector<8x8x16xf32> to vector<8x8xf32>
    %125 = vector.shape_cast %124 : vector<8x8xf32> to vector<8x8x1xf32>
    %126 = tpu.reciprocal %125 {approx = true} : vector<8x8x1xf32> -> vector<8x8x1xf32>
    %127 = vector.broadcast %126 : vector<8x8x1xf32> to vector<8x8x16xf32>
    %128 = arith.mulf %123, %127 : vector<8x8x16xf32>
    "tpu.trace_start"() <{level = 10 : i32, message = "hqk,khd->qhd"}> : () -> ()
    %cst_67 = arith.constant dense<0.000000e+00> : vector<8x16x8xf32>
    %129 = tpu.matmul %115, %128, %cst_67 {dimension_numbers = #tpu.dot_dimension_numbers<[0], [2], [2], [1], [0, 1, 0, 2, 1, 1], [1], [0]>} : vector<16x8x16xf32>, vector<8x8x16xf32>, vector<8x16x8xf32> -> vector<8x16x8xf32>
    %130 = tpu.transpose %129, [2, 0, 1] : vector<8x16x8xf32> -> vector<8x8x16xf32>
    "tpu.trace_stop"() : () -> ()
    %131 = vector.shape_cast %130 : vector<8x8x16xf32> to vector<8x128xf32>
    %c0_68 = arith.constant 0 : index
    %c0_69 = arith.constant 0 : index
    %c0_70 = arith.constant 0 : index
    %132 = vector.load %arg17[%c0_68, %c0_69, %c0_70] : memref<2x128x128xf32, #tpu.memory_space<vmem>>, vector<1x128x128xf32>
    %133 = vector.shape_cast %132 : vector<1x128x128xf32> to vector<128x128xf32>
    %cst_71 = arith.constant dense<0.000000e+00> : vector<8x128xf32>
    %134 = tpu.matmul %131, %133, %cst_71 {dimension_numbers = #tpu.dot_dimension_numbers<[1], [0], [0], [1], [0, 0, 1, 1], [], []>} : vector<8x128xf32>, vector<128x128xf32>, vector<8x128xf32> -> vector<8x128xf32>
    %135 = arith.addf %70, %134 : vector<8x128xf32>
    %c0_72 = arith.constant 0 : index
    %c0_73 = arith.constant 0 : index
    %c0_74 = arith.constant 0 : index
    %136 = vector.load %arg18[%c0_72, %c0_73, %c0_74] : memref<2x1x128xf32, #tpu.memory_space<vmem>>, vector<1x1x128xf32>
    %137 = vector.shape_cast %136 : vector<1x1x128xf32> to vector<1x128xf32>
    %138 = vector.broadcast %137 : vector<1x128xf32> to vector<8x128xf32>
    %139 = arith.addf %135, %138 : vector<8x128xf32>
    %c0_75 = arith.constant 0 : index
    %c0_76 = arith.constant 0 : index
    %c0_77 = arith.constant 0 : index
    %140 = vector.load %arg19[%c0_75, %c0_76, %c0_77] : memref<2x1x128xf32, #tpu.memory_space<vmem>>, vector<1x1x128xf32>
    %141 = vector.shape_cast %140 : vector<1x1x128xf32> to vector<1x128xf32>
    %c0_78 = arith.constant 0 : index
    %c0_79 = arith.constant 0 : index
    %c0_80 = arith.constant 0 : index
    %142 = vector.load %arg20[%c0_78, %c0_79, %c0_80] : memref<2x1x128xf32, #tpu.memory_space<vmem>>, vector<1x1x128xf32>
    %143 = vector.shape_cast %142 : vector<1x1x128xf32> to vector<1x128xf32>
    %cst_81 = arith.constant dense<0.000000e+00> : vector<8xf32>
    %144 = vector.multi_reduction <add>, %139, %cst_81 [1] : vector<8x128xf32> to vector<8xf32>
    %145 = vector.shape_cast %144 : vector<8xf32> to vector<8x1xf32>
    %cst_82 = arith.constant 1.280000e+02 : f32
    %146 = vector.broadcast %cst_82 : f32 to vector<8x1xf32>
    %147 = arith.divf %145, %146 : vector<8x1xf32>
    %148 = vector.broadcast %147 : vector<8x1xf32> to vector<8x128xf32>
    %149 = arith.subf %139, %148 : vector<8x128xf32>
    %150 = arith.mulf %149, %149 : vector<8x128xf32>
    %cst_83 = arith.constant dense<0.000000e+00> : vector<8xf32>
    %151 = vector.multi_reduction <add>, %150, %cst_83 [1] : vector<8x128xf32> to vector<8xf32>
    %152 = vector.shape_cast %151 : vector<8xf32> to vector<8x1xf32>
    %cst_84 = arith.constant 1.280000e+02 : f32
    %153 = vector.broadcast %cst_84 : f32 to vector<8x1xf32>
    %154 = arith.divf %152, %153 : vector<8x1xf32>
    %155 = vector.broadcast %147 : vector<8x1xf32> to vector<8x128xf32>
    %156 = arith.subf %139, %155 : vector<8x128xf32>
    %cst_85 = arith.constant 9.99999974E-6 : f32
    %157 = vector.broadcast %cst_85 : f32 to vector<8x1xf32>
    %158 = arith.addf %154, %157 : vector<8x1xf32>
    %159 = math.rsqrt %158 : vector<8x1xf32>
    %160 = vector.broadcast %159 : vector<8x1xf32> to vector<8x128xf32>
    %161 = arith.mulf %156, %160 : vector<8x128xf32>
    %162 = vector.broadcast %141 : vector<1x128xf32> to vector<8x128xf32>
    %163 = arith.mulf %161, %162 : vector<8x128xf32>
    %164 = vector.broadcast %143 : vector<1x128xf32> to vector<8x128xf32>
    %165 = arith.addf %163, %164 : vector<8x128xf32>
    %c0_86 = arith.constant 0 : index
    %c0_87 = arith.constant 0 : index
    %c0_88 = arith.constant 0 : index
    %166 = vector.load %arg21[%c0_86, %c0_87, %c0_88] : memref<2x128x256xf32, #tpu.memory_space<vmem>>, vector<1x128x256xf32>
    %167 = vector.shape_cast %166 : vector<1x128x256xf32> to vector<128x256xf32>
    %cst_89 = arith.constant dense<0.000000e+00> : vector<8x256xf32>
    %168 = tpu.matmul %165, %167, %cst_89 {dimension_numbers = #tpu.dot_dimension_numbers<[1], [0], [0], [1], [0, 0, 1, 1], [], []>} : vector<8x128xf32>, vector<128x256xf32>, vector<8x256xf32> -> vector<8x256xf32>
    %c0_90 = arith.constant 0 : index
    %c0_91 = arith.constant 0 : index
    %c0_92 = arith.constant 0 : index
    %169 = vector.load %arg22[%c0_90, %c0_91, %c0_92] : memref<2x1x256xf32, #tpu.memory_space<vmem>>, vector<1x1x256xf32>
    %170 = vector.shape_cast %169 : vector<1x1x256xf32> to vector<1x256xf32>
    %171 = vector.broadcast %170 : vector<1x256xf32> to vector<8x256xf32>
    %172 = arith.addf %168, %171 : vector<8x256xf32>
    %cst_93 = arith.constant 5.000000e-01 : f32
    %173 = vector.broadcast %cst_93 : f32 to vector<8x256xf32>
    %174 = arith.mulf %173, %172 : vector<8x256xf32>
    %cst_94 = arith.constant 4.471500e-02 : f32
    %175 = vector.broadcast %cst_94 : f32 to vector<8x256xf32>
    %176 = arith.mulf %175, %172 : vector<8x256xf32>
    %177 = arith.mulf %176, %172 : vector<8x256xf32>
    %178 = arith.mulf %177, %172 : vector<8x256xf32>
    %179 = arith.addf %172, %178 : vector<8x256xf32>
    %cst_95 = arith.constant 0.797884583 : f32
    %180 = vector.broadcast %cst_95 : f32 to vector<8x256xf32>
    %181 = arith.mulf %180, %179 : vector<8x256xf32>
    %182 = math.tanh %181 : vector<8x256xf32>
    %cst_96 = arith.constant 1.000000e+00 : f32
    %183 = vector.broadcast %cst_96 : f32 to vector<8x256xf32>
    %184 = arith.addf %183, %182 : vector<8x256xf32>
    %185 = arith.mulf %174, %184 : vector<8x256xf32>
    %c0_97 = arith.constant 0 : index
    %c0_98 = arith.constant 0 : index
    %c0_99 = arith.constant 0 : index
    %186 = vector.load %arg23[%c0_97, %c0_98, %c0_99] : memref<2x256x128xf32, #tpu.memory_space<vmem>>, vector<1x256x128xf32>
    %187 = vector.shape_cast %186 : vector<1x256x128xf32> to vector<256x128xf32>
    %cst_100 = arith.constant dense<0.000000e+00> : vector<8x128xf32>
    %188 = tpu.matmul %185, %187, %cst_100 {dimension_numbers = #tpu.dot_dimension_numbers<[1], [0], [0], [1], [0, 0, 1, 1], [], []>} : vector<8x256xf32>, vector<256x128xf32>, vector<8x128xf32> -> vector<8x128xf32>
    %189 = arith.addf %139, %188 : vector<8x128xf32>
    %c0_101 = arith.constant 0 : index
    %c0_102 = arith.constant 0 : index
    %c0_103 = arith.constant 0 : index
    %190 = vector.load %arg24[%c0_101, %c0_102, %c0_103] : memref<2x1x128xf32, #tpu.memory_space<vmem>>, vector<1x1x128xf32>
    %191 = vector.shape_cast %190 : vector<1x1x128xf32> to vector<1x128xf32>
    %192 = vector.broadcast %191 : vector<1x128xf32> to vector<8x128xf32>
    %193 = arith.addf %189, %192 : vector<8x128xf32>
    %c1 = arith.constant 1 : index
    %c0_104 = arith.constant 0 : index
    %c0_105 = arith.constant 0 : index
    %194 = vector.load %arg5[%c1, %c0_104, %c0_105] : memref<2x1x128xf32, #tpu.memory_space<vmem>>, vector<1x1x128xf32>
    %195 = vector.shape_cast %194 : vector<1x1x128xf32> to vector<1x128xf32>
    %c1_106 = arith.constant 1 : index
    %c0_107 = arith.constant 0 : index
    %c0_108 = arith.constant 0 : index
    %196 = vector.load %arg6[%c1_106, %c0_107, %c0_108] : memref<2x1x128xf32, #tpu.memory_space<vmem>>, vector<1x1x128xf32>
    %197 = vector.shape_cast %196 : vector<1x1x128xf32> to vector<1x128xf32>
    %cst_109 = arith.constant dense<0.000000e+00> : vector<8xf32>
    %198 = vector.multi_reduction <add>, %193, %cst_109 [1] : vector<8x128xf32> to vector<8xf32>
    %199 = vector.shape_cast %198 : vector<8xf32> to vector<8x1xf32>
    %cst_110 = arith.constant 1.280000e+02 : f32
    %200 = vector.broadcast %cst_110 : f32 to vector<8x1xf32>
    %201 = arith.divf %199, %200 : vector<8x1xf32>
    %202 = vector.broadcast %201 : vector<8x1xf32> to vector<8x128xf32>
    %203 = arith.subf %193, %202 : vector<8x128xf32>
    %204 = arith.mulf %203, %203 : vector<8x128xf32>
    %cst_111 = arith.constant dense<0.000000e+00> : vector<8xf32>
    %205 = vector.multi_reduction <add>, %204, %cst_111 [1] : vector<8x128xf32> to vector<8xf32>
    %206 = vector.shape_cast %205 : vector<8xf32> to vector<8x1xf32>
    %cst_112 = arith.constant 1.280000e+02 : f32
    %207 = vector.broadcast %cst_112 : f32 to vector<8x1xf32>
    %208 = arith.divf %206, %207 : vector<8x1xf32>
    %209 = vector.broadcast %201 : vector<8x1xf32> to vector<8x128xf32>
    %210 = arith.subf %193, %209 : vector<8x128xf32>
    %cst_113 = arith.constant 9.99999974E-6 : f32
    %211 = vector.broadcast %cst_113 : f32 to vector<8x1xf32>
    %212 = arith.addf %208, %211 : vector<8x1xf32>
    %213 = math.rsqrt %212 : vector<8x1xf32>
    %214 = vector.broadcast %213 : vector<8x1xf32> to vector<8x128xf32>
    %215 = arith.mulf %210, %214 : vector<8x128xf32>
    %216 = vector.broadcast %195 : vector<1x128xf32> to vector<8x128xf32>
    %217 = arith.mulf %215, %216 : vector<8x128xf32>
    %218 = vector.broadcast %197 : vector<1x128xf32> to vector<8x128xf32>
    %219 = arith.addf %217, %218 : vector<8x128xf32>
    %c1_114 = arith.constant 1 : index
    %c0_115 = arith.constant 0 : index
    %c0_116 = arith.constant 0 : index
    %220 = vector.load %arg7[%c1_114, %c0_115, %c0_116] : memref<2x128x384xf32, #tpu.memory_space<vmem>>, vector<1x128x384xf32>
    %221 = vector.shape_cast %220 : vector<1x128x384xf32> to vector<128x384xf32>
    %cst_117 = arith.constant dense<0.000000e+00> : vector<8x384xf32>
    %222 = tpu.matmul %219, %221, %cst_117 {dimension_numbers = #tpu.dot_dimension_numbers<[1], [0], [0], [1], [0, 0, 1, 1], [], []>} : vector<8x128xf32>, vector<128x384xf32>, vector<8x384xf32> -> vector<8x384xf32>
    %c1_118 = arith.constant 1 : index
    %c0_119 = arith.constant 0 : index
    %c0_120 = arith.constant 0 : index
    %223 = vector.load %arg8[%c1_118, %c0_119, %c0_120] : memref<2x1x384xf32, #tpu.memory_space<vmem>>, vector<1x1x384xf32>
    %224 = vector.shape_cast %223 : vector<1x1x384xf32> to vector<1x384xf32>
    %225 = vector.broadcast %224 : vector<1x384xf32> to vector<8x384xf32>
    %226 = arith.addf %222, %225 : vector<8x384xf32>
    %227 = vector.extract_strided_slice %226 {offsets = [0, 0], sizes = [8, 128], strides = [1, 1]} : vector<8x384xf32> to vector<8x128xf32>
    %228 = vector.extract_strided_slice %226 {offsets = [0, 128], sizes = [8, 128], strides = [1, 1]} : vector<8x384xf32> to vector<8x128xf32>
    %229 = vector.extract_strided_slice %226 {offsets = [0, 256], sizes = [8, 128], strides = [1, 1]} : vector<8x384xf32> to vector<8x128xf32>
    %230 = vector.shape_cast %227 : vector<8x128xf32> to vector<8x8x16xf32>
    %231 = vector.shape_cast %228 : vector<8x128xf32> to vector<8x8x16xf32>
    %232 = vector.shape_cast %229 : vector<8x128xf32> to vector<8x8x16xf32>
    "tpu.trace_start"() <{level = 10 : i32, message = "qhd,khd->hqk"}> : () -> ()
    %cst_121 = arith.constant dense<0.000000e+00> : vector<8x8x8xf32>
    %233 = tpu.matmul %230, %231, %cst_121 {dimension_numbers = #tpu.dot_dimension_numbers<[2], [2], [0], [0], [0, 1, 0, 0, 1, 0], [1], [1]>} : vector<8x8x16xf32>, vector<8x8x16xf32>, vector<8x8x8xf32> -> vector<8x8x8xf32>
    "tpu.trace_stop"() : () -> ()
    %cst_122 = arith.constant 2.500000e-01 : f32
    %234 = vector.broadcast %cst_122 : f32 to vector<8x8x8xf32>
    %235 = arith.mulf %233, %234 : vector<8x8x8xf32>
    %cst_123 = arith.constant dense<0xFF800000> : vector<8x8xf32>
    %236 = vector.multi_reduction <maximumf>, %235, %cst_123 [2] : vector<8x8x8xf32> to vector<8x8xf32>
    %237 = vector.shape_cast %236 : vector<8x8xf32> to vector<8x8x1xf32>
    %238 = vector.broadcast %237 : vector<8x8x1xf32> to vector<8x8x8xf32>
    %239 = arith.subf %235, %238 : vector<8x8x8xf32>
    %240 = math.exp %239 : vector<8x8x8xf32>
    %cst_124 = arith.constant dense<0.000000e+00> : vector<8x8xf32>
    %241 = vector.multi_reduction <add>, %240, %cst_124 [2] : vector<8x8x8xf32> to vector<8x8xf32>
    %242 = vector.shape_cast %241 : vector<8x8xf32> to vector<8x8x1xf32>
    %243 = tpu.reciprocal %242 {approx = true} : vector<8x8x1xf32> -> vector<8x8x1xf32>
    %244 = vector.broadcast %243 : vector<8x8x1xf32> to vector<8x8x8xf32>
    %245 = arith.mulf %240, %244 : vector<8x8x8xf32>
    "tpu.trace_start"() <{level = 10 : i32, message = "hqk,khd->qhd"}> : () -> ()
    %cst_125 = arith.constant dense<0.000000e+00> : vector<8x16x8xf32>
    %246 = tpu.matmul %232, %245, %cst_125 {dimension_numbers = #tpu.dot_dimension_numbers<[0], [2], [2], [1], [0, 1, 0, 2, 1, 1], [1], [0]>} : vector<8x8x16xf32>, vector<8x8x8xf32>, vector<8x16x8xf32> -> vector<8x16x8xf32>
    %247 = tpu.transpose %246, [2, 0, 1] : vector<8x16x8xf32> -> vector<8x8x16xf32>
    "tpu.trace_stop"() : () -> ()
    %248 = vector.shape_cast %247 : vector<8x8x16xf32> to vector<8x128xf32>
    %c1_126 = arith.constant 1 : index
    %c0_127 = arith.constant 0 : index
    %c0_128 = arith.constant 0 : index
    %249 = vector.load %arg9[%c1_126, %c0_127, %c0_128] : memref<2x128x128xf32, #tpu.memory_space<vmem>>, vector<1x128x128xf32>
    %250 = vector.shape_cast %249 : vector<1x128x128xf32> to vector<128x128xf32>
    %cst_129 = arith.constant dense<0.000000e+00> : vector<8x128xf32>
    %251 = tpu.matmul %248, %250, %cst_129 {dimension_numbers = #tpu.dot_dimension_numbers<[1], [0], [0], [1], [0, 0, 1, 1], [], []>} : vector<8x128xf32>, vector<128x128xf32>, vector<8x128xf32> -> vector<8x128xf32>
    %252 = arith.addf %193, %251 : vector<8x128xf32>
    %c1_130 = arith.constant 1 : index
    %c0_131 = arith.constant 0 : index
    %c0_132 = arith.constant 0 : index
    %253 = vector.load %arg10[%c1_130, %c0_131, %c0_132] : memref<2x1x128xf32, #tpu.memory_space<vmem>>, vector<1x1x128xf32>
    %254 = vector.shape_cast %253 : vector<1x1x128xf32> to vector<1x128xf32>
    %255 = vector.broadcast %254 : vector<1x128xf32> to vector<8x128xf32>
    %256 = arith.addf %252, %255 : vector<8x128xf32>
    %c1_133 = arith.constant 1 : index
    %c0_134 = arith.constant 0 : index
    %c0_135 = arith.constant 0 : index
    %257 = vector.load %arg11[%c1_133, %c0_134, %c0_135] : memref<2x1x128xf32, #tpu.memory_space<vmem>>, vector<1x1x128xf32>
    %258 = vector.shape_cast %257 : vector<1x1x128xf32> to vector<1x128xf32>
    %c1_136 = arith.constant 1 : index
    %c0_137 = arith.constant 0 : index
    %c0_138 = arith.constant 0 : index
    %259 = vector.load %arg12[%c1_136, %c0_137, %c0_138] : memref<2x1x128xf32, #tpu.memory_space<vmem>>, vector<1x1x128xf32>
    %260 = vector.shape_cast %259 : vector<1x1x128xf32> to vector<1x128xf32>
    %cst_139 = arith.constant dense<0.000000e+00> : vector<8xf32>
    %261 = vector.multi_reduction <add>, %256, %cst_139 [1] : vector<8x128xf32> to vector<8xf32>
    %262 = vector.shape_cast %261 : vector<8xf32> to vector<8x1xf32>
    %cst_140 = arith.constant 1.280000e+02 : f32
    %263 = vector.broadcast %cst_140 : f32 to vector<8x1xf32>
    %264 = arith.divf %262, %263 : vector<8x1xf32>
    %265 = vector.broadcast %264 : vector<8x1xf32> to vector<8x128xf32>
    %266 = arith.subf %256, %265 : vector<8x128xf32>
    %267 = arith.mulf %266, %266 : vector<8x128xf32>
    %cst_141 = arith.constant dense<0.000000e+00> : vector<8xf32>
    %268 = vector.multi_reduction <add>, %267, %cst_141 [1] : vector<8x128xf32> to vector<8xf32>
    %269 = vector.shape_cast %268 : vector<8xf32> to vector<8x1xf32>
    %cst_142 = arith.constant 1.280000e+02 : f32
    %270 = vector.broadcast %cst_142 : f32 to vector<8x1xf32>
    %271 = arith.divf %269, %270 : vector<8x1xf32>
    %272 = vector.broadcast %264 : vector<8x1xf32> to vector<8x128xf32>
    %273 = arith.subf %256, %272 : vector<8x128xf32>
    %cst_143 = arith.constant 9.99999974E-6 : f32
    %274 = vector.broadcast %cst_143 : f32 to vector<8x1xf32>
    %275 = arith.addf %271, %274 : vector<8x1xf32>
    %276 = math.rsqrt %275 : vector<8x1xf32>
    %277 = vector.broadcast %276 : vector<8x1xf32> to vector<8x128xf32>
    %278 = arith.mulf %273, %277 : vector<8x128xf32>
    %279 = vector.broadcast %258 : vector<1x128xf32> to vector<8x128xf32>
    %280 = arith.mulf %278, %279 : vector<8x128xf32>
    %281 = vector.broadcast %260 : vector<1x128xf32> to vector<8x128xf32>
    %282 = arith.addf %280, %281 : vector<8x128xf32>
    %c1_144 = arith.constant 1 : index
    %c0_145 = arith.constant 0 : index
    %c0_146 = arith.constant 0 : index
    %283 = vector.load %arg13[%c1_144, %c0_145, %c0_146] : memref<2x128x128xf32, #tpu.memory_space<vmem>>, vector<1x128x128xf32>
    %284 = vector.shape_cast %283 : vector<1x128x128xf32> to vector<128x128xf32>
    %cst_147 = arith.constant dense<0.000000e+00> : vector<8x128xf32>
    %285 = tpu.matmul %282, %284, %cst_147 {dimension_numbers = #tpu.dot_dimension_numbers<[1], [0], [0], [1], [0, 0, 1, 1], [], []>} : vector<8x128xf32>, vector<128x128xf32>, vector<8x128xf32> -> vector<8x128xf32>
    %c1_148 = arith.constant 1 : index
    %c0_149 = arith.constant 0 : index
    %c0_150 = arith.constant 0 : index
    %286 = vector.load %arg14[%c1_148, %c0_149, %c0_150] : memref<2x1x128xf32, #tpu.memory_space<vmem>>, vector<1x1x128xf32>
    %287 = vector.shape_cast %286 : vector<1x1x128xf32> to vector<1x128xf32>
    %288 = vector.broadcast %287 : vector<1x128xf32> to vector<8x128xf32>
    %289 = arith.addf %285, %288 : vector<8x128xf32>
    %c1_151 = arith.constant 1 : index
    %c0_152 = arith.constant 0 : index
    %c0_153 = arith.constant 0 : index
    %290 = vector.load %arg15[%c1_151, %c0_152, %c0_153] : memref<2x128x256xf32, #tpu.memory_space<vmem>>, vector<1x128x256xf32>
    %291 = vector.shape_cast %290 : vector<1x128x256xf32> to vector<128x256xf32>
    %cst_154 = arith.constant dense<0.000000e+00> : vector<16x256xf32>
    %292 = tpu.matmul %6, %291, %cst_154 {dimension_numbers = #tpu.dot_dimension_numbers<[1], [0], [0], [1], [0, 0, 1, 1], [], []>} : vector<16x128xf32>, vector<128x256xf32>, vector<16x256xf32> -> vector<16x256xf32>
    %c1_155 = arith.constant 1 : index
    %c0_156 = arith.constant 0 : index
    %c0_157 = arith.constant 0 : index
    %293 = vector.load %arg16[%c1_155, %c0_156, %c0_157] : memref<2x1x256xf32, #tpu.memory_space<vmem>>, vector<1x1x256xf32>
    %294 = vector.shape_cast %293 : vector<1x1x256xf32> to vector<1x256xf32>
    %295 = vector.broadcast %294 : vector<1x256xf32> to vector<16x256xf32>
    %296 = arith.addf %292, %295 : vector<16x256xf32>
    %297 = vector.extract_strided_slice %296 {offsets = [0, 0], sizes = [16, 128], strides = [1, 1]} : vector<16x256xf32> to vector<16x128xf32>
    %298 = vector.extract_strided_slice %296 {offsets = [0, 128], sizes = [16, 128], strides = [1, 1]} : vector<16x256xf32> to vector<16x128xf32>
    %299 = vector.shape_cast %289 : vector<8x128xf32> to vector<8x8x16xf32>
    %300 = vector.shape_cast %297 : vector<16x128xf32> to vector<16x8x16xf32>
    %301 = vector.shape_cast %298 : vector<16x128xf32> to vector<16x8x16xf32>
    "tpu.trace_start"() <{level = 10 : i32, message = "qhd,khd->hqk"}> : () -> ()
    %cst_158 = arith.constant dense<0.000000e+00> : vector<8x8x16xf32>
    %302 = tpu.matmul %299, %300, %cst_158 {dimension_numbers = #tpu.dot_dimension_numbers<[2], [2], [0], [0], [0, 1, 0, 0, 1, 0], [1], [1]>} : vector<8x8x16xf32>, vector<16x8x16xf32>, vector<8x8x16xf32> -> vector<8x8x16xf32>
    "tpu.trace_stop"() : () -> ()
    %cst_159 = arith.constant 2.500000e-01 : f32
    %303 = vector.broadcast %cst_159 : f32 to vector<8x8x16xf32>
    %304 = arith.mulf %302, %303 : vector<8x8x16xf32>
    %cst_160 = arith.constant dense<0xFF800000> : vector<8x8xf32>
    %305 = vector.multi_reduction <maximumf>, %304, %cst_160 [2] : vector<8x8x16xf32> to vector<8x8xf32>
    %306 = vector.shape_cast %305 : vector<8x8xf32> to vector<8x8x1xf32>
    %307 = vector.broadcast %306 : vector<8x8x1xf32> to vector<8x8x16xf32>
    %308 = arith.subf %304, %307 : vector<8x8x16xf32>
    %309 = math.exp %308 : vector<8x8x16xf32>
    %cst_161 = arith.constant dense<0.000000e+00> : vector<8x8xf32>
    %310 = vector.multi_reduction <add>, %309, %cst_161 [2] : vector<8x8x16xf32> to vector<8x8xf32>
    %311 = vector.shape_cast %310 : vector<8x8xf32> to vector<8x8x1xf32>
    %312 = tpu.reciprocal %311 {approx = true} : vector<8x8x1xf32> -> vector<8x8x1xf32>
    %313 = vector.broadcast %312 : vector<8x8x1xf32> to vector<8x8x16xf32>
    %314 = arith.mulf %309, %313 : vector<8x8x16xf32>
    "tpu.trace_start"() <{level = 10 : i32, message = "hqk,khd->qhd"}> : () -> ()
    %cst_162 = arith.constant dense<0.000000e+00> : vector<8x16x8xf32>
    %315 = tpu.matmul %301, %314, %cst_162 {dimension_numbers = #tpu.dot_dimension_numbers<[0], [2], [2], [1], [0, 1, 0, 2, 1, 1], [1], [0]>} : vector<16x8x16xf32>, vector<8x8x16xf32>, vector<8x16x8xf32> -> vector<8x16x8xf32>
    %316 = tpu.transpose %315, [2, 0, 1] : vector<8x16x8xf32> -> vector<8x8x16xf32>
    "tpu.trace_stop"() : () -> ()
    %317 = vector.shape_cast %316 : vector<8x8x16xf32> to vector<8x128xf32>
    %c1_163 = arith.constant 1 : index
    %c0_164 = arith.constant 0 : index
    %c0_165 = arith.constant 0 : index
    %318 = vector.load %arg17[%c1_163, %c0_164, %c0_165] : memref<2x128x128xf32, #tpu.memory_space<vmem>>, vector<1x128x128xf32>
    %319 = vector.shape_cast %318 : vector<1x128x128xf32> to vector<128x128xf32>
    %cst_166 = arith.constant dense<0.000000e+00> : vector<8x128xf32>
    %320 = tpu.matmul %317, %319, %cst_166 {dimension_numbers = #tpu.dot_dimension_numbers<[1], [0], [0], [1], [0, 0, 1, 1], [], []>} : vector<8x128xf32>, vector<128x128xf32>, vector<8x128xf32> -> vector<8x128xf32>
    %321 = arith.addf %256, %320 : vector<8x128xf32>
    %c1_167 = arith.constant 1 : index
    %c0_168 = arith.constant 0 : index
    %c0_169 = arith.constant 0 : index
    %322 = vector.load %arg18[%c1_167, %c0_168, %c0_169] : memref<2x1x128xf32, #tpu.memory_space<vmem>>, vector<1x1x128xf32>
    %323 = vector.shape_cast %322 : vector<1x1x128xf32> to vector<1x128xf32>
    %324 = vector.broadcast %323 : vector<1x128xf32> to vector<8x128xf32>
    %325 = arith.addf %321, %324 : vector<8x128xf32>
    %c1_170 = arith.constant 1 : index
    %c0_171 = arith.constant 0 : index
    %c0_172 = arith.constant 0 : index
    %326 = vector.load %arg19[%c1_170, %c0_171, %c0_172] : memref<2x1x128xf32, #tpu.memory_space<vmem>>, vector<1x1x128xf32>
    %327 = vector.shape_cast %326 : vector<1x1x128xf32> to vector<1x128xf32>
    %c1_173 = arith.constant 1 : index
    %c0_174 = arith.constant 0 : index
    %c0_175 = arith.constant 0 : index
    %328 = vector.load %arg20[%c1_173, %c0_174, %c0_175] : memref<2x1x128xf32, #tpu.memory_space<vmem>>, vector<1x1x128xf32>
    %329 = vector.shape_cast %328 : vector<1x1x128xf32> to vector<1x128xf32>
    %cst_176 = arith.constant dense<0.000000e+00> : vector<8xf32>
    %330 = vector.multi_reduction <add>, %325, %cst_176 [1] : vector<8x128xf32> to vector<8xf32>
    %331 = vector.shape_cast %330 : vector<8xf32> to vector<8x1xf32>
    %cst_177 = arith.constant 1.280000e+02 : f32
    %332 = vector.broadcast %cst_177 : f32 to vector<8x1xf32>
    %333 = arith.divf %331, %332 : vector<8x1xf32>
    %334 = vector.broadcast %333 : vector<8x1xf32> to vector<8x128xf32>
    %335 = arith.subf %325, %334 : vector<8x128xf32>
    %336 = arith.mulf %335, %335 : vector<8x128xf32>
    %cst_178 = arith.constant dense<0.000000e+00> : vector<8xf32>
    %337 = vector.multi_reduction <add>, %336, %cst_178 [1] : vector<8x128xf32> to vector<8xf32>
    %338 = vector.shape_cast %337 : vector<8xf32> to vector<8x1xf32>
    %cst_179 = arith.constant 1.280000e+02 : f32
    %339 = vector.broadcast %cst_179 : f32 to vector<8x1xf32>
    %340 = arith.divf %338, %339 : vector<8x1xf32>
    %341 = vector.broadcast %333 : vector<8x1xf32> to vector<8x128xf32>
    %342 = arith.subf %325, %341 : vector<8x128xf32>
    %cst_180 = arith.constant 9.99999974E-6 : f32
    %343 = vector.broadcast %cst_180 : f32 to vector<8x1xf32>
    %344 = arith.addf %340, %343 : vector<8x1xf32>
    %345 = math.rsqrt %344 : vector<8x1xf32>
    %346 = vector.broadcast %345 : vector<8x1xf32> to vector<8x128xf32>
    %347 = arith.mulf %342, %346 : vector<8x128xf32>
    %348 = vector.broadcast %327 : vector<1x128xf32> to vector<8x128xf32>
    %349 = arith.mulf %347, %348 : vector<8x128xf32>
    %350 = vector.broadcast %329 : vector<1x128xf32> to vector<8x128xf32>
    %351 = arith.addf %349, %350 : vector<8x128xf32>
    %c1_181 = arith.constant 1 : index
    %c0_182 = arith.constant 0 : index
    %c0_183 = arith.constant 0 : index
    %352 = vector.load %arg21[%c1_181, %c0_182, %c0_183] : memref<2x128x256xf32, #tpu.memory_space<vmem>>, vector<1x128x256xf32>
    %353 = vector.shape_cast %352 : vector<1x128x256xf32> to vector<128x256xf32>
    %cst_184 = arith.constant dense<0.000000e+00> : vector<8x256xf32>
    %354 = tpu.matmul %351, %353, %cst_184 {dimension_numbers = #tpu.dot_dimension_numbers<[1], [0], [0], [1], [0, 0, 1, 1], [], []>} : vector<8x128xf32>, vector<128x256xf32>, vector<8x256xf32> -> vector<8x256xf32>
    %c1_185 = arith.constant 1 : index
    %c0_186 = arith.constant 0 : index
    %c0_187 = arith.constant 0 : index
    %355 = vector.load %arg22[%c1_185, %c0_186, %c0_187] : memref<2x1x256xf32, #tpu.memory_space<vmem>>, vector<1x1x256xf32>
    %356 = vector.shape_cast %355 : vector<1x1x256xf32> to vector<1x256xf32>
    %357 = vector.broadcast %356 : vector<1x256xf32> to vector<8x256xf32>
    %358 = arith.addf %354, %357 : vector<8x256xf32>
    %cst_188 = arith.constant 5.000000e-01 : f32
    %359 = vector.broadcast %cst_188 : f32 to vector<8x256xf32>
    %360 = arith.mulf %359, %358 : vector<8x256xf32>
    %cst_189 = arith.constant 4.471500e-02 : f32
    %361 = vector.broadcast %cst_189 : f32 to vector<8x256xf32>
    %362 = arith.mulf %361, %358 : vector<8x256xf32>
    %363 = arith.mulf %362, %358 : vector<8x256xf32>
    %364 = arith.mulf %363, %358 : vector<8x256xf32>
    %365 = arith.addf %358, %364 : vector<8x256xf32>
    %cst_190 = arith.constant 0.797884583 : f32
    %366 = vector.broadcast %cst_190 : f32 to vector<8x256xf32>
    %367 = arith.mulf %366, %365 : vector<8x256xf32>
    %368 = math.tanh %367 : vector<8x256xf32>
    %cst_191 = arith.constant 1.000000e+00 : f32
    %369 = vector.broadcast %cst_191 : f32 to vector<8x256xf32>
    %370 = arith.addf %369, %368 : vector<8x256xf32>
    %371 = arith.mulf %360, %370 : vector<8x256xf32>
    %c1_192 = arith.constant 1 : index
    %c0_193 = arith.constant 0 : index
    %c0_194 = arith.constant 0 : index
    %372 = vector.load %arg23[%c1_192, %c0_193, %c0_194] : memref<2x256x128xf32, #tpu.memory_space<vmem>>, vector<1x256x128xf32>
    %373 = vector.shape_cast %372 : vector<1x256x128xf32> to vector<256x128xf32>
    %cst_195 = arith.constant dense<0.000000e+00> : vector<8x128xf32>
    %374 = tpu.matmul %371, %373, %cst_195 {dimension_numbers = #tpu.dot_dimension_numbers<[1], [0], [0], [1], [0, 0, 1, 1], [], []>} : vector<8x256xf32>, vector<256x128xf32>, vector<8x128xf32> -> vector<8x128xf32>
    %375 = arith.addf %325, %374 : vector<8x128xf32>
    %c1_196 = arith.constant 1 : index
    %c0_197 = arith.constant 0 : index
    %c0_198 = arith.constant 0 : index
    %376 = vector.load %arg24[%c1_196, %c0_197, %c0_198] : memref<2x1x128xf32, #tpu.memory_space<vmem>>, vector<1x1x128xf32>
    %377 = vector.shape_cast %376 : vector<1x1x128xf32> to vector<1x128xf32>
    %378 = vector.broadcast %377 : vector<1x128xf32> to vector<8x128xf32>
    %379 = arith.addf %375, %378 : vector<8x128xf32>
    %c0_199 = arith.constant 0 : index
    %c0_200 = arith.constant 0 : index
    %380 = vector.load %arg25[%c0_199, %c0_200] : memref<128x128xf32, #tpu.memory_space<vmem>>, vector<128x128xf32>
    %cst_201 = arith.constant dense<0.000000e+00> : vector<8x128xf32>
    %381 = tpu.matmul %379, %380, %cst_201 {dimension_numbers = #tpu.dot_dimension_numbers<[1], [0], [0], [1], [0, 0, 1, 1], [], []>} : vector<8x128xf32>, vector<128x128xf32>, vector<8x128xf32> -> vector<8x128xf32>
    %c0_202 = arith.constant 0 : index
    %c0_203 = arith.constant 0 : index
    %382 = vector.load %arg26[%c0_202, %c0_203] : memref<1x128xf32, #tpu.memory_space<vmem>>, vector<1x128xf32>
    %383 = vector.broadcast %382 : vector<1x128xf32> to vector<8x128xf32>
    %384 = arith.addf %381, %383 : vector<8x128xf32>
    %c0_204 = arith.constant 0 : index
    %c0_205 = arith.constant 0 : index
    %c0_206 = arith.constant 0 : index
    %385 = vector.load %arg27[%c0_204, %c0_205, %c0_206] : memref<1x8x128xf32, #tpu.memory_space<vmem>>, vector<1x8x128xf32>
    %386 = vector.shape_cast %385 : vector<1x8x128xf32> to vector<8x128xf32>
    %387 = vector.shape_cast %384 : vector<8x128xf32> to vector<1x8x128xf32>
    tpu.vector_store %arg27[%c0_204, %c0_205, %c0_206], %387 {strides = array<i32>} : memref<1x8x128xf32, #tpu.memory_space<vmem>>, vector<1x8x128xf32>,
    return
  }
  func.func @transform_0(%arg0: i32) -> (i32, i32, i32) {
    %c0_i32 = arith.constant 0 : i32
    %c0_i32_0 = arith.constant 0 : i32
    %c0_i32_1 = arith.constant 0 : i32
    return %arg0, %c0_i32, %c0_i32_0 : i32, i32, i32
  }
  func.func @transform_1(%arg0: i32) -> (i32, i32) {
    %c0_i32 = arith.constant 0 : i32
    %c0_i32_0 = arith.constant 0 : i32
    %c0_i32_1 = arith.constant 0 : i32
    return %c0_i32, %c0_i32_0 : i32, i32
  }
  func.func @transform_2(%arg0: i32) -> (i32, i32) {
    %c0_i32 = arith.constant 0 : i32
    %c0_i32_0 = arith.constant 0 : i32
    %c0_i32_1 = arith.constant 0 : i32
    return %c0_i32, %c0_i32_0 : i32, i32
  }
  func.func @transform_3(%arg0: i32) -> (i32, i32) {
    %c0_i32 = arith.constant 0 : i32
    %c0_i32_0 = arith.constant 0 : i32
    %c0_i32_1 = arith.constant 0 : i32
    return %c0_i32, %c0_i32_0 : i32, i32
  }
  func.func @transform_4(%arg0: i32) -> (i32, i32, i32) {
    %c0_i32 = arith.constant 0 : i32
    %c0_i32_0 = arith.constant 0 : i32
    %c0_i32_1 = arith.constant 0 : i32
    %c0_i32_2 = arith.constant 0 : i32
    return %c0_i32, %c0_i32_0, %c0_i32_1 : i32, i32, i32
  }
  func.func @transform_5(%arg0: i32) -> (i32, i32, i32) {
    %c0_i32 = arith.constant 0 : i32
    %c0_i32_0 = arith.constant 0 : i32
    %c0_i32_1 = arith.constant 0 : i32
    %c0_i32_2 = arith.constant 0 : i32
    return %c0_i32, %c0_i32_0, %c0_i32_1 : i32, i32, i32
  }
  func.func @transform_6(%arg0: i32) -> (i32, i32, i32) {
    %c0_i32 = arith.constant 0 : i32
    %c0_i32_0 = arith.constant 0 : i32
    %c0_i32_1 = arith.constant 0 : i32
    %c0_i32_2 = arith.constant 0 : i32
    return %c0_i32, %c0_i32_0, %c0_i32_1 : i32, i32, i32
  }
  func.func @transform_7(%arg0: i32) -> (i32, i32, i32) {
    %c0_i32 = arith.constant 0 : i32
    %c0_i32_0 = arith.constant 0 : i32
    %c0_i32_1 = arith.constant 0 : i32
    %c0_i32_2 = arith.constant 0 : i32
    return %c0_i32, %c0_i32_0, %c0_i32_1 : i32, i32, i32
  }
  func.func @transform_8(%arg0: i32) -> (i32, i32, i32) {
    %c0_i32 = arith.constant 0 : i32
    %c0_i32_0 = arith.constant 0 : i32
    %c0_i32_1 = arith.constant 0 : i32
    %c0_i32_2 = arith.constant 0 : i32
    return %c0_i32, %c0_i32_0, %c0_i32_1 : i32, i32, i32
  }
  func.func @transform_9(%arg0: i32) -> (i32, i32, i32) {
    %c0_i32 = arith.constant 0 : i32
    %c0_i32_0 = arith.constant 0 : i32
    %c0_i32_1 = arith.constant 0 : i32
    %c0_i32_2 = arith.constant 0 : i32
    return %c0_i32, %c0_i32_0, %c0_i32_1 : i32, i32, i32
  }
  func.func @transform_10(%arg0: i32) -> (i32, i32, i32) {
    %c0_i32 = arith.constant 0 : i32
    %c0_i32_0 = arith.constant 0 : i32
    %c0_i32_1 = arith.constant 0 : i32
    %c0_i32_2 = arith.constant 0 : i32
    return %c0_i32, %c0_i32_0, %c0_i32_1 : i32, i32, i32
  }
  func.func @transform_11(%arg0: i32) -> (i32, i32, i32) {
    %c0_i32 = arith.constant 0 : i32
    %c0_i32_0 = arith.constant 0 : i32
    %c0_i32_1 = arith.constant 0 : i32
    %c0_i32_2 = arith.constant 0 : i32
    return %c0_i32, %c0_i32_0, %c0_i32_1 : i32, i32, i32
  }
  func.func @transform_12(%arg0: i32) -> (i32, i32, i32) {
    %c0_i32 = arith.constant 0 : i32
    %c0_i32_0 = arith.constant 0 : i32
    %c0_i32_1 = arith.constant 0 : i32
    %c0_i32_2 = arith.constant 0 : i32
    return %c0_i32, %c0_i32_0, %c0_i32_1 : i32, i32, i32
  }
  func.func @transform_13(%arg0: i32) -> (i32, i32, i32) {
    %c0_i32 = arith.constant 0 : i32
    %c0_i32_0 = arith.constant 0 : i32
    %c0_i32_1 = arith.constant 0 : i32
    %c0_i32_2 = arith.constant 0 : i32
    return %c0_i32, %c0_i32_0, %c0_i32_1 : i32, i32, i32
  }
  func.func @transform_14(%arg0: i32) -> (i32, i32, i32) {
    %c0_i32 = arith.constant 0 : i32
    %c0_i32_0 = arith.constant 0 : i32
    %c0_i32_1 = arith.constant 0 : i32
    %c0_i32_2 = arith.constant 0 : i32
    return %c0_i32, %c0_i32_0, %c0_i32_1 : i32, i32, i32
  }
  func.func @transform_15(%arg0: i32) -> (i32, i32, i32) {
    %c0_i32 = arith.constant 0 : i32
    %c0_i32_0 = arith.constant 0 : i32
    %c0_i32_1 = arith.constant 0 : i32
    %c0_i32_2 = arith.constant 0 : i32
    return %c0_i32, %c0_i32_0, %c0_i32_1 : i32, i32, i32
  }
  func.func @transform_16(%arg0: i32) -> (i32, i32, i32) {
    %c0_i32 = arith.constant 0 : i32
    %c0_i32_0 = arith.constant 0 : i32
    %c0_i32_1 = arith.constant 0 : i32
    %c0_i32_2 = arith.constant 0 : i32
    return %c0_i32, %c0_i32_0, %c0_i32_1 : i32, i32, i32
  }
  func.func @transform_17(%arg0: i32) -> (i32, i32, i32) {
    %c0_i32 = arith.constant 0 : i32
    %c0_i32_0 = arith.constant 0 : i32
    %c0_i32_1 = arith.constant 0 : i32
    %c0_i32_2 = arith.constant 0 : i32
    return %c0_i32, %c0_i32_0, %c0_i32_1 : i32, i32, i32
  }
  func.func @transform_18(%arg0: i32) -> (i32, i32, i32) {
    %c0_i32 = arith.constant 0 : i32
    %c0_i32_0 = arith.constant 0 : i32
    %c0_i32_1 = arith.constant 0 : i32
    %c0_i32_2 = arith.constant 0 : i32
    return %c0_i32, %c0_i32_0, %c0_i32_1 : i32, i32, i32
  }
  func.func @transform_19(%arg0: i32) -> (i32, i32, i32) {
    %c0_i32 = arith.constant 0 : i32
    %c0_i32_0 = arith.constant 0 : i32
    %c0_i32_1 = arith.constant 0 : i32
    %c0_i32_2 = arith.constant 0 : i32
    return %c0_i32, %c0_i32_0, %c0_i32_1 : i32, i32, i32
  }
  func.func @transform_20(%arg0: i32) -> (i32, i32, i32) {
    %c0_i32 = arith.constant 0 : i32
    %c0_i32_0 = arith.constant 0 : i32
    %c0_i32_1 = arith.constant 0 : i32
    %c0_i32_2 = arith.constant 0 : i32
    return %c0_i32, %c0_i32_0, %c0_i32_1 : i32, i32, i32
  }
  func.func @transform_21(%arg0: i32) -> (i32, i32, i32) {
    %c0_i32 = arith.constant 0 : i32
    %c0_i32_0 = arith.constant 0 : i32
    %c0_i32_1 = arith.constant 0 : i32
    %c0_i32_2 = arith.constant 0 : i32
    return %c0_i32, %c0_i32_0, %c0_i32_1 : i32, i32, i32
  }
  func.func @transform_22(%arg0: i32) -> (i32, i32, i32) {
    %c0_i32 = arith.constant 0 : i32
    %c0_i32_0 = arith.constant 0 : i32
    %c0_i32_1 = arith.constant 0 : i32
    %c0_i32_2 = arith.constant 0 : i32
    return %c0_i32, %c0_i32_0, %c0_i32_1 : i32, i32, i32
  }
  func.func @transform_23(%arg0: i32) -> (i32, i32, i32) {
    %c0_i32 = arith.constant 0 : i32
    %c0_i32_0 = arith.constant 0 : i32
    %c0_i32_1 = arith.constant 0 : i32
    %c0_i32_2 = arith.constant 0 : i32
    return %c0_i32, %c0_i32_0, %c0_i32_1 : i32, i32, i32
  }
  func.func @transform_24(%arg0: i32) -> (i32, i32) {
    %c0_i32 = arith.constant 0 : i32
    %c0_i32_0 = arith.constant 0 : i32
    %c0_i32_1 = arith.constant 0 : i32
    return %c0_i32, %c0_i32_0 : i32, i32
  }
  func.func @transform_25(%arg0: i32) -> (i32, i32) {
    %c0_i32 = arith.constant 0 : i32
    %c0_i32_0 = arith.constant 0 : i32
    %c0_i32_1 = arith.constant 0 : i32
    return %c0_i32, %c0_i32_0 : i32, i32
  }
  func.func @transform_26(%arg0: i32) -> (i32, i32, i32) {
    %c0_i32 = arith.constant 0 : i32
    %c0_i32_0 = arith.constant 0 : i32
    %c0_i32_1 = arith.constant 0 : i32
    return %arg0, %c0_i32, %c0_i32_0 : i32, i32, i32
  }
}

</mosaic_0001>

<llo_original>
// kernel: tpu_custom_call.1
$region0: #{tpu_custom_call.1}
  #allocation0 [shape = 'u32[]', space=smem, size = 0x4, offset = 0x4, fixed_abs, tag = 'smem constant byte address 0x4 - core index']
  #allocation1 [shape = 'u32[72,128]{1,0:T(1,128)}', space=vmem, size = 0x9000, scoped, tag = 'internal scratch']
  %s0 = inlined_call_operand.hbm [shape: f32[2,16,128], index: 0, kind: input, shape index: {}]
  %s1 = inlined_call_operand.hbm [shape: f32[8,128], index: 1, kind: input, shape index: {}]
  %s2 = inlined_call_operand.hbm [shape: f32[128,128], index: 2, kind: input, shape index: {}]
  %s3 = inlined_call_operand.hbm [shape: f32[1,128], index: 3, kind: input, shape index: {}]
  %s4 = inlined_call_operand.hbm [shape: f32[2,1,128], index: 4, kind: input, shape index: {}]
  %s5 = inlined_call_operand.hbm [shape: f32[2,1,128], index: 5, kind: input, shape index: {}]
  %s6 = inlined_call_operand.hbm [shape: f32[2,128,384], index: 6, kind: input, shape index: {}]
  %s7 = inlined_call_operand.vmem [shape: f32[2,1,384], index: 7, kind: input, shape index: {}]
  %s8 = inlined_call_operand.hbm [shape: f32[2,128,128], index: 8, kind: input, shape index: {}]
  %s9 = inlined_call_operand.hbm [shape: f32[2,1,128], index: 9, kind: input, shape index: {}]
  %s10 = inlined_call_operand.hbm [shape: f32[2,1,128], index: 10, kind: input, shape index: {}]
  %s11 = inlined_call_operand.hbm [shape: f32[2,1,128], index: 11, kind: input, shape index: {}]
  %s12 = inlined_call_operand.hbm [shape: f32[2,128,128], index: 12, kind: input, shape index: {}]
  %s13 = inlined_call_operand.hbm [shape: f32[2,1,128], index: 13, kind: input, shape index: {}]
  %s14 = inlined_call_operand.hbm [shape: f32[2,128,256], index: 14, kind: input, shape index: {}]
  %s15 = inlined_call_operand.vmem [shape: f32[2,1,256], index: 15, kind: input, shape index: {}]
  %s16 = inlined_call_operand.hbm [shape: f32[2,128,128], index: 16, kind: input, shape index: {}]
  %s17 = inlined_call_operand.vmem [shape: f32[2,1,128], index: 17, kind: input, shape index: {}]
  %s18 = inlined_call_operand.hbm [shape: f32[2,1,128], index: 18, kind: input, shape index: {}]
  %s19 = inlined_call_operand.vmem [shape: f32[2,1,128], index: 19, kind: input, shape index: {}]
  %s20 = inlined_call_operand.hbm [shape: f32[2,128,256], index: 20, kind: input, shape index: {}]
  %s21 = inlined_call_operand.vmem [shape: f32[2,1,256], index: 21, kind: input, shape index: {}]
  %s22 = inlined_call_operand.hbm [shape: f32[2,256,128], index: 22, kind: input, shape index: {}]
  %s23 = inlined_call_operand.vmem [shape: f32[2,1,128], index: 23, kind: input, shape index: {}]
  %s24 = inlined_call_operand.hbm [shape: f32[128,128], index: 24, kind: input, shape index: {}]
  %s25 = inlined_call_operand.vmem [shape: f32[1,128], index: 25, kind: input, shape index: {}]
  %s26 = inlined_call_operand.hbm [shape: f32[2,8,128], index: 26, kind: output, shape index: {}]
  %s27 = sld [smem:[#allocation0]]
  $region213: #{tpu_custom_call.1} parent=0
    _
  %s29 = ssub.s32 1, %s27
  %s30 = scalar_select 0, %s29, %s27
  $region1: #{tpu_custom_call.1} parent=0
    #allocation2 [shape = 'u8[16384]{0}', space=vmem, size = 0x4000, scoped, tag = 'input window, operand 0']
    #allocation3 [shape = 's32[2]{0}', space=sflag, size = 0x8, scoped, tag = 'scoped memory for tpu_custom_call.1']
    #allocation4 [shape = 's32[2]{0}', space=sflag, size = 0x8, scoped, tag = 'scoped memory for tpu_custom_call.1']
    #allocation5 [shape = 'u8[4096]{0}', space=vmem, size = 0x1000, scoped, tag = 'input window, operand 1, single buffered']
    #allocation6 [shape = 's32[1]{0}', space=sflag, size = 0x4, scoped, tag = 'scoped memory for tpu_custom_call.1']
    #allocation7 [shape = 'u8[65536]{0}', space=vmem, size = 0x10000, scoped, tag = 'input window, operand 2, single buffered']
    #allocation8 [shape = 'u8[512]{0}', space=vmem, size = 0x400, scoped, tag = 'input window, operand 3, single buffered']
    #allocation9 [shape = 's32[1]{0}', space=sflag, size = 0x4, scoped, tag = 'scoped memory for tpu_custom_call.1']
    #allocation10 [shape = 'u8[1024]{0}', space=vmem, size = 0x400, scoped, tag = 'input window, operand 4, single buffered']
    #allocation11 [shape = 'u8[1024]{0}', space=vmem, size = 0x400, scoped, tag = 'input window, operand 5, single buffered']
    #allocation12 [shape = 's32[1]{0}', space=sflag, size = 0x4, scoped, tag = 'scoped memory for tpu_custom_call.1']
    #allocation13 [shape = 'u8[393216]{0}', space=vmem, size = 0x60000, scoped, tag = 'input window, operand 6, single buffered']
    #allocation14 [shape = 'u8[131072]{0}', space=vmem, size = 0x20000, scoped, tag = 'input window, operand 8, single buffered']
    #allocation15 [shape = 's32[1]{0}', space=sflag, size = 0x4, scoped, tag = 'scoped memory for tpu_custom_call.1']
    #allocation16 [shape = 'u8[1024]{0}', space=vmem, size = 0x400, scoped, tag = 'input window, operand 9, single buffered']
    #allocation17 [shape = 'u8[1024]{0}', space=vmem, size = 0x400, scoped, tag = 'input window, operand 10, single buffered']
    #allocation18 [shape = 's32[1]{0}', space=sflag, size = 0x4, scoped, tag = 'scoped memory for tpu_custom_call.1']
    #allocation19 [shape = 'u8[1024]{0}', space=vmem, size = 0x400, scoped, tag = 'input window, operand 11, single buffered']
    #allocation20 [shape = 'u8[131072]{0}', space=vmem, size = 0x20000, scoped, tag = 'input window, operand 12, single buffered']
    #allocation21 [shape = 's32[1]{0}', space=sflag, size = 0x4, scoped, tag = 'scoped memory for tpu_custom_call.1']
    #allocation22 [shape = 'u8[1024]{0}', space=vmem, size = 0x400, scoped, tag = 'input window, operand 13, single buffered']
    #allocation23 [shape = 'u8[262144]{0}', space=vmem, size = 0x40000, scoped, tag = 'input window, operand 14, single buffered']
    #allocation24 [shape = 's32[1]{0}', space=sflag, size = 0x4, scoped, tag = 'scoped memory for tpu_custom_call.1']
    #allocation25 [shape = 'u8[131072]{0}', space=vmem, size = 0x20000, scoped, tag = 'input window, operand 16, single buffered']
    #allocation26 [shape = 'u8[1024]{0}', space=vmem, size = 0x400, scoped, tag = 'input window, operand 18, single buffered']
    #allocation27 [shape = 's32[1]{0}', space=sflag, size = 0x4, scoped, tag = 'scoped memory for tpu_custom_call.1']
    #allocation28 [shape = 'u8[262144]{0}', space=vmem, size = 0x40000, scoped, tag = 'input window, operand 20, single buffered']
    #allocation29 [shape = 'u8[262144]{0}', space=vmem, size = 0x40000, scoped, tag = 'input window, operand 22, single buffered']
    #allocation30 [shape = 's32[1]{0}', space=sflag, size = 0x4, scoped, tag = 'scoped memory for tpu_custom_call.1']
    #allocation31 [shape = 'u8[65536]{0}', space=vmem, size = 0x10000, scoped, tag = 'input window, operand 24, single buffered']
    #allocation32 [shape = 'u8[8192]{0}', space=vmem, size = 0x2000, scoped, tag = 'output window, operand 0']
    %31 = vsyncpa [#allocation3], 0
    %s32 = scalar_lea.sflag [#allocation3], 1
    %33 = vsyncpa %s32, 0
    %34 = vsyncpa [#allocation6], 0
    %35 = vsyncpa [#allocation9], 0
    %36 = vsyncpa [#allocation12], 0
    %37 = vsyncpa [#allocation15], 0
    %38 = vsyncpa [#allocation18], 0
    %39 = vsyncpa [#allocation21], 0
    %40 = vsyncpa [#allocation24], 0
    %41 = vsyncpa [#allocation27], 0
    %42 = vsyncpa [#allocation30], 0
    %43 = vsyncpa [#allocation4], 0
    %s44 = scalar_lea.sflag [#allocation4], 1
    %45 = vsyncpa %s44, 0
    loop: start=0, step=1, limit=4
    $region2: #{tpu_custom_call.1} parent=1 // loop_pre_header
      _
    $region3: #{tpu_custom_call.1} parent=1 // loop_header
      %s47 = sphi 0, %s51
      %p48 = scmp.ge.s32.totalorder %s47, 4
      %s57 = sphi 0, %s59
      %s60 = sphi 0, %s57
      %s61 = sphi 0, %s60
      %s77 = sphi 0, %s61
      %s81 = sphi 0, %s81
      %s83 = sphi 0, %s81
      %s84 = sphi 0, %s83
      %s98 = sphi 0, %s84
      %s102 = sphi 0, %s102
      %s104 = sphi 0, %s102
      %s105 = sphi 0, %s104
      %s119 = sphi 0, %s105
      %s123 = sphi 0, %s123
      %s125 = sphi 0, %s123
      %s126 = sphi 0, %s125
      %s140 = sphi 0, %s126
      %s144 = sphi 0, %s144
      %s146 = sphi 0, %s144
      %s147 = sphi 0, %s146
      %s161 = sphi 0, %s147
      %s165 = sphi 0, %s165
      %s167 = sphi 0, %s165
      %s168 = sphi 0, %s167
      %s182 = sphi 0, %s168
      %s186 = sphi 0, %s186
      %s188 = sphi 0, %s186
      %s189 = sphi 0, %s188
      %s203 = sphi 0, %s189
      %s207 = sphi 0, %s207
      %s209 = sphi 0, %s207
      %s210 = sphi 0, %s209
      %s224 = sphi 0, %s210
      %s228 = sphi 0, %s228
      %s230 = sphi 0, %s228
      %s231 = sphi 0, %s230
      %s245 = sphi 0, %s231
      %s249 = sphi 0, %s249
      %s251 = sphi 0, %s249
      %s252 = sphi 0, %s251
      %s266 = sphi 0, %s252
      %s270 = sphi 0, %s270
      %s272 = sphi 0, %s270
      %s273 = sphi 0, %s272
      %s287 = sphi 0, %s273
      %s291 = sphi 0, %s291
      %s293 = sphi 0, %s291
      %s294 = sphi 0, %s293
      %s308 = sphi 0, %s294
      %s312 = sphi 0, %s312
      %s314 = sphi 0, %s312
      %s315 = sphi 0, %s314
      %s329 = sphi 0, %s315
      %s333 = sphi 0, %s333
      %s335 = sphi 0, %s333
      %s336 = sphi 0, %s335
      %s350 = sphi 0, %s336
      %s354 = sphi 0, %s354
      %s356 = sphi 0, %s354
      %s357 = sphi 0, %s356
      %s371 = sphi 0, %s357
      %s375 = sphi 0, %s375
      %s377 = sphi 0, %s375
      %s378 = sphi 0, %s377
      %s392 = sphi 0, %s378
      %s396 = sphi 0, %s396
      %s398 = sphi 0, %s396
      %s399 = sphi 0, %s398
      %s413 = sphi 0, %s399
      %s417 = sphi 0, %s417
      %s419 = sphi 0, %s417
      %s420 = sphi 0, %s419
      %s434 = sphi 0, %s420
      %s438 = sphi 0, %s438
      %s440 = sphi 0, %s438
      %s441 = sphi 0, %s440
      %s455 = sphi 0, %s441
      %s459 = sphi 0, %s459
      %s461 = sphi 0, %s459
      %s462 = sphi 0, %s461
      %s476 = sphi 0, %s462
      %s480 = sphi 0, %s480
      %s482 = sphi 0, %s480
      %s483 = sphi 0, %s482
      %s497 = sphi 0, %s483
      %s501 = sphi 0, %s501
      %s503 = sphi 0, %s501
      %s504 = sphi 0, %s503
      %s518 = sphi 0, %s504
      %s522 = sphi 0, %s522
      %s524 = sphi 0, %s522
      %s525 = sphi 0, %s524
      %s539 = sphi 0, %s525
      %s543 = sphi 0, %s543
      %s545 = sphi 0, %s543
      %s546 = sphi 0, %s545
      %s560 = sphi 0, %s546
      %s564 = sphi 0, %s564
      %s566 = sphi 0, %s564
      %s567 = sphi 0, %s566
      %s581 = sphi 0, %s567
      %s585 = sphi 0, %s585
      %s587 = sphi 0, %s585
      %s588 = sphi 0, %s587
      %s602 = sphi 0, %s588
      %s608 = sphi 0, %s610
      %s611 = sphi 0, %s608
      %s612 = sphi 0, %s611
      %s628 = sphi 0, %s612
    $region4: #{tpu_custom_call.1} parent=1 // loop_header_branch
      %50 = sbr.rel (%p48) target = $region8
    $region5: #{tpu_custom_call.1} parent=1 // loop_body
      %s52 = ssub.s32 %s47, 1
      %s53 = ssub.s32 %s47, 2
      %s54 = sadd.s32 %s47, 1
      %s55 = ssub.s32 %s47, %s54
      %p56 = scmp.eq.s32.totalorder %s55, 0
      %s58 = sadd.s32 %s57, 1
      %s59 = scalar_select %p56, %s57, %s58
      %p62 = pneg %p56
      %p63 = scmp.eq.s32.totalorder %s47, 1
      %p64 = por %p62, %p63
      %p65 = scmp.ne.s32.totalorder %s57, %s60
      %p66 = scmp.eq.s32.totalorder %s47, 0
      %p67 = por %p65, %p66
      %p68 = scmp.ne.s32.totalorder %s57, %s60
      %p69 = scmp.eq.s32.totalorder %s52, 1
      %p70 = por %p68, %p69
      %p71 = scmp.ne.s32.totalorder %s60, %s61
      %p72 = scmp.eq.s32.totalorder %s52, 0
      %p73 = por %p71, %p72
      %p74 = scmp.ne.s32.totalorder %s60, %s61
      %p75 = scmp.eq.s32.totalorder %s53, 1
      %p76 = por %p74, %p75
      %p78 = scmp.ne.s32.totalorder %s61, %s77
      %p79 = scmp.eq.s32.totalorder %s53, 0
      %p80 = por %p78, %p79
      %s82 = sadd.s32 %s81, 1
      %p85 = scmp.eq.s32.totalorder %s47, 1
      %p86 = scmp.ne.s32.totalorder %s81, %s83
      %p87 = scmp.eq.s32.totalorder %s47, 0
      %p88 = por %p86, %p87
      %p89 = scmp.ne.s32.totalorder %s81, %s83
      %p90 = scmp.eq.s32.totalorder %s52, 1
      %p91 = por %p89, %p90
      %p92 = scmp.ne.s32.totalorder %s83, %s84
      %p93 = scmp.eq.s32.totalorder %s52, 0
      %p94 = por %p92, %p93
      %p95 = scmp.ne.s32.totalorder %s83, %s84
      %p96 = scmp.eq.s32.totalorder %s53, 1
      %p97 = por %p95, %p96
      %p99 = scmp.ne.s32.totalorder %s84, %s98
      %p100 = scmp.eq.s32.totalorder %s53, 0
      %p101 = por %p99, %p100
      %s103 = sadd.s32 %s102, 1
      %p106 = scmp.eq.s32.totalorder %s47, 1
      %p107 = scmp.ne.s32.totalorder %s102, %s104
      %p108 = scmp.eq.s32.totalorder %s47, 0
      %p109 = por %p107, %p108
      %p110 = scmp.ne.s32.totalorder %s102, %s104
      %p111 = scmp.eq.s32.totalorder %s52, 1
      %p112 = por %p110, %p111
      %p113 = scmp.ne.s32.totalorder %s104, %s105
      %p114 = scmp.eq.s32.totalorder %s52, 0
      %p115 = por %p113, %p114
      %p116 = scmp.ne.s32.totalorder %s104, %s105
      %p117 = scmp.eq.s32.totalorder %s53, 1
      %p118 = por %p116, %p117
      %p120 = scmp.ne.s32.totalorder %s105, %s119
      %p121 = scmp.eq.s32.totalorder %s53, 0
      %p122 = por %p120, %p121
      %s124 = sadd.s32 %s123, 1
      %p127 = scmp.eq.s32.totalorder %s47, 1
      %p128 = scmp.ne.s32.totalorder %s123, %s125
      %p129 = scmp.eq.s32.totalorder %s47, 0
      %p130 = por %p128, %p129
      %p131 = scmp.ne.s32.totalorder %s123, %s125
      %p132 = scmp.eq.s32.totalorder %s52, 1
      %p133 = por %p131, %p132
      %p134 = scmp.ne.s32.totalorder %s125, %s126
      %p135 = scmp.eq.s32.totalorder %s52, 0
      %p136 = por %p134, %p135
      %p137 = scmp.ne.s32.totalorder %s125, %s126
      %p138 = scmp.eq.s32.totalorder %s53, 1
      %p139 = por %p137, %p138
      %p141 = scmp.ne.s32.totalorder %s126, %s140
      %p142 = scmp.eq.s32.totalorder %s53, 0
      %p143 = por %p141, %p142
      %s145 = sadd.s32 %s144, 1
      %p148 = scmp.eq.s32.totalorder %s47, 1
      %p149 = scmp.ne.s32.totalorder %s144, %s146
      %p150 = scmp.eq.s32.totalorder %s47, 0
      %p151 = por %p149, %p150
      %p152 = scmp.ne.s32.totalorder %s144, %s146
      %p153 = scmp.eq.s32.totalorder %s52, 1
      %p154 = por %p152, %p153
      %p155 = scmp.ne.s32.totalorder %s146, %s147
      %p156 = scmp.eq.s32.totalorder %s52, 0
      %p157 = por %p155, %p156
      %p158 = scmp.ne.s32.totalorder %s146, %s147
      %p159 = scmp.eq.s32.totalorder %s53, 1
      %p160 = por %p158, %p159
      %p162 = scmp.ne.s32.totalorder %s147, %s161
      %p163 = scmp.eq.s32.totalorder %s53, 0
      %p164 = por %p162, %p163
      %s166 = sadd.s32 %s165, 1
      %p169 = scmp.eq.s32.totalorder %s47, 1
      %p170 = scmp.ne.s32.totalorder %s165, %s167
      %p171 = scmp.eq.s32.totalorder %s47, 0
      %p172 = por %p170, %p171
      %p173 = scmp.ne.s32.totalorder %s165, %s167
      %p174 = scmp.eq.s32.totalorder %s52, 1
      %p175 = por %p173, %p174
      %p176 = scmp.ne.s32.totalorder %s167, %s168
      %p177 = scmp.eq.s32.totalorder %s52, 0
      %p178 = por %p176, %p177
      %p179 = scmp.ne.s32.totalorder %s167, %s168
      %p180 = scmp.eq.s32.totalorder %s53, 1
      %p181 = por %p179, %p180
      %p183 = scmp.ne.s32.totalorder %s168, %s182
      %p184 = scmp.eq.s32.totalorder %s53, 0
      %p185 = por %p183, %p184
      %s187 = sadd.s32 %s186, 1
      %p190 = scmp.eq.s32.totalorder %s47, 1
      %p191 = scmp.ne.s32.totalorder %s186, %s188
      %p192 = scmp.eq.s32.totalorder %s47, 0
      %p193 = por %p191, %p192
      %p194 = scmp.ne.s32.totalorder %s186, %s188
      %p195 = scmp.eq.s32.totalorder %s52, 1
      %p196 = por %p194, %p195
      %p197 = scmp.ne.s32.totalorder %s188, %s189
      %p198 = scmp.eq.s32.totalorder %s52, 0
      %p199 = por %p197, %p198
      %p200 = scmp.ne.s32.totalorder %s188, %s189
      %p201 = scmp.eq.s32.totalorder %s53, 1
      %p202 = por %p200, %p201
      %p204 = scmp.ne.s32.totalorder %s189, %s203
      %p205 = scmp.eq.s32.totalorder %s53, 0
      %p206 = por %p204, %p205
      %s208 = sadd.s32 %s207, 1
      %p211 = scmp.eq.s32.totalorder %s47, 1
      %p212 = scmp.ne.s32.totalorder %s207, %s209
      %p213 = scmp.eq.s32.totalorder %s47, 0
      %p214 = por %p212, %p213
      %p215 = scmp.ne.s32.totalorder %s207, %s209
      %p216 = scmp.eq.s32.totalorder %s52, 1
      %p217 = por %p215, %p216
      %p218 = scmp.ne.s32.totalorder %s209, %s210
      %p219 = scmp.eq.s32.totalorder %s52, 0
      %p220 = por %p218, %p219
      %p221 = scmp.ne.s32.totalorder %s209, %s210
      %p222 = scmp.eq.s32.totalorder %s53, 1
      %p223 = por %p221, %p222
      %p225 = scmp.ne.s32.totalorder %s210, %s224
      %p226 = scmp.eq.s32.totalorder %s53, 0
      %p227 = por %p225, %p226
      %s229 = sadd.s32 %s228, 1
      %p232 = scmp.eq.s32.totalorder %s47, 1
      %p233 = scmp.ne.s32.totalorder %s228, %s230
      %p234 = scmp.eq.s32.totalorder %s47, 0
      %p235 = por %p233, %p234
      %p236 = scmp.ne.s32.totalorder %s228, %s230
      %p237 = scmp.eq.s32.totalorder %s52, 1
      %p238 = por %p236, %p237
      %p239 = scmp.ne.s32.totalorder %s230, %s231
      %p240 = scmp.eq.s32.totalorder %s52, 0
      %p241 = por %p239, %p240
      %p242 = scmp.ne.s32.totalorder %s230, %s231
      %p243 = scmp.eq.s32.totalorder %s53, 1
      %p244 = por %p242, %p243
      %p246 = scmp.ne.s32.totalorder %s231, %s245
      %p247 = scmp.eq.s32.totalorder %s53, 0
      %p248 = por %p246, %p247
      %s250 = sadd.s32 %s249, 1
      %p253 = scmp.eq.s32.totalorder %s47, 1
      %p254 = scmp.ne.s32.totalorder %s249, %s251
      %p255 = scmp.eq.s32.totalorder %s47, 0
      %p256 = por %p254, %p255
      %p257 = scmp.ne.s32.totalorder %s249, %s251
      %p258 = scmp.eq.s32.totalorder %s52, 1
      %p259 = por %p257, %p258
      %p260 = scmp.ne.s32.totalorder %s251, %s252
      %p261 = scmp.eq.s32.totalorder %s52, 0
      %p262 = por %p260, %p261
      %p263 = scmp.ne.s32.totalorder %s251, %s252
      %p264 = scmp.eq.s32.totalorder %s53, 1
      %p265 = por %p263, %p264
      %p267 = scmp.ne.s32.totalorder %s252, %s266
      %p268 = scmp.eq.s32.totalorder %s53, 0
      %p269 = por %p267, %p268
      %s271 = sadd.s32 %s270, 1
      %p274 = scmp.eq.s32.totalorder %s47, 1
      %p275 = scmp.ne.s32.totalorder %s270, %s272
      %p276 = scmp.eq.s32.totalorder %s47, 0
      %p277 = por %p275, %p276
      %p278 = scmp.ne.s32.totalorder %s270, %s272
      %p279 = scmp.eq.s32.totalorder %s52, 1
      %p280 = por %p278, %p279
      %p281 = scmp.ne.s32.totalorder %s272, %s273
      %p282 = scmp.eq.s32.totalorder %s52, 0
      %p283 = por %p281, %p282
      %p284 = scmp.ne.s32.totalorder %s272, %s273
      %p285 = scmp.eq.s32.totalorder %s53, 1
      %p286 = por %p284, %p285
      %p288 = scmp.ne.s32.totalorder %s273, %s287
      %p289 = scmp.eq.s32.totalorder %s53, 0
      %p290 = por %p288, %p289
      %s292 = sadd.s32 %s291, 1
      %p295 = scmp.eq.s32.totalorder %s47, 1
      %p296 = scmp.ne.s32.totalorder %s291, %s293
      %p297 = scmp.eq.s32.totalorder %s47, 0
      %p298 = por %p296, %p297
      %p299 = scmp.ne.s32.totalorder %s291, %s293
      %p300 = scmp.eq.s32.totalorder %s52, 1
      %p301 = por %p299, %p300
      %p302 = scmp.ne.s32.totalorder %s293, %s294
      %p303 = scmp.eq.s32.totalorder %s52, 0
      %p304 = por %p302, %p303
      %p305 = scmp.ne.s32.totalorder %s293, %s294
      %p306 = scmp.eq.s32.totalorder %s53, 1
      %p307 = por %p305, %p306
      %p309 = scmp.ne.s32.totalorder %s294, %s308
      %p310 = scmp.eq.s32.totalorder %s53, 0
      %p311 = por %p309, %p310
      %s313 = sadd.s32 %s312, 1
      %p316 = scmp.eq.s32.totalorder %s47, 1
      %p317 = scmp.ne.s32.totalorder %s312, %s314
      %p318 = scmp.eq.s32.totalorder %s47, 0
      %p319 = por %p317, %p318
      %p320 = scmp.ne.s32.totalorder %s312, %s314
      %p321 = scmp.eq.s32.totalorder %s52, 1
      %p322 = por %p320, %p321
      %p323 = scmp.ne.s32.totalorder %s314, %s315
      %p324 = scmp.eq.s32.totalorder %s52, 0
      %p325 = por %p323, %p324
      %p326 = scmp.ne.s32.totalorder %s314, %s315
      %p327 = scmp.eq.s32.totalorder %s53, 1
      %p328 = por %p326, %p327
      %p330 = scmp.ne.s32.totalorder %s315, %s329
      %p331 = scmp.eq.s32.totalorder %s53, 0
      %p332 = por %p330, %p331
      %s334 = sadd.s32 %s333, 1
      %p337 = scmp.eq.s32.totalorder %s47, 1
      %p338 = scmp.ne.s32.totalorder %s333, %s335
      %p339 = scmp.eq.s32.totalorder %s47, 0
      %p340 = por %p338, %p339
      %p341 = scmp.ne.s32.totalorder %s333, %s335
      %p342 = scmp.eq.s32.totalorder %s52, 1
      %p343 = por %p341, %p342
      %p344 = scmp.ne.s32.totalorder %s335, %s336
      %p345 = scmp.eq.s32.totalorder %s52, 0
      %p346 = por %p344, %p345
      %p347 = scmp.ne.s32.totalorder %s335, %s336
      %p348 = scmp.eq.s32.totalorder %s53, 1
      %p349 = por %p347, %p348
      %p351 = scmp.ne.s32.totalorder %s336, %s350
      %p352 = scmp.eq.s32.totalorder %s53, 0
      %p353 = por %p351, %p352
      %s355 = sadd.s32 %s354, 1
      %p358 = scmp.eq.s32.totalorder %s47, 1
      %p359 = scmp.ne.s32.totalorder %s354, %s356
      %p360 = scmp.eq.s32.totalorder %s47, 0
      %p361 = por %p359, %p360
      %p362 = scmp.ne.s32.totalorder %s354, %s356
      %p363 = scmp.eq.s32.totalorder %s52, 1
      %p364 = por %p362, %p363
      %p365 = scmp.ne.s32.totalorder %s356, %s357
      %p366 = scmp.eq.s32.totalorder %s52, 0
      %p367 = por %p365, %p366
      %p368 = scmp.ne.s32.totalorder %s356, %s357
      %p369 = scmp.eq.s32.totalorder %s53, 1
      %p370 = por %p368, %p369
      %p372 = scmp.ne.s32.totalorder %s357, %s371
      %p373 = scmp.eq.s32.totalorder %s53, 0
      %p374 = por %p372, %p373
      %s376 = sadd.s32 %s375, 1
      %p379 = scmp.eq.s32.totalorder %s47, 1
      %p380 = scmp.ne.s32.totalorder %s375, %s377
      %p381 = scmp.eq.s32.totalorder %s47, 0
      %p382 = por %p380, %p381
      %p383 = scmp.ne.s32.totalorder %s375, %s377
      %p384 = scmp.eq.s32.totalorder %s52, 1
      %p385 = por %p383, %p384
      %p386 = scmp.ne.s32.totalorder %s377, %s378
      %p387 = scmp.eq.s32.totalorder %s52, 0
      %p388 = por %p386, %p387
      %p389 = scmp.ne.s32.totalorder %s377, %s378
      %p390 = scmp.eq.s32.totalorder %s53, 1
      %p391 = por %p389, %p390
      %p393 = scmp.ne.s32.totalorder %s378, %s392
      %p394 = scmp.eq.s32.totalorder %s53, 0
      %p395 = por %p393, %p394
      %s397 = sadd.s32 %s396, 1
      %p400 = scmp.eq.s32.totalorder %s47, 1
      %p401 = scmp.ne.s32.totalorder %s396, %s398
      %p402 = scmp.eq.s32.totalorder %s47, 0
      %p403 = por %p401, %p402
      %p404 = scmp.ne.s32.totalorder %s396, %s398
      %p405 = scmp.eq.s32.totalorder %s52, 1
      %p406 = por %p404, %p405
      %p407 = scmp.ne.s32.totalorder %s398, %s399
      %p408 = scmp.eq.s32.totalorder %s52, 0
      %p409 = por %p407, %p408
      %p410 = scmp.ne.s32.totalorder %s398, %s399
      %p411 = scmp.eq.s32.totalorder %s53, 1
      %p412 = por %p410, %p411
      %p414 = scmp.ne.s32.totalorder %s399, %s413
      %p415 = scmp.eq.s32.totalorder %s53, 0
      %p416 = por %p414, %p415
      %s418 = sadd.s32 %s417, 1
      %p421 = scmp.eq.s32.totalorder %s47, 1
      %p422 = scmp.ne.s32.totalorder %s417, %s419
      %p423 = scmp.eq.s32.totalorder %s47, 0
      %p424 = por %p422, %p423
      %p425 = scmp.ne.s32.totalorder %s417, %s419
      %p426 = scmp.eq.s32.totalorder %s52, 1
      %p427 = por %p425, %p426
      %p428 = scmp.ne.s32.totalorder %s419, %s420
      %p429 = scmp.eq.s32.totalorder %s52, 0
      %p430 = por %p428, %p429
      %p431 = scmp.ne.s32.totalorder %s419, %s420
      %p432 = scmp.eq.s32.totalorder %s53, 1
      %p433 = por %p431, %p432
      %p435 = scmp.ne.s32.totalorder %s420, %s434
      %p436 = scmp.eq.s32.totalorder %s53, 0
      %p437 = por %p435, %p436
      %s439 = sadd.s32 %s438, 1
      %p442 = scmp.eq.s32.totalorder %s47, 1
      %p443 = scmp.ne.s32.totalorder %s438, %s440
      %p444 = scmp.eq.s32.totalorder %s47, 0
      %p445 = por %p443, %p444
      %p446 = scmp.ne.s32.totalorder %s438, %s440
      %p447 = scmp.eq.s32.totalorder %s52, 1
      %p448 = por %p446, %p447
      %p449 = scmp.ne.s32.totalorder %s440, %s441
      %p450 = scmp.eq.s32.totalorder %s52, 0
      %p451 = por %p449, %p450
      %p452 = scmp.ne.s32.totalorder %s440, %s441
      %p453 = scmp.eq.s32.totalorder %s53, 1
      %p454 = por %p452, %p453
      %p456 = scmp.ne.s32.totalorder %s441, %s455
      %p457 = scmp.eq.s32.totalorder %s53, 0
      %p458 = por %p456, %p457
      %s460 = sadd.s32 %s459, 1
      %p463 = scmp.eq.s32.totalorder %s47, 1
      %p464 = scmp.ne.s32.totalorder %s459, %s461
      %p465 = scmp.eq.s32.totalorder %s47, 0
      %p466 = por %p464, %p465
      %p467 = scmp.ne.s32.totalorder %s459, %s461
      %p468 = scmp.eq.s32.totalorder %s52, 1
      %p469 = por %p467, %p468
      %p470 = scmp.ne.s32.totalorder %s461, %s462
      %p471 = scmp.eq.s32.totalorder %s52, 0
      %p472 = por %p470, %p471
      %p473 = scmp.ne.s32.totalorder %s461, %s462
      %p474 = scmp.eq.s32.totalorder %s53, 1
      %p475 = por %p473, %p474
      %p477 = scmp.ne.s32.totalorder %s462, %s476
      %p478 = scmp.eq.s32.totalorder %s53, 0
      %p479 = por %p477, %p478
      %s481 = sadd.s32 %s480, 1
      %p484 = scmp.eq.s32.totalorder %s47, 1
      %p485 = scmp.ne.s32.totalorder %s480, %s482
      %p486 = scmp.eq.s32.totalorder %s47, 0
      %p487 = por %p485, %p486
      %p488 = scmp.ne.s32.totalorder %s480, %s482
      %p489 = scmp.eq.s32.totalorder %s52, 1
      %p490 = por %p488, %p489
      %p491 = scmp.ne.s32.totalorder %s482, %s483
      %p492 = scmp.eq.s32.totalorder %s52, 0
      %p493 = por %p491, %p492
      %p494 = scmp.ne.s32.totalorder %s482, %s483
      %p495 = scmp.eq.s32.totalorder %s53, 1
      %p496 = por %p494, %p495
      %p498 = scmp.ne.s32.totalorder %s483, %s497
      %p499 = scmp.eq.s32.totalorder %s53, 0
      %p500 = por %p498, %p499
      %s502 = sadd.s32 %s501, 1
      %p505 = scmp.eq.s32.totalorder %s47, 1
      %p506 = scmp.ne.s32.totalorder %s501, %s503
      %p507 = scmp.eq.s32.totalorder %s47, 0
      %p508 = por %p506, %p507
      %p509 = scmp.ne.s32.totalorder %s501, %s503
      %p510 = scmp.eq.s32.totalorder %s52, 1
      %p511 = por %p509, %p510
      %p512 = scmp.ne.s32.totalorder %s503, %s504
      %p513 = scmp.eq.s32.totalorder %s52, 0
      %p514 = por %p512, %p513
      %p515 = scmp.ne.s32.totalorder %s503, %s504
      %p516 = scmp.eq.s32.totalorder %s53, 1
      %p517 = por %p515, %p516
      %p519 = scmp.ne.s32.totalorder %s504, %s518
      %p520 = scmp.eq.s32.totalorder %s53, 0
      %p521 = por %p519, %p520
      %s523 = sadd.s32 %s522, 1
      %p526 = scmp.eq.s32.totalorder %s47, 1
      %p527 = scmp.ne.s32.totalorder %s522, %s524
      %p528 = scmp.eq.s32.totalorder %s47, 0
      %p529 = por %p527, %p528
      %p530 = scmp.ne.s32.totalorder %s522, %s524
      %p531 = scmp.eq.s32.totalorder %s52, 1
      %p532 = por %p530, %p531
      %p533 = scmp.ne.s32.totalorder %s524, %s525
      %p534 = scmp.eq.s32.totalorder %s52, 0
      %p535 = por %p533, %p534
      %p536 = scmp.ne.s32.totalorder %s524, %s525
      %p537 = scmp.eq.s32.totalorder %s53, 1
      %p538 = por %p536, %p537
      %p540 = scmp.ne.s32.totalorder %s525, %s539
      %p541 = scmp.eq.s32.totalorder %s53, 0
      %p542 = por %p540, %p541
      %s544 = sadd.s32 %s543, 1
      %p547 = scmp.eq.s32.totalorder %s47, 1
      %p548 = scmp.ne.s32.totalorder %s543, %s545
      %p549 = scmp.eq.s32.totalorder %s47, 0
      %p550 = por %p548, %p549
      %p551 = scmp.ne.s32.totalorder %s543, %s545
      %p552 = scmp.eq.s32.totalorder %s52, 1
      %p553 = por %p551, %p552
      %p554 = scmp.ne.s32.totalorder %s545, %s546
      %p555 = scmp.eq.s32.totalorder %s52, 0
      %p556 = por %p554, %p555
      %p557 = scmp.ne.s32.totalorder %s545, %s546
      %p558 = scmp.eq.s32.totalorder %s53, 1
      %p559 = por %p557, %p558
      %p561 = scmp.ne.s32.totalorder %s546, %s560
      %p562 = scmp.eq.s32.totalorder %s53, 0
      %p563 = por %p561, %p562
      %s565 = sadd.s32 %s564, 1
      %p568 = scmp.eq.s32.totalorder %s47, 1
      %p569 = scmp.ne.s32.totalorder %s564, %s566
      %p570 = scmp.eq.s32.totalorder %s47, 0
      %p571 = por %p569, %p570
      %p572 = scmp.ne.s32.totalorder %s564, %s566
      %p573 = scmp.eq.s32.totalorder %s52, 1
      %p574 = por %p572, %p573
      %p575 = scmp.ne.s32.totalorder %s566, %s567
      %p576 = scmp.eq.s32.totalorder %s52, 0
      %p577 = por %p575, %p576
      %p578 = scmp.ne.s32.totalorder %s566, %s567
      %p579 = scmp.eq.s32.totalorder %s53, 1
      %p580 = por %p578, %p579
      %p582 = scmp.ne.s32.totalorder %s567, %s581
      %p583 = scmp.eq.s32.totalorder %s53, 0
      %p584 = por %p582, %p583
      %s586 = sadd.s32 %s585, 1
      %p589 = scmp.eq.s32.totalorder %s47, 1
      %p590 = scmp.ne.s32.totalorder %s585, %s587
      %p591 = scmp.eq.s32.totalorder %s47, 0
      %p592 = por %p590, %p591
      %p593 = scmp.ne.s32.totalorder %s585, %s587
      %p594 = scmp.eq.s32.totalorder %s52, 1
      %p595 = por %p593, %p594
      %p596 = scmp.ne.s32.totalorder %s587, %s588
      %p597 = scmp.eq.s32.totalorder %s52, 0
      %p598 = por %p596, %p597
      %p599 = scmp.ne.s32.totalorder %s587, %s588
      %p600 = scmp.eq.s32.totalorder %s53, 1
      %p601 = por %p599, %p600
      %p603 = scmp.ne.s32.totalorder %s588, %s602
      %p604 = scmp.eq.s32.totalorder %s53, 0
      %p605 = por %p603, %p604
      %s606 = ssub.s32 %s47, %s54
      %p607 = scmp.eq.s32.totalorder %s606, 0
      %s609 = sadd.s32 %s608, 1
      %s610 = scalar_select %p607, %s608, %s609
      %p613 = pneg %p607
      %p614 = scmp.eq.s32.totalorder %s47, 1
      %p615 = por %p613, %p614
      %p616 = scmp.ne.s32.totalorder %s608, %s611
      %p617 = scmp.eq.s32.totalorder %s47, 0
      %p618 = por %p616, %p617
      %p619 = scmp.ne.s32.totalorder %s608, %s611
      %p620 = scmp.eq.s32.totalorder %s52, 1
      %p621 = por %p619, %p620
      %p622 = scmp.ne.s32.totalorder %s611, %s612
      %p623 = scmp.eq.s32.totalorder %s52, 0
      %p624 = por %p622, %p623
      %p625 = scmp.ne.s32.totalorder %s611, %s612
      %p626 = scmp.eq.s32.totalorder %s53, 1
      %p627 = por %p625, %p626
      %p629 = scmp.ne.s32.totalorder %s612, %s628
      %p630 = scmp.eq.s32.totalorder %s53, 0
      %p631 = por %p629, %p630
      %p632 = scmp.le.s32.totalorder 1, %s47
      %p633 = scmp.lt.s32.totalorder %s47, 3
      %p634 = pnand %p632, %p633
      %p635 = pneg %p634
      // Predicated region
      $region9: #{tpu_custom_call.1} parent=5 // pred_check
        _
      $region10: #{tpu_custom_call.1} parent=5 // pred_check_branch
        %637 = sbr.rel (%p634) target = $region12
      $region11: #{tpu_custom_call.1} parent=5 // pred_region
        %s638 = ssub.s32 %s47, 1
        // Predicated region
        $region13: #{tpu_custom_call.1} parent=11 // pred_check
          %p639 = pneg %p94
        $region14: #{tpu_custom_call.1} parent=11 // pred_check_branch
          %641 = sbr.rel (%p639) target = $region16
        $region15: #{tpu_custom_call.1} parent=11 // pred_region
          %643 = vsyncadd [#allocation6], 0
          %s645 = sshll.u32 %s1, 4
          %s646 = int_to_ptr.hbm [resolvable:$true] %s645
          %s647 = sshll.u32 [#allocation5], 4
          %s648 = int_to_ptr.vmem [resolvable:$true] %s647
          %650 = dma.hbm_to_vmem [thread:$0]  %s646, 128, %s648, [#allocation6]
        $region16: #{tpu_custom_call.1} parent=11 // pred_fallthru
          _
        // Predicated region
        $region17: #{tpu_custom_call.1} parent=11 // pred_check
          %p651 = pneg %p115
        $region18: #{tpu_custom_call.1} parent=11 // pred_check_branch
          %653 = sbr.rel (%p651) target = $region20
        $region19: #{tpu_custom_call.1} parent=11 // pred_region
          %655 = vsyncadd [#allocation6], 0
          %s656 = sshll.u32 %s2, 4
          %s657 = int_to_ptr.hbm [resolvable:$true] %s656
          %s658 = sshll.u32 [#allocation7], 4
          %s659 = int_to_ptr.vmem [resolvable:$true] %s658
          %664 = dma.hbm_to_vmem [thread:$0]  %s657, 2048, %s659, [#allocation6], 128, 128, 8
        $region20: #{tpu_custom_call.1} parent=11 // pred_fallthru
          _
        // Predicated region
        $region21: #{tpu_custom_call.1} parent=11 // pred_check
          %p665 = pneg %p136
        $region22: #{tpu_custom_call.1} parent=11 // pred_check_branch
          %667 = sbr.rel (%p665) target = $region24
        $region23: #{tpu_custom_call.1} parent=11 // pred_region
          %669 = vsyncadd [#allocation9], 0
          %s671 = sshll.u32 %s3, 4
          %s672 = int_to_ptr.hbm [resolvable:$true] %s671
          %s673 = sshll.u32 [#allocation8], 4
          %s674 = int_to_ptr.vmem [resolvable:$true] %s673
          %676 = dma.hbm_to_vmem [thread:$0]  %s672, 16, %s674, [#allocation9]
        $region24: #{tpu_custom_call.1} parent=11 // pred_fallthru
          _
        // Predicated region
        $region25: #{tpu_custom_call.1} parent=11 // pred_check
          %p677 = pneg %p157
        $region26: #{tpu_custom_call.1} parent=11 // pred_check_branch
          %679 = sbr.rel (%p677) target = $region28
        $region27: #{tpu_custom_call.1} parent=11 // pred_region
          %681 = vsyncadd [#allocation9], 0
          %s682 = sshll.u32 %s4, 4
          %s683 = int_to_ptr.hbm [resolvable:$true] %s682
          %s684 = sshll.u32 [#allocation10], 4
          %s685 = int_to_ptr.vmem [resolvable:$true] %s684
          %690 = dma.hbm_to_vmem [thread:$0]  %s683, 32, %s685, [#allocation9], 16, 16, 1
        $region28: #{tpu_custom_call.1} parent=11 // pred_fallthru
          _
        // Predicated region
        $region29: #{tpu_custom_call.1} parent=11 // pred_check
          %p691 = pneg %p178
        $region30: #{tpu_custom_call.1} parent=11 // pred_check_branch
          %693 = sbr.rel (%p691) target = $region32
        $region31: #{tpu_custom_call.1} parent=11 // pred_region
          %695 = vsyncadd [#allocation12], 0
          %s696 = sshll.u32 %s5, 4
          %s697 = int_to_ptr.hbm [resolvable:$true] %s696
          %s698 = sshll.u32 [#allocation11], 4
          %s699 = int_to_ptr.vmem [resolvable:$true] %s698
          %704 = dma.hbm_to_vmem [thread:$0]  %s697, 32, %s699, [#allocation12], 16, 16, 1
        $region32: #{tpu_custom_call.1} parent=11 // pred_fallthru
          _
        // Predicated region
        $region33: #{tpu_custom_call.1} parent=11 // pred_check
          %p705 = pneg %p199
        $region34: #{tpu_custom_call.1} parent=11 // pred_check_branch
          %707 = sbr.rel (%p705) target = $region36
        $region35: #{tpu_custom_call.1} parent=11 // pred_region
          %709 = vsyncadd [#allocation12], 0
          %s710 = sshll.u32 %s6, 4
          %s711 = int_to_ptr.hbm [resolvable:$true] %s710
          %s712 = sshll.u32 [#allocation13], 4
          %s713 = int_to_ptr.vmem [resolvable:$true] %s712
          %718 = dma.hbm_to_vmem [thread:$0]  %s711, 12288, %s713, [#allocation12], 384, 384, 24
        $region36: #{tpu_custom_call.1} parent=11 // pred_fallthru
          _
        // Predicated region
        $region37: #{tpu_custom_call.1} parent=11 // pred_check
          %p719 = pneg %p220
        $region38: #{tpu_custom_call.1} parent=11 // pred_check_branch
          %721 = sbr.rel (%p719) target = $region40
        $region39: #{tpu_custom_call.1} parent=11 // pred_region
          _
        $region40: #{tpu_custom_call.1} parent=11 // pred_fallthru
          _
        // Predicated region
        $region41: #{tpu_custom_call.1} parent=11 // pred_check
          %p722 = pneg %p241
        $region42: #{tpu_custom_call.1} parent=11 // pred_check_branch
          %724 = sbr.rel (%p722) target = $region44
        $region43: #{tpu_custom_call.1} parent=11 // pred_region
          %726 = vsyncadd [#allocation15], 0
          %s727 = sshll.u32 %s8, 4
          %s728 = int_to_ptr.hbm [resolvable:$true] %s727
          %s729 = sshll.u32 [#allocation14], 4
          %s730 = int_to_ptr.vmem [resolvable:$true] %s729
          %735 = dma.hbm_to_vmem [thread:$0]  %s728, 4096, %s730, [#allocation15], 128, 128, 8
        $region44: #{tpu_custom_call.1} parent=11 // pred_fallthru
          _
        // Predicated region
        $region45: #{tpu_custom_call.1} parent=11 // pred_check
          %p736 = pneg %p262
        $region46: #{tpu_custom_call.1} parent=11 // pred_check_branch
          %738 = sbr.rel (%p736) target = $region48
        $region47: #{tpu_custom_call.1} parent=11 // pred_region
          %740 = vsyncadd [#allocation15], 0
          %s741 = sshll.u32 %s9, 4
          %s742 = int_to_ptr.hbm [resolvable:$true] %s741
          %s743 = sshll.u32 [#allocation16], 4
          %s744 = int_to_ptr.vmem [resolvable:$true] %s743
          %749 = dma.hbm_to_vmem [thread:$0]  %s742, 32, %s744, [#allocation15], 16, 16, 1
        $region48: #{tpu_custom_call.1} parent=11 // pred_fallthru
          _
        // Predicated region
        $region49: #{tpu_custom_call.1} parent=11 // pred_check
          %p750 = pneg %p283
        $region50: #{tpu_custom_call.1} parent=11 // pred_check_branch
          %752 = sbr.rel (%p750) target = $region52
        $region51: #{tpu_custom_call.1} parent=11 // pred_region
          %754 = vsyncadd [#allocation18], 0
          %s755 = sshll.u32 %s10, 4
          %s756 = int_to_ptr.hbm [resolvable:$true] %s755
          %s757 = sshll.u32 [#allocation17], 4
          %s758 = int_to_ptr.vmem [resolvable:$true] %s757
          %763 = dma.hbm_to_vmem [thread:$0]  %s756, 32, %s758, [#allocation18], 16, 16, 1
        $region52: #{tpu_custom_call.1} parent=11 // pred_fallthru
          _
        // Predicated region
        $region53: #{tpu_custom_call.1} parent=11 // pred_check
          %p764 = pneg %p304
        $region54: #{tpu_custom_call.1} parent=11 // pred_check_branch
          %766 = sbr.rel (%p764) target = $region56
        $region55: #{tpu_custom_call.1} parent=11 // pred_region
          %768 = vsyncadd [#allocation18], 0
          %s769 = sshll.u32 %s11, 4
          %s770 = int_to_ptr.hbm [resolvable:$true] %s769
          %s771 = sshll.u32 [#allocation19], 4
          %s772 = int_to_ptr.vmem [resolvable:$true] %s771
          %777 = dma.hbm_to_vmem [thread:$0]  %s770, 32, %s772, [#allocation18], 16, 16, 1
        $region56: #{tpu_custom_call.1} parent=11 // pred_fallthru
          _
        // Predicated region
        $region57: #{tpu_custom_call.1} parent=11 // pred_check
          %p778 = pneg %p325
        $region58: #{tpu_custom_call.1} parent=11 // pred_check_branch
          %780 = sbr.rel (%p778) target = $region60
        $region59: #{tpu_custom_call.1} parent=11 // pred_region
          %782 = vsyncadd [#allocation21], 0
          %s783 = sshll.u32 %s12, 4
          %s784 = int_to_ptr.hbm [resolvable:$true] %s783
          %s785 = sshll.u32 [#allocation20], 4
          %s786 = int_to_ptr.vmem [resolvable:$true] %s785
          %791 = dma.hbm_to_vmem [thread:$0]  %s784, 4096, %s786, [#allocation21], 128, 128, 8
        $region60: #{tpu_custom_call.1} parent=11 // pred_fallthru
          _
        // Predicated region
        $region61: #{tpu_custom_call.1} parent=11 // pred_check
          %p792 = pneg %p346
        $region62: #{tpu_custom_call.1} parent=11 // pred_check_branch
          %794 = sbr.rel (%p792) target = $region64
        $region63: #{tpu_custom_call.1} parent=11 // pred_region
          %796 = vsyncadd [#allocation21], 0
          %s797 = sshll.u32 %s13, 4
          %s798 = int_to_ptr.hbm [resolvable:$true] %s797
          %s799 = sshll.u32 [#allocation22], 4
          %s800 = int_to_ptr.vmem [resolvable:$true] %s799
          %805 = dma.hbm_to_vmem [thread:$0]  %s798, 32, %s800, [#allocation21], 16, 16, 1
        $region64: #{tpu_custom_call.1} parent=11 // pred_fallthru
          _
        // Predicated region
        $region65: #{tpu_custom_call.1} parent=11 // pred_check
          %p806 = pneg %p367
        $region66: #{tpu_custom_call.1} parent=11 // pred_check_branch
          %808 = sbr.rel (%p806) target = $region68
        $region67: #{tpu_custom_call.1} parent=11 // pred_region
          %810 = vsyncadd [#allocation24], 0
          %s811 = sshll.u32 %s14, 4
          %s812 = int_to_ptr.hbm [resolvable:$true] %s811
          %s813 = sshll.u32 [#allocation23], 4
          %s814 = int_to_ptr.vmem [resolvable:$true] %s813
          %819 = dma.hbm_to_vmem [thread:$0]  %s812, 8192, %s814, [#allocation24], 256, 256, 16
        $region68: #{tpu_custom_call.1} parent=11 // pred_fallthru
          _
        // Predicated region
        $region69: #{tpu_custom_call.1} parent=11 // pred_check
          %p820 = pneg %p388
        $region70: #{tpu_custom_call.1} parent=11 // pred_check_branch
          %822 = sbr.rel (%p820) target = $region72
        $region71: #{tpu_custom_call.1} parent=11 // pred_region
          _
        $region72: #{tpu_custom_call.1} parent=11 // pred_fallthru
          _
        // Predicated region
        $region73: #{tpu_custom_call.1} parent=11 // pred_check
          %p823 = pneg %p409
        $region74: #{tpu_custom_call.1} parent=11 // pred_check_branch
          %825 = sbr.rel (%p823) target = $region76
        $region75: #{tpu_custom_call.1} parent=11 // pred_region
          %827 = vsyncadd [#allocation24], 0
          %s828 = sshll.u32 %s16, 4
          %s829 = int_to_ptr.hbm [resolvable:$true] %s828
          %s830 = sshll.u32 [#allocation25], 4
          %s831 = int_to_ptr.vmem [resolvable:$true] %s830
          %836 = dma.hbm_to_vmem [thread:$0]  %s829, 4096, %s831, [#allocation24], 128, 128, 8
        $region76: #{tpu_custom_call.1} parent=11 // pred_fallthru
          _
        // Predicated region
        $region77: #{tpu_custom_call.1} parent=11 // pred_check
          %p837 = pneg %p430
        $region78: #{tpu_custom_call.1} parent=11 // pred_check_branch
          %839 = sbr.rel (%p837) target = $region80
        $region79: #{tpu_custom_call.1} parent=11 // pred_region
          _
        $region80: #{tpu_custom_call.1} parent=11 // pred_fallthru
          _
        // Predicated region
        $region81: #{tpu_custom_call.1} parent=11 // pred_check
          %p840 = pneg %p451
        $region82: #{tpu_custom_call.1} parent=11 // pred_check_branch
          %842 = sbr.rel (%p840) target = $region84
        $region83: #{tpu_custom_call.1} parent=11 // pred_region
          %844 = vsyncadd [#allocation27], 0
          %s845 = sshll.u32 %s18, 4
          %s846 = int_to_ptr.hbm [resolvable:$true] %s845
          %s847 = sshll.u32 [#allocation26], 4
          %s848 = int_to_ptr.vmem [resolvable:$true] %s847
          %853 = dma.hbm_to_vmem [thread:$0]  %s846, 32, %s848, [#allocation27], 16, 16, 1
        $region84: #{tpu_custom_call.1} parent=11 // pred_fallthru
          _
        // Predicated region
        $region85: #{tpu_custom_call.1} parent=11 // pred_check
          %p854 = pneg %p472
        $region86: #{tpu_custom_call.1} parent=11 // pred_check_branch
          %856 = sbr.rel (%p854) target = $region88
        $region87: #{tpu_custom_call.1} parent=11 // pred_region
          _
        $region88: #{tpu_custom_call.1} parent=11 // pred_fallthru
          _
        // Predicated region
        $region89: #{tpu_custom_call.1} parent=11 // pred_check
          %p857 = pneg %p493
        $region90: #{tpu_custom_call.1} parent=11 // pred_check_branch
          %859 = sbr.rel (%p857) target = $region92
        $region91: #{tpu_custom_call.1} parent=11 // pred_region
          %861 = vsyncadd [#allocation27], 0
          %s862 = sshll.u32 %s20, 4
          %s863 = int_to_ptr.hbm [resolvable:$true] %s862
          %s864 = sshll.u32 [#allocation28], 4
          %s865 = int_to_ptr.vmem [resolvable:$true] %s864
          %870 = dma.hbm_to_vmem [thread:$0]  %s863, 8192, %s865, [#allocation27], 256, 256, 16
        $region92: #{tpu_custom_call.1} parent=11 // pred_fallthru
          _
        // Predicated region
        $region93: #{tpu_custom_call.1} parent=11 // pred_check
          %p871 = pneg %p514
        $region94: #{tpu_custom_call.1} parent=11 // pred_check_branch
          %873 = sbr.rel (%p871) target = $region96
        $region95: #{tpu_custom_call.1} parent=11 // pred_region
          _
        $region96: #{tpu_custom_call.1} parent=11 // pred_fallthru
          _
        // Predicated region
        $region97: #{tpu_custom_call.1} parent=11 // pred_check
          %p874 = pneg %p535
        $region98: #{tpu_custom_call.1} parent=11 // pred_check_branch
          %876 = sbr.rel (%p874) target = $region100
        $region99: #{tpu_custom_call.1} parent=11 // pred_region
          %878 = vsyncadd [#allocation30], 0
          %s879 = sshll.u32 %s22, 4
          %s880 = int_to_ptr.hbm [resolvable:$true] %s879
          %s881 = sshll.u32 [#allocation29], 4
          %s882 = int_to_ptr.vmem [resolvable:$true] %s881
          %887 = dma.hbm_to_vmem [thread:$0]  %s880, 8192, %s882, [#allocation30], 128, 128, 8
        $region100: #{tpu_custom_call.1} parent=11 // pred_fallthru
          _
        // Predicated region
        $region101: #{tpu_custom_call.1} parent=11 // pred_check
          %p888 = pneg %p556
        $region102: #{tpu_custom_call.1} parent=11 // pred_check_branch
          %890 = sbr.rel (%p888) target = $region104
        $region103: #{tpu_custom_call.1} parent=11 // pred_region
          _
        $region104: #{tpu_custom_call.1} parent=11 // pred_fallthru
          _
        // Predicated region
        $region105: #{tpu_custom_call.1} parent=11 // pred_check
          %p891 = pneg %p577
        $region106: #{tpu_custom_call.1} parent=11 // pred_check_branch
          %893 = sbr.rel (%p891) target = $region108
        $region107: #{tpu_custom_call.1} parent=11 // pred_region
          %895 = vsyncadd [#allocation30], 0
          %s896 = sshll.u32 %s24, 4
          %s897 = int_to_ptr.hbm [resolvable:$true] %s896
          %s898 = sshll.u32 [#allocation31], 4
          %s899 = int_to_ptr.vmem [resolvable:$true] %s898
          %904 = dma.hbm_to_vmem [thread:$0]  %s897, 2048, %s899, [#allocation30], 128, 128, 8
        $region108: #{tpu_custom_call.1} parent=11 // pred_fallthru
          _
        // Predicated region
        $region109: #{tpu_custom_call.1} parent=11 // pred_check
          %p905 = pneg %p598
        $region110: #{tpu_custom_call.1} parent=11 // pred_check_branch
          %907 = sbr.rel (%p905) target = $region112
        $region111: #{tpu_custom_call.1} parent=11 // pred_region
          _
        $region112: #{tpu_custom_call.1} parent=11 // pred_fallthru
          _
      $region12: #{tpu_custom_call.1} parent=5 // pred_fallthru
        _
      %p908 = scmp.lt.s32.totalorder %s47, 2
      // Predicated region
      $region113: #{tpu_custom_call.1} parent=5 // pred_check
        %p909 = pneg %p908
      $region114: #{tpu_custom_call.1} parent=5 // pred_check_branch
        %911 = sbr.rel (%p909) target = $region116
      $region115: #{tpu_custom_call.1} parent=5 // pred_region
        // Predicated region
        $region117: #{tpu_custom_call.1} parent=115 // pred_check
          %p912 = pneg %p67
        $region118: #{tpu_custom_call.1} parent=115 // pred_check_branch
          %914 = sbr.rel (%p912) target = $region120
        $region119: #{tpu_custom_call.1} parent=115 // pred_region
          %s915 = sand.u32 %s57, 1
          %s916 = scalar_lea.sflag [#allocation3], %s915
          %s917 = sand.u32 %s57, 1
          %s918 = smul.addr %s917, 16
          %s919 = scalar_lea.vmem [#allocation2], %s918
          %921 = vsyncadd %s916, 0
          %s922 = smul.addr %s47, 2
          %s923 = smul.addr %s922, 8
          %s924 = scalar_lea.hbm %s0, %s923
          %s925 = sshll.u32 %s924, 4
          %s926 = int_to_ptr.hbm [resolvable:$true] %s925
          %s927 = sshll.u32 %s919, 4
          %s928 = int_to_ptr.vmem [resolvable:$true] %s927
          %933 = dma.hbm_to_vmem [thread:$0]  %s926, 256, %s928, %s916, 128, 128, 8
        $region120: #{tpu_custom_call.1} parent=115 // pred_fallthru
          _
      $region116: #{tpu_custom_call.1} parent=5 // pred_fallthru
        _
      %p934 = scmp.le.s32.totalorder 1, %s47
      %p935 = scmp.lt.s32.totalorder %s47, 3
      %p936 = pnand %p934, %p935
      %p937 = pneg %p936
      // Predicated region
      $region121: #{tpu_custom_call.1} parent=5 // pred_check
        _
      $region122: #{tpu_custom_call.1} parent=5 // pred_check_branch
        %939 = sbr.rel (%p936) target = $region124
      $region123: #{tpu_custom_call.1} parent=5 // pred_region
        %s940 = ssub.s32 %s47, 1
        %s941 = sand.u32 %s60, 1
        %s942 = scalar_lea.sflag [#allocation3], %s941
        %s943 = sand.u32 %s60, 1
        %s944 = smul.addr %s943, 16
        %s945 = scalar_lea.vmem [#allocation2], %s944
        // Predicated region
        $region125: #{tpu_custom_call.1} parent=123 // pred_check
          %p946 = pneg %p73
        $region126: #{tpu_custom_call.1} parent=123 // pred_check_branch
          %948 = sbr.rel (%p946) target = $region128
        $region127: #{tpu_custom_call.1} parent=123 // pred_region
          %950 = dma.done %s942, 256
        $region128: #{tpu_custom_call.1} parent=123 // pred_fallthru
          _
        // Predicated region
        $region129: #{tpu_custom_call.1} parent=123 // pred_check
          %p951 = pneg %p94
        $region130: #{tpu_custom_call.1} parent=123 // pred_check_branch
          %953 = sbr.rel (%p951) target = $region132
        $region131: #{tpu_custom_call.1} parent=123 // pred_region
          %955 = dma.done [#allocation6], 128
        $region132: #{tpu_custom_call.1} parent=123 // pred_fallthru
          _
        // Predicated region
        $region133: #{tpu_custom_call.1} parent=123 // pred_check
          %p956 = pneg %p115
        $region134: #{tpu_custom_call.1} parent=123 // pred_check_branch
          %958 = sbr.rel (%p956) target = $region136
        $region135: #{tpu_custom_call.1} parent=123 // pred_region
          %960 = dma.done [#allocation6], 2048
        $region136: #{tpu_custom_call.1} parent=123 // pred_fallthru
          _
        // Predicated region
        $region137: #{tpu_custom_call.1} parent=123 // pred_check
          %p961 = pneg %p136
        $region138: #{tpu_custom_call.1} parent=123 // pred_check_branch
          %963 = sbr.rel (%p961) target = $region140
        $region139: #{tpu_custom_call.1} parent=123 // pred_region
          %965 = dma.done [#allocation9], 16
        $region140: #{tpu_custom_call.1} parent=123 // pred_fallthru
          _
        // Predicated region
        $region141: #{tpu_custom_call.1} parent=123 // pred_check
          %p966 = pneg %p157
        $region142: #{tpu_custom_call.1} parent=123 // pred_check_branch
          %968 = sbr.rel (%p966) target = $region144
        $region143: #{tpu_custom_call.1} parent=123 // pred_region
          %970 = dma.done [#allocation9], 32
        $region144: #{tpu_custom_call.1} parent=123 // pred_fallthru
          _
        // Predicated region
        $region145: #{tpu_custom_call.1} parent=123 // pred_check
          %p971 = pneg %p178
        $region146: #{tpu_custom_call.1} parent=123 // pred_check_branch
          %973 = sbr.rel (%p971) target = $region148
        $region147: #{tpu_custom_call.1} parent=123 // pred_region
          %975 = dma.done [#allocation12], 32
        $region148: #{tpu_custom_call.1} parent=123 // pred_fallthru
          _
        // Predicated region
        $region149: #{tpu_custom_call.1} parent=123 // pred_check
          %p976 = pneg %p199
        $region150: #{tpu_custom_call.1} parent=123 // pred_check_branch
          %978 = sbr.rel (%p976) target = $region152
        $region151: #{tpu_custom_call.1} parent=123 // pred_region
          %980 = dma.done [#allocation12], 12288
        $region152: #{tpu_custom_call.1} parent=123 // pred_fallthru
          _
        // Predicated region
        $region153: #{tpu_custom_call.1} parent=123 // pred_check
          %p981 = pneg %p241
        $region154: #{tpu_custom_call.1} parent=123 // pred_check_branch
          %983 = sbr.rel (%p981) target = $region156
        $region155: #{tpu_custom_call.1} parent=123 // pred_region
          %985 = dma.done [#allocation15], 4096
        $region156: #{tpu_custom_call.1} parent=123 // pred_fallthru
          _
        // Predicated region
        $region157: #{tpu_custom_call.1} parent=123 // pred_check
          %p986 = pneg %p262
        $region158: #{tpu_custom_call.1} parent=123 // pred_check_branch
          %988 = sbr.rel (%p986) target = $region160
        $region159: #{tpu_custom_call.1} parent=123 // pred_region
          %990 = dma.done [#allocation15], 32
        $region160: #{tpu_custom_call.1} parent=123 // pred_fallthru
          _
        // Predicated region
        $region161: #{tpu_custom_call.1} parent=123 // pred_check
          %p991 = pneg %p283
        $region162: #{tpu_custom_call.1} parent=123 // pred_check_branch
          %993 = sbr.rel (%p991) target = $region164
        $region163: #{tpu_custom_call.1} parent=123 // pred_region
          %995 = dma.done [#allocation18], 32
        $region164: #{tpu_custom_call.1} parent=123 // pred_fallthru
          _
        // Predicated region
        $region165: #{tpu_custom_call.1} parent=123 // pred_check
          %p996 = pneg %p304
        $region166: #{tpu_custom_call.1} parent=123 // pred_check_branch
          %998 = sbr.rel (%p996) target = $region168
        $region167: #{tpu_custom_call.1} parent=123 // pred_region
          %1000 = dma.done [#allocation18], 32
        $region168: #{tpu_custom_call.1} parent=123 // pred_fallthru
          _
        // Predicated region
        $region169: #{tpu_custom_call.1} parent=123 // pred_check
          %p1001 = pneg %p325
        $region170: #{tpu_custom_call.1} parent=123 // pred_check_branch
          %1003 = sbr.rel (%p1001) target = $region172
        $region171: #{tpu_custom_call.1} parent=123 // pred_region
          %1005 = dma.done [#allocation21], 4096
        $region172: #{tpu_custom_call.1} parent=123 // pred_fallthru
          _
        // Predicated region
        $region173: #{tpu_custom_call.1} parent=123 // pred_check
          %p1006 = pneg %p346
        $region174: #{tpu_custom_call.1} parent=123 // pred_check_branch
          %1008 = sbr.rel (%p1006) target = $region176
        $region175: #{tpu_custom_call.1} parent=123 // pred_region
          %1010 = dma.done [#allocation21], 32
        $region176: #{tpu_custom_call.1} parent=123 // pred_fallthru
          _
        // Predicated region
        $region177: #{tpu_custom_call.1} parent=123 // pred_check
          %p1011 = pneg %p367
        $region178: #{tpu_custom_call.1} parent=123 // pred_check_branch
          %1013 = sbr.rel (%p1011) target = $region180
        $region179: #{tpu_custom_call.1} parent=123 // pred_region
          %1015 = dma.done [#allocation24], 8192
        $region180: #{tpu_custom_call.1} parent=123 // pred_fallthru
          _
        // Predicated region
        $region181: #{tpu_custom_call.1} parent=123 // pred_check
          %p1016 = pneg %p409
        $region182: #{tpu_custom_call.1} parent=123 // pred_check_branch
          %1018 = sbr.rel (%p1016) target = $region184
        $region183: #{tpu_custom_call.1} parent=123 // pred_region
          %1020 = dma.done [#allocation24], 4096
        $region184: #{tpu_custom_call.1} parent=123 // pred_fallthru
          _
        // Predicated region
        $region185: #{tpu_custom_call.1} parent=123 // pred_check
          %p1021 = pneg %p451
        $region186: #{tpu_custom_call.1} parent=123 // pred_check_branch
          %1023 = sbr.rel (%p1021) target = $region188
        $region187: #{tpu_custom_call.1} parent=123 // pred_region
          %1025 = dma.done [#allocation27], 32
        $region188: #{tpu_custom_call.1} parent=123 // pred_fallthru
          _
        // Predicated region
        $region189: #{tpu_custom_call.1} parent=123 // pred_check
          %p1026 = pneg %p493
        $region190: #{tpu_custom_call.1} parent=123 // pred_check_branch
          %1028 = sbr.rel (%p1026) target = $region192
        $region191: #{tpu_custom_call.1} parent=123 // pred_region
          %1030 = dma.done [#allocation27], 8192
        $region192: #{tpu_custom_call.1} parent=123 // pred_fallthru
          _
        // Predicated region
        $region193: #{tpu_custom_call.1} parent=123 // pred_check
          %p1031 = pneg %p535
        $region194: #{tpu_custom_call.1} parent=123 // pred_check_branch
          %1033 = sbr.rel (%p1031) target = $region196
        $region195: #{tpu_custom_call.1} parent=123 // pred_region
          %1035 = dma.done [#allocation30], 8192
        $region196: #{tpu_custom_call.1} parent=123 // pred_fallthru
          _
        // Predicated region
        $region197: #{tpu_custom_call.1} parent=123 // pred_check
          %p1036 = pneg %p577
        $region198: #{tpu_custom_call.1} parent=123 // pred_check_branch
          %1038 = sbr.rel (%p1036) target = $region200
        $region199: #{tpu_custom_call.1} parent=123 // pred_region
          %1040 = dma.done [#allocation30], 2048
        $region200: #{tpu_custom_call.1} parent=123 // pred_fallthru
          _
        %s1041 = sand.u32 %s60, 1
        %s1042 = scalar_lea.sflag [#allocation3], %s1041
        %s1043 = sand.u32 %s60, 1
        %s1044 = smul.addr %s1043, 16
        %s1045 = scalar_lea.vmem [#allocation2], %s1044
        %p1046 = pneg %p73
        %p1047 = pneg %p70
        %p1048 = pneg %p94
        %p1049 = pneg %p91
        %p1050 = pneg %p115
        %p1051 = pneg %p112
        %p1052 = pneg %p136
        %p1053 = pneg %p133
        %p1054 = pneg %p157
        %p1055 = pneg %p154
        %p1056 = pneg %p178
        %p1057 = pneg %p175
        %p1058 = pneg %p199
        %p1059 = pneg %p196
        %p1060 = pneg %p220
        %p1061 = pneg %p217
        %p1062 = pneg %p241
        %p1063 = pneg %p238
        %p1064 = pneg %p262
        %p1065 = pneg %p259
        %p1066 = pneg %p283
        %p1067 = pneg %p280
        %p1068 = pneg %p304
        %p1069 = pneg %p301
        %p1070 = pneg %p325
        %p1071 = pneg %p322
        %p1072 = pneg %p346
        %p1073 = pneg %p343
        %p1074 = pneg %p367
        %p1075 = pneg %p364
        %p1076 = pneg %p388
        %p1077 = pneg %p385
        %p1078 = pneg %p409
        %p1079 = pneg %p406
        %p1080 = pneg %p430
        %p1081 = pneg %p427
        %p1082 = pneg %p451
        %p1083 = pneg %p448
        %p1084 = pneg %p472
        %p1085 = pneg %p469
        %p1086 = pneg %p493
        %p1087 = pneg %p490
        %p1088 = pneg %p514
        %p1089 = pneg %p511
        %p1090 = pneg %p535
        %p1091 = pneg %p532
        %p1092 = pneg %p556
        %p1093 = pneg %p553
        %p1094 = pneg %p577
        %p1095 = pneg %p574
        %p1096 = pneg %p598
        %p1097 = pneg %p595
        %p1098 = pneg %p624
        %p1099 = pneg %p621
        %s1100 = sand.u32 %s611, 1
        %s1101 = scalar_lea.sflag [#allocation4], %s1100
        %s1102 = sand.u32 %s611, 1
        %s1103 = smul.addr %s1102, 8
        %s1104 = scalar_lea.vmem [#allocation32], %s1103
        %v1105 = vld [vmem:[%s945] sm:$0xff]
        %v1106 = vld [vmem:[%s945 + $0x8] sm:$0xff]
        %v1107 = vld [vmem:[#allocation7] sm:$0xff]
        %v1108 = vld [vmem:[#allocation7 + $0x8] sm:$0xff]
        %v1109 = vld [vmem:[#allocation7 + $0x10] sm:$0xff]
        %v1110 = vld [vmem:[#allocation7 + $0x18] sm:$0xff]
        %v1111 = vld [vmem:[#allocation7 + $0x20] sm:$0xff]
        %v1112 = vld [vmem:[#allocation7 + $0x28] sm:$0xff]
        %v1113 = vld [vmem:[#allocation7 + $0x30] sm:$0xff]
        %v1114 = vld [vmem:[#allocation7 + $0x38] sm:$0xff]
        %v1115 = vld [vmem:[#allocation7 + $0x40] sm:$0xff]
        %v1116 = vld [vmem:[#allocation7 + $0x48] sm:$0xff]
        %v1117 = vld [vmem:[#allocation7 + $0x50] sm:$0xff]
        %v1118 = vld [vmem:[#allocation7 + $0x58] sm:$0xff]
        %v1119 = vld [vmem:[#allocation7 + $0x60] sm:$0xff]
        %v1120 = vld [vmem:[#allocation7 + $0x68] sm:$0xff]
        %v1121 = vld [vmem:[#allocation7 + $0x70] sm:$0xff]
        %v1122 = vld [vmem:[#allocation7 + $0x78] sm:$0xff]
        %v1123 = vld [vmem:[#allocation8] sm:$0x1]
        %v1125 = vperm.slane %v1123, 0
        %1127 = vmatpush.msra.mxu0 %v1122
        %1128 = vmatpush.msra.mxu0 %v1121
        %1129 = vmatpush.msra.mxu0 %v1120
        %1130 = vmatpush.msra.mxu0 %v1119
        %1131 = vmatpush.msra.mxu0 %v1118
        %1132 = vmatpush.msra.mxu0 %v1117
        %1133 = vmatpush.msra.mxu0 %v1116
        %1134 = vmatpush.msra.mxu0 %v1115
        %1135 = vmatpush.msra.mxu0 %v1114
        %1136 = vmatpush.msra.mxu0 %v1113
        %1137 = vmatpush.msra.mxu0 %v1112
        %1138 = vmatpush.msra.mxu0 %v1111
        %1139 = vmatpush.msra.mxu0 %v1110
        %1140 = vmatpush.msra.mxu0 %v1109
        %1141 = vmatpush.msra.mxu0 %v1108
        %1142 = vmatpush.msra.mxu0 %v1107
        %1143 = vmatmul.f32.gmra.mxu0 %v1105
        %v1144 = vpop.f32.mrf.mxu0
        %v1145 = vadd.f32 %v1125, %v1144
        %1146 = vmatmul.f32.gmra.mxu0 %v1106
        %v1147 = vpop.f32.mrf.mxu0
        %v1148 = vadd.f32 %v1125, %v1147
        %1149 = vdwg.mxu0
        %v1150 = vld [vmem:[#allocation5] sm:$0xff]
        %v1151 = vld [vmem:[#allocation10] sm:$0x1]
        %v1152 = vld [vmem:[#allocation11] sm:$0x1]
        %1153 = vadd.xlane.f32.xlu0 %v1150
        %v1154 = vpop.xlane.xlu0 %1153
        %v1155 = vrcp.pop 128.0
        %v1156 = vmul.f32 128.0, %v1155
        %v1157 = vsub.f32 1.0, %v1156
        %v1158 = vmul.f32 %v1155, %v1157
        %v1159 = vadd.f32 %v1155, %v1158
        %vm1160 = vweird.f32 %v1155
        %v1161 = vsel %vm1160, %v1155, %v1159
        %v1162 = vmul.f32 %v1154, %v1161
        %v1163 = vsub.f32 %v1150, %v1162
        %v1164 = vmul.f32 %v1163, %v1163
        %1165 = vadd.xlane.f32.xlu0 %v1164
        %v1166 = vpop.xlane.xlu0 %1165
        %v1167 = vmul.f32 %v1166, %v1161
        %v1168 = vadd.f32 %v1167, 1e-05
        %v1169 = vrsqrt.pop %v1168
        %v1170 = vmul.f32 %v1169, %v1168
        %v1171 = vmul.f32 %v1170, %v1169
        %v1172 = vmul.f32 0.5, %v1171
        %v1173 = vsub.f32 1.5, %v1172
        %v1174 = vmul.f32 %v1169, %v1173
        %vm1175 = vweird.f32 %v1168
        %vm1176 = vweird.f32 %v1169
        %vm1177 = vmor %vm1175, %vm1176
        %v1178 = vsel %vm1177, %v1169, %v1174
        %v1179 = vmul.f32 %v1163, %v1178
        %v1181 = vperm.slane %v1151, 0
        %v1183 = vmul.f32 %v1179, %v1181
        %v1185 = vperm.slane %v1152, 0
        %v1187 = vadd.f32 %v1183, %v1185
        %v1188 = vld [vmem:[#allocation13] sm:$0xff]
        %v1189 = vld [vmem:[#allocation13 + $0x8] sm:$0xff]
        %v1190 = vld [vmem:[#allocation13 + $0x10] sm:$0xff]
        %v1191 = vld [vmem:[#allocation13 + $0x18] sm:$0xff]
        %v1192 = vld [vmem:[#allocation13 + $0x20] sm:$0xff]
        %v1193 = vld [vmem:[#allocation13 + $0x28] sm:$0xff]
        %v1194 = vld [vmem:[#allocation13 + $0x30] sm:$0xff]
        %v1195 = vld [vmem:[#allocation13 + $0x38] sm:$0xff]
        %v1196 = vld [vmem:[#allocation13 + $0x40] sm:$0xff]
        %v1197 = vld [vmem:[#allocation13 + $0x48] sm:$0xff]
        %v1198 = vld [vmem:[#allocation13 + $0x50] sm:$0xff]
        %v1199 = vld [vmem:[#allocation13 + $0x58] sm:$0xff]
        %v1200 = vld [vmem:[#allocation13 + $0x60] sm:$0xff]
        %v1201 = vld [vmem:[#allocation13 + $0x68] sm:$0xff]
        %v1202 = vld [vmem:[#allocation13 + $0x70] sm:$0xff]
        %v1203 = vld [vmem:[#allocation13 + $0x78] sm:$0xff]
        %v1204 = vld [vmem:[#allocation13 + $0x80] sm:$0xff]
        %v1205 = vld [vmem:[#allocation13 + $0x88] sm:$0xff]
        %v1206 = vld [vmem:[#allocation13 + $0x90] sm:$0xff]
        %v1207 = vld [vmem:[#allocation13 + $0x98] sm:$0xff]
        %v1208 = vld [vmem:[#allocation13 + $0xa0] sm:$0xff]
        %v1209 = vld [vmem:[#allocation13 + $0xa8] sm:$0xff]
        %v1210 = vld [vmem:[#allocation13 + $0xb0] sm:$0xff]
        %v1211 = vld [vmem:[#allocation13 + $0xb8] sm:$0xff]
        %v1212 = vld [vmem:[#allocation13 + $0xc0] sm:$0xff]
        %v1213 = vld [vmem:[#allocation13 + $0xc8] sm:$0xff]
        %v1214 = vld [vmem:[#allocation13 + $0xd0] sm:$0xff]
        %v1215 = vld [vmem:[#allocation13 + $0xd8] sm:$0xff]
        %v1216 = vld [vmem:[#allocation13 + $0xe0] sm:$0xff]
        %v1217 = vld [vmem:[#allocation13 + $0xe8] sm:$0xff]
        %v1218 = vld [vmem:[#allocation13 + $0xf0] sm:$0xff]
        %v1219 = vld [vmem:[#allocation13 + $0xf8] sm:$0xff]
        %v1220 = vld [vmem:[#allocation13 + $0x100] sm:$0xff]
        %v1221 = vld [vmem:[#allocation13 + $0x108] sm:$0xff]
        %v1222 = vld [vmem:[#allocation13 + $0x110] sm:$0xff]
        %v1223 = vld [vmem:[#allocation13 + $0x118] sm:$0xff]
        %v1224 = vld [vmem:[#allocation13 + $0x120] sm:$0xff]
        %v1225 = vld [vmem:[#allocation13 + $0x128] sm:$0xff]
        %v1226 = vld [vmem:[#allocation13 + $0x130] sm:$0xff]
        %v1227 = vld [vmem:[#allocation13 + $0x138] sm:$0xff]
        %v1228 = vld [vmem:[#allocation13 + $0x140] sm:$0xff]
        %v1229 = vld [vmem:[#allocation13 + $0x148] sm:$0xff]
        %v1230 = vld [vmem:[#allocation13 + $0x150] sm:$0xff]
        %v1231 = vld [vmem:[#allocation13 + $0x158] sm:$0xff]
        %v1232 = vld [vmem:[#allocation13 + $0x160] sm:$0xff]
        %v1233 = vld [vmem:[#allocation13 + $0x168] sm:$0xff]
        %v1234 = vld [vmem:[#allocation13 + $0x170] sm:$0xff]
        %v1235 = vld [vmem:[#allocation13 + $0x178] sm:$0xff]
        %v1236 = vld [vmem:[%s7] sm:$0x7]
        %v1238 = vperm.slane %v1236, 0
        %v1239 = vperm.slane %v1236, 1
        %v1240 = vperm.slane %v1236, 2
        %1244 = vmatpush.msra.mxu0 %v1233
        %1245 = vmatpush.msra.mxu0 %v1230
        %1246 = vmatpush.msra.mxu0 %v1227
        %1247 = vmatpush.msra.mxu0 %v1224
        %1248 = vmatpush.msra.mxu0 %v1221
        %1249 = vmatpush.msra.mxu0 %v1218
        %1250 = vmatpush.msra.mxu0 %v1215
        %1251 = vmatpush.msra.mxu0 %v1212
        %1252 = vmatpush.msra.mxu0 %v1209
        %1253 = vmatpush.msra.mxu0 %v1206
        %1254 = vmatpush.msra.mxu0 %v1203
        %1255 = vmatpush.msra.mxu0 %v1200
        %1256 = vmatpush.msra.mxu0 %v1197
        %1257 = vmatpush.msra.mxu0 %v1194
        %1258 = vmatpush.msra.mxu0 %v1191
        %1259 = vmatpush.msra.mxu0 %v1188
        %1260 = vmatmul.f32.gmra.mxu0 %v1187
        %v1261 = vpop.f32.mrf.mxu0
        %v1262 = vadd.f32 %v1238, %v1261
        %1263 = vdwg.mxu0
        %1264 = vmatpush.msra.mxu0 %v1234
        %1265 = vmatpush.msra.mxu0 %v1231
        %1266 = vmatpush.msra.mxu0 %v1228
        %1267 = vmatpush.msra.mxu0 %v1225
        %1268 = vmatpush.msra.mxu0 %v1222
        %1269 = vmatpush.msra.mxu0 %v1219
        %1270 = vmatpush.msra.mxu0 %v1216
        %1271 = vmatpush.msra.mxu0 %v1213
        %1272 = vmatpush.msra.mxu0 %v1210
        %1273 = vmatpush.msra.mxu0 %v1207
        %1274 = vmatpush.msra.mxu0 %v1204
        %1275 = vmatpush.msra.mxu0 %v1201
        %1276 = vmatpush.msra.mxu0 %v1198
        %1277 = vmatpush.msra.mxu0 %v1195
        %1278 = vmatpush.msra.mxu0 %v1192
        %1279 = vmatpush.msra.mxu0 %v1189
        %1280 = vmatmul.f32.gmra.mxu0 %v1187
        %v1281 = vpop.f32.mrf.mxu0
        %v1282 = vadd.f32 %v1239, %v1281
        %1283 = vdwg.mxu0
        %1284 = vmatpush.msra.mxu0 %v1235
        %1285 = vmatpush.msra.mxu0 %v1232
        %1286 = vmatpush.msra.mxu0 %v1229
        %1287 = vmatpush.msra.mxu0 %v1226
        %1288 = vmatpush.msra.mxu0 %v1223
        %1289 = vmatpush.msra.mxu0 %v1220
        %1290 = vmatpush.msra.mxu0 %v1217
        %1291 = vmatpush.msra.mxu0 %v1214
        %1292 = vmatpush.msra.mxu0 %v1211
        %1293 = vmatpush.msra.mxu0 %v1208
        %1294 = vmatpush.msra.mxu0 %v1205
        %1295 = vmatpush.msra.mxu0 %v1202
        %1296 = vmatpush.msra.mxu0 %v1199
        %1297 = vmatpush.msra.mxu0 %v1196
        %1298 = vmatpush.msra.mxu0 %v1193
        %1299 = vmatpush.msra.mxu0 %v1190
        %1300 = vmatmul.f32.gmra.mxu0 %v1187
        %v1301 = vpop.f32.mrf.mxu0
        %v1302 = vadd.f32 %v1240, %v1301
        %1303 = vdwg.mxu0
        %1305 = vrot.lane.b32.xlu0 %v1262, 112
        %v1306 = vpop.permute.xlu0 %1305
        %1307 = vrot.lane.b32.xlu0 %v1262, 96
        %v1308 = vpop.permute.xlu0 %1307
        %1309 = vrot.lane.b32.xlu0 %v1262, 80
        %v1310 = vpop.permute.xlu0 %1309
        %1311 = vrot.lane.b32.xlu0 %v1262, 64
        %v1312 = vpop.permute.xlu0 %1311
        %1313 = vrot.lane.b32.xlu0 %v1262, 48
        %v1314 = vpop.permute.xlu0 %1313
        %1315 = vrot.lane.b32.xlu0 %v1262, 32
        %v1316 = vpop.permute.xlu0 %1315
        %1317 = vrot.lane.b32.xlu0 %v1262, 16
        %v1318 = vpop.permute.xlu0 %1317
        %1320 = vrot.lane.b32.xlu0 %v1282, 112
        %v1321 = vpop.permute.xlu0 %1320
        %1323 = vrot.lane.b32.xlu0 %v1282, 96
        %v1324 = vpop.permute.xlu0 %1323
        %1326 = vrot.lane.b32.xlu0 %v1282, 80
        %v1327 = vpop.permute.xlu0 %1326
        %1329 = vrot.lane.b32.xlu0 %v1282, 64
        %v1330 = vpop.permute.xlu0 %1329
        %1332 = vrot.lane.b32.xlu0 %v1282, 48
        %v1333 = vpop.permute.xlu0 %1332
        %1335 = vrot.lane.b32.xlu0 %v1282, 32
        %v1336 = vpop.permute.xlu0 %1335
        %1338 = vrot.lane.b32.xlu0 %v1282, 16
        %v1339 = vpop.permute.xlu0 %1338
        %1342 = vrot.lane.b32.xlu0 %v1302, 112
        %v1343 = vpop.permute.xlu0 %1342
        %1345 = vrot.lane.b32.xlu0 %v1302, 96
        %v1346 = vpop.permute.xlu0 %1345
        %1348 = vrot.lane.b32.xlu0 %v1302, 80
        %v1349 = vpop.permute.xlu0 %1348
        %1351 = vrot.lane.b32.xlu0 %v1302, 64
        %v1352 = vpop.permute.xlu0 %1351
        %1354 = vrot.lane.b32.xlu0 %v1302, 48
        %v1355 = vpop.permute.xlu0 %1354
        %1357 = vrot.lane.b32.xlu0 %v1302, 32
        %v1358 = vpop.permute.xlu0 %1357
        %1360 = vrot.lane.b32.xlu0 %v1302, 16
        %v1361 = vpop.permute.xlu0 %1360
        %1363 = vxpose.xlu0.b32.start [1/16] %v1282, 128
        %1364 = vxpose.xlu0.b32.cont [2/16] 0.0, 128
        %1365 = vxpose.xlu0.b32.cont [3/16] 0.0, 128
        %1366 = vxpose.xlu0.b32.cont [4/16] 0.0, 128
        %1367 = vxpose.xlu0.b32.cont [5/16] 0.0, 128
        %1368 = vxpose.xlu0.b32.cont [6/16] 0.0, 128
        %1369 = vxpose.xlu0.b32.cont [7/16] 0.0, 128
        %1370 = vxpose.xlu0.b32.cont [8/16] 0.0, 128
        %1371 = vxpose.xlu0.b32.cont [9/16] 0.0, 128
        %1372 = vxpose.xlu0.b32.cont [10/16] 0.0, 128
        %1373 = vxpose.xlu0.b32.cont [11/16] 0.0, 128
        %1374 = vxpose.xlu0.b32.cont [12/16] 0.0, 128
        %1375 = vxpose.xlu0.b32.cont [13/16] 0.0, 128
        %1376 = vxpose.xlu0.b32.cont [14/16] 0.0, 128
        %1377 = vxpose.xlu0.b32.cont [15/16] 0.0, 128
        %1378 = vxpose.xlu0.b32.end [16/16] 0.0, 128
        %v1379 = vpop.trf.xlu0
        %v1380 = vpop.trf.xlu0
        %v1381 = vpop.trf.xlu0
        %v1382 = vpop.trf.xlu0
        %v1383 = vpop.trf.xlu0
        %v1384 = vpop.trf.xlu0
        %v1385 = vpop.trf.xlu0
        %v1386 = vpop.trf.xlu0
        %v1387 = vpop.trf.xlu0
        %v1388 = vpop.trf.xlu0
        %v1389 = vpop.trf.xlu0
        %v1390 = vpop.trf.xlu0
        %v1391 = vpop.trf.xlu0
        %v1392 = vpop.trf.xlu0
        %v1393 = vpop.trf.xlu0
        %v1394 = vpop.trf.xlu0
        %1395 = vxpose.xlu0.b32.start [1/16] %v1321, 128
        %1396 = vxpose.xlu0.b32.cont [2/16] 0.0, 128
        %1397 = vxpose.xlu0.b32.cont [3/16] 0.0, 128
        %1398 = vxpose.xlu0.b32.cont [4/16] 0.0, 128
        %1399 = vxpose.xlu0.b32.cont [5/16] 0.0, 128
        %1400 = vxpose.xlu0.b32.cont [6/16] 0.0, 128
        %1401 = vxpose.xlu0.b32.cont [7/16] 0.0, 128
        %1402 = vxpose.xlu0.b32.cont [8/16] 0.0, 128
        %1403 = vxpose.xlu0.b32.cont [9/16] 0.0, 128
        %1404 = vxpose.xlu0.b32.cont [10/16] 0.0, 128
        %1405 = vxpose.xlu0.b32.cont [11/16] 0.0, 128
        %1406 = vxpose.xlu0.b32.cont [12/16] 0.0, 128
        %1407 = vxpose.xlu0.b32.cont [13/16] 0.0, 128
        %1408 = vxpose.xlu0.b32.cont [14/16] 0.0, 128
        %1409 = vxpose.xlu0.b32.cont [15/16] 0.0, 128
        %1410 = vxpose.xlu0.b32.end [16/16] 0.0, 128
        %v1411 = vpop.trf.xlu0
        %v1412 = vpop.trf.xlu0
        %v1413 = vpop.trf.xlu0
        %v1414 = vpop.trf.xlu0
        %v1415 = vpop.trf.xlu0
        %v1416 = vpop.trf.xlu0
        %v1417 = vpop.trf.xlu0
        %v1418 = vpop.trf.xlu0
        %v1419 = vpop.trf.xlu0
        %v1420 = vpop.trf.xlu0
        %v1421 = vpop.trf.xlu0
        %v1422 = vpop.trf.xlu0
        %v1423 = vpop.trf.xlu0
        %v1424 = vpop.trf.xlu0
        %v1425 = vpop.trf.xlu0
        %v1426 = vpop.trf.xlu0
        %1427 = vxpose.xlu0.b32.start [1/16] %v1324, 128
        %1428 = vxpose.xlu0.b32.cont [2/16] 0.0, 128
        %1429 = vxpose.xlu0.b32.cont [3/16] 0.0, 128
        %1430 = vxpose.xlu0.b32.cont [4/16] 0.0, 128
        %1431 = vxpose.xlu0.b32.cont [5/16] 0.0, 128
        %1432 = vxpose.xlu0.b32.cont [6/16] 0.0, 128
        %1433 = vxpose.xlu0.b32.cont [7/16] 0.0, 128
        %1434 = vxpose.xlu0.b32.cont [8/16] 0.0, 128
        %1435 = vxpose.xlu0.b32.cont [9/16] 0.0, 128
        %1436 = vxpose.xlu0.b32.cont [10/16] 0.0, 128
        %1437 = vxpose.xlu0.b32.cont [11/16] 0.0, 128
        %1438 = vxpose.xlu0.b32.cont [12/16] 0.0, 128
        %1439 = vxpose.xlu0.b32.cont [13/16] 0.0, 128
        %1440 = vxpose.xlu0.b32.cont [14/16] 0.0, 128
        %1441 = vxpose.xlu0.b32.cont [15/16] 0.0, 128
        %1442 = vxpose.xlu0.b32.end [16/16] 0.0, 128
        %v1443 = vpop.trf.xlu0
        %v1444 = vpop.trf.xlu0
        %v1445 = vpop.trf.xlu0
        %v1446 = vpop.trf.xlu0
        %v1447 = vpop.trf.xlu0
        %v1448 = vpop.trf.xlu0
        %v1449 = vpop.trf.xlu0
        %v1450 = vpop.trf.xlu0
        %v1451 = vpop.trf.xlu0
        %v1452 = vpop.trf.xlu0
        %v1453 = vpop.trf.xlu0
        %v1454 = vpop.trf.xlu0
        %v1455 = vpop.trf.xlu0
        %v1456 = vpop.trf.xlu0
        %v1457 = vpop.trf.xlu0
        %v1458 = vpop.trf.xlu0
        %1459 = vxpose.xlu0.b32.start [1/16] %v1327, 128
        %1460 = vxpose.xlu0.b32.cont [2/16] 0.0, 128
        %1461 = vxpose.xlu0.b32.cont [3/16] 0.0, 128
        %1462 = vxpose.xlu0.b32.cont [4/16] 0.0, 128
        %1463 = vxpose.xlu0.b32.cont [5/16] 0.0, 128
        %1464 = vxpose.xlu0.b32.cont [6/16] 0.0, 128
        %1465 = vxpose.xlu0.b32.cont [7/16] 0.0, 128
        %1466 = vxpose.xlu0.b32.cont [8/16] 0.0, 128
        %1467 = vxpose.xlu0.b32.cont [9/16] 0.0, 128
        %1468 = vxpose.xlu0.b32.cont [10/16] 0.0, 128
        %1469 = vxpose.xlu0.b32.cont [11/16] 0.0, 128
        %1470 = vxpose.xlu0.b32.cont [12/16] 0.0, 128
        %1471 = vxpose.xlu0.b32.cont [13/16] 0.0, 128
        %1472 = vxpose.xlu0.b32.cont [14/16] 0.0, 128
        %1473 = vxpose.xlu0.b32.cont [15/16] 0.0, 128
        %1474 = vxpose.xlu0.b32.end [16/16] 0.0, 128
        %v1475 = vpop.trf.xlu0
        %v1476 = vpop.trf.xlu0
        %v1477 = vpop.trf.xlu0
        %v1478 = vpop.trf.xlu0
        %v1479 = vpop.trf.xlu0
        %v1480 = vpop.trf.xlu0
        %v1481 = vpop.trf.xlu0
        %v1482 = vpop.trf.xlu0
        %v1483 = vpop.trf.xlu0
        %v1484 = vpop.trf.xlu0
        %v1485 = vpop.trf.xlu0
        %v1486 = vpop.trf.xlu0
        %v1487 = vpop.trf.xlu0
        %v1488 = vpop.trf.xlu0
        %v1489 = vpop.trf.xlu0
        %v1490 = vpop.trf.xlu0
        %1491 = vxpose.xlu0.b32.start [1/16] %v1330, 128
        %1492 = vxpose.xlu0.b32.cont [2/16] 0.0, 128
        %1493 = vxpose.xlu0.b32.cont [3/16] 0.0, 128
        %1494 = vxpose.xlu0.b32.cont [4/16] 0.0, 128
        %1495 = vxpose.xlu0.b32.cont [5/16] 0.0, 128
        %1496 = vxpose.xlu0.b32.cont [6/16] 0.0, 128
        %1497 = vxpose.xlu0.b32.cont [7/16] 0.0, 128
        %1498 = vxpose.xlu0.b32.cont [8/16] 0.0, 128
        %1499 = vxpose.xlu0.b32.cont [9/16] 0.0, 128
        %1500 = vxpose.xlu0.b32.cont [10/16] 0.0, 128
        %1501 = vxpose.xlu0.b32.cont [11/16] 0.0, 128
        %1502 = vxpose.xlu0.b32.cont [12/16] 0.0, 128
        %1503 = vxpose.xlu0.b32.cont [13/16] 0.0, 128
        %1504 = vxpose.xlu0.b32.cont [14/16] 0.0, 128
        %1505 = vxpose.xlu0.b32.cont [15/16] 0.0, 128
        %1506 = vxpose.xlu0.b32.end [16/16] 0.0, 128
        %v1507 = vpop.trf.xlu0
        %v1508 = vpop.trf.xlu0
        %v1509 = vpop.trf.xlu0
        %v1510 = vpop.trf.xlu0
        %v1511 = vpop.trf.xlu0
        %v1512 = vpop.trf.xlu0
        %v1513 = vpop.trf.xlu0
        %v1514 = vpop.trf.xlu0
        %v1515 = vpop.trf.xlu0
        %v1516 = vpop.trf.xlu0
        %v1517 = vpop.trf.xlu0
        %v1518 = vpop.trf.xlu0
        %v1519 = vpop.trf.xlu0
        %v1520 = vpop.trf.xlu0
        %v1521 = vpop.trf.xlu0
        %v1522 = vpop.trf.xlu0
        %1523 = vxpose.xlu0.b32.start [1/16] %v1333, 128
        %1524 = vxpose.xlu0.b32.cont [2/16] 0.0, 128
        %1525 = vxpose.xlu0.b32.cont [3/16] 0.0, 128
        %1526 = vxpose.xlu0.b32.cont [4/16] 0.0, 128
        %1527 = vxpose.xlu0.b32.cont [5/16] 0.0, 128
        %1528 = vxpose.xlu0.b32.cont [6/16] 0.0, 128
        %1529 = vxpose.xlu0.b32.cont [7/16] 0.0, 128
        %1530 = vxpose.xlu0.b32.cont [8/16] 0.0, 128
        %1531 = vxpose.xlu0.b32.cont [9/16] 0.0, 128
        %1532 = vxpose.xlu0.b32.cont [10/16] 0.0, 128
        %1533 = vxpose.xlu0.b32.cont [11/16] 0.0, 128
        %1534 = vxpose.xlu0.b32.cont [12/16] 0.0, 128
        %1535 = vxpose.xlu0.b32.cont [13/16] 0.0, 128
        %1536 = vxpose.xlu0.b32.cont [14/16] 0.0, 128
        %1537 = vxpose.xlu0.b32.cont [15/16] 0.0, 128
        %1538 = vxpose.xlu0.b32.end [16/16] 0.0, 128
        %v1539 = vpop.trf.xlu0
        %v1540 = vpop.trf.xlu0
        %v1541 = vpop.trf.xlu0
        %v1542 = vpop.trf.xlu0
        %v1543 = vpop.trf.xlu0
        %v1544 = vpop.trf.xlu0
        %v1545 = vpop.trf.xlu0
        %v1546 = vpop.trf.xlu0
        %v1547 = vpop.trf.xlu0
        %v1548 = vpop.trf.xlu0
        %v1549 = vpop.trf.xlu0
        %v1550 = vpop.trf.xlu0
        %v1551 = vpop.trf.xlu0
        %v1552 = vpop.trf.xlu0
        %v1553 = vpop.trf.xlu0
        %v1554 = vpop.trf.xlu0
        %1555 = vxpose.xlu0.b32.start [1/16] %v1336, 128
        %1556 = vxpose.xlu0.b32.cont [2/16] 0.0, 128
        %1557 = vxpose.xlu0.b32.cont [3/16] 0.0, 128
        %1558 = vxpose.xlu0.b32.cont [4/16] 0.0, 128
        %1559 = vxpose.xlu0.b32.cont [5/16] 0.0, 128
        %1560 = vxpose.xlu0.b32.cont [6/16] 0.0, 128
        %1561 = vxpose.xlu0.b32.cont [7/16] 0.0, 128
        %1562 = vxpose.xlu0.b32.cont [8/16] 0.0, 128
        %1563 = vxpose.xlu0.b32.cont [9/16] 0.0, 128
        %1564 = vxpose.xlu0.b32.cont [10/16] 0.0, 128
        %1565 = vxpose.xlu0.b32.cont [11/16] 0.0, 128
        %1566 = vxpose.xlu0.b32.cont [12/16] 0.0, 128
        %1567 = vxpose.xlu0.b32.cont [13/16] 0.0, 128
        %1568 = vxpose.xlu0.b32.cont [14/16] 0.0, 128
        %1569 = vxpose.xlu0.b32.cont [15/16] 0.0, 128
        %1570 = vxpose.xlu0.b32.end [16/16] 0.0, 128
        %v1571 = vpop.trf.xlu0
        %v1572 = vpop.trf.xlu0
        %v1573 = vpop.trf.xlu0
        %v1574 = vpop.trf.xlu0
        %v1575 = vpop.trf.xlu0
        %v1576 = vpop.trf.xlu0
        %v1577 = vpop.trf.xlu0
        %v1578 = vpop.trf.xlu0
        %v1579 = vpop.trf.xlu0
        %v1580 = vpop.trf.xlu0
        %v1581 = vpop.trf.xlu0
        %v1582 = vpop.trf.xlu0
        %v1583 = vpop.trf.xlu0
        %v1584 = vpop.trf.xlu0
        %v1585 = vpop.trf.xlu0
        %v1586 = vpop.trf.xlu0
        %1587 = vxpose.xlu0.b32.start [1/16] %v1339, 128
        %1588 = vxpose.xlu0.b32.cont [2/16] 0.0, 128
        %1589 = vxpose.xlu0.b32.cont [3/16] 0.0, 128
        %1590 = vxpose.xlu0.b32.cont [4/16] 0.0, 128
        %1591 = vxpose.xlu0.b32.cont [5/16] 0.0, 128
        %1592 = vxpose.xlu0.b32.cont [6/16] 0.0, 128
        %1593 = vxpose.xlu0.b32.cont [7/16] 0.0, 128
        %1594 = vxpose.xlu0.b32.cont [8/16] 0.0, 128
        %1595 = vxpose.xlu0.b32.cont [9/16] 0.0, 128
        %1596 = vxpose.xlu0.b32.cont [10/16] 0.0, 128
        %1597 = vxpose.xlu0.b32.cont [11/16] 0.0, 128
        %1598 = vxpose.xlu0.b32.cont [12/16] 0.0, 128
        %1599 = vxpose.xlu0.b32.cont [13/16] 0.0, 128
        %1600 = vxpose.xlu0.b32.cont [14/16] 0.0, 128
        %1601 = vxpose.xlu0.b32.cont [15/16] 0.0, 128
        %1602 = vxpose.xlu0.b32.end [16/16] 0.0, 128
        %v1603 = vpop.trf.xlu0
        %v1604 = vpop.trf.xlu0
        %v1605 = vpop.trf.xlu0
        %v1606 = vpop.trf.xlu0
        %v1607 = vpop.trf.xlu0
        %v1608 = vpop.trf.xlu0
        %v1609 = vpop.trf.xlu0
        %v1610 = vpop.trf.xlu0
        %v1611 = vpop.trf.xlu0
        %v1612 = vpop.trf.xlu0
        %v1613 = vpop.trf.xlu0
        %v1614 = vpop.trf.xlu0
        %v1615 = vpop.trf.xlu0
        %v1616 = vpop.trf.xlu0
        %v1617 = vpop.trf.xlu0
        %v1618 = vpop.trf.xlu0
        %vm1619 = vcmask 130048
        %v1620 = vsel %vm1619, %v1262, 0
        %1622 = vmatpush.msra.mxu0 0.0
        %1623 = vmatpush.msra.mxu0 0.0
        %1624 = vmatpush.msra.mxu0 0.0
        %1625 = vmatpush.msra.mxu0 0.0
        %1626 = vmatpush.msra.mxu0 0.0
        %1627 = vmatpush.msra.mxu0 0.0
        %1628 = vmatpush.msra.mxu0 0.0
        %1629 = vmatpush.msra.mxu0 0.0
        %1630 = vmatpush.msra.mxu0 0.0
        %1631 = vmatpush.msra.mxu0 0.0
        %1632 = vmatpush.msra.mxu0 0.0
        %1633 = vmatpush.msra.mxu0 0.0
        %1634 = vmatpush.msra.mxu0 0.0
        %1635 = vmatpush.msra.mxu0 0.0
        %1636 = vmatpush.msra.mxu0 %v1380
        %1637 = vmatpush.msra.mxu0 %v1379
        %1638 = vmatmul.f32.gmra.mxu0 %v1620
        %v1639 = vpop.f32.mrf.mxu0
        %v1640 = vadd.f32 0.0, %v1639
        %1641 = vdwg.mxu0
        %v1642 = vsel %vm1619, %v1306, 0
        %1644 = vmatpush.msra.mxu0 0.0
        %1645 = vmatpush.msra.mxu0 0.0
        %1646 = vmatpush.msra.mxu0 0.0
        %1647 = vmatpush.msra.mxu0 0.0
        %1648 = vmatpush.msra.mxu0 0.0
        %1649 = vmatpush.msra.mxu0 0.0
        %1650 = vmatpush.msra.mxu0 0.0
        %1651 = vmatpush.msra.mxu0 0.0
        %1652 = vmatpush.msra.mxu0 0.0
        %1653 = vmatpush.msra.mxu0 0.0
        %1654 = vmatpush.msra.mxu0 0.0
        %1655 = vmatpush.msra.mxu0 0.0
        %1656 = vmatpush.msra.mxu0 0.0
        %1657 = vmatpush.msra.mxu0 0.0
        %1658 = vmatpush.msra.mxu0 %v1412
        %1659 = vmatpush.msra.mxu0 %v1411
        %1660 = vmatmul.f32.gmra.mxu0 %v1642
        %v1661 = vpop.f32.mrf.mxu0
        %v1662 = vadd.f32 0.0, %v1661
        %1663 = vdwg.mxu0
        %v1664 = vsel %vm1619, %v1308, 0
        %1666 = vmatpush.msra.mxu0 0.0
        %1667 = vmatpush.msra.mxu0 0.0
        %1668 = vmatpush.msra.mxu0 0.0
        %1669 = vmatpush.msra.mxu0 0.0
        %1670 = vmatpush.msra.mxu0 0.0
        %1671 = vmatpush.msra.mxu0 0.0
        %1672 = vmatpush.msra.mxu0 0.0
        %1673 = vmatpush.msra.mxu0 0.0
        %1674 = vmatpush.msra.mxu0 0.0
        %1675 = vmatpush.msra.mxu0 0.0
        %1676 = vmatpush.msra.mxu0 0.0
        %1677 = vmatpush.msra.mxu0 0.0
        %1678 = vmatpush.msra.mxu0 0.0
        %1679 = vmatpush.msra.mxu0 0.0
        %1680 = vmatpush.msra.mxu0 %v1444
        %1681 = vmatpush.msra.mxu0 %v1443
        %1682 = vmatmul.f32.gmra.mxu0 %v1664
        %v1683 = vpop.f32.mrf.mxu0
        %v1684 = vadd.f32 0.0, %v1683
        %1685 = vdwg.mxu0
        %v1686 = vsel %vm1619, %v1310, 0
        %1688 = vmatpush.msra.mxu0 0.0
        %1689 = vmatpush.msra.mxu0 0.0
        %1690 = vmatpush.msra.mxu0 0.0
        %1691 = vmatpush.msra.mxu0 0.0
        %1692 = vmatpush.msra.mxu0 0.0
        %1693 = vmatpush.msra.mxu0 0.0
        %1694 = vmatpush.msra.mxu0 0.0
        %1695 = vmatpush.msra.mxu0 0.0
        %1696 = vmatpush.msra.mxu0 0.0
        %1697 = vmatpush.msra.mxu0 0.0
        %1698 = vmatpush.msra.mxu0 0.0
        %1699 = vmatpush.msra.mxu0 0.0
        %1700 = vmatpush.msra.mxu0 0.0
        %1701 = vmatpush.msra.mxu0 0.0
        %1702 = vmatpush.msra.mxu0 %v1476
        %1703 = vmatpush.msra.mxu0 %v1475
        %1704 = vmatmul.f32.gmra.mxu0 %v1686
        %v1705 = vpop.f32.mrf.mxu0
        %v1706 = vadd.f32 0.0, %v1705
        %1707 = vdwg.mxu0
        %v1708 = vsel %vm1619, %v1312, 0
        %1710 = vmatpush.msra.mxu0 0.0
        %1711 = vmatpush.msra.mxu0 0.0
        %1712 = vmatpush.msra.mxu0 0.0
        %1713 = vmatpush.msra.mxu0 0.0
        %1714 = vmatpush.msra.mxu0 0.0
        %1715 = vmatpush.msra.mxu0 0.0
        %1716 = vmatpush.msra.mxu0 0.0
        %1717 = vmatpush.msra.mxu0 0.0
        %1718 = vmatpush.msra.mxu0 0.0
        %1719 = vmatpush.msra.mxu0 0.0
        %1720 = vmatpush.msra.mxu0 0.0
        %1721 = vmatpush.msra.mxu0 0.0
        %1722 = vmatpush.msra.mxu0 0.0
        %1723 = vmatpush.msra.mxu0 0.0
        %1724 = vmatpush.msra.mxu0 %v1508
        %1725 = vmatpush.msra.mxu0 %v1507
        %1726 = vmatmul.f32.gmra.mxu0 %v1708
        %v1727 = vpop.f32.mrf.mxu0
        %v1728 = vadd.f32 0.0, %v1727
        %1729 = vdwg.mxu0
        %v1730 = vsel %vm1619, %v1314, 0
        %1732 = vmatpush.msra.mxu0 0.0
        %1733 = vmatpush.msra.mxu0 0.0
        %1734 = vmatpush.msra.mxu0 0.0
        %1735 = vmatpush.msra.mxu0 0.0
        %1736 = vmatpush.msra.mxu0 0.0
        %1737 = vmatpush.msra.mxu0 0.0
        %1738 = vmatpush.msra.mxu0 0.0
        %1739 = vmatpush.msra.mxu0 0.0
        %1740 = vmatpush.msra.mxu0 0.0
        %1741 = vmatpush.msra.mxu0 0.0
        %1742 = vmatpush.msra.mxu0 0.0
        %1743 = vmatpush.msra.mxu0 0.0
        %1744 = vmatpush.msra.mxu0 0.0
        %1745 = vmatpush.msra.mxu0 0.0
        %1746 = vmatpush.msra.mxu0 %v1540
        %1747 = vmatpush.msra.mxu0 %v1539
        %1748 = vmatmul.f32.gmra.mxu0 %v1730
        %v1749 = vpop.f32.mrf.mxu0
        %v1750 = vadd.f32 0.0, %v1749
        %1751 = vdwg.mxu0
        %v1752 = vsel %vm1619, %v1316, 0
        %1754 = vmatpush.msra.mxu0 0.0
        %1755 = vmatpush.msra.mxu0 0.0
        %1756 = vmatpush.msra.mxu0 0.0
        %1757 = vmatpush.msra.mxu0 0.0
        %1758 = vmatpush.msra.mxu0 0.0
        %1759 = vmatpush.msra.mxu0 0.0
        %1760 = vmatpush.msra.mxu0 0.0
        %1761 = vmatpush.msra.mxu0 0.0
        %1762 = vmatpush.msra.mxu0 0.0
        %1763 = vmatpush.msra.mxu0 0.0
        %1764 = vmatpush.msra.mxu0 0.0
        %1765 = vmatpush.msra.mxu0 0.0
        %1766 = vmatpush.msra.mxu0 0.0
        %1767 = vmatpush.msra.mxu0 0.0
        %1768 = vmatpush.msra.mxu0 %v1572
        %1769 = vmatpush.msra.mxu0 %v1571
        %1770 = vmatmul.f32.gmra.mxu0 %v1752
        %v1771 = vpop.f32.mrf.mxu0
        %v1772 = vadd.f32 0.0, %v1771
        %1773 = vdwg.mxu0
        %v1774 = vsel %vm1619, %v1318, 0
        %1776 = vmatpush.msra.mxu0 0.0
        %1777 = vmatpush.msra.mxu0 0.0
        %1778 = vmatpush.msra.mxu0 0.0
        %1779 = vmatpush.msra.mxu0 0.0
        %1780 = vmatpush.msra.mxu0 0.0
        %1781 = vmatpush.msra.mxu0 0.0
        %1782 = vmatpush.msra.mxu0 0.0
        %1783 = vmatpush.msra.mxu0 0.0
        %1784 = vmatpush.msra.mxu0 0.0
        %1785 = vmatpush.msra.mxu0 0.0
        %1786 = vmatpush.msra.mxu0 0.0
        %1787 = vmatpush.msra.mxu0 0.0
        %1788 = vmatpush.msra.mxu0 0.0
        %1789 = vmatpush.msra.mxu0 0.0
        %1790 = vmatpush.msra.mxu0 %v1604
        %1791 = vmatpush.msra.mxu0 %v1603
        %1792 = vmatmul.f32.gmra.mxu0 %v1774
        %v1793 = vpop.f32.mrf.mxu0
        %v1794 = vadd.f32 0.0, %v1793
        %1795 = vdwg.mxu0
        %v1796 = vmul.f32 %v1640, 0.25
        %v1797 = vmul.f32 %v1662, 0.25
        %v1798 = vmul.f32 %v1684, 0.25
        %v1799 = vmul.f32 %v1706, 0.25
        %v1800 = vmul.f32 %v1728, 0.25
        %v1801 = vmul.f32 %v1750, 0.25
        %v1802 = vmul.f32 %v1772, 0.25
        %v1803 = vmul.f32 %v1794, 0.25
        %vm1804 = vcmask 64512
        %v1805 = vsel %vm1804, %v1796, -inf
        %1806 = vmax.xlane.f32.xlu0 %v1805
        %v1807 = vpop.xlane.xlu0 %1806
        %v1808 = vsel %vm1804, %v1797, -inf
        %1809 = vmax.xlane.f32.xlu0 %v1808
        %v1810 = vpop.xlane.xlu0 %1809
        %v1811 = vsel %vm1804, %v1798, -inf
        %1812 = vmax.xlane.f32.xlu0 %v1811
        %v1813 = vpop.xlane.xlu0 %1812
        %v1814 = vsel %vm1804, %v1799, -inf
        %1815 = vmax.xlane.f32.xlu0 %v1814
        %v1816 = vpop.xlane.xlu0 %1815
        %v1817 = vsel %vm1804, %v1800, -inf
        %1818 = vmax.xlane.f32.xlu0 %v1817
        %v1819 = vpop.xlane.xlu0 %1818
        %v1820 = vsel %vm1804, %v1801, -inf
        %1821 = vmax.xlane.f32.xlu0 %v1820
        %v1822 = vpop.xlane.xlu0 %1821
        %v1823 = vsel %vm1804, %v1802, -inf
        %1824 = vmax.xlane.f32.xlu0 %v1823
        %v1825 = vpop.xlane.xlu0 %1824
        %v1826 = vsel %vm1804, %v1803, -inf
        %1827 = vmax.xlane.f32.xlu0 %v1826
        %v1828 = vpop.xlane.xlu0 %1827
        %v1829 = vsub.f32 %v1796, %v1807
        %v1830 = vsub.f32 %v1797, %v1810
        %v1831 = vsub.f32 %v1798, %v1813
        %v1832 = vsub.f32 %v1799, %v1816
        %v1833 = vsub.f32 %v1800, %v1819
        %v1834 = vsub.f32 %v1801, %v1822
        %v1835 = vsub.f32 %v1802, %v1825
        %v1836 = vsub.f32 %v1803, %v1828
        %v1837 = vmul.f32 %v1829, 1.442695
        %v1838 = vpow.pop %v1837
        %v1839 = vmul.f32 %v1830, 1.442695
        %v1840 = vpow.pop %v1839
        %v1841 = vmul.f32 %v1831, 1.442695
        %v1842 = vpow.pop %v1841
        %v1843 = vmul.f32 %v1832, 1.442695
        %v1844 = vpow.pop %v1843
        %v1845 = vmul.f32 %v1833, 1.442695
        %v1846 = vpow.pop %v1845
        %v1847 = vmul.f32 %v1834, 1.442695
        %v1848 = vpow.pop %v1847
        %v1849 = vmul.f32 %v1835, 1.442695
        %v1850 = vpow.pop %v1849
        %v1851 = vmul.f32 %v1836, 1.442695
        %v1852 = vpow.pop %v1851
        %v1853 = vsel %vm1804, %v1838, 0.0
        %1854 = vadd.xlane.f32.xlu0 %v1853
        %v1855 = vpop.xlane.xlu0 %1854
        %v1856 = vsel %vm1804, %v1840, 0.0
        %1857 = vadd.xlane.f32.xlu0 %v1856
        %v1858 = vpop.xlane.xlu0 %1857
        %v1859 = vsel %vm1804, %v1842, 0.0
        %1860 = vadd.xlane.f32.xlu0 %v1859
        %v1861 = vpop.xlane.xlu0 %1860
        %v1862 = vsel %vm1804, %v1844, 0.0
        %1863 = vadd.xlane.f32.xlu0 %v1862
        %v1864 = vpop.xlane.xlu0 %1863
        %v1865 = vsel %vm1804, %v1846, 0.0
        %1866 = vadd.xlane.f32.xlu0 %v1865
        %v1867 = vpop.xlane.xlu0 %1866
        %v1868 = vsel %vm1804, %v1848, 0.0
        %1869 = vadd.xlane.f32.xlu0 %v1868
        %v1870 = vpop.xlane.xlu0 %1869
        %v1871 = vsel %vm1804, %v1850, 0.0
        %1872 = vadd.xlane.f32.xlu0 %v1871
        %v1873 = vpop.xlane.xlu0 %1872
        %v1874 = vsel %vm1804, %v1852, 0.0
        %1875 = vadd.xlane.f32.xlu0 %v1874
        %v1876 = vpop.xlane.xlu0 %1875
        %v1877 = vrcp.pop %v1855
        %v1878 = vrcp.pop %v1858
        %v1879 = vrcp.pop %v1861
        %v1880 = vrcp.pop %v1864
        %v1881 = vrcp.pop %v1867
        %v1882 = vrcp.pop %v1870
        %v1883 = vrcp.pop %v1873
        %v1884 = vrcp.pop %v1876
        %v1885 = vmul.f32 %v1838, %v1877
        %v1886 = vmul.f32 %v1840, %v1878
        %v1887 = vmul.f32 %v1842, %v1879
        %v1888 = vmul.f32 %v1844, %v1880
        %v1889 = vmul.f32 %v1846, %v1881
        %v1890 = vmul.f32 %v1848, %v1882
        %v1891 = vmul.f32 %v1850, %v1883
        %v1892 = vmul.f32 %v1852, %v1884
        %1893 = vxpose.xlu0.b32.start [1/16] %v1302, 128
        %1894 = vxpose.xlu0.b32.cont [2/16] 0.0, 128
        %1895 = vxpose.xlu0.b32.cont [3/16] 0.0, 128
        %1896 = vxpose.xlu0.b32.cont [4/16] 0.0, 128
        %1897 = vxpose.xlu0.b32.cont [5/16] 0.0, 128
        %1898 = vxpose.xlu0.b32.cont [6/16] 0.0, 128
        %1899 = vxpose.xlu0.b32.cont [7/16] 0.0, 128
        %1900 = vxpose.xlu0.b32.cont [8/16] 0.0, 128
        %1901 = vxpose.xlu0.b32.cont [9/16] 0.0, 128
        %1902 = vxpose.xlu0.b32.cont [10/16] 0.0, 128
        %1903 = vxpose.xlu0.b32.cont [11/16] 0.0, 128
        %1904 = vxpose.xlu0.b32.cont [12/16] 0.0, 128
        %1905 = vxpose.xlu0.b32.cont [13/16] 0.0, 128
        %1906 = vxpose.xlu0.b32.cont [14/16] 0.0, 128
        %1907 = vxpose.xlu0.b32.cont [15/16] 0.0, 128
        %1908 = vxpose.xlu0.b32.end [16/16] 0.0, 128
        %v1909 = vpop.trf.xlu0
        %v1910 = vpop.trf.xlu0
        %v1911 = vpop.trf.xlu0
        %v1912 = vpop.trf.xlu0
        %v1913 = vpop.trf.xlu0
        %v1914 = vpop.trf.xlu0
        %v1915 = vpop.trf.xlu0
        %v1916 = vpop.trf.xlu0
        %v1917 = vpop.trf.xlu0
        %v1918 = vpop.trf.xlu0
        %v1919 = vpop.trf.xlu0
        %v1920 = vpop.trf.xlu0
        %v1921 = vpop.trf.xlu0
        %v1922 = vpop.trf.xlu0
        %v1923 = vpop.trf.xlu0
        %v1924 = vpop.trf.xlu0
        %1925 = vxpose.xlu0.b32.start [1/16] %v1343, 128
        %1926 = vxpose.xlu0.b32.cont [2/16] 0.0, 128
        %1927 = vxpose.xlu0.b32.cont [3/16] 0.0, 128
        %1928 = vxpose.xlu0.b32.cont [4/16] 0.0, 128
        %1929 = vxpose.xlu0.b32.cont [5/16] 0.0, 128
        %1930 = vxpose.xlu0.b32.cont [6/16] 0.0, 128
        %1931 = vxpose.xlu0.b32.cont [7/16] 0.0, 128
        %1932 = vxpose.xlu0.b32.cont [8/16] 0.0, 128
        %1933 = vxpose.xlu0.b32.cont [9/16] 0.0, 128
        %1934 = vxpose.xlu0.b32.cont [10/16] 0.0, 128
        %1935 = vxpose.xlu0.b32.cont [11/16] 0.0, 128
        %1936 = vxpose.xlu0.b32.cont [12/16] 0.0, 128
        %1937 = vxpose.xlu0.b32.cont [13/16] 0.0, 128
        %1938 = vxpose.xlu0.b32.cont [14/16] 0.0, 128
        %1939 = vxpose.xlu0.b32.cont [15/16] 0.0, 128
        %1940 = vxpose.xlu0.b32.end [16/16] 0.0, 128
        %v1941 = vpop.trf.xlu0
        %v1942 = vpop.trf.xlu0
        %v1943 = vpop.trf.xlu0
        %v1944 = vpop.trf.xlu0
        %v1945 = vpop.trf.xlu0
        %v1946 = vpop.trf.xlu0
        %v1947 = vpop.trf.xlu0
        %v1948 = vpop.trf.xlu0
        %v1949 = vpop.trf.xlu0
        %v1950 = vpop.trf.xlu0
        %v1951 = vpop.trf.xlu0
        %v1952 = vpop.trf.xlu0
        %v1953 = vpop.trf.xlu0
        %v1954 = vpop.trf.xlu0
        %v1955 = vpop.trf.xlu0
        %v1956 = vpop.trf.xlu0
        %1957 = vxpose.xlu0.b32.start [1/16] %v1346, 128
        %1958 = vxpose.xlu0.b32.cont [2/16] 0.0, 128
        %1959 = vxpose.xlu0.b32.cont [3/16] 0.0, 128
        %1960 = vxpose.xlu0.b32.cont [4/16] 0.0, 128
        %1961 = vxpose.xlu0.b32.cont [5/16] 0.0, 128
        %1962 = vxpose.xlu0.b32.cont [6/16] 0.0, 128
        %1963 = vxpose.xlu0.b32.cont [7/16] 0.0, 128
        %1964 = vxpose.xlu0.b32.cont [8/16] 0.0, 128
        %1965 = vxpose.xlu0.b32.cont [9/16] 0.0, 128
        %1966 = vxpose.xlu0.b32.cont [10/16] 0.0, 128
        %1967 = vxpose.xlu0.b32.cont [11/16] 0.0, 128
        %1968 = vxpose.xlu0.b32.cont [12/16] 0.0, 128
        %1969 = vxpose.xlu0.b32.cont [13/16] 0.0, 128
        %1970 = vxpose.xlu0.b32.cont [14/16] 0.0, 128
        %1971 = vxpose.xlu0.b32.cont [15/16] 0.0, 128
        %1972 = vxpose.xlu0.b32.end [16/16] 0.0, 128
        %v1973 = vpop.trf.xlu0
        %v1974 = vpop.trf.xlu0
        %v1975 = vpop.trf.xlu0
        %v1976 = vpop.trf.xlu0
        %v1977 = vpop.trf.xlu0
        %v1978 = vpop.trf.xlu0
        %v1979 = vpop.trf.xlu0
        %v1980 = vpop.trf.xlu0
        %v1981 = vpop.trf.xlu0
        %v1982 = vpop.trf.xlu0
        %v1983 = vpop.trf.xlu0
        %v1984 = vpop.trf.xlu0
        %v1985 = vpop.trf.xlu0
        %v1986 = vpop.trf.xlu0
        %v1987 = vpop.trf.xlu0
        %v1988 = vpop.trf.xlu0
        %1989 = vxpose.xlu0.b32.start [1/16] %v1349, 128
        %1990 = vxpose.xlu0.b32.cont [2/16] 0.0, 128
        %1991 = vxpose.xlu0.b32.cont [3/16] 0.0, 128
        %1992 = vxpose.xlu0.b32.cont [4/16] 0.0, 128
        %1993 = vxpose.xlu0.b32.cont [5/16] 0.0, 128
        %1994 = vxpose.xlu0.b32.cont [6/16] 0.0, 128
        %1995 = vxpose.xlu0.b32.cont [7/16] 0.0, 128
        %1996 = vxpose.xlu0.b32.cont [8/16] 0.0, 128
        %1997 = vxpose.xlu0.b32.cont [9/16] 0.0, 128
        %1998 = vxpose.xlu0.b32.cont [10/16] 0.0, 128
        %1999 = vxpose.xlu0.b32.cont [11/16] 0.0, 128
        %2000 = vxpose.xlu0.b32.cont [12/16] 0.0, 128
        %2001 = vxpose.xlu0.b32.cont [13/16] 0.0, 128
        %2002 = vxpose.xlu0.b32.cont [14/16] 0.0, 128
        %2003 = vxpose.xlu0.b32.cont [15/16] 0.0, 128
        %2004 = vxpose.xlu0.b32.end [16/16] 0.0, 128
        %v2005 = vpop.trf.xlu0
        %v2006 = vpop.trf.xlu0
        %v2007 = vpop.trf.xlu0
        %v2008 = vpop.trf.xlu0
        %v2009 = vpop.trf.xlu0
        %v2010 = vpop.trf.xlu0
        %v2011 = vpop.trf.xlu0
        %v2012 = vpop.trf.xlu0
        %v2013 = vpop.trf.xlu0
        %v2014 = vpop.trf.xlu0
        %v2015 = vpop.trf.xlu0
        %v2016 = vpop.trf.xlu0
        %v2017 = vpop.trf.xlu0
        %v2018 = vpop.trf.xlu0
        %v2019 = vpop.trf.xlu0
        %v2020 = vpop.trf.xlu0
        %2021 = vxpose.xlu0.b32.start [1/16] %v1352, 128
        %2022 = vxpose.xlu0.b32.cont [2/16] 0.0, 128
        %2023 = vxpose.xlu0.b32.cont [3/16] 0.0, 128
        %2024 = vxpose.xlu0.b32.cont [4/16] 0.0, 128
        %2025 = vxpose.xlu0.b32.cont [5/16] 0.0, 128
        %2026 = vxpose.xlu0.b32.cont [6/16] 0.0, 128
        %2027 = vxpose.xlu0.b32.cont [7/16] 0.0, 128
        %2028 = vxpose.xlu0.b32.cont [8/16] 0.0, 128
        %2029 = vxpose.xlu0.b32.cont [9/16] 0.0, 128
        %2030 = vxpose.xlu0.b32.cont [10/16] 0.0, 128
        %2031 = vxpose.xlu0.b32.cont [11/16] 0.0, 128
        %2032 = vxpose.xlu0.b32.cont [12/16] 0.0, 128
        %2033 = vxpose.xlu0.b32.cont [13/16] 0.0, 128
        %2034 = vxpose.xlu0.b32.cont [14/16] 0.0, 128
        %2035 = vxpose.xlu0.b32.cont [15/16] 0.0, 128
        %2036 = vxpose.xlu0.b32.end [16/16] 0.0, 128
        %v2037 = vpop.trf.xlu0
        %v2038 = vpop.trf.xlu0
        %v2039 = vpop.trf.xlu0
        %v2040 = vpop.trf.xlu0
        %v2041 = vpop.trf.xlu0
        %v2042 = vpop.trf.xlu0
        %v2043 = vpop.trf.xlu0
        %v2044 = vpop.trf.xlu0
        %v2045 = vpop.trf.xlu0
        %v2046 = vpop.trf.xlu0
        %v2047 = vpop.trf.xlu0
        %v2048 = vpop.trf.xlu0
        %v2049 = vpop.trf.xlu0
        %v2050 = vpop.trf.xlu0
        %v2051 = vpop.trf.xlu0
        %v2052 = vpop.trf.xlu0
        %2053 = vxpose.xlu0.b32.start [1/16] %v1355, 128
        %2054 = vxpose.xlu0.b32.cont [2/16] 0.0, 128
        %2055 = vxpose.xlu0.b32.cont [3/16] 0.0, 128
        %2056 = vxpose.xlu0.b32.cont [4/16] 0.0, 128
        %2057 = vxpose.xlu0.b32.cont [5/16] 0.0, 128
        %2058 = vxpose.xlu0.b32.cont [6/16] 0.0, 128
        %2059 = vxpose.xlu0.b32.cont [7/16] 0.0, 128
        %2060 = vxpose.xlu0.b32.cont [8/16] 0.0, 128
        %2061 = vxpose.xlu0.b32.cont [9/16] 0.0, 128
        %2062 = vxpose.xlu0.b32.cont [10/16] 0.0, 128
        %2063 = vxpose.xlu0.b32.cont [11/16] 0.0, 128
        %2064 = vxpose.xlu0.b32.cont [12/16] 0.0, 128
        %2065 = vxpose.xlu0.b32.cont [13/16] 0.0, 128
        %2066 = vxpose.xlu0.b32.cont [14/16] 0.0, 128
        %2067 = vxpose.xlu0.b32.cont [15/16] 0.0, 128
        %2068 = vxpose.xlu0.b32.end [16/16] 0.0, 128
        %v2069 = vpop.trf.xlu0
        %v2070 = vpop.trf.xlu0
        %v2071 = vpop.trf.xlu0
        %v2072 = vpop.trf.xlu0
        %v2073 = vpop.trf.xlu0
        %v2074 = vpop.trf.xlu0
        %v2075 = vpop.trf.xlu0
        %v2076 = vpop.trf.xlu0
        %v2077 = vpop.trf.xlu0
        %v2078 = vpop.trf.xlu0
        %v2079 = vpop.trf.xlu0
        %v2080 = vpop.trf.xlu0
        %v2081 = vpop.trf.xlu0
        %v2082 = vpop.trf.xlu0
        %v2083 = vpop.trf.xlu0
        %v2084 = vpop.trf.xlu0
        %2085 = vxpose.xlu0.b32.start [1/16] %v1358, 128
        %2086 = vxpose.xlu0.b32.cont [2/16] 0.0, 128
        %2087 = vxpose.xlu0.b32.cont [3/16] 0.0, 128
        %2088 = vxpose.xlu0.b32.cont [4/16] 0.0, 128
        %2089 = vxpose.xlu0.b32.cont [5/16] 0.0, 128
        %2090 = vxpose.xlu0.b32.cont [6/16] 0.0, 128
        %2091 = vxpose.xlu0.b32.cont [7/16] 0.0, 128
        %2092 = vxpose.xlu0.b32.cont [8/16] 0.0, 128
        %2093 = vxpose.xlu0.b32.cont [9/16] 0.0, 128
        %2094 = vxpose.xlu0.b32.cont [10/16] 0.0, 128
        %2095 = vxpose.xlu0.b32.cont [11/16] 0.0, 128
        %2096 = vxpose.xlu0.b32.cont [12/16] 0.0, 128
        %2097 = vxpose.xlu0.b32.cont [13/16] 0.0, 128
        %2098 = vxpose.xlu0.b32.cont [14/16] 0.0, 128
        %2099 = vxpose.xlu0.b32.cont [15/16] 0.0, 128
        %2100 = vxpose.xlu0.b32.end [16/16] 0.0, 128
        %v2101 = vpop.trf.xlu0
        %v2102 = vpop.trf.xlu0
        %v2103 = vpop.trf.xlu0
        %v2104 = vpop.trf.xlu0
        %v2105 = vpop.trf.xlu0
        %v2106 = vpop.trf.xlu0
        %v2107 = vpop.trf.xlu0
        %v2108 = vpop.trf.xlu0
        %v2109 = vpop.trf.xlu0
        %v2110 = vpop.trf.xlu0
        %v2111 = vpop.trf.xlu0
        %v2112 = vpop.trf.xlu0
        %v2113 = vpop.trf.xlu0
        %v2114 = vpop.trf.xlu0
        %v2115 = vpop.trf.xlu0
        %v2116 = vpop.trf.xlu0
        %2117 = vxpose.xlu0.b32.start [1/16] %v1361, 128
        %2118 = vxpose.xlu0.b32.cont [2/16] 0.0, 128
        %2119 = vxpose.xlu0.b32.cont [3/16] 0.0, 128
        %2120 = vxpose.xlu0.b32.cont [4/16] 0.0, 128
        %2121 = vxpose.xlu0.b32.cont [5/16] 0.0, 128
        %2122 = vxpose.xlu0.b32.cont [6/16] 0.0, 128
        %2123 = vxpose.xlu0.b32.cont [7/16] 0.0, 128
        %2124 = vxpose.xlu0.b32.cont [8/16] 0.0, 128
        %2125 = vxpose.xlu0.b32.cont [9/16] 0.0, 128
        %2126 = vxpose.xlu0.b32.cont [10/16] 0.0, 128
        %2127 = vxpose.xlu0.b32.cont [11/16] 0.0, 128
        %2128 = vxpose.xlu0.b32.cont [12/16] 0.0, 128
        %2129 = vxpose.xlu0.b32.cont [13/16] 0.0, 128
        %2130 = vxpose.xlu0.b32.cont [14/16] 0.0, 128
        %2131 = vxpose.xlu0.b32.cont [15/16] 0.0, 128
        %2132 = vxpose.xlu0.b32.end [16/16] 0.0, 128
        %v2133 = vpop.trf.xlu0
        %v2134 = vpop.trf.xlu0
        %v2135 = vpop.trf.xlu0
        %v2136 = vpop.trf.xlu0
        %v2137 = vpop.trf.xlu0
        %v2138 = vpop.trf.xlu0
        %v2139 = vpop.trf.xlu0
        %v2140 = vpop.trf.xlu0
        %v2141 = vpop.trf.xlu0
        %v2142 = vpop.trf.xlu0
        %v2143 = vpop.trf.xlu0
        %v2144 = vpop.trf.xlu0
        %v2145 = vpop.trf.xlu0
        %v2146 = vpop.trf.xlu0
        %v2147 = vpop.trf.xlu0
        %v2148 = vpop.trf.xlu0
        %v2150 = vsel %vm1804, %v1909, 0
        %v2153 = vsel %vm1804, %v1910, 0
        %v2156 = vsel %vm1804, %v1885, 0
        %2158 = vmatpush.xpose.msra.mxu0 0.0
        %2159 = vmatpush.xpose.msra.mxu0 0.0
        %2160 = vmatpush.xpose.msra.mxu0 0.0
        %2161 = vmatpush.xpose.msra.mxu0 0.0
        %2162 = vmatpush.xpose.msra.mxu0 0.0
        %2163 = vmatpush.xpose.msra.mxu0 0.0
        %2164 = vmatpush.xpose.msra.mxu0 0.0
        %2165 = vmatpush.xpose.msra.mxu0 0.0
        %2166 = vmatpush.xpose.msra.mxu0 0.0
        %2167 = vmatpush.xpose.msra.mxu0 0.0
        %2168 = vmatpush.xpose.msra.mxu0 0.0
        %2169 = vmatpush.xpose.msra.mxu0 0.0
        %2170 = vmatpush.xpose.msra.mxu0 0.0
        %2171 = vmatpush.xpose.msra.mxu0 0.0
        %2172 = vmatpush.xpose.msra.mxu0 0.0
        %2173 = vmatpush.xpose.msra.mxu0 %v2156
        %2174 = vmatmul.f32.gmra.mxu0 %v2150
        %v2175 = vpop.f32.mrf.mxu0
        %v2176 = vadd.f32 0.0, %v2175
        %2177 = vmatmul.f32.gmra.mxu0 %v2153
        %v2178 = vpop.f32.mrf.mxu0
        %v2179 = vadd.f32 0.0, %v2178
        %2180 = vdwg.mxu0
        %v2182 = vsel %vm1804, %v1941, 0
        %v2185 = vsel %vm1804, %v1942, 0
        %v2188 = vsel %vm1804, %v1886, 0
        %2190 = vmatpush.xpose.msra.mxu0 0.0
        %2191 = vmatpush.xpose.msra.mxu0 0.0
        %2192 = vmatpush.xpose.msra.mxu0 0.0
        %2193 = vmatpush.xpose.msra.mxu0 0.0
        %2194 = vmatpush.xpose.msra.mxu0 0.0
        %2195 = vmatpush.xpose.msra.mxu0 0.0
        %2196 = vmatpush.xpose.msra.mxu0 0.0
        %2197 = vmatpush.xpose.msra.mxu0 0.0
        %2198 = vmatpush.xpose.msra.mxu0 0.0
        %2199 = vmatpush.xpose.msra.mxu0 0.0
        %2200 = vmatpush.xpose.msra.mxu0 0.0
        %2201 = vmatpush.xpose.msra.mxu0 0.0
        %2202 = vmatpush.xpose.msra.mxu0 0.0
        %2203 = vmatpush.xpose.msra.mxu0 0.0
        %2204 = vmatpush.xpose.msra.mxu0 0.0
        %2205 = vmatpush.xpose.msra.mxu0 %v2188
        %2206 = vmatmul.f32.gmra.mxu0 %v2182
        %v2207 = vpop.f32.mrf.mxu0
        %v2208 = vadd.f32 0.0, %v2207
        %2209 = vmatmul.f32.gmra.mxu0 %v2185
        %v2210 = vpop.f32.mrf.mxu0
        %v2211 = vadd.f32 0.0, %v2210
        %2212 = vdwg.mxu0
        %v2214 = vsel %vm1804, %v1973, 0
        %v2217 = vsel %vm1804, %v1974, 0
        %v2220 = vsel %vm1804, %v1887, 0
        %2222 = vmatpush.xpose.msra.mxu0 0.0
        %2223 = vmatpush.xpose.msra.mxu0 0.0
        %2224 = vmatpush.xpose.msra.mxu0 0.0
        %2225 = vmatpush.xpose.msra.mxu0 0.0
        %2226 = vmatpush.xpose.msra.mxu0 0.0
        %2227 = vmatpush.xpose.msra.mxu0 0.0
        %2228 = vmatpush.xpose.msra.mxu0 0.0
        %2229 = vmatpush.xpose.msra.mxu0 0.0
        %2230 = vmatpush.xpose.msra.mxu0 0.0
        %2231 = vmatpush.xpose.msra.mxu0 0.0
        %2232 = vmatpush.xpose.msra.mxu0 0.0
        %2233 = vmatpush.xpose.msra.mxu0 0.0
        %2234 = vmatpush.xpose.msra.mxu0 0.0
        %2235 = vmatpush.xpose.msra.mxu0 0.0
        %2236 = vmatpush.xpose.msra.mxu0 0.0
        %2237 = vmatpush.xpose.msra.mxu0 %v2220
        %2238 = vmatmul.f32.gmra.mxu0 %v2214
        %v2239 = vpop.f32.mrf.mxu0
        %v2240 = vadd.f32 0.0, %v2239
        %2241 = vmatmul.f32.gmra.mxu0 %v2217
        %v2242 = vpop.f32.mrf.mxu0
        %v2243 = vadd.f32 0.0, %v2242
        %2244 = vdwg.mxu0
        %v2246 = vsel %vm1804, %v2005, 0
        %v2249 = vsel %vm1804, %v2006, 0
        %v2252 = vsel %vm1804, %v1888, 0
        %2254 = vmatpush.xpose.msra.mxu0 0.0
        %2255 = vmatpush.xpose.msra.mxu0 0.0
        %2256 = vmatpush.xpose.msra.mxu0 0.0
        %2257 = vmatpush.xpose.msra.mxu0 0.0
        %2258 = vmatpush.xpose.msra.mxu0 0.0
        %2259 = vmatpush.xpose.msra.mxu0 0.0
        %2260 = vmatpush.xpose.msra.mxu0 0.0
        %2261 = vmatpush.xpose.msra.mxu0 0.0
        %2262 = vmatpush.xpose.msra.mxu0 0.0
        %2263 = vmatpush.xpose.msra.mxu0 0.0
        %2264 = vmatpush.xpose.msra.mxu0 0.0
        %2265 = vmatpush.xpose.msra.mxu0 0.0
        %2266 = vmatpush.xpose.msra.mxu0 0.0
        %2267 = vmatpush.xpose.msra.mxu0 0.0
        %2268 = vmatpush.xpose.msra.mxu0 0.0
        %2269 = vmatpush.xpose.msra.mxu0 %v2252
        %2270 = vmatmul.f32.gmra.mxu0 %v2246
        %v2271 = vpop.f32.mrf.mxu0
        %v2272 = vadd.f32 0.0, %v2271
        %2273 = vmatmul.f32.gmra.mxu0 %v2249
        %v2274 = vpop.f32.mrf.mxu0
        %v2275 = vadd.f32 0.0, %v2274
        %2276 = vdwg.mxu0
        %v2278 = vsel %vm1804, %v2037, 0
        %v2281 = vsel %vm1804, %v2038, 0
        %v2284 = vsel %vm1804, %v1889, 0
        %2286 = vmatpush.xpose.msra.mxu0 0.0
        %2287 = vmatpush.xpose.msra.mxu0 0.0
        %2288 = vmatpush.xpose.msra.mxu0 0.0
        %2289 = vmatpush.xpose.msra.mxu0 0.0
        %2290 = vmatpush.xpose.msra.mxu0 0.0
        %2291 = vmatpush.xpose.msra.mxu0 0.0
        %2292 = vmatpush.xpose.msra.mxu0 0.0
        %2293 = vmatpush.xpose.msra.mxu0 0.0
        %2294 = vmatpush.xpose.msra.mxu0 0.0
        %2295 = vmatpush.xpose.msra.mxu0 0.0
        %2296 = vmatpush.xpose.msra.mxu0 0.0
        %2297 = vmatpush.xpose.msra.mxu0 0.0
        %2298 = vmatpush.xpose.msra.mxu0 0.0
        %2299 = vmatpush.xpose.msra.mxu0 0.0
        %2300 = vmatpush.xpose.msra.mxu0 0.0
        %2301 = vmatpush.xpose.msra.mxu0 %v2284
        %2302 = vmatmul.f32.gmra.mxu0 %v2278
        %v2303 = vpop.f32.mrf.mxu0
        %v2304 = vadd.f32 0.0, %v2303
        %2305 = vmatmul.f32.gmra.mxu0 %v2281
        %v2306 = vpop.f32.mrf.mxu0
        %v2307 = vadd.f32 0.0, %v2306
        %2308 = vdwg.mxu0
        %v2310 = vsel %vm1804, %v2069, 0
        %v2313 = vsel %vm1804, %v2070, 0
        %v2316 = vsel %vm1804, %v1890, 0
        %2318 = vmatpush.xpose.msra.mxu0 0.0
        %2319 = vmatpush.xpose.msra.mxu0 0.0
        %2320 = vmatpush.xpose.msra.mxu0 0.0
        %2321 = vmatpush.xpose.msra.mxu0 0.0
        %2322 = vmatpush.xpose.msra.mxu0 0.0
        %2323 = vmatpush.xpose.msra.mxu0 0.0
        %2324 = vmatpush.xpose.msra.mxu0 0.0
        %2325 = vmatpush.xpose.msra.mxu0 0.0
        %2326 = vmatpush.xpose.msra.mxu0 0.0
        %2327 = vmatpush.xpose.msra.mxu0 0.0
        %2328 = vmatpush.xpose.msra.mxu0 0.0
        %2329 = vmatpush.xpose.msra.mxu0 0.0
        %2330 = vmatpush.xpose.msra.mxu0 0.0
        %2331 = vmatpush.xpose.msra.mxu0 0.0
        %2332 = vmatpush.xpose.msra.mxu0 0.0
        %2333 = vmatpush.xpose.msra.mxu0 %v2316
        %2334 = vmatmul.f32.gmra.mxu0 %v2310
        %v2335 = vpop.f32.mrf.mxu0
        %v2336 = vadd.f32 0.0, %v2335
        %2337 = vmatmul.f32.gmra.mxu0 %v2313
        %v2338 = vpop.f32.mrf.mxu0
        %v2339 = vadd.f32 0.0, %v2338
        %2340 = vdwg.mxu0
        %v2342 = vsel %vm1804, %v2101, 0
        %v2345 = vsel %vm1804, %v2102, 0
        %v2348 = vsel %vm1804, %v1891, 0
        %2350 = vmatpush.xpose.msra.mxu0 0.0
        %2351 = vmatpush.xpose.msra.mxu0 0.0
        %2352 = vmatpush.xpose.msra.mxu0 0.0
        %2353 = vmatpush.xpose.msra.mxu0 0.0
        %2354 = vmatpush.xpose.msra.mxu0 0.0
        %2355 = vmatpush.xpose.msra.mxu0 0.0
        %2356 = vmatpush.xpose.msra.mxu0 0.0
        %2357 = vmatpush.xpose.msra.mxu0 0.0
        %2358 = vmatpush.xpose.msra.mxu0 0.0
        %2359 = vmatpush.xpose.msra.mxu0 0.0
        %2360 = vmatpush.xpose.msra.mxu0 0.0
        %2361 = vmatpush.xpose.msra.mxu0 0.0
        %2362 = vmatpush.xpose.msra.mxu0 0.0
        %2363 = vmatpush.xpose.msra.mxu0 0.0
        %2364 = vmatpush.xpose.msra.mxu0 0.0
        %2365 = vmatpush.xpose.msra.mxu0 %v2348
        %2366 = vmatmul.f32.gmra.mxu0 %v2342
        %v2367 = vpop.f32.mrf.mxu0
        %v2368 = vadd.f32 0.0, %v2367
        %2369 = vmatmul.f32.gmra.mxu0 %v2345
        %v2370 = vpop.f32.mrf.mxu0
        %v2371 = vadd.f32 0.0, %v2370
        %2372 = vdwg.mxu0
        %v2374 = vsel %vm1804, %v2133, 0
        %v2377 = vsel %vm1804, %v2134, 0
        %v2380 = vsel %vm1804, %v1892, 0
        %2382 = vmatpush.xpose.msra.mxu0 0.0
        %2383 = vmatpush.xpose.msra.mxu0 0.0
        %2384 = vmatpush.xpose.msra.mxu0 0.0
        %2385 = vmatpush.xpose.msra.mxu0 0.0
        %2386 = vmatpush.xpose.msra.mxu0 0.0
        %2387 = vmatpush.xpose.msra.mxu0 0.0
        %2388 = vmatpush.xpose.msra.mxu0 0.0
        %2389 = vmatpush.xpose.msra.mxu0 0.0
        %2390 = vmatpush.xpose.msra.mxu0 0.0
        %2391 = vmatpush.xpose.msra.mxu0 0.0
        %2392 = vmatpush.xpose.msra.mxu0 0.0
        %2393 = vmatpush.xpose.msra.mxu0 0.0
        %2394 = vmatpush.xpose.msra.mxu0 0.0
        %2395 = vmatpush.xpose.msra.mxu0 0.0
        %2396 = vmatpush.xpose.msra.mxu0 0.0
        %2397 = vmatpush.xpose.msra.mxu0 %v2380
        %2398 = vmatmul.f32.gmra.mxu0 %v2374
        %v2399 = vpop.f32.mrf.mxu0
        %v2400 = vadd.f32 0.0, %v2399
        %2401 = vmatmul.f32.gmra.mxu0 %v2377
        %v2402 = vpop.f32.mrf.mxu0
        %v2403 = vadd.f32 0.0, %v2402
        %2404 = vdwg.mxu0
        %2405 = vxpose.xlu0.b32.start [1/16] %v2176, 128
        %2406 = vxpose.xlu0.b32.cont [2/16] %v2179, 128
        %2407 = vxpose.xlu0.b32.cont [3/16] 0.0, 128
        %2408 = vxpose.xlu0.b32.cont [4/16] 0.0, 128
        %2409 = vxpose.xlu0.b32.cont [5/16] 0.0, 128
        %2410 = vxpose.xlu0.b32.cont [6/16] 0.0, 128
        %2411 = vxpose.xlu0.b32.cont [7/16] 0.0, 128
        %2412 = vxpose.xlu0.b32.cont [8/16] 0.0, 128
        %2413 = vxpose.xlu0.b32.cont [9/16] 0.0, 128
        %2414 = vxpose.xlu0.b32.cont [10/16] 0.0, 128
        %2415 = vxpose.xlu0.b32.cont [11/16] 0.0, 128
        %2416 = vxpose.xlu0.b32.cont [12/16] 0.0, 128
        %2417 = vxpose.xlu0.b32.cont [13/16] 0.0, 128
        %2418 = vxpose.xlu0.b32.cont [14/16] 0.0, 128
        %2419 = vxpose.xlu0.b32.cont [15/16] 0.0, 128
        %2420 = vxpose.xlu0.b32.end [16/16] 0.0, 128
        %v2421 = vpop.trf.xlu0
        %v2422 = vpop.trf.xlu0
        %v2423 = vpop.trf.xlu0
        %v2424 = vpop.trf.xlu0
        %v2425 = vpop.trf.xlu0
        %v2426 = vpop.trf.xlu0
        %v2427 = vpop.trf.xlu0
        %v2428 = vpop.trf.xlu0
        %v2429 = vpop.trf.xlu0
        %v2430 = vpop.trf.xlu0
        %v2431 = vpop.trf.xlu0
        %v2432 = vpop.trf.xlu0
        %v2433 = vpop.trf.xlu0
        %v2434 = vpop.trf.xlu0
        %v2435 = vpop.trf.xlu0
        %v2436 = vpop.trf.xlu0
        %2437 = vxpose.xlu0.b32.start [1/16] %v2208, 128
        %2438 = vxpose.xlu0.b32.cont [2/16] %v2211, 128
        %2439 = vxpose.xlu0.b32.cont [3/16] 0.0, 128
        %2440 = vxpose.xlu0.b32.cont [4/16] 0.0, 128
        %2441 = vxpose.xlu0.b32.cont [5/16] 0.0, 128
        %2442 = vxpose.xlu0.b32.cont [6/16] 0.0, 128
        %2443 = vxpose.xlu0.b32.cont [7/16] 0.0, 128
        %2444 = vxpose.xlu0.b32.cont [8/16] 0.0, 128
        %2445 = vxpose.xlu0.b32.cont [9/16] 0.0, 128
        %2446 = vxpose.xlu0.b32.cont [10/16] 0.0, 128
        %2447 = vxpose.xlu0.b32.cont [11/16] 0.0, 128
        %2448 = vxpose.xlu0.b32.cont [12/16] 0.0, 128
        %2449 = vxpose.xlu0.b32.cont [13/16] 0.0, 128
        %2450 = vxpose.xlu0.b32.cont [14/16] 0.0, 128
        %2451 = vxpose.xlu0.b32.cont [15/16] 0.0, 128
        %2452 = vxpose.xlu0.b32.end [16/16] 0.0, 128
        %v2453 = vpop.trf.xlu0
        %v2454 = vpop.trf.xlu0
        %v2455 = vpop.trf.xlu0
        %v2456 = vpop.trf.xlu0
        %v2457 = vpop.trf.xlu0
        %v2458 = vpop.trf.xlu0
        %v2459 = vpop.trf.xlu0
        %v2460 = vpop.trf.xlu0
        %v2461 = vpop.trf.xlu0
        %v2462 = vpop.trf.xlu0
        %v2463 = vpop.trf.xlu0
        %v2464 = vpop.trf.xlu0
        %v2465 = vpop.trf.xlu0
        %v2466 = vpop.trf.xlu0
        %v2467 = vpop.trf.xlu0
        %v2468 = vpop.trf.xlu0
        %2469 = vxpose.xlu0.b32.start [1/16] %v2240, 128
        %2470 = vxpose.xlu0.b32.cont [2/16] %v2243, 128
        %2471 = vxpose.xlu0.b32.cont [3/16] 0.0, 128
        %2472 = vxpose.xlu0.b32.cont [4/16] 0.0, 128
        %2473 = vxpose.xlu0.b32.cont [5/16] 0.0, 128
        %2474 = vxpose.xlu0.b32.cont [6/16] 0.0, 128
        %2475 = vxpose.xlu0.b32.cont [7/16] 0.0, 128
        %2476 = vxpose.xlu0.b32.cont [8/16] 0.0, 128
        %2477 = vxpose.xlu0.b32.cont [9/16] 0.0, 128
        %2478 = vxpose.xlu0.b32.cont [10/16] 0.0, 128
        %2479 = vxpose.xlu0.b32.cont [11/16] 0.0, 128
        %2480 = vxpose.xlu0.b32.cont [12/16] 0.0, 128
        %2481 = vxpose.xlu0.b32.cont [13/16] 0.0, 128
        %2482 = vxpose.xlu0.b32.cont [14/16] 0.0, 128
        %2483 = vxpose.xlu0.b32.cont [15/16] 0.0, 128
        %2484 = vxpose.xlu0.b32.end [16/16] 0.0, 128
        %v2485 = vpop.trf.xlu0
        %v2486 = vpop.trf.xlu0
        %v2487 = vpop.trf.xlu0
        %v2488 = vpop.trf.xlu0
        %v2489 = vpop.trf.xlu0
        %v2490 = vpop.trf.xlu0
        %v2491 = vpop.trf.xlu0
        %v2492 = vpop.trf.xlu0
        %v2493 = vpop.trf.xlu0
        %v2494 = vpop.trf.xlu0
        %v2495 = vpop.trf.xlu0
        %v2496 = vpop.trf.xlu0
        %v2497 = vpop.trf.xlu0
        %v2498 = vpop.trf.xlu0
        %v2499 = vpop.trf.xlu0
        %v2500 = vpop.trf.xlu0
        %2501 = vxpose.xlu0.b32.start [1/16] %v2272, 128
        %2502 = vxpose.xlu0.b32.cont [2/16] %v2275, 128
        %2503 = vxpose.xlu0.b32.cont [3/16] 0.0, 128
        %2504 = vxpose.xlu0.b32.cont [4/16] 0.0, 128
        %2505 = vxpose.xlu0.b32.cont [5/16] 0.0, 128
        %2506 = vxpose.xlu0.b32.cont [6/16] 0.0, 128
        %2507 = vxpose.xlu0.b32.cont [7/16] 0.0, 128
        %2508 = vxpose.xlu0.b32.cont [8/16] 0.0, 128
        %2509 = vxpose.xlu0.b32.cont [9/16] 0.0, 128
        %2510 = vxpose.xlu0.b32.cont [10/16] 0.0, 128
        %2511 = vxpose.xlu0.b32.cont [11/16] 0.0, 128
        %2512 = vxpose.xlu0.b32.cont [12/16] 0.0, 128
        %2513 = vxpose.xlu0.b32.cont [13/16] 0.0, 128
        %2514 = vxpose.xlu0.b32.cont [14/16] 0.0, 128
        %2515 = vxpose.xlu0.b32.cont [15/16] 0.0, 128
        %2516 = vxpose.xlu0.b32.end [16/16] 0.0, 128
        %v2517 = vpop.trf.xlu0
        %v2518 = vpop.trf.xlu0
        %v2519 = vpop.trf.xlu0
        %v2520 = vpop.trf.xlu0
        %v2521 = vpop.trf.xlu0
        %v2522 = vpop.trf.xlu0
        %v2523 = vpop.trf.xlu0
        %v2524 = vpop.trf.xlu0
        %v2525 = vpop.trf.xlu0
        %v2526 = vpop.trf.xlu0
        %v2527 = vpop.trf.xlu0
        %v2528 = vpop.trf.xlu0
        %v2529 = vpop.trf.xlu0
        %v2530 = vpop.trf.xlu0
        %v2531 = vpop.trf.xlu0
        %v2532 = vpop.trf.xlu0
        %2533 = vxpose.xlu0.b32.start [1/16] %v2304, 128
        %2534 = vxpose.xlu0.b32.cont [2/16] %v2307, 128
        %2535 = vxpose.xlu0.b32.cont [3/16] 0.0, 128
        %2536 = vxpose.xlu0.b32.cont [4/16] 0.0, 128
        %2537 = vxpose.xlu0.b32.cont [5/16] 0.0, 128
        %2538 = vxpose.xlu0.b32.cont [6/16] 0.0, 128
        %2539 = vxpose.xlu0.b32.cont [7/16] 0.0, 128
        %2540 = vxpose.xlu0.b32.cont [8/16] 0.0, 128
        %2541 = vxpose.xlu0.b32.cont [9/16] 0.0, 128
        %2542 = vxpose.xlu0.b32.cont [10/16] 0.0, 128
        %2543 = vxpose.xlu0.b32.cont [11/16] 0.0, 128
        %2544 = vxpose.xlu0.b32.cont [12/16] 0.0, 128
        %2545 = vxpose.xlu0.b32.cont [13/16] 0.0, 128
        %2546 = vxpose.xlu0.b32.cont [14/16] 0.0, 128
        %2547 = vxpose.xlu0.b32.cont [15/16] 0.0, 128
        %2548 = vxpose.xlu0.b32.end [16/16] 0.0, 128
        %v2549 = vpop.trf.xlu0
        %v2550 = vpop.trf.xlu0
        %v2551 = vpop.trf.xlu0
        %v2552 = vpop.trf.xlu0
        %v2553 = vpop.trf.xlu0
        %v2554 = vpop.trf.xlu0
        %v2555 = vpop.trf.xlu0
        %v2556 = vpop.trf.xlu0
        %v2557 = vpop.trf.xlu0
        %v2558 = vpop.trf.xlu0
        %v2559 = vpop.trf.xlu0
        %v2560 = vpop.trf.xlu0
        %v2561 = vpop.trf.xlu0
        %v2562 = vpop.trf.xlu0
        %v2563 = vpop.trf.xlu0
        %v2564 = vpop.trf.xlu0
        %2565 = vxpose.xlu0.b32.start [1/16] %v2336, 128
        %2566 = vxpose.xlu0.b32.cont [2/16] %v2339, 128
        %2567 = vxpose.xlu0.b32.cont [3/16] 0.0, 128
        %2568 = vxpose.xlu0.b32.cont [4/16] 0.0, 128
        %2569 = vxpose.xlu0.b32.cont [5/16] 0.0, 128
        %2570 = vxpose.xlu0.b32.cont [6/16] 0.0, 128
        %2571 = vxpose.xlu0.b32.cont [7/16] 0.0, 128
        %2572 = vxpose.xlu0.b32.cont [8/16] 0.0, 128
        %2573 = vxpose.xlu0.b32.cont [9/16] 0.0, 128
        %2574 = vxpose.xlu0.b32.cont [10/16] 0.0, 128
        %2575 = vxpose.xlu0.b32.cont [11/16] 0.0, 128
        %2576 = vxpose.xlu0.b32.cont [12/16] 0.0, 128
        %2577 = vxpose.xlu0.b32.cont [13/16] 0.0, 128
        %2578 = vxpose.xlu0.b32.cont [14/16] 0.0, 128
        %2579 = vxpose.xlu0.b32.cont [15/16] 0.0, 128
        %2580 = vxpose.xlu0.b32.end [16/16] 0.0, 128
        %v2581 = vpop.trf.xlu0
        %v2582 = vpop.trf.xlu0
        %v2583 = vpop.trf.xlu0
        %v2584 = vpop.trf.xlu0
        %v2585 = vpop.trf.xlu0
        %v2586 = vpop.trf.xlu0
        %v2587 = vpop.trf.xlu0
        %v2588 = vpop.trf.xlu0
        %v2589 = vpop.trf.xlu0
        %v2590 = vpop.trf.xlu0
        %v2591 = vpop.trf.xlu0
        %v2592 = vpop.trf.xlu0
        %v2593 = vpop.trf.xlu0
        %v2594 = vpop.trf.xlu0
        %v2595 = vpop.trf.xlu0
        %v2596 = vpop.trf.xlu0
        %2597 = vxpose.xlu0.b32.start [1/16] %v2368, 128
        %2598 = vxpose.xlu0.b32.cont [2/16] %v2371, 128
        %2599 = vxpose.xlu0.b32.cont [3/16] 0.0, 128
        %2600 = vxpose.xlu0.b32.cont [4/16] 0.0, 128
        %2601 = vxpose.xlu0.b32.cont [5/16] 0.0, 128
        %2602 = vxpose.xlu0.b32.cont [6/16] 0.0, 128
        %2603 = vxpose.xlu0.b32.cont [7/16] 0.0, 128
        %2604 = vxpose.xlu0.b32.cont [8/16] 0.0, 128
        %2605 = vxpose.xlu0.b32.cont [9/16] 0.0, 128
        %2606 = vxpose.xlu0.b32.cont [10/16] 0.0, 128
        %2607 = vxpose.xlu0.b32.cont [11/16] 0.0, 128
        %2608 = vxpose.xlu0.b32.cont [12/16] 0.0, 128
        %2609 = vxpose.xlu0.b32.cont [13/16] 0.0, 128
        %2610 = vxpose.xlu0.b32.cont [14/16] 0.0, 128
        %2611 = vxpose.xlu0.b32.cont [15/16] 0.0, 128
        %2612 = vxpose.xlu0.b32.end [16/16] 0.0, 128
        %v2613 = vpop.trf.xlu0
        %v2614 = vpop.trf.xlu0
        %v2615 = vpop.trf.xlu0
        %v2616 = vpop.trf.xlu0
        %v2617 = vpop.trf.xlu0
        %v2618 = vpop.trf.xlu0
        %v2619 = vpop.trf.xlu0
        %v2620 = vpop.trf.xlu0
        %v2621 = vpop.trf.xlu0
        %v2622 = vpop.trf.xlu0
        %v2623 = vpop.trf.xlu0
        %v2624 = vpop.trf.xlu0
        %v2625 = vpop.trf.xlu0
        %v2626 = vpop.trf.xlu0
        %v2627 = vpop.trf.xlu0
        %v2628 = vpop.trf.xlu0
        %2629 = vxpose.xlu0.b32.start [1/16] %v2400, 128
        %2630 = vxpose.xlu0.b32.cont [2/16] %v2403, 128
        %2631 = vxpose.xlu0.b32.cont [3/16] 0.0, 128
        %2632 = vxpose.xlu0.b32.cont [4/16] 0.0, 128
        %2633 = vxpose.xlu0.b32.cont [5/16] 0.0, 128
        %2634 = vxpose.xlu0.b32.cont [6/16] 0.0, 128
        %2635 = vxpose.xlu0.b32.cont [7/16] 0.0, 128
        %2636 = vxpose.xlu0.b32.cont [8/16] 0.0, 128
        %2637 = vxpose.xlu0.b32.cont [9/16] 0.0, 128
        %2638 = vxpose.xlu0.b32.cont [10/16] 0.0, 128
        %2639 = vxpose.xlu0.b32.cont [11/16] 0.0, 128
        %2640 = vxpose.xlu0.b32.cont [12/16] 0.0, 128
        %2641 = vxpose.xlu0.b32.cont [13/16] 0.0, 128
        %2642 = vxpose.xlu0.b32.cont [14/16] 0.0, 128
        %2643 = vxpose.xlu0.b32.cont [15/16] 0.0, 128
        %2644 = vxpose.xlu0.b32.end [16/16] 0.0, 128
        %v2645 = vpop.trf.xlu0
        %v2646 = vpop.trf.xlu0
        %v2647 = vpop.trf.xlu0
        %v2648 = vpop.trf.xlu0
        %v2649 = vpop.trf.xlu0
        %v2650 = vpop.trf.xlu0
        %v2651 = vpop.trf.xlu0
        %v2652 = vpop.trf.xlu0
        %v2653 = vpop.trf.xlu0
        %v2654 = vpop.trf.xlu0
        %v2655 = vpop.trf.xlu0
        %v2656 = vpop.trf.xlu0
        %v2657 = vpop.trf.xlu0
        %v2658 = vpop.trf.xlu0
        %v2659 = vpop.trf.xlu0
        %v2660 = vpop.trf.xlu0
        %v2661 = vrot.slane %v2485, 4
        %vm2662 = vcmask 1047556
        %v2663 = vsel %vm2662, %v2661, %v2421
        %v2664 = vrot.slane %v2421, 4
        %v2665 = vsel %vm2662, %v2485, %v2664
        %v2667 = vunpack.c.l.s4 1983009808
        %v2668 = vunpack.c.0.s8 %v2667
        %v2669 = vperm.slane %v2663, %v2668
        %v2671 = vunpack.c.l.s4 1983009808
        %v2672 = vunpack.c.0.s8 %v2671
        %v2673 = vperm.slane %v2665, %v2672
        %v2674 = vrot.slane %v2517, 4
        %v2675 = vsel %vm2662, %v2674, %v2453
        %v2676 = vrot.slane %v2453, 4
        %v2677 = vsel %vm2662, %v2517, %v2676
        %v2679 = vunpack.c.l.s4 1983009808
        %v2680 = vunpack.c.0.s8 %v2679
        %v2681 = vperm.slane %v2675, %v2680
        %v2683 = vunpack.c.l.s4 1983009808
        %v2684 = vunpack.c.0.s8 %v2683
        %v2685 = vperm.slane %v2677, %v2684
        %v2686 = vrot.slane %v2613, 4
        %v2687 = vsel %vm2662, %v2686, %v2549
        %v2688 = vrot.slane %v2549, 4
        %v2689 = vsel %vm2662, %v2613, %v2688
        %v2691 = vunpack.c.l.s4 1983009808
        %v2692 = vunpack.c.0.s8 %v2691
        %v2693 = vperm.slane %v2687, %v2692
        %v2695 = vunpack.c.l.s4 1983009808
        %v2696 = vunpack.c.0.s8 %v2695
        %v2697 = vperm.slane %v2689, %v2696
        %v2698 = vrot.slane %v2645, 4
        %v2699 = vsel %vm2662, %v2698, %v2581
        %v2700 = vrot.slane %v2581, 4
        %v2701 = vsel %vm2662, %v2645, %v2700
        %v2703 = vunpack.c.l.s4 1983009808
        %v2704 = vunpack.c.0.s8 %v2703
        %v2705 = vperm.slane %v2699, %v2704
        %v2707 = vunpack.c.l.s4 1983009808
        %v2708 = vunpack.c.0.s8 %v2707
        %v2709 = vperm.slane %v2701, %v2708
        %v2710 = vrot.slane %v2681, 4
        %v2711 = vsel %vm2662, %v2710, %v2669
        %v2712 = vrot.slane %v2669, 4
        %v2713 = vsel %vm2662, %v2681, %v2712
        %v2715 = vunpack.c.l.s4 1934713408
        %v2716 = vunpack.c.0.s8 %v2715
        %v2717 = vperm.slane %v2711, %v2716
        %v2719 = vunpack.c.l.s4 1934713408
        %v2720 = vunpack.c.0.s8 %v2719
        %v2721 = vperm.slane %v2713, %v2720
        %v2722 = vrot.slane %v2685, 4
        %v2723 = vsel %vm2662, %v2722, %v2673
        %v2724 = vrot.slane %v2673, 4
        %v2725 = vsel %vm2662, %v2685, %v2724
        %v2727 = vunpack.c.l.s4 1934713408
        %v2728 = vunpack.c.0.s8 %v2727
        %v2729 = vperm.slane %v2723, %v2728
        %v2731 = vunpack.c.l.s4 1934713408
        %v2732 = vunpack.c.0.s8 %v2731
        %v2733 = vperm.slane %v2725, %v2732
        %v2734 = vrot.slane %v2705, 4
        %v2735 = vsel %vm2662, %v2734, %v2693
        %v2736 = vrot.slane %v2693, 4
        %v2737 = vsel %vm2662, %v2705, %v2736
        %v2739 = vunpack.c.l.s4 1934713408
        %v2740 = vunpack.c.0.s8 %v2739
        %v2741 = vperm.slane %v2735, %v2740
        %v2743 = vunpack.c.l.s4 1934713408
        %v2744 = vunpack.c.0.s8 %v2743
        %v2745 = vperm.slane %v2737, %v2744
        %v2746 = vrot.slane %v2709, 4
        %v2747 = vsel %vm2662, %v2746, %v2697
        %v2748 = vrot.slane %v2697, 4
        %v2749 = vsel %vm2662, %v2709, %v2748
        %v2751 = vunpack.c.l.s4 1934713408
        %v2752 = vunpack.c.0.s8 %v2751
        %v2753 = vperm.slane %v2747, %v2752
        %v2755 = vunpack.c.l.s4 1934713408
        %v2756 = vunpack.c.0.s8 %v2755
        %v2757 = vperm.slane %v2749, %v2756
        %v2758 = vrot.slane %v2741, 4
        %v2759 = vsel %vm2662, %v2758, %v2717
        %v2760 = vrot.slane %v2717, 4
        %v2761 = vsel %vm2662, %v2741, %v2760
        %v2762 = vrot.slane %v2745, 4
        %v2763 = vsel %vm2662, %v2762, %v2721
        %v2764 = vrot.slane %v2721, 4
        %v2765 = vsel %vm2662, %v2745, %v2764
        %v2766 = vrot.slane %v2753, 4
        %v2767 = vsel %vm2662, %v2766, %v2729
        %v2768 = vrot.slane %v2729, 4
        %v2769 = vsel %vm2662, %v2753, %v2768
        %v2770 = vrot.slane %v2757, 4
        %v2771 = vsel %vm2662, %v2770, %v2733
        %v2772 = vrot.slane %v2733, 4
        %v2773 = vsel %vm2662, %v2757, %v2772
        %v2774 = vrot.slane %v2763, 4
        %v2775 = vsel %vm2662, %v2774, %v2759
        %v2776 = vrot.slane %v2759, 4
        %v2777 = vsel %vm2662, %v2763, %v2776
        %v2779 = vunpack.c.l.s4 1983009808
        %v2780 = vunpack.c.0.s8 %v2779
        %v2781 = vperm.slane %v2775, %v2780
        %v2783 = vunpack.c.l.s4 1983009808
        %v2784 = vunpack.c.0.s8 %v2783
        %v2785 = vperm.slane %v2777, %v2784
        %v2786 = vrot.slane %v2765, 4
        %v2787 = vsel %vm2662, %v2786, %v2761
        %v2788 = vrot.slane %v2761, 4
        %v2789 = vsel %vm2662, %v2765, %v2788
        %v2791 = vunpack.c.l.s4 1983009808
        %v2792 = vunpack.c.0.s8 %v2791
        %v2793 = vperm.slane %v2787, %v2792
        %v2795 = vunpack.c.l.s4 1983009808
        %v2796 = vunpack.c.0.s8 %v2795
        %v2797 = vperm.slane %v2789, %v2796
        %v2798 = vrot.slane %v2771, 4
        %v2799 = vsel %vm2662, %v2798, %v2767
        %v2800 = vrot.slane %v2767, 4
        %v2801 = vsel %vm2662, %v2771, %v2800
        %v2803 = vunpack.c.l.s4 1983009808
        %v2804 = vunpack.c.0.s8 %v2803
        %v2805 = vperm.slane %v2799, %v2804
        %v2807 = vunpack.c.l.s4 1983009808
        %v2808 = vunpack.c.0.s8 %v2807
        %v2809 = vperm.slane %v2801, %v2808
        %v2810 = vrot.slane %v2773, 4
        %v2811 = vsel %vm2662, %v2810, %v2769
        %v2812 = vrot.slane %v2769, 4
        %v2813 = vsel %vm2662, %v2773, %v2812
        %v2815 = vunpack.c.l.s4 1983009808
        %v2816 = vunpack.c.0.s8 %v2815
        %v2817 = vperm.slane %v2811, %v2816
        %v2819 = vunpack.c.l.s4 1983009808
        %v2820 = vunpack.c.0.s8 %v2819
        %v2821 = vperm.slane %v2813, %v2820
        %v2822 = vrot.slane %v2793, 4
        %v2823 = vsel %vm2662, %v2822, %v2781
        %v2824 = vrot.slane %v2781, 4
        %v2825 = vsel %vm2662, %v2793, %v2824
        %v2827 = vunpack.c.l.s4 1934713408
        %v2828 = vunpack.c.0.s8 %v2827
        %v2829 = vperm.slane %v2823, %v2828
        %v2831 = vunpack.c.l.s4 1934713408
        %v2832 = vunpack.c.0.s8 %v2831
        %v2833 = vperm.slane %v2825, %v2832
        %v2834 = vrot.slane %v2797, 4
        %v2835 = vsel %vm2662, %v2834, %v2785
        %v2836 = vrot.slane %v2785, 4
        %v2837 = vsel %vm2662, %v2797, %v2836
        %v2839 = vunpack.c.l.s4 1934713408
        %v2840 = vunpack.c.0.s8 %v2839
        %v2841 = vperm.slane %v2835, %v2840
        %v2843 = vunpack.c.l.s4 1934713408
        %v2844 = vunpack.c.0.s8 %v2843
        %v2845 = vperm.slane %v2837, %v2844
        %v2846 = vrot.slane %v2817, 4
        %v2847 = vsel %vm2662, %v2846, %v2805
        %v2848 = vrot.slane %v2805, 4
        %v2849 = vsel %vm2662, %v2817, %v2848
        %v2851 = vunpack.c.l.s4 1934713408
        %v2852 = vunpack.c.0.s8 %v2851
        %v2853 = vperm.slane %v2847, %v2852
        %v2855 = vunpack.c.l.s4 1934713408
        %v2856 = vunpack.c.0.s8 %v2855
        %v2857 = vperm.slane %v2849, %v2856
        %v2858 = vrot.slane %v2821, 4
        %v2859 = vsel %vm2662, %v2858, %v2809
        %v2860 = vrot.slane %v2809, 4
        %v2861 = vsel %vm2662, %v2821, %v2860
        %v2863 = vunpack.c.l.s4 1934713408
        %v2864 = vunpack.c.0.s8 %v2863
        %v2865 = vperm.slane %v2859, %v2864
        %v2867 = vunpack.c.l.s4 1934713408
        %v2868 = vunpack.c.0.s8 %v2867
        %v2869 = vperm.slane %v2861, %v2868
        %v2870 = vrot.slane %v2853, 4
        %v2871 = vsel %vm2662, %v2870, %v2829
        %v2872 = vrot.slane %v2829, 4
        %v2873 = vsel %vm2662, %v2853, %v2872
        %v2874 = vrot.slane %v2857, 4
        %v2875 = vsel %vm2662, %v2874, %v2833
        %v2876 = vrot.slane %v2833, 4
        %v2877 = vsel %vm2662, %v2857, %v2876
        %v2878 = vrot.slane %v2865, 4
        %v2879 = vsel %vm2662, %v2878, %v2841
        %v2880 = vrot.slane %v2841, 4
        %v2881 = vsel %vm2662, %v2865, %v2880
        %v2882 = vrot.slane %v2869, 4
        %v2883 = vsel %vm2662, %v2882, %v2845
        %v2884 = vrot.slane %v2845, 4
        %v2885 = vsel %vm2662, %v2869, %v2884
        %2887 = vrot.lane.b32.xlu0 %v2873, 16
        %v2888 = vpop.permute.xlu0 %2887
        %2891 = vrot.lane.b32.xlu0 %v2875, 32
        %v2892 = vpop.permute.xlu0 %2891
        %2895 = vrot.lane.b32.xlu0 %v2877, 48
        %v2896 = vpop.permute.xlu0 %2895
        %2899 = vrot.lane.b32.xlu0 %v2879, 64
        %v2900 = vpop.permute.xlu0 %2899
        %2903 = vrot.lane.b32.xlu0 %v2881, 80
        %v2904 = vpop.permute.xlu0 %2903
        %2907 = vrot.lane.b32.xlu0 %v2883, 96
        %v2908 = vpop.permute.xlu0 %2907
        %2911 = vrot.lane.b32.xlu0 %v2885, 112
        %v2912 = vpop.permute.xlu0 %2911
        %v2914 = vsel %vm1619, %v2871, %v2888
        %vm2915 = vcmask 261120
        %v2916 = vsel %vm2915, %v2914, %v2892
        %vm2917 = vcmask 392192
        %v2918 = vsel %vm2917, %v2916, %v2896
        %vm2919 = vcmask 523264
        %v2920 = vsel %vm2919, %v2918, %v2900
        %vm2921 = vcmask 654336
        %v2922 = vsel %vm2921, %v2920, %v2904
        %vm2923 = vcmask 785408
        %v2924 = vsel %vm2923, %v2922, %v2908
        %vm2925 = vcmask 916480
        %v2926 = vsel %vm2925, %v2924, %v2912
        %v2927 = vld [vmem:[#allocation14] sm:$0xff]
        %v2928 = vld [vmem:[#allocation14 + $0x8] sm:$0xff]
        %v2929 = vld [vmem:[#allocation14 + $0x10] sm:$0xff]
        %v2930 = vld [vmem:[#allocation14 + $0x18] sm:$0xff]
        %v2931 = vld [vmem:[#allocation14 + $0x20] sm:$0xff]
        %v2932 = vld [vmem:[#allocation14 + $0x28] sm:$0xff]
        %v2933 = vld [vmem:[#allocation14 + $0x30] sm:$0xff]
        %v2934 = vld [vmem:[#allocation14 + $0x38] sm:$0xff]
        %v2935 = vld [vmem:[#allocation14 + $0x40] sm:$0xff]
        %v2936 = vld [vmem:[#allocation14 + $0x48] sm:$0xff]
        %v2937 = vld [vmem:[#allocation14 + $0x50] sm:$0xff]
        %v2938 = vld [vmem:[#allocation14 + $0x58] sm:$0xff]
        %v2939 = vld [vmem:[#allocation14 + $0x60] sm:$0xff]
        %v2940 = vld [vmem:[#allocation14 + $0x68] sm:$0xff]
        %v2941 = vld [vmem:[#allocation14 + $0x70] sm:$0xff]
        %v2942 = vld [vmem:[#allocation14 + $0x78] sm:$0xff]
        %2943 = vmatpush.msra.mxu0 %v2942
        %2944 = vmatpush.msra.mxu0 %v2941
        %2945 = vmatpush.msra.mxu0 %v2940
        %2946 = vmatpush.msra.mxu0 %v2939
        %2947 = vmatpush.msra.mxu0 %v2938
        %2948 = vmatpush.msra.mxu0 %v2937
        %2949 = vmatpush.msra.mxu0 %v2936
        %2950 = vmatpush.msra.mxu0 %v2935
        %2951 = vmatpush.msra.mxu0 %v2934
        %2952 = vmatpush.msra.mxu0 %v2933
        %2953 = vmatpush.msra.mxu0 %v2932
        %2954 = vmatpush.msra.mxu0 %v2931
        %2955 = vmatpush.msra.mxu0 %v2930
        %2956 = vmatpush.msra.mxu0 %v2929
        %2957 = vmatpush.msra.mxu0 %v2928
        %2958 = vmatpush.msra.mxu0 %v2927
        %2959 = vmatmul.f32.gmra.mxu0 %v2926
        %v2960 = vpop.f32.mrf.mxu0
        %v2961 = vadd.f32 0.0, %v2960
        %2962 = vdwg.mxu0
        %v2963 = vadd.f32 %v1150, %v2961
        %v2964 = vld [vmem:[#allocation16] sm:$0x1]
        %v2966 = vperm.slane %v2964, 0
        %v2968 = vadd.f32 %v2963, %v2966
        %v2969 = vld [vmem:[#allocation17] sm:$0x1]
        %v2970 = vld [vmem:[#allocation19] sm:$0x1]
        %2971 = vadd.xlane.f32.xlu0 %v2968
        %v2972 = vpop.xlane.xlu0 %2971
        %v2973 = vmul.f32 %v2972, %v1161
        %v2974 = vsub.f32 %v2968, %v2973
        %v2975 = vmul.f32 %v2974, %v2974
        %2976 = vadd.xlane.f32.xlu0 %v2975
        %v2977 = vpop.xlane.xlu0 %2976
        %v2978 = vmul.f32 %v2977, %v1161
        %v2979 = vadd.f32 %v2978, 1e-05
        %v2980 = vrsqrt.pop %v2979
        %v2981 = vmul.f32 %v2980, %v2979
        %v2982 = vmul.f32 %v2981, %v2980
        %v2983 = vmul.f32 0.5, %v2982
        %v2984 = vsub.f32 1.5, %v2983
        %v2985 = vmul.f32 %v2980, %v2984
        %vm2986 = vweird.f32 %v2979
        %vm2987 = vweird.f32 %v2980
        %vm2988 = vmor %vm2986, %vm2987
        %v2989 = vsel %vm2988, %v2980, %v2985
        %v2990 = vmul.f32 %v2974, %v2989
        %v2992 = vperm.slane %v2969, 0
        %v2994 = vmul.f32 %v2990, %v2992
        %v2996 = vperm.slane %v2970, 0
        %v2998 = vadd.f32 %v2994, %v2996
        %v2999 = vld [vmem:[#allocation20] sm:$0xff]
        %v3000 = vld [vmem:[#allocation20 + $0x8] sm:$0xff]
        %v3001 = vld [vmem:[#allocation20 + $0x10] sm:$0xff]
        %v3002 = vld [vmem:[#allocation20 + $0x18] sm:$0xff]
        %v3003 = vld [vmem:[#allocation20 + $0x20] sm:$0xff]
        %v3004 = vld [vmem:[#allocation20 + $0x28] sm:$0xff]
        %v3005 = vld [vmem:[#allocation20 + $0x30] sm:$0xff]
        %v3006 = vld [vmem:[#allocation20 + $0x38] sm:$0xff]
        %v3007 = vld [vmem:[#allocation20 + $0x40] sm:$0xff]
        %v3008 = vld [vmem:[#allocation20 + $0x48] sm:$0xff]
        %v3009 = vld [vmem:[#allocation20 + $0x50] sm:$0xff]
        %v3010 = vld [vmem:[#allocation20 + $0x58] sm:$0xff]
        %v3011 = vld [vmem:[#allocation20 + $0x60] sm:$0xff]
        %v3012 = vld [vmem:[#allocation20 + $0x68] sm:$0xff]
        %v3013 = vld [vmem:[#allocation20 + $0x70] sm:$0xff]
        %v3014 = vld [vmem:[#allocation20 + $0x78] sm:$0xff]
        %v3015 = vld [vmem:[#allocation22] sm:$0x1]
        %v3017 = vperm.slane %v3015, 0
        %3019 = vmatpush.msra.mxu0 %v3014
        %3020 = vmatpush.msra.mxu0 %v3013
        %3021 = vmatpush.msra.mxu0 %v3012
        %3022 = vmatpush.msra.mxu0 %v3011
        %3023 = vmatpush.msra.mxu0 %v3010
        %3024 = vmatpush.msra.mxu0 %v3009
        %3025 = vmatpush.msra.mxu0 %v3008
        %3026 = vmatpush.msra.mxu0 %v3007
        %3027 = vmatpush.msra.mxu0 %v3006
        %3028 = vmatpush.msra.mxu0 %v3005
        %3029 = vmatpush.msra.mxu0 %v3004
        %3030 = vmatpush.msra.mxu0 %v3003
        %3031 = vmatpush.msra.mxu0 %v3002
        %3032 = vmatpush.msra.mxu0 %v3001
        %3033 = vmatpush.msra.mxu0 %v3000
        %3034 = vmatpush.msra.mxu0 %v2999
        %3035 = vmatmul.f32.gmra.mxu0 %v2998
        %v3036 = vpop.f32.mrf.mxu0
        %v3037 = vadd.f32 %v3017, %v3036
        %3038 = vdwg.mxu0
        %v3039 = vld [vmem:[#allocation23] sm:$0xff]
        %v3040 = vld [vmem:[#allocation23 + $0x8] sm:$0xff]
        %v3041 = vld [vmem:[#allocation23 + $0x10] sm:$0xff]
        %v3042 = vld [vmem:[#allocation23 + $0x18] sm:$0xff]
        %v3043 = vld [vmem:[#allocation23 + $0x20] sm:$0xff]
        %v3044 = vld [vmem:[#allocation23 + $0x28] sm:$0xff]
        %v3045 = vld [vmem:[#allocation23 + $0x30] sm:$0xff]
        %v3046 = vld [vmem:[#allocation23 + $0x38] sm:$0xff]
        %v3047 = vld [vmem:[#allocation23 + $0x40] sm:$0xff]
        %v3048 = vld [vmem:[#allocation23 + $0x48] sm:$0xff]
        %v3049 = vld [vmem:[#allocation23 + $0x50] sm:$0xff]
        %v3050 = vld [vmem:[#allocation23 + $0x58] sm:$0xff]
        %v3051 = vld [vmem:[#allocation23 + $0x60] sm:$0xff]
        %v3052 = vld [vmem:[#allocation23 + $0x68] sm:$0xff]
        %v3053 = vld [vmem:[#allocation23 + $0x70] sm:$0xff]
        %v3054 = vld [vmem:[#allocation23 + $0x78] sm:$0xff]
        %v3055 = vld [vmem:[#allocation23 + $0x80] sm:$0xff]
        %v3056 = vld [vmem:[#allocation23 + $0x88] sm:$0xff]
        %v3057 = vld [vmem:[#allocation23 + $0x90] sm:$0xff]
        %v3058 = vld [vmem:[#allocation23 + $0x98] sm:$0xff]
        %v3059 = vld [vmem:[#allocation23 + $0xa0] sm:$0xff]
        %v3060 = vld [vmem:[#allocation23 + $0xa8] sm:$0xff]
        %v3061 = vld [vmem:[#allocation23 + $0xb0] sm:$0xff]
        %v3062 = vld [vmem:[#allocation23 + $0xb8] sm:$0xff]
        %v3063 = vld [vmem:[#allocation23 + $0xc0] sm:$0xff]
        %v3064 = vld [vmem:[#allocation23 + $0xc8] sm:$0xff]
        %v3065 = vld [vmem:[#allocation23 + $0xd0] sm:$0xff]
        %v3066 = vld [vmem:[#allocation23 + $0xd8] sm:$0xff]
        %v3067 = vld [vmem:[#allocation23 + $0xe0] sm:$0xff]
        %v3068 = vld [vmem:[#allocation23 + $0xe8] sm:$0xff]
        %v3069 = vld [vmem:[#allocation23 + $0xf0] sm:$0xff]
        %v3070 = vld [vmem:[#allocation23 + $0xf8] sm:$0xff]
        %v3071 = vld [vmem:[%s15] sm:$0x3]
        %v3073 = vperm.slane %v3071, 0
        %v3074 = vperm.slane %v3071, 1
        %3077 = vmatpush.msra.mxu0 %v3069
        %3078 = vmatpush.msra.mxu0 %v3067
        %3079 = vmatpush.msra.mxu0 %v3065
        %3080 = vmatpush.msra.mxu0 %v3063
        %3081 = vmatpush.msra.mxu0 %v3061
        %3082 = vmatpush.msra.mxu0 %v3059
        %3083 = vmatpush.msra.mxu0 %v3057
        %3084 = vmatpush.msra.mxu0 %v3055
        %3085 = vmatpush.msra.mxu0 %v3053
        %3086 = vmatpush.msra.mxu0 %v3051
        %3087 = vmatpush.msra.mxu0 %v3049
        %3088 = vmatpush.msra.mxu0 %v3047
        %3089 = vmatpush.msra.mxu0 %v3045
        %3090 = vmatpush.msra.mxu0 %v3043
        %3091 = vmatpush.msra.mxu0 %v3041
        %3092 = vmatpush.msra.mxu0 %v3039
        %3093 = vmatmul.f32.gmra.mxu0 %v1145
        %v3094 = vpop.f32.mrf.mxu0
        %v3095 = vadd.f32 %v3073, %v3094
        %3096 = vmatmul.f32.gmra.mxu0 %v1148
        %v3097 = vpop.f32.mrf.mxu0
        %v3098 = vadd.f32 %v3073, %v3097
        %3099 = vdwg.mxu0
        %3100 = vmatpush.msra.mxu0 %v3070
        %3101 = vmatpush.msra.mxu0 %v3068
        %3102 = vmatpush.msra.mxu0 %v3066
        %3103 = vmatpush.msra.mxu0 %v3064
        %3104 = vmatpush.msra.mxu0 %v3062
        %3105 = vmatpush.msra.mxu0 %v3060
        %3106 = vmatpush.msra.mxu0 %v3058
        %3107 = vmatpush.msra.mxu0 %v3056
        %3108 = vmatpush.msra.mxu0 %v3054
        %3109 = vmatpush.msra.mxu0 %v3052
        %3110 = vmatpush.msra.mxu0 %v3050
        %3111 = vmatpush.msra.mxu0 %v3048
        %3112 = vmatpush.msra.mxu0 %v3046
        %3113 = vmatpush.msra.mxu0 %v3044
        %3114 = vmatpush.msra.mxu0 %v3042
        %3115 = vmatpush.msra.mxu0 %v3040
        %3116 = vmatmul.f32.gmra.mxu0 %v1145
        %v3117 = vpop.f32.mrf.mxu0
        %v3118 = vadd.f32 %v3074, %v3117
        %3119 = vmatmul.f32.gmra.mxu0 %v1148
        %v3120 = vpop.f32.mrf.mxu0
        %v3121 = vadd.f32 %v3074, %v3120
        %3122 = vdwg.mxu0
        %3124 = vrot.lane.b32.xlu0 %v3037, 112
        %v3125 = vpop.permute.xlu0 %3124
        %3126 = vrot.lane.b32.xlu0 %v3037, 96
        %v3127 = vpop.permute.xlu0 %3126
        %3128 = vrot.lane.b32.xlu0 %v3037, 80
        %v3129 = vpop.permute.xlu0 %3128
        %3130 = vrot.lane.b32.xlu0 %v3037, 64
        %v3131 = vpop.permute.xlu0 %3130
        %3132 = vrot.lane.b32.xlu0 %v3037, 48
        %v3133 = vpop.permute.xlu0 %3132
        %3134 = vrot.lane.b32.xlu0 %v3037, 32
        %v3135 = vpop.permute.xlu0 %3134
        %3136 = vrot.lane.b32.xlu0 %v3037, 16
        %v3137 = vpop.permute.xlu0 %3136
        %3140 = vrot.lane.b32.xlu0 %v3095, 112
        %v3141 = vpop.permute.xlu0 %3140
        %3142 = vrot.lane.b32.xlu0 %v3098, 112
        %v3143 = vpop.permute.xlu0 %3142
        %3146 = vrot.lane.b32.xlu0 %v3095, 96
        %v3147 = vpop.permute.xlu0 %3146
        %3148 = vrot.lane.b32.xlu0 %v3098, 96
        %v3149 = vpop.permute.xlu0 %3148
        %3152 = vrot.lane.b32.xlu0 %v3095, 80
        %v3153 = vpop.permute.xlu0 %3152
        %3154 = vrot.lane.b32.xlu0 %v3098, 80
        %v3155 = vpop.permute.xlu0 %3154
        %3158 = vrot.lane.b32.xlu0 %v3095, 64
        %v3159 = vpop.permute.xlu0 %3158
        %3160 = vrot.lane.b32.xlu0 %v3098, 64
        %v3161 = vpop.permute.xlu0 %3160
        %3164 = vrot.lane.b32.xlu0 %v3095, 48
        %v3165 = vpop.permute.xlu0 %3164
        %3166 = vrot.lane.b32.xlu0 %v3098, 48
        %v3167 = vpop.permute.xlu0 %3166
        %3170 = vrot.lane.b32.xlu0 %v3095, 32
        %v3171 = vpop.permute.xlu0 %3170
        %3172 = vrot.lane.b32.xlu0 %v3098, 32
        %v3173 = vpop.permute.xlu0 %3172
        %3176 = vrot.lane.b32.xlu0 %v3095, 16
        %v3177 = vpop.permute.xlu0 %3176
        %3178 = vrot.lane.b32.xlu0 %v3098, 16
        %v3179 = vpop.permute.xlu0 %3178
        %3184 = vrot.lane.b32.xlu0 %v3118, 112
        %v3185 = vpop.permute.xlu0 %3184
        %3186 = vrot.lane.b32.xlu0 %v3121, 112
        %v3187 = vpop.permute.xlu0 %3186
        %3190 = vrot.lane.b32.xlu0 %v3118, 96
        %v3191 = vpop.permute.xlu0 %3190
        %3192 = vrot.lane.b32.xlu0 %v3121, 96
        %v3193 = vpop.permute.xlu0 %3192
        %3196 = vrot.lane.b32.xlu0 %v3118, 80
        %v3197 = vpop.permute.xlu0 %3196
        %3198 = vrot.lane.b32.xlu0 %v3121, 80
        %v3199 = vpop.permute.xlu0 %3198
        %3202 = vrot.lane.b32.xlu0 %v3118, 64
        %v3203 = vpop.permute.xlu0 %3202
        %3204 = vrot.lane.b32.xlu0 %v3121, 64
        %v3205 = vpop.permute.xlu0 %3204
        %3208 = vrot.lane.b32.xlu0 %v3118, 48
        %v3209 = vpop.permute.xlu0 %3208
        %3210 = vrot.lane.b32.xlu0 %v3121, 48
        %v3211 = vpop.permute.xlu0 %3210
        %3214 = vrot.lane.b32.xlu0 %v3118, 32
        %v3215 = vpop.permute.xlu0 %3214
        %3216 = vrot.lane.b32.xlu0 %v3121, 32
        %v3217 = vpop.permute.xlu0 %3216
        %3220 = vrot.lane.b32.xlu0 %v3118, 16
        %v3221 = vpop.permute.xlu0 %3220
        %3222 = vrot.lane.b32.xlu0 %v3121, 16
        %v3223 = vpop.permute.xlu0 %3222
        %3226 = vxpose.xlu0.b32.start [1/16] %v3095, 128
        %3227 = vxpose.xlu0.b32.cont [2/16] %v3098, 128
        %3228 = vxpose.xlu0.b32.cont [3/16] 0.0, 128
        %3229 = vxpose.xlu0.b32.cont [4/16] 0.0, 128
        %3230 = vxpose.xlu0.b32.cont [5/16] 0.0, 128
        %3231 = vxpose.xlu0.b32.cont [6/16] 0.0, 128
        %3232 = vxpose.xlu0.b32.cont [7/16] 0.0, 128
        %3233 = vxpose.xlu0.b32.cont [8/16] 0.0, 128
        %3234 = vxpose.xlu0.b32.cont [9/16] 0.0, 128
        %3235 = vxpose.xlu0.b32.cont [10/16] 0.0, 128
        %3236 = vxpose.xlu0.b32.cont [11/16] 0.0, 128
        %3237 = vxpose.xlu0.b32.cont [12/16] 0.0, 128
        %3238 = vxpose.xlu0.b32.cont [13/16] 0.0, 128
        %3239 = vxpose.xlu0.b32.cont [14/16] 0.0, 128
        %3240 = vxpose.xlu0.b32.cont [15/16] 0.0, 128
        %3241 = vxpose.xlu0.b32.end [16/16] 0.0, 128
        %v3242 = vpop.trf.xlu0
        %v3243 = vpop.trf.xlu0
        %v3244 = vpop.trf.xlu0
        %v3245 = vpop.trf.xlu0
        %v3246 = vpop.trf.xlu0
        %v3247 = vpop.trf.xlu0
        %v3248 = vpop.trf.xlu0
        %v3249 = vpop.trf.xlu0
        %v3250 = vpop.trf.xlu0
        %v3251 = vpop.trf.xlu0
        %v3252 = vpop.trf.xlu0
        %v3253 = vpop.trf.xlu0
        %v3254 = vpop.trf.xlu0
        %v3255 = vpop.trf.xlu0
        %v3256 = vpop.trf.xlu0
        %v3257 = vpop.trf.xlu0
        %3258 = vxpose.xlu0.b32.start [1/16] %v3141, 128
        %3259 = vxpose.xlu0.b32.cont [2/16] %v3143, 128
        %3260 = vxpose.xlu0.b32.cont [3/16] 0.0, 128
        %3261 = vxpose.xlu0.b32.cont [4/16] 0.0, 128
        %3262 = vxpose.xlu0.b32.cont [5/16] 0.0, 128
        %3263 = vxpose.xlu0.b32.cont [6/16] 0.0, 128
        %3264 = vxpose.xlu0.b32.cont [7/16] 0.0, 128
        %3265 = vxpose.xlu0.b32.cont [8/16] 0.0, 128
        %3266 = vxpose.xlu0.b32.cont [9/16] 0.0, 128
        %3267 = vxpose.xlu0.b32.cont [10/16] 0.0, 128
        %3268 = vxpose.xlu0.b32.cont [11/16] 0.0, 128
        %3269 = vxpose.xlu0.b32.cont [12/16] 0.0, 128
        %3270 = vxpose.xlu0.b32.cont [13/16] 0.0, 128
        %3271 = vxpose.xlu0.b32.cont [14/16] 0.0, 128
        %3272 = vxpose.xlu0.b32.cont [15/16] 0.0, 128
        %3273 = vxpose.xlu0.b32.end [16/16] 0.0, 128
        %v3274 = vpop.trf.xlu0
        %v3275 = vpop.trf.xlu0
        %v3276 = vpop.trf.xlu0
        %v3277 = vpop.trf.xlu0
        %v3278 = vpop.trf.xlu0
        %v3279 = vpop.trf.xlu0
        %v3280 = vpop.trf.xlu0
        %v3281 = vpop.trf.xlu0
        %v3282 = vpop.trf.xlu0
        %v3283 = vpop.trf.xlu0
        %v3284 = vpop.trf.xlu0
        %v3285 = vpop.trf.xlu0
        %v3286 = vpop.trf.xlu0
        %v3287 = vpop.trf.xlu0
        %v3288 = vpop.trf.xlu0
        %v3289 = vpop.trf.xlu0
        %3290 = vxpose.xlu0.b32.start [1/16] %v3147, 128
        %3291 = vxpose.xlu0.b32.cont [2/16] %v3149, 128
        %3292 = vxpose.xlu0.b32.cont [3/16] 0.0, 128
        %3293 = vxpose.xlu0.b32.cont [4/16] 0.0, 128
        %3294 = vxpose.xlu0.b32.cont [5/16] 0.0, 128
        %3295 = vxpose.xlu0.b32.cont [6/16] 0.0, 128
        %3296 = vxpose.xlu0.b32.cont [7/16] 0.0, 128
        %3297 = vxpose.xlu0.b32.cont [8/16] 0.0, 128
        %3298 = vxpose.xlu0.b32.cont [9/16] 0.0, 128
        %3299 = vxpose.xlu0.b32.cont [10/16] 0.0, 128
        %3300 = vxpose.xlu0.b32.cont [11/16] 0.0, 128
        %3301 = vxpose.xlu0.b32.cont [12/16] 0.0, 128
        %3302 = vxpose.xlu0.b32.cont [13/16] 0.0, 128
        %3303 = vxpose.xlu0.b32.cont [14/16] 0.0, 128
        %3304 = vxpose.xlu0.b32.cont [15/16] 0.0, 128
        %3305 = vxpose.xlu0.b32.end [16/16] 0.0, 128
        %v3306 = vpop.trf.xlu0
        %v3307 = vpop.trf.xlu0
        %v3308 = vpop.trf.xlu0
        %v3309 = vpop.trf.xlu0
        %v3310 = vpop.trf.xlu0
        %v3311 = vpop.trf.xlu0
        %v3312 = vpop.trf.xlu0
        %v3313 = vpop.trf.xlu0
        %v3314 = vpop.trf.xlu0
        %v3315 = vpop.trf.xlu0
        %v3316 = vpop.trf.xlu0
        %v3317 = vpop.trf.xlu0
        %v3318 = vpop.trf.xlu0
        %v3319 = vpop.trf.xlu0
        %v3320 = vpop.trf.xlu0
        %v3321 = vpop.trf.xlu0
        %3322 = vxpose.xlu0.b32.start [1/16] %v3153, 128
        %3323 = vxpose.xlu0.b32.cont [2/16] %v3155, 128
        %3324 = vxpose.xlu0.b32.cont [3/16] 0.0, 128
        %3325 = vxpose.xlu0.b32.cont [4/16] 0.0, 128
        %3326 = vxpose.xlu0.b32.cont [5/16] 0.0, 128
        %3327 = vxpose.xlu0.b32.cont [6/16] 0.0, 128
        %3328 = vxpose.xlu0.b32.cont [7/16] 0.0, 128
        %3329 = vxpose.xlu0.b32.cont [8/16] 0.0, 128
        %3330 = vxpose.xlu0.b32.cont [9/16] 0.0, 128
        %3331 = vxpose.xlu0.b32.cont [10/16] 0.0, 128
        %3332 = vxpose.xlu0.b32.cont [11/16] 0.0, 128
        %3333 = vxpose.xlu0.b32.cont [12/16] 0.0, 128
        %3334 = vxpose.xlu0.b32.cont [13/16] 0.0, 128
        %3335 = vxpose.xlu0.b32.cont [14/16] 0.0, 128
        %3336 = vxpose.xlu0.b32.cont [15/16] 0.0, 128
        %3337 = vxpose.xlu0.b32.end [16/16] 0.0, 128
        %v3338 = vpop.trf.xlu0
        %v3339 = vpop.trf.xlu0
        %v3340 = vpop.trf.xlu0
        %v3341 = vpop.trf.xlu0
        %v3342 = vpop.trf.xlu0
        %v3343 = vpop.trf.xlu0
        %v3344 = vpop.trf.xlu0
        %v3345 = vpop.trf.xlu0
        %v3346 = vpop.trf.xlu0
        %v3347 = vpop.trf.xlu0
        %v3348 = vpop.trf.xlu0
        %v3349 = vpop.trf.xlu0
        %v3350 = vpop.trf.xlu0
        %v3351 = vpop.trf.xlu0
        %v3352 = vpop.trf.xlu0
        %v3353 = vpop.trf.xlu0
        %3354 = vxpose.xlu0.b32.start [1/16] %v3159, 128
        %3355 = vxpose.xlu0.b32.cont [2/16] %v3161, 128
        %3356 = vxpose.xlu0.b32.cont [3/16] 0.0, 128
        %3357 = vxpose.xlu0.b32.cont [4/16] 0.0, 128
        %3358 = vxpose.xlu0.b32.cont [5/16] 0.0, 128
        %3359 = vxpose.xlu0.b32.cont [6/16] 0.0, 128
        %3360 = vxpose.xlu0.b32.cont [7/16] 0.0, 128
        %3361 = vxpose.xlu0.b32.cont [8/16] 0.0, 128
        %3362 = vxpose.xlu0.b32.cont [9/16] 0.0, 128
        %3363 = vxpose.xlu0.b32.cont [10/16] 0.0, 128
        %3364 = vxpose.xlu0.b32.cont [11/16] 0.0, 128
        %3365 = vxpose.xlu0.b32.cont [12/16] 0.0, 128
        %3366 = vxpose.xlu0.b32.cont [13/16] 0.0, 128
        %3367 = vxpose.xlu0.b32.cont [14/16] 0.0, 128
        %3368 = vxpose.xlu0.b32.cont [15/16] 0.0, 128
        %3369 = vxpose.xlu0.b32.end [16/16] 0.0, 128
        %v3370 = vpop.trf.xlu0
        %v3371 = vpop.trf.xlu0
        %v3372 = vpop.trf.xlu0
        %v3373 = vpop.trf.xlu0
        %v3374 = vpop.trf.xlu0
        %v3375 = vpop.trf.xlu0
        %v3376 = vpop.trf.xlu0
        %v3377 = vpop.trf.xlu0
        %v3378 = vpop.trf.xlu0
        %v3379 = vpop.trf.xlu0
        %v3380 = vpop.trf.xlu0
        %v3381 = vpop.trf.xlu0
        %v3382 = vpop.trf.xlu0
        %v3383 = vpop.trf.xlu0
        %v3384 = vpop.trf.xlu0
        %v3385 = vpop.trf.xlu0
        %3386 = vxpose.xlu0.b32.start [1/16] %v3165, 128
        %3387 = vxpose.xlu0.b32.cont [2/16] %v3167, 128
        %3388 = vxpose.xlu0.b32.cont [3/16] 0.0, 128
        %3389 = vxpose.xlu0.b32.cont [4/16] 0.0, 128
        %3390 = vxpose.xlu0.b32.cont [5/16] 0.0, 128
        %3391 = vxpose.xlu0.b32.cont [6/16] 0.0, 128
        %3392 = vxpose.xlu0.b32.cont [7/16] 0.0, 128
        %3393 = vxpose.xlu0.b32.cont [8/16] 0.0, 128
        %3394 = vxpose.xlu0.b32.cont [9/16] 0.0, 128
        %3395 = vxpose.xlu0.b32.cont [10/16] 0.0, 128
        %3396 = vxpose.xlu0.b32.cont [11/16] 0.0, 128
        %3397 = vxpose.xlu0.b32.cont [12/16] 0.0, 128
        %3398 = vxpose.xlu0.b32.cont [13/16] 0.0, 128
        %3399 = vxpose.xlu0.b32.cont [14/16] 0.0, 128
        %3400 = vxpose.xlu0.b32.cont [15/16] 0.0, 128
        %3401 = vxpose.xlu0.b32.end [16/16] 0.0, 128
        %v3402 = vpop.trf.xlu0
        %v3403 = vpop.trf.xlu0
        %v3404 = vpop.trf.xlu0
        %v3405 = vpop.trf.xlu0
        %v3406 = vpop.trf.xlu0
        %v3407 = vpop.trf.xlu0
        %v3408 = vpop.trf.xlu0
        %v3409 = vpop.trf.xlu0
        %v3410 = vpop.trf.xlu0
        %v3411 = vpop.trf.xlu0
        %v3412 = vpop.trf.xlu0
        %v3413 = vpop.trf.xlu0
        %v3414 = vpop.trf.xlu0
        %v3415 = vpop.trf.xlu0
        %v3416 = vpop.trf.xlu0
        %v3417 = vpop.trf.xlu0
        %3418 = vxpose.xlu0.b32.start [1/16] %v3171, 128
        %3419 = vxpose.xlu0.b32.cont [2/16] %v3173, 128
        %3420 = vxpose.xlu0.b32.cont [3/16] 0.0, 128
        %3421 = vxpose.xlu0.b32.cont [4/16] 0.0, 128
        %3422 = vxpose.xlu0.b32.cont [5/16] 0.0, 128
        %3423 = vxpose.xlu0.b32.cont [6/16] 0.0, 128
        %3424 = vxpose.xlu0.b32.cont [7/16] 0.0, 128
        %3425 = vxpose.xlu0.b32.cont [8/16] 0.0, 128
        %3426 = vxpose.xlu0.b32.cont [9/16] 0.0, 128
        %3427 = vxpose.xlu0.b32.cont [10/16] 0.0, 128
        %3428 = vxpose.xlu0.b32.cont [11/16] 0.0, 128
        %3429 = vxpose.xlu0.b32.cont [12/16] 0.0, 128
        %3430 = vxpose.xlu0.b32.cont [13/16] 0.0, 128
        %3431 = vxpose.xlu0.b32.cont [14/16] 0.0, 128
        %3432 = vxpose.xlu0.b32.cont [15/16] 0.0, 128
        %3433 = vxpose.xlu0.b32.end [16/16] 0.0, 128
        %v3434 = vpop.trf.xlu0
        %v3435 = vpop.trf.xlu0
        %v3436 = vpop.trf.xlu0
        %v3437 = vpop.trf.xlu0
        %v3438 = vpop.trf.xlu0
        %v3439 = vpop.trf.xlu0
        %v3440 = vpop.trf.xlu0
        %v3441 = vpop.trf.xlu0
        %v3442 = vpop.trf.xlu0
        %v3443 = vpop.trf.xlu0
        %v3444 = vpop.trf.xlu0
        %v3445 = vpop.trf.xlu0
        %v3446 = vpop.trf.xlu0
        %v3447 = vpop.trf.xlu0
        %v3448 = vpop.trf.xlu0
        %v3449 = vpop.trf.xlu0
        %3450 = vxpose.xlu0.b32.start [1/16] %v3177, 128
        %3451 = vxpose.xlu0.b32.cont [2/16] %v3179, 128
        %3452 = vxpose.xlu0.b32.cont [3/16] 0.0, 128
        %3453 = vxpose.xlu0.b32.cont [4/16] 0.0, 128
        %3454 = vxpose.xlu0.b32.cont [5/16] 0.0, 128
        %3455 = vxpose.xlu0.b32.cont [6/16] 0.0, 128
        %3456 = vxpose.xlu0.b32.cont [7/16] 0.0, 128
        %3457 = vxpose.xlu0.b32.cont [8/16] 0.0, 128
        %3458 = vxpose.xlu0.b32.cont [9/16] 0.0, 128
        %3459 = vxpose.xlu0.b32.cont [10/16] 0.0, 128
        %3460 = vxpose.xlu0.b32.cont [11/16] 0.0, 128
        %3461 = vxpose.xlu0.b32.cont [12/16] 0.0, 128
        %3462 = vxpose.xlu0.b32.cont [13/16] 0.0, 128
        %3463 = vxpose.xlu0.b32.cont [14/16] 0.0, 128
        %3464 = vxpose.xlu0.b32.cont [15/16] 0.0, 128
        %3465 = vxpose.xlu0.b32.end [16/16] 0.0, 128
        %v3466 = vpop.trf.xlu0
        %v3467 = vpop.trf.xlu0
        %v3468 = vpop.trf.xlu0
        %v3469 = vpop.trf.xlu0
        %v3470 = vpop.trf.xlu0
        %v3471 = vpop.trf.xlu0
        %v3472 = vpop.trf.xlu0
        %v3473 = vpop.trf.xlu0
        %v3474 = vpop.trf.xlu0
        %v3475 = vpop.trf.xlu0
        %v3476 = vpop.trf.xlu0
        %v3477 = vpop.trf.xlu0
        %v3478 = vpop.trf.xlu0
        %v3479 = vpop.trf.xlu0
        %v3480 = vpop.trf.xlu0
        %v3481 = vpop.trf.xlu0
        %v3482 = vsel %vm1619, %v3037, 0
        %3484 = vmatpush.msra.mxu0 0.0
        %3485 = vmatpush.msra.mxu0 0.0
        %3486 = vmatpush.msra.mxu0 0.0
        %3487 = vmatpush.msra.mxu0 0.0
        %3488 = vmatpush.msra.mxu0 0.0
        %3489 = vmatpush.msra.mxu0 0.0
        %3490 = vmatpush.msra.mxu0 0.0
        %3491 = vmatpush.msra.mxu0 0.0
        %3492 = vmatpush.msra.mxu0 0.0
        %3493 = vmatpush.msra.mxu0 0.0
        %3494 = vmatpush.msra.mxu0 0.0
        %3495 = vmatpush.msra.mxu0 0.0
        %3496 = vmatpush.msra.mxu0 0.0
        %3497 = vmatpush.msra.mxu0 0.0
        %3498 = vmatpush.msra.mxu0 %v3243
        %3499 = vmatpush.msra.mxu0 %v3242
        %3500 = vmatmul.f32.gmra.mxu0 %v3482
        %v3501 = vpop.f32.mrf.mxu0
        %v3502 = vadd.f32 0.0, %v3501
        %3503 = vdwg.mxu0
        %v3504 = vsel %vm1619, %v3125, 0
        %3506 = vmatpush.msra.mxu0 0.0
        %3507 = vmatpush.msra.mxu0 0.0
        %3508 = vmatpush.msra.mxu0 0.0
        %3509 = vmatpush.msra.mxu0 0.0
        %3510 = vmatpush.msra.mxu0 0.0
        %3511 = vmatpush.msra.mxu0 0.0
        %3512 = vmatpush.msra.mxu0 0.0
        %3513 = vmatpush.msra.mxu0 0.0
        %3514 = vmatpush.msra.mxu0 0.0
        %3515 = vmatpush.msra.mxu0 0.0
        %3516 = vmatpush.msra.mxu0 0.0
        %3517 = vmatpush.msra.mxu0 0.0
        %3518 = vmatpush.msra.mxu0 0.0
        %3519 = vmatpush.msra.mxu0 0.0
        %3520 = vmatpush.msra.mxu0 %v3275
        %3521 = vmatpush.msra.mxu0 %v3274
        %3522 = vmatmul.f32.gmra.mxu0 %v3504
        %v3523 = vpop.f32.mrf.mxu0
        %v3524 = vadd.f32 0.0, %v3523
        %3525 = vdwg.mxu0
        %v3526 = vsel %vm1619, %v3127, 0
        %3528 = vmatpush.msra.mxu0 0.0
        %3529 = vmatpush.msra.mxu0 0.0
        %3530 = vmatpush.msra.mxu0 0.0
        %3531 = vmatpush.msra.mxu0 0.0
        %3532 = vmatpush.msra.mxu0 0.0
        %3533 = vmatpush.msra.mxu0 0.0
        %3534 = vmatpush.msra.mxu0 0.0
        %3535 = vmatpush.msra.mxu0 0.0
        %3536 = vmatpush.msra.mxu0 0.0
        %3537 = vmatpush.msra.mxu0 0.0
        %3538 = vmatpush.msra.mxu0 0.0
        %3539 = vmatpush.msra.mxu0 0.0
        %3540 = vmatpush.msra.mxu0 0.0
        %3541 = vmatpush.msra.mxu0 0.0
        %3542 = vmatpush.msra.mxu0 %v3307
        %3543 = vmatpush.msra.mxu0 %v3306
        %3544 = vmatmul.f32.gmra.mxu0 %v3526
        %v3545 = vpop.f32.mrf.mxu0
        %v3546 = vadd.f32 0.0, %v3545
        %3547 = vdwg.mxu0
        %v3548 = vsel %vm1619, %v3129, 0
        %3550 = vmatpush.msra.mxu0 0.0
        %3551 = vmatpush.msra.mxu0 0.0
        %3552 = vmatpush.msra.mxu0 0.0
        %3553 = vmatpush.msra.mxu0 0.0
        %3554 = vmatpush.msra.mxu0 0.0
        %3555 = vmatpush.msra.mxu0 0.0
        %3556 = vmatpush.msra.mxu0 0.0
        %3557 = vmatpush.msra.mxu0 0.0
        %3558 = vmatpush.msra.mxu0 0.0
        %3559 = vmatpush.msra.mxu0 0.0
        %3560 = vmatpush.msra.mxu0 0.0
        %3561 = vmatpush.msra.mxu0 0.0
        %3562 = vmatpush.msra.mxu0 0.0
        %3563 = vmatpush.msra.mxu0 0.0
        %3564 = vmatpush.msra.mxu0 %v3339
        %3565 = vmatpush.msra.mxu0 %v3338
        %3566 = vmatmul.f32.gmra.mxu0 %v3548
        %v3567 = vpop.f32.mrf.mxu0
        %v3568 = vadd.f32 0.0, %v3567
        %3569 = vdwg.mxu0
        %v3570 = vsel %vm1619, %v3131, 0
        %3572 = vmatpush.msra.mxu0 0.0
        %3573 = vmatpush.msra.mxu0 0.0
        %3574 = vmatpush.msra.mxu0 0.0
        %3575 = vmatpush.msra.mxu0 0.0
        %3576 = vmatpush.msra.mxu0 0.0
        %3577 = vmatpush.msra.mxu0 0.0
        %3578 = vmatpush.msra.mxu0 0.0
        %3579 = vmatpush.msra.mxu0 0.0
        %3580 = vmatpush.msra.mxu0 0.0
        %3581 = vmatpush.msra.mxu0 0.0
        %3582 = vmatpush.msra.mxu0 0.0
        %3583 = vmatpush.msra.mxu0 0.0
        %3584 = vmatpush.msra.mxu0 0.0
        %3585 = vmatpush.msra.mxu0 0.0
        %3586 = vmatpush.msra.mxu0 %v3371
        %3587 = vmatpush.msra.mxu0 %v3370
        %3588 = vmatmul.f32.gmra.mxu0 %v3570
        %v3589 = vpop.f32.mrf.mxu0
        %v3590 = vadd.f32 0.0, %v3589
        %3591 = vdwg.mxu0
        %v3592 = vsel %vm1619, %v3133, 0
        %3594 = vmatpush.msra.mxu0 0.0
        %3595 = vmatpush.msra.mxu0 0.0
        %3596 = vmatpush.msra.mxu0 0.0
        %3597 = vmatpush.msra.mxu0 0.0
        %3598 = vmatpush.msra.mxu0 0.0
        %3599 = vmatpush.msra.mxu0 0.0
        %3600 = vmatpush.msra.mxu0 0.0
        %3601 = vmatpush.msra.mxu0 0.0
        %3602 = vmatpush.msra.mxu0 0.0
        %3603 = vmatpush.msra.mxu0 0.0
        %3604 = vmatpush.msra.mxu0 0.0
        %3605 = vmatpush.msra.mxu0 0.0
        %3606 = vmatpush.msra.mxu0 0.0
        %3607 = vmatpush.msra.mxu0 0.0
        %3608 = vmatpush.msra.mxu0 %v3403
        %3609 = vmatpush.msra.mxu0 %v3402
        %3610 = vmatmul.f32.gmra.mxu0 %v3592
        %v3611 = vpop.f32.mrf.mxu0
        %v3612 = vadd.f32 0.0, %v3611
        %3613 = vdwg.mxu0
        %v3614 = vsel %vm1619, %v3135, 0
        %3616 = vmatpush.msra.mxu0 0.0
        %3617 = vmatpush.msra.mxu0 0.0
        %3618 = vmatpush.msra.mxu0 0.0
        %3619 = vmatpush.msra.mxu0 0.0
        %3620 = vmatpush.msra.mxu0 0.0
        %3621 = vmatpush.msra.mxu0 0.0
        %3622 = vmatpush.msra.mxu0 0.0
        %3623 = vmatpush.msra.mxu0 0.0
        %3624 = vmatpush.msra.mxu0 0.0
        %3625 = vmatpush.msra.mxu0 0.0
        %3626 = vmatpush.msra.mxu0 0.0
        %3627 = vmatpush.msra.mxu0 0.0
        %3628 = vmatpush.msra.mxu0 0.0
        %3629 = vmatpush.msra.mxu0 0.0
        %3630 = vmatpush.msra.mxu0 %v3435
        %3631 = vmatpush.msra.mxu0 %v3434
        %3632 = vmatmul.f32.gmra.mxu0 %v3614
        %v3633 = vpop.f32.mrf.mxu0
        %v3634 = vadd.f32 0.0, %v3633
        %3635 = vdwg.mxu0
        %v3636 = vsel %vm1619, %v3137, 0
        %3638 = vmatpush.msra.mxu0 0.0
        %3639 = vmatpush.msra.mxu0 0.0
        %3640 = vmatpush.msra.mxu0 0.0
        %3641 = vmatpush.msra.mxu0 0.0
        %3642 = vmatpush.msra.mxu0 0.0
        %3643 = vmatpush.msra.mxu0 0.0
        %3644 = vmatpush.msra.mxu0 0.0
        %3645 = vmatpush.msra.mxu0 0.0
        %3646 = vmatpush.msra.mxu0 0.0
        %3647 = vmatpush.msra.mxu0 0.0
        %3648 = vmatpush.msra.mxu0 0.0
        %3649 = vmatpush.msra.mxu0 0.0
        %3650 = vmatpush.msra.mxu0 0.0
        %3651 = vmatpush.msra.mxu0 0.0
        %3652 = vmatpush.msra.mxu0 %v3467
        %3653 = vmatpush.msra.mxu0 %v3466
        %3654 = vmatmul.f32.gmra.mxu0 %v3636
        %v3655 = vpop.f32.mrf.mxu0
        %v3656 = vadd.f32 0.0, %v3655
        %3657 = vdwg.mxu0
        %v3658 = vmul.f32 %v3502, 0.25
        %v3659 = vmul.f32 %v3524, 0.25
        %v3660 = vmul.f32 %v3546, 0.25
        %v3661 = vmul.f32 %v3568, 0.25
        %v3662 = vmul.f32 %v3590, 0.25
        %v3663 = vmul.f32 %v3612, 0.25
        %v3664 = vmul.f32 %v3634, 0.25
        %v3665 = vmul.f32 %v3656, 0.25
        %v3666 = vsel %vm1619, %v3658, -inf
        %3667 = vmax.xlane.f32.xlu0 %v3666
        %v3668 = vpop.xlane.xlu0 %3667
        %v3669 = vsel %vm1619, %v3659, -inf
        %3670 = vmax.xlane.f32.xlu0 %v3669
        %v3671 = vpop.xlane.xlu0 %3670
        %v3672 = vsel %vm1619, %v3660, -inf
        %3673 = vmax.xlane.f32.xlu0 %v3672
        %v3674 = vpop.xlane.xlu0 %3673
        %v3675 = vsel %vm1619, %v3661, -inf
        %3676 = vmax.xlane.f32.xlu0 %v3675
        %v3677 = vpop.xlane.xlu0 %3676
        %v3678 = vsel %vm1619, %v3662, -inf
        %3679 = vmax.xlane.f32.xlu0 %v3678
        %v3680 = vpop.xlane.xlu0 %3679
        %v3681 = vsel %vm1619, %v3663, -inf
        %3682 = vmax.xlane.f32.xlu0 %v3681
        %v3683 = vpop.xlane.xlu0 %3682
        %v3684 = vsel %vm1619, %v3664, -inf
        %3685 = vmax.xlane.f32.xlu0 %v3684
        %v3686 = vpop.xlane.xlu0 %3685
        %v3687 = vsel %vm1619, %v3665, -inf
        %3688 = vmax.xlane.f32.xlu0 %v3687
        %v3689 = vpop.xlane.xlu0 %3688
        %v3690 = vsub.f32 %v3658, %v3668
        %v3691 = vsub.f32 %v3659, %v3671
        %v3692 = vsub.f32 %v3660, %v3674
        %v3693 = vsub.f32 %v3661, %v3677
        %v3694 = vsub.f32 %v3662, %v3680
        %v3695 = vsub.f32 %v3663, %v3683
        %v3696 = vsub.f32 %v3664, %v3686
        %v3697 = vsub.f32 %v3665, %v3689
        %v3698 = vmul.f32 %v3690, 1.442695
        %v3699 = vpow.pop %v3698
        %v3700 = vmul.f32 %v3691, 1.442695
        %v3701 = vpow.pop %v3700
        %v3702 = vmul.f32 %v3692, 1.442695
        %v3703 = vpow.pop %v3702
        %v3704 = vmul.f32 %v3693, 1.442695
        %v3705 = vpow.pop %v3704
        %v3706 = vmul.f32 %v3694, 1.442695
        %v3707 = vpow.pop %v3706
        %v3708 = vmul.f32 %v3695, 1.442695
        %v3709 = vpow.pop %v3708
        %v3710 = vmul.f32 %v3696, 1.442695
        %v3711 = vpow.pop %v3710
        %v3712 = vmul.f32 %v3697, 1.442695
        %v3713 = vpow.pop %v3712
        %v3714 = vsel %vm1619, %v3699, 0.0
        %3715 = vadd.xlane.f32.xlu0 %v3714
        %v3716 = vpop.xlane.xlu0 %3715
        %v3717 = vsel %vm1619, %v3701, 0.0
        %3718 = vadd.xlane.f32.xlu0 %v3717
        %v3719 = vpop.xlane.xlu0 %3718
        %v3720 = vsel %vm1619, %v3703, 0.0
        %3721 = vadd.xlane.f32.xlu0 %v3720
        %v3722 = vpop.xlane.xlu0 %3721
        %v3723 = vsel %vm1619, %v3705, 0.0
        %3724 = vadd.xlane.f32.xlu0 %v3723
        %v3725 = vpop.xlane.xlu0 %3724
        %v3726 = vsel %vm1619, %v3707, 0.0
        %3727 = vadd.xlane.f32.xlu0 %v3726
        %v3728 = vpop.xlane.xlu0 %3727
        %v3729 = vsel %vm1619, %v3709, 0.0
        %3730 = vadd.xlane.f32.xlu0 %v3729
        %v3731 = vpop.xlane.xlu0 %3730
        %v3732 = vsel %vm1619, %v3711, 0.0
        %3733 = vadd.xlane.f32.xlu0 %v3732
        %v3734 = vpop.xlane.xlu0 %3733
        %v3735 = vsel %vm1619, %v3713, 0.0
        %3736 = vadd.xlane.f32.xlu0 %v3735
        %v3737 = vpop.xlane.xlu0 %3736
        %v3738 = vrcp.pop %v3716
        %v3739 = vrcp.pop %v3719
        %v3740 = vrcp.pop %v3722
        %v3741 = vrcp.pop %v3725
        %v3742 = vrcp.pop %v3728
        %v3743 = vrcp.pop %v3731
        %v3744 = vrcp.pop %v3734
        %v3745 = vrcp.pop %v3737
        %v3746 = vmul.f32 %v3699, %v3738
        %v3747 = vmul.f32 %v3701, %v3739
        %v3748 = vmul.f32 %v3703, %v3740
        %v3749 = vmul.f32 %v3705, %v3741
        %v3750 = vmul.f32 %v3707, %v3742
        %v3751 = vmul.f32 %v3709, %v3743
        %v3752 = vmul.f32 %v3711, %v3744
        %v3753 = vmul.f32 %v3713, %v3745
        %3754 = vxpose.xlu0.b32.start [1/16] %v3118, 128
        %3755 = vxpose.xlu0.b32.cont [2/16] %v3121, 128
        %3756 = vxpose.xlu0.b32.cont [3/16] 0.0, 128
        %3757 = vxpose.xlu0.b32.cont [4/16] 0.0, 128
        %3758 = vxpose.xlu0.b32.cont [5/16] 0.0, 128
        %3759 = vxpose.xlu0.b32.cont [6/16] 0.0, 128
        %3760 = vxpose.xlu0.b32.cont [7/16] 0.0, 128
        %3761 = vxpose.xlu0.b32.cont [8/16] 0.0, 128
        %3762 = vxpose.xlu0.b32.cont [9/16] 0.0, 128
        %3763 = vxpose.xlu0.b32.cont [10/16] 0.0, 128
        %3764 = vxpose.xlu0.b32.cont [11/16] 0.0, 128
        %3765 = vxpose.xlu0.b32.cont [12/16] 0.0, 128
        %3766 = vxpose.xlu0.b32.cont [13/16] 0.0, 128
        %3767 = vxpose.xlu0.b32.cont [14/16] 0.0, 128
        %3768 = vxpose.xlu0.b32.cont [15/16] 0.0, 128
        %3769 = vxpose.xlu0.b32.end [16/16] 0.0, 128
        %v3770 = vpop.trf.xlu0
        %v3771 = vpop.trf.xlu0
        %v3772 = vpop.trf.xlu0
        %v3773 = vpop.trf.xlu0
        %v3774 = vpop.trf.xlu0
        %v3775 = vpop.trf.xlu0
        %v3776 = vpop.trf.xlu0
        %v3777 = vpop.trf.xlu0
        %v3778 = vpop.trf.xlu0
        %v3779 = vpop.trf.xlu0
        %v3780 = vpop.trf.xlu0
        %v3781 = vpop.trf.xlu0
        %v3782 = vpop.trf.xlu0
        %v3783 = vpop.trf.xlu0
        %v3784 = vpop.trf.xlu0
        %v3785 = vpop.trf.xlu0
        %3786 = vxpose.xlu0.b32.start [1/16] %v3185, 128
        %3787 = vxpose.xlu0.b32.cont [2/16] %v3187, 128
        %3788 = vxpose.xlu0.b32.cont [3/16] 0.0, 128
        %3789 = vxpose.xlu0.b32.cont [4/16] 0.0, 128
        %3790 = vxpose.xlu0.b32.cont [5/16] 0.0, 128
        %3791 = vxpose.xlu0.b32.cont [6/16] 0.0, 128
        %3792 = vxpose.xlu0.b32.cont [7/16] 0.0, 128
        %3793 = vxpose.xlu0.b32.cont [8/16] 0.0, 128
        %3794 = vxpose.xlu0.b32.cont [9/16] 0.0, 128
        %3795 = vxpose.xlu0.b32.cont [10/16] 0.0, 128
        %3796 = vxpose.xlu0.b32.cont [11/16] 0.0, 128
        %3797 = vxpose.xlu0.b32.cont [12/16] 0.0, 128
        %3798 = vxpose.xlu0.b32.cont [13/16] 0.0, 128
        %3799 = vxpose.xlu0.b32.cont [14/16] 0.0, 128
        %3800 = vxpose.xlu0.b32.cont [15/16] 0.0, 128
        %3801 = vxpose.xlu0.b32.end [16/16] 0.0, 128
        %v3802 = vpop.trf.xlu0
        %v3803 = vpop.trf.xlu0
        %v3804 = vpop.trf.xlu0
        %v3805 = vpop.trf.xlu0
        %v3806 = vpop.trf.xlu0
        %v3807 = vpop.trf.xlu0
        %v3808 = vpop.trf.xlu0
        %v3809 = vpop.trf.xlu0
        %v3810 = vpop.trf.xlu0
        %v3811 = vpop.trf.xlu0
        %v3812 = vpop.trf.xlu0
        %v3813 = vpop.trf.xlu0
        %v3814 = vpop.trf.xlu0
        %v3815 = vpop.trf.xlu0
        %v3816 = vpop.trf.xlu0
        %v3817 = vpop.trf.xlu0
        %3818 = vxpose.xlu0.b32.start [1/16] %v3191, 128
        %3819 = vxpose.xlu0.b32.cont [2/16] %v3193, 128
        %3820 = vxpose.xlu0.b32.cont [3/16] 0.0, 128
        %3821 = vxpose.xlu0.b32.cont [4/16] 0.0, 128
        %3822 = vxpose.xlu0.b32.cont [5/16] 0.0, 128
        %3823 = vxpose.xlu0.b32.cont [6/16] 0.0, 128
        %3824 = vxpose.xlu0.b32.cont [7/16] 0.0, 128
        %3825 = vxpose.xlu0.b32.cont [8/16] 0.0, 128
        %3826 = vxpose.xlu0.b32.cont [9/16] 0.0, 128
        %3827 = vxpose.xlu0.b32.cont [10/16] 0.0, 128
        %3828 = vxpose.xlu0.b32.cont [11/16] 0.0, 128
        %3829 = vxpose.xlu0.b32.cont [12/16] 0.0, 128
        %3830 = vxpose.xlu0.b32.cont [13/16] 0.0, 128
        %3831 = vxpose.xlu0.b32.cont [14/16] 0.0, 128
        %3832 = vxpose.xlu0.b32.cont [15/16] 0.0, 128
        %3833 = vxpose.xlu0.b32.end [16/16] 0.0, 128
        %v3834 = vpop.trf.xlu0
        %v3835 = vpop.trf.xlu0
        %v3836 = vpop.trf.xlu0
        %v3837 = vpop.trf.xlu0
        %v3838 = vpop.trf.xlu0
        %v3839 = vpop.trf.xlu0
        %v3840 = vpop.trf.xlu0
        %v3841 = vpop.trf.xlu0
        %v3842 = vpop.trf.xlu0
        %v3843 = vpop.trf.xlu0
        %v3844 = vpop.trf.xlu0
        %v3845 = vpop.trf.xlu0
        %v3846 = vpop.trf.xlu0
        %v3847 = vpop.trf.xlu0
        %v3848 = vpop.trf.xlu0
        %v3849 = vpop.trf.xlu0
        %3850 = vxpose.xlu0.b32.start [1/16] %v3197, 128
        %3851 = vxpose.xlu0.b32.cont [2/16] %v3199, 128
        %3852 = vxpose.xlu0.b32.cont [3/16] 0.0, 128
        %3853 = vxpose.xlu0.b32.cont [4/16] 0.0, 128
        %3854 = vxpose.xlu0.b32.cont [5/16] 0.0, 128
        %3855 = vxpose.xlu0.b32.cont [6/16] 0.0, 128
        %3856 = vxpose.xlu0.b32.cont [7/16] 0.0, 128
        %3857 = vxpose.xlu0.b32.cont [8/16] 0.0, 128
        %3858 = vxpose.xlu0.b32.cont [9/16] 0.0, 128
        %3859 = vxpose.xlu0.b32.cont [10/16] 0.0, 128
        %3860 = vxpose.xlu0.b32.cont [11/16] 0.0, 128
        %3861 = vxpose.xlu0.b32.cont [12/16] 0.0, 128
        %3862 = vxpose.xlu0.b32.cont [13/16] 0.0, 128
        %3863 = vxpose.xlu0.b32.cont [14/16] 0.0, 128
        %3864 = vxpose.xlu0.b32.cont [15/16] 0.0, 128
        %3865 = vxpose.xlu0.b32.end [16/16] 0.0, 128
        %v3866 = vpop.trf.xlu0
        %v3867 = vpop.trf.xlu0
        %v3868 = vpop.trf.xlu0
        %v3869 = vpop.trf.xlu0
        %v3870 = vpop.trf.xlu0
        %v3871 = vpop.trf.xlu0
        %v3872 = vpop.trf.xlu0
        %v3873 = vpop.trf.xlu0
        %v3874 = vpop.trf.xlu0
        %v3875 = vpop.trf.xlu0
        %v3876 = vpop.trf.xlu0
        %v3877 = vpop.trf.xlu0
        %v3878 = vpop.trf.xlu0
        %v3879 = vpop.trf.xlu0
        %v3880 = vpop.trf.xlu0
        %v3881 = vpop.trf.xlu0
        %3882 = vxpose.xlu0.b32.start [1/16] %v3203, 128
        %3883 = vxpose.xlu0.b32.cont [2/16] %v3205, 128
        %3884 = vxpose.xlu0.b32.cont [3/16] 0.0, 128
        %3885 = vxpose.xlu0.b32.cont [4/16] 0.0, 128
        %3886 = vxpose.xlu0.b32.cont [5/16] 0.0, 128
        %3887 = vxpose.xlu0.b32.cont [6/16] 0.0, 128
        %3888 = vxpose.xlu0.b32.cont [7/16] 0.0, 128
        %3889 = vxpose.xlu0.b32.cont [8/16] 0.0, 128
        %3890 = vxpose.xlu0.b32.cont [9/16] 0.0, 128
        %3891 = vxpose.xlu0.b32.cont [10/16] 0.0, 128
        %3892 = vxpose.xlu0.b32.cont [11/16] 0.0, 128
        %3893 = vxpose.xlu0.b32.cont [12/16] 0.0, 128
        %3894 = vxpose.xlu0.b32.cont [13/16] 0.0, 128
        %3895 = vxpose.xlu0.b32.cont [14/16] 0.0, 128
        %3896 = vxpose.xlu0.b32.cont [15/16] 0.0, 128
        %3897 = vxpose.xlu0.b32.end [16/16] 0.0, 128
        %v3898 = vpop.trf.xlu0
        %v3899 = vpop.trf.xlu0
        %v3900 = vpop.trf.xlu0
        %v3901 = vpop.trf.xlu0
        %v3902 = vpop.trf.xlu0
        %v3903 = vpop.trf.xlu0
        %v3904 = vpop.trf.xlu0
        %v3905 = vpop.trf.xlu0
        %v3906 = vpop.trf.xlu0
        %v3907 = vpop.trf.xlu0
        %v3908 = vpop.trf.xlu0
        %v3909 = vpop.trf.xlu0
        %v3910 = vpop.trf.xlu0
        %v3911 = vpop.trf.xlu0
        %v3912 = vpop.trf.xlu0
        %v3913 = vpop.trf.xlu0
        %3914 = vxpose.xlu0.b32.start [1/16] %v3209, 128
        %3915 = vxpose.xlu0.b32.cont [2/16] %v3211, 128
        %3916 = vxpose.xlu0.b32.cont [3/16] 0.0, 128
        %3917 = vxpose.xlu0.b32.cont [4/16] 0.0, 128
        %3918 = vxpose.xlu0.b32.cont [5/16] 0.0, 128
        %3919 = vxpose.xlu0.b32.cont [6/16] 0.0, 128
        %3920 = vxpose.xlu0.b32.cont [7/16] 0.0, 128
        %3921 = vxpose.xlu0.b32.cont [8/16] 0.0, 128
        %3922 = vxpose.xlu0.b32.cont [9/16] 0.0, 128
        %3923 = vxpose.xlu0.b32.cont [10/16] 0.0, 128
        %3924 = vxpose.xlu0.b32.cont [11/16] 0.0, 128
        %3925 = vxpose.xlu0.b32.cont [12/16] 0.0, 128
        %3926 = vxpose.xlu0.b32.cont [13/16] 0.0, 128
        %3927 = vxpose.xlu0.b32.cont [14/16] 0.0, 128
        %3928 = vxpose.xlu0.b32.cont [15/16] 0.0, 128
        %3929 = vxpose.xlu0.b32.end [16/16] 0.0, 128
        %v3930 = vpop.trf.xlu0
        %v3931 = vpop.trf.xlu0
        %v3932 = vpop.trf.xlu0
        %v3933 = vpop.trf.xlu0
        %v3934 = vpop.trf.xlu0
        %v3935 = vpop.trf.xlu0
        %v3936 = vpop.trf.xlu0
        %v3937 = vpop.trf.xlu0
        %v3938 = vpop.trf.xlu0
        %v3939 = vpop.trf.xlu0
        %v3940 = vpop.trf.xlu0
        %v3941 = vpop.trf.xlu0
        %v3942 = vpop.trf.xlu0
        %v3943 = vpop.trf.xlu0
        %v3944 = vpop.trf.xlu0
        %v3945 = vpop.trf.xlu0
        %3946 = vxpose.xlu0.b32.start [1/16] %v3215, 128
        %3947 = vxpose.xlu0.b32.cont [2/16] %v3217, 128
        %3948 = vxpose.xlu0.b32.cont [3/16] 0.0, 128
        %3949 = vxpose.xlu0.b32.cont [4/16] 0.0, 128
        %3950 = vxpose.xlu0.b32.cont [5/16] 0.0, 128
        %3951 = vxpose.xlu0.b32.cont [6/16] 0.0, 128
        %3952 = vxpose.xlu0.b32.cont [7/16] 0.0, 128
        %3953 = vxpose.xlu0.b32.cont [8/16] 0.0, 128
        %3954 = vxpose.xlu0.b32.cont [9/16] 0.0, 128
        %3955 = vxpose.xlu0.b32.cont [10/16] 0.0, 128
        %3956 = vxpose.xlu0.b32.cont [11/16] 0.0, 128
        %3957 = vxpose.xlu0.b32.cont [12/16] 0.0, 128
        %3958 = vxpose.xlu0.b32.cont [13/16] 0.0, 128
        %3959 = vxpose.xlu0.b32.cont [14/16] 0.0, 128
        %3960 = vxpose.xlu0.b32.cont [15/16] 0.0, 128
        %3961 = vxpose.xlu0.b32.end [16/16] 0.0, 128
        %v3962 = vpop.trf.xlu0
        %v3963 = vpop.trf.xlu0
        %v3964 = vpop.trf.xlu0
        %v3965 = vpop.trf.xlu0
        %v3966 = vpop.trf.xlu0
        %v3967 = vpop.trf.xlu0
        %v3968 = vpop.trf.xlu0
        %v3969 = vpop.trf.xlu0
        %v3970 = vpop.trf.xlu0
        %v3971 = vpop.trf.xlu0
        %v3972 = vpop.trf.xlu0
        %v3973 = vpop.trf.xlu0
        %v3974 = vpop.trf.xlu0
        %v3975 = vpop.trf.xlu0
        %v3976 = vpop.trf.xlu0
        %v3977 = vpop.trf.xlu0
        %3978 = vxpose.xlu0.b32.start [1/16] %v3221, 128
        %3979 = vxpose.xlu0.b32.cont [2/16] %v3223, 128
        %3980 = vxpose.xlu0.b32.cont [3/16] 0.0, 128
        %3981 = vxpose.xlu0.b32.cont [4/16] 0.0, 128
        %3982 = vxpose.xlu0.b32.cont [5/16] 0.0, 128
        %3983 = vxpose.xlu0.b32.cont [6/16] 0.0, 128
        %3984 = vxpose.xlu0.b32.cont [7/16] 0.0, 128
        %3985 = vxpose.xlu0.b32.cont [8/16] 0.0, 128
        %3986 = vxpose.xlu0.b32.cont [9/16] 0.0, 128
        %3987 = vxpose.xlu0.b32.cont [10/16] 0.0, 128
        %3988 = vxpose.xlu0.b32.cont [11/16] 0.0, 128
        %3989 = vxpose.xlu0.b32.cont [12/16] 0.0, 128
        %3990 = vxpose.xlu0.b32.cont [13/16] 0.0, 128
        %3991 = vxpose.xlu0.b32.cont [14/16] 0.0, 128
        %3992 = vxpose.xlu0.b32.cont [15/16] 0.0, 128
        %3993 = vxpose.xlu0.b32.end [16/16] 0.0, 128
        %v3994 = vpop.trf.xlu0
        %v3995 = vpop.trf.xlu0
        %v3996 = vpop.trf.xlu0
        %v3997 = vpop.trf.xlu0
        %v3998 = vpop.trf.xlu0
        %v3999 = vpop.trf.xlu0
        %v4000 = vpop.trf.xlu0
        %v4001 = vpop.trf.xlu0
        %v4002 = vpop.trf.xlu0
        %v4003 = vpop.trf.xlu0
        %v4004 = vpop.trf.xlu0
        %v4005 = vpop.trf.xlu0
        %v4006 = vpop.trf.xlu0
        %v4007 = vpop.trf.xlu0
        %v4008 = vpop.trf.xlu0
        %v4009 = vpop.trf.xlu0
        %v4011 = vsel %vm1619, %v3770, 0
        %v4014 = vsel %vm1619, %v3771, 0
        %v4017 = vsel %vm1619, %v3746, 0
        %4019 = vmatpush.xpose.msra.mxu0 0.0
        %4020 = vmatpush.xpose.msra.mxu0 0.0
        %4021 = vmatpush.xpose.msra.mxu0 0.0
        %4022 = vmatpush.xpose.msra.mxu0 0.0
        %4023 = vmatpush.xpose.msra.mxu0 0.0
        %4024 = vmatpush.xpose.msra.mxu0 0.0
        %4025 = vmatpush.xpose.msra.mxu0 0.0
        %4026 = vmatpush.xpose.msra.mxu0 0.0
        %4027 = vmatpush.xpose.msra.mxu0 0.0
        %4028 = vmatpush.xpose.msra.mxu0 0.0
        %4029 = vmatpush.xpose.msra.mxu0 0.0
        %4030 = vmatpush.xpose.msra.mxu0 0.0
        %4031 = vmatpush.xpose.msra.mxu0 0.0
        %4032 = vmatpush.xpose.msra.mxu0 0.0
        %4033 = vmatpush.xpose.msra.mxu0 0.0
        %4034 = vmatpush.xpose.msra.mxu0 %v4017
        %4035 = vmatmul.f32.gmra.mxu0 %v4011
        %v4036 = vpop.f32.mrf.mxu0
        %v4037 = vadd.f32 0.0, %v4036
        %4038 = vmatmul.f32.gmra.mxu0 %v4014
        %v4039 = vpop.f32.mrf.mxu0
        %v4040 = vadd.f32 0.0, %v4039
        %4041 = vdwg.mxu0
        %v4043 = vsel %vm1619, %v3802, 0
        %v4046 = vsel %vm1619, %v3803, 0
        %v4049 = vsel %vm1619, %v3747, 0
        %4051 = vmatpush.xpose.msra.mxu0 0.0
        %4052 = vmatpush.xpose.msra.mxu0 0.0
        %4053 = vmatpush.xpose.msra.mxu0 0.0
        %4054 = vmatpush.xpose.msra.mxu0 0.0
        %4055 = vmatpush.xpose.msra.mxu0 0.0
        %4056 = vmatpush.xpose.msra.mxu0 0.0
        %4057 = vmatpush.xpose.msra.mxu0 0.0
        %4058 = vmatpush.xpose.msra.mxu0 0.0
        %4059 = vmatpush.xpose.msra.mxu0 0.0
        %4060 = vmatpush.xpose.msra.mxu0 0.0
        %4061 = vmatpush.xpose.msra.mxu0 0.0
        %4062 = vmatpush.xpose.msra.mxu0 0.0
        %4063 = vmatpush.xpose.msra.mxu0 0.0
        %4064 = vmatpush.xpose.msra.mxu0 0.0
        %4065 = vmatpush.xpose.msra.mxu0 0.0
        %4066 = vmatpush.xpose.msra.mxu0 %v4049
        %4067 = vmatmul.f32.gmra.mxu0 %v4043
        %v4068 = vpop.f32.mrf.mxu0
        %v4069 = vadd.f32 0.0, %v4068
        %4070 = vmatmul.f32.gmra.mxu0 %v4046
        %v4071 = vpop.f32.mrf.mxu0
        %v4072 = vadd.f32 0.0, %v4071
        %4073 = vdwg.mxu0
        %v4075 = vsel %vm1619, %v3834, 0
        %v4078 = vsel %vm1619, %v3835, 0
        %v4081 = vsel %vm1619, %v3748, 0
        %4083 = vmatpush.xpose.msra.mxu0 0.0
        %4084 = vmatpush.xpose.msra.mxu0 0.0
        %4085 = vmatpush.xpose.msra.mxu0 0.0
        %4086 = vmatpush.xpose.msra.mxu0 0.0
        %4087 = vmatpush.xpose.msra.mxu0 0.0
        %4088 = vmatpush.xpose.msra.mxu0 0.0
        %4089 = vmatpush.xpose.msra.mxu0 0.0
        %4090 = vmatpush.xpose.msra.mxu0 0.0
        %4091 = vmatpush.xpose.msra.mxu0 0.0
        %4092 = vmatpush.xpose.msra.mxu0 0.0
        %4093 = vmatpush.xpose.msra.mxu0 0.0
        %4094 = vmatpush.xpose.msra.mxu0 0.0
        %4095 = vmatpush.xpose.msra.mxu0 0.0
        %4096 = vmatpush.xpose.msra.mxu0 0.0
        %4097 = vmatpush.xpose.msra.mxu0 0.0
        %4098 = vmatpush.xpose.msra.mxu0 %v4081
        %4099 = vmatmul.f32.gmra.mxu0 %v4075
        %v4100 = vpop.f32.mrf.mxu0
        %v4101 = vadd.f32 0.0, %v4100
        %4102 = vmatmul.f32.gmra.mxu0 %v4078
        %v4103 = vpop.f32.mrf.mxu0
        %v4104 = vadd.f32 0.0, %v4103
        %4105 = vdwg.mxu0
        %v4107 = vsel %vm1619, %v3866, 0
        %v4110 = vsel %vm1619, %v3867, 0
        %v4113 = vsel %vm1619, %v3749, 0
        %4115 = vmatpush.xpose.msra.mxu0 0.0
        %4116 = vmatpush.xpose.msra.mxu0 0.0
        %4117 = vmatpush.xpose.msra.mxu0 0.0
        %4118 = vmatpush.xpose.msra.mxu0 0.0
        %4119 = vmatpush.xpose.msra.mxu0 0.0
        %4120 = vmatpush.xpose.msra.mxu0 0.0
        %4121 = vmatpush.xpose.msra.mxu0 0.0
        %4122 = vmatpush.xpose.msra.mxu0 0.0
        %4123 = vmatpush.xpose.msra.mxu0 0.0
        %4124 = vmatpush.xpose.msra.mxu0 0.0
        %4125 = vmatpush.xpose.msra.mxu0 0.0
        %4126 = vmatpush.xpose.msra.mxu0 0.0
        %4127 = vmatpush.xpose.msra.mxu0 0.0
        %4128 = vmatpush.xpose.msra.mxu0 0.0
        %4129 = vmatpush.xpose.msra.mxu0 0.0
        %4130 = vmatpush.xpose.msra.mxu0 %v4113
        %4131 = vmatmul.f32.gmra.mxu0 %v4107
        %v4132 = vpop.f32.mrf.mxu0
        %v4133 = vadd.f32 0.0, %v4132
        %4134 = vmatmul.f32.gmra.mxu0 %v4110
        %v4135 = vpop.f32.mrf.mxu0
        %v4136 = vadd.f32 0.0, %v4135
        %4137 = vdwg.mxu0
        %v4139 = vsel %vm1619, %v3898, 0
        %v4142 = vsel %vm1619, %v3899, 0
        %v4145 = vsel %vm1619, %v3750, 0
        %4147 = vmatpush.xpose.msra.mxu0 0.0
        %4148 = vmatpush.xpose.msra.mxu0 0.0
        %4149 = vmatpush.xpose.msra.mxu0 0.0
        %4150 = vmatpush.xpose.msra.mxu0 0.0
        %4151 = vmatpush.xpose.msra.mxu0 0.0
        %4152 = vmatpush.xpose.msra.mxu0 0.0
        %4153 = vmatpush.xpose.msra.mxu0 0.0
        %4154 = vmatpush.xpose.msra.mxu0 0.0
        %4155 = vmatpush.xpose.msra.mxu0 0.0
        %4156 = vmatpush.xpose.msra.mxu0 0.0
        %4157 = vmatpush.xpose.msra.mxu0 0.0
        %4158 = vmatpush.xpose.msra.mxu0 0.0
        %4159 = vmatpush.xpose.msra.mxu0 0.0
        %4160 = vmatpush.xpose.msra.mxu0 0.0
        %4161 = vmatpush.xpose.msra.mxu0 0.0
        %4162 = vmatpush.xpose.msra.mxu0 %v4145
        %4163 = vmatmul.f32.gmra.mxu0 %v4139
        %v4164 = vpop.f32.mrf.mxu0
        %v4165 = vadd.f32 0.0, %v4164
        %4166 = vmatmul.f32.gmra.mxu0 %v4142
        %v4167 = vpop.f32.mrf.mxu0
        %v4168 = vadd.f32 0.0, %v4167
        %4169 = vdwg.mxu0
        %v4171 = vsel %vm1619, %v3930, 0
        %v4174 = vsel %vm1619, %v3931, 0
        %v4177 = vsel %vm1619, %v3751, 0
        %4179 = vmatpush.xpose.msra.mxu0 0.0
        %4180 = vmatpush.xpose.msra.mxu0 0.0
        %4181 = vmatpush.xpose.msra.mxu0 0.0
        %4182 = vmatpush.xpose.msra.mxu0 0.0
        %4183 = vmatpush.xpose.msra.mxu0 0.0
        %4184 = vmatpush.xpose.msra.mxu0 0.0
        %4185 = vmatpush.xpose.msra.mxu0 0.0
        %4186 = vmatpush.xpose.msra.mxu0 0.0
        %4187 = vmatpush.xpose.msra.mxu0 0.0
        %4188 = vmatpush.xpose.msra.mxu0 0.0
        %4189 = vmatpush.xpose.msra.mxu0 0.0
        %4190 = vmatpush.xpose.msra.mxu0 0.0
        %4191 = vmatpush.xpose.msra.mxu0 0.0
        %4192 = vmatpush.xpose.msra.mxu0 0.0
        %4193 = vmatpush.xpose.msra.mxu0 0.0
        %4194 = vmatpush.xpose.msra.mxu0 %v4177
        %4195 = vmatmul.f32.gmra.mxu0 %v4171
        %v4196 = vpop.f32.mrf.mxu0
        %v4197 = vadd.f32 0.0, %v4196
        %4198 = vmatmul.f32.gmra.mxu0 %v4174
        %v4199 = vpop.f32.mrf.mxu0
        %v4200 = vadd.f32 0.0, %v4199
        %4201 = vdwg.mxu0
        %v4203 = vsel %vm1619, %v3962, 0
        %v4206 = vsel %vm1619, %v3963, 0
        %v4209 = vsel %vm1619, %v3752, 0
        %4211 = vmatpush.xpose.msra.mxu0 0.0
        %4212 = vmatpush.xpose.msra.mxu0 0.0
        %4213 = vmatpush.xpose.msra.mxu0 0.0
        %4214 = vmatpush.xpose.msra.mxu0 0.0
        %4215 = vmatpush.xpose.msra.mxu0 0.0
        %4216 = vmatpush.xpose.msra.mxu0 0.0
        %4217 = vmatpush.xpose.msra.mxu0 0.0
        %4218 = vmatpush.xpose.msra.mxu0 0.0
        %4219 = vmatpush.xpose.msra.mxu0 0.0
        %4220 = vmatpush.xpose.msra.mxu0 0.0
        %4221 = vmatpush.xpose.msra.mxu0 0.0
        %4222 = vmatpush.xpose.msra.mxu0 0.0
        %4223 = vmatpush.xpose.msra.mxu0 0.0
        %4224 = vmatpush.xpose.msra.mxu0 0.0
        %4225 = vmatpush.xpose.msra.mxu0 0.0
        %4226 = vmatpush.xpose.msra.mxu0 %v4209
        %4227 = vmatmul.f32.gmra.mxu0 %v4203
        %v4228 = vpop.f32.mrf.mxu0
        %v4229 = vadd.f32 0.0, %v4228
        %4230 = vmatmul.f32.gmra.mxu0 %v4206
        %v4231 = vpop.f32.mrf.mxu0
        %v4232 = vadd.f32 0.0, %v4231
        %4233 = vdwg.mxu0
        %v4235 = vsel %vm1619, %v3994, 0
        %v4238 = vsel %vm1619, %v3995, 0
        %v4241 = vsel %vm1619, %v3753, 0
        %4243 = vmatpush.xpose.msra.mxu0 0.0
        %4244 = vmatpush.xpose.msra.mxu0 0.0
        %4245 = vmatpush.xpose.msra.mxu0 0.0
        %4246 = vmatpush.xpose.msra.mxu0 0.0
        %4247 = vmatpush.xpose.msra.mxu0 0.0
        %4248 = vmatpush.xpose.msra.mxu0 0.0
        %4249 = vmatpush.xpose.msra.mxu0 0.0
        %4250 = vmatpush.xpose.msra.mxu0 0.0
        %4251 = vmatpush.xpose.msra.mxu0 0.0
        %4252 = vmatpush.xpose.msra.mxu0 0.0
        %4253 = vmatpush.xpose.msra.mxu0 0.0
        %4254 = vmatpush.xpose.msra.mxu0 0.0
        %4255 = vmatpush.xpose.msra.mxu0 0.0
        %4256 = vmatpush.xpose.msra.mxu0 0.0
        %4257 = vmatpush.xpose.msra.mxu0 0.0
        %4258 = vmatpush.xpose.msra.mxu0 %v4241
        %4259 = vmatmul.f32.gmra.mxu0 %v4235
        %v4260 = vpop.f32.mrf.mxu0
        %v4261 = vadd.f32 0.0, %v4260
        %4262 = vmatmul.f32.gmra.mxu0 %v4238
        %v4263 = vpop.f32.mrf.mxu0
        %v4264 = vadd.f32 0.0, %v4263
        %4265 = vdwg.mxu0
        %4266 = vxpose.xlu0.b32.start [1/16] %v4037, 128
        %4267 = vxpose.xlu0.b32.cont [2/16] %v4040, 128
        %4268 = vxpose.xlu0.b32.cont [3/16] 0.0, 128
        %4269 = vxpose.xlu0.b32.cont [4/16] 0.0, 128
        %4270 = vxpose.xlu0.b32.cont [5/16] 0.0, 128
        %4271 = vxpose.xlu0.b32.cont [6/16] 0.0, 128
        %4272 = vxpose.xlu0.b32.cont [7/16] 0.0, 128
        %4273 = vxpose.xlu0.b32.cont [8/16] 0.0, 128
        %4274 = vxpose.xlu0.b32.cont [9/16] 0.0, 128
        %4275 = vxpose.xlu0.b32.cont [10/16] 0.0, 128
        %4276 = vxpose.xlu0.b32.cont [11/16] 0.0, 128
        %4277 = vxpose.xlu0.b32.cont [12/16] 0.0, 128
        %4278 = vxpose.xlu0.b32.cont [13/16] 0.0, 128
        %4279 = vxpose.xlu0.b32.cont [14/16] 0.0, 128
        %4280 = vxpose.xlu0.b32.cont [15/16] 0.0, 128
        %4281 = vxpose.xlu0.b32.end [16/16] 0.0, 128
        %v4282 = vpop.trf.xlu0
        %v4283 = vpop.trf.xlu0
        %v4284 = vpop.trf.xlu0
        %v4285 = vpop.trf.xlu0
        %v4286 = vpop.trf.xlu0
        %v4287 = vpop.trf.xlu0
        %v4288 = vpop.trf.xlu0
        %v4289 = vpop.trf.xlu0
        %v4290 = vpop.trf.xlu0
        %v4291 = vpop.trf.xlu0
        %v4292 = vpop.trf.xlu0
        %v4293 = vpop.trf.xlu0
        %v4294 = vpop.trf.xlu0
        %v4295 = vpop.trf.xlu0
        %v4296 = vpop.trf.xlu0
        %v4297 = vpop.trf.xlu0
        %4298 = vxpose.xlu0.b32.start [1/16] %v4069, 128
        %4299 = vxpose.xlu0.b32.cont [2/16] %v4072, 128
        %4300 = vxpose.xlu0.b32.cont [3/16] 0.0, 128
        %4301 = vxpose.xlu0.b32.cont [4/16] 0.0, 128
        %4302 = vxpose.xlu0.b32.cont [5/16] 0.0, 128
        %4303 = vxpose.xlu0.b32.cont [6/16] 0.0, 128
        %4304 = vxpose.xlu0.b32.cont [7/16] 0.0, 128
        %4305 = vxpose.xlu0.b32.cont [8/16] 0.0, 128
        %4306 = vxpose.xlu0.b32.cont [9/16] 0.0, 128
        %4307 = vxpose.xlu0.b32.cont [10/16] 0.0, 128
        %4308 = vxpose.xlu0.b32.cont [11/16] 0.0, 128
        %4309 = vxpose.xlu0.b32.cont [12/16] 0.0, 128
        %4310 = vxpose.xlu0.b32.cont [13/16] 0.0, 128
        %4311 = vxpose.xlu0.b32.cont [14/16] 0.0, 128
        %4312 = vxpose.xlu0.b32.cont [15/16] 0.0, 128
        %4313 = vxpose.xlu0.b32.end [16/16] 0.0, 128
        %v4314 = vpop.trf.xlu0
        %v4315 = vpop.trf.xlu0
        %v4316 = vpop.trf.xlu0
        %v4317 = vpop.trf.xlu0
        %v4318 = vpop.trf.xlu0
        %v4319 = vpop.trf.xlu0
        %v4320 = vpop.trf.xlu0
        %v4321 = vpop.trf.xlu0
        %v4322 = vpop.trf.xlu0
        %v4323 = vpop.trf.xlu0
        %v4324 = vpop.trf.xlu0
        %v4325 = vpop.trf.xlu0
        %v4326 = vpop.trf.xlu0
        %v4327 = vpop.trf.xlu0
        %v4328 = vpop.trf.xlu0
        %v4329 = vpop.trf.xlu0
        %4330 = vxpose.xlu0.b32.start [1/16] %v4101, 128
        %4331 = vxpose.xlu0.b32.cont [2/16] %v4104, 128
        %4332 = vxpose.xlu0.b32.cont [3/16] 0.0, 128
        %4333 = vxpose.xlu0.b32.cont [4/16] 0.0, 128
        %4334 = vxpose.xlu0.b32.cont [5/16] 0.0, 128
        %4335 = vxpose.xlu0.b32.cont [6/16] 0.0, 128
        %4336 = vxpose.xlu0.b32.cont [7/16] 0.0, 128
        %4337 = vxpose.xlu0.b32.cont [8/16] 0.0, 128
        %4338 = vxpose.xlu0.b32.cont [9/16] 0.0, 128
        %4339 = vxpose.xlu0.b32.cont [10/16] 0.0, 128
        %4340 = vxpose.xlu0.b32.cont [11/16] 0.0, 128
        %4341 = vxpose.xlu0.b32.cont [12/16] 0.0, 128
        %4342 = vxpose.xlu0.b32.cont [13/16] 0.0, 128
        %4343 = vxpose.xlu0.b32.cont [14/16] 0.0, 128
        %4344 = vxpose.xlu0.b32.cont [15/16] 0.0, 128
        %4345 = vxpose.xlu0.b32.end [16/16] 0.0, 128
        %v4346 = vpop.trf.xlu0
        %v4347 = vpop.trf.xlu0
        %v4348 = vpop.trf.xlu0
        %v4349 = vpop.trf.xlu0
        %v4350 = vpop.trf.xlu0
        %v4351 = vpop.trf.xlu0
        %v4352 = vpop.trf.xlu0
        %v4353 = vpop.trf.xlu0
        %v4354 = vpop.trf.xlu0
        %v4355 = vpop.trf.xlu0
        %v4356 = vpop.trf.xlu0
        %v4357 = vpop.trf.xlu0
        %v4358 = vpop.trf.xlu0
        %v4359 = vpop.trf.xlu0
        %v4360 = vpop.trf.xlu0
        %v4361 = vpop.trf.xlu0
        %4362 = vxpose.xlu0.b32.start [1/16] %v4133, 128
        %4363 = vxpose.xlu0.b32.cont [2/16] %v4136, 128
        %4364 = vxpose.xlu0.b32.cont [3/16] 0.0, 128
        %4365 = vxpose.xlu0.b32.cont [4/16] 0.0, 128
        %4366 = vxpose.xlu0.b32.cont [5/16] 0.0, 128
        %4367 = vxpose.xlu0.b32.cont [6/16] 0.0, 128
        %4368 = vxpose.xlu0.b32.cont [7/16] 0.0, 128
        %4369 = vxpose.xlu0.b32.cont [8/16] 0.0, 128
        %4370 = vxpose.xlu0.b32.cont [9/16] 0.0, 128
        %4371 = vxpose.xlu0.b32.cont [10/16] 0.0, 128
        %4372 = vxpose.xlu0.b32.cont [11/16] 0.0, 128
        %4373 = vxpose.xlu0.b32.cont [12/16] 0.0, 128
        %4374 = vxpose.xlu0.b32.cont [13/16] 0.0, 128
        %4375 = vxpose.xlu0.b32.cont [14/16] 0.0, 128
        %4376 = vxpose.xlu0.b32.cont [15/16] 0.0, 128
        %4377 = vxpose.xlu0.b32.end [16/16] 0.0, 128
        %v4378 = vpop.trf.xlu0
        %v4379 = vpop.trf.xlu0
        %v4380 = vpop.trf.xlu0
        %v4381 = vpop.trf.xlu0
        %v4382 = vpop.trf.xlu0
        %v4383 = vpop.trf.xlu0
        %v4384 = vpop.trf.xlu0
        %v4385 = vpop.trf.xlu0
        %v4386 = vpop.trf.xlu0
        %v4387 = vpop.trf.xlu0
        %v4388 = vpop.trf.xlu0
        %v4389 = vpop.trf.xlu0
        %v4390 = vpop.trf.xlu0
        %v4391 = vpop.trf.xlu0
        %v4392 = vpop.trf.xlu0
        %v4393 = vpop.trf.xlu0
        %4394 = vxpose.xlu0.b32.start [1/16] %v4165, 128
        %4395 = vxpose.xlu0.b32.cont [2/16] %v4168, 128
        %4396 = vxpose.xlu0.b32.cont [3/16] 0.0, 128
        %4397 = vxpose.xlu0.b32.cont [4/16] 0.0, 128
        %4398 = vxpose.xlu0.b32.cont [5/16] 0.0, 128
        %4399 = vxpose.xlu0.b32.cont [6/16] 0.0, 128
        %4400 = vxpose.xlu0.b32.cont [7/16] 0.0, 128
        %4401 = vxpose.xlu0.b32.cont [8/16] 0.0, 128
        %4402 = vxpose.xlu0.b32.cont [9/16] 0.0, 128
        %4403 = vxpose.xlu0.b32.cont [10/16] 0.0, 128
        %4404 = vxpose.xlu0.b32.cont [11/16] 0.0, 128
        %4405 = vxpose.xlu0.b32.cont [12/16] 0.0, 128
        %4406 = vxpose.xlu0.b32.cont [13/16] 0.0, 128
        %4407 = vxpose.xlu0.b32.cont [14/16] 0.0, 128
        %4408 = vxpose.xlu0.b32.cont [15/16] 0.0, 128
        %4409 = vxpose.xlu0.b32.end [16/16] 0.0, 128
        %v4410 = vpop.trf.xlu0
        %v4411 = vpop.trf.xlu0
        %v4412 = vpop.trf.xlu0
        %v4413 = vpop.trf.xlu0
        %v4414 = vpop.trf.xlu0
        %v4415 = vpop.trf.xlu0
        %v4416 = vpop.trf.xlu0
        %v4417 = vpop.trf.xlu0
        %v4418 = vpop.trf.xlu0
        %v4419 = vpop.trf.xlu0
        %v4420 = vpop.trf.xlu0
        %v4421 = vpop.trf.xlu0
        %v4422 = vpop.trf.xlu0
        %v4423 = vpop.trf.xlu0
        %v4424 = vpop.trf.xlu0
        %v4425 = vpop.trf.xlu0
        %4426 = vxpose.xlu0.b32.start [1/16] %v4197, 128
        %4427 = vxpose.xlu0.b32.cont [2/16] %v4200, 128
        %4428 = vxpose.xlu0.b32.cont [3/16] 0.0, 128
        %4429 = vxpose.xlu0.b32.cont [4/16] 0.0, 128
        %4430 = vxpose.xlu0.b32.cont [5/16] 0.0, 128
        %4431 = vxpose.xlu0.b32.cont [6/16] 0.0, 128
        %4432 = vxpose.xlu0.b32.cont [7/16] 0.0, 128
        %4433 = vxpose.xlu0.b32.cont [8/16] 0.0, 128
        %4434 = vxpose.xlu0.b32.cont [9/16] 0.0, 128
        %4435 = vxpose.xlu0.b32.cont [10/16] 0.0, 128
        %4436 = vxpose.xlu0.b32.cont [11/16] 0.0, 128
        %4437 = vxpose.xlu0.b32.cont [12/16] 0.0, 128
        %4438 = vxpose.xlu0.b32.cont [13/16] 0.0, 128
        %4439 = vxpose.xlu0.b32.cont [14/16] 0.0, 128
        %4440 = vxpose.xlu0.b32.cont [15/16] 0.0, 128
        %4441 = vxpose.xlu0.b32.end [16/16] 0.0, 128
        %v4442 = vpop.trf.xlu0
        %v4443 = vpop.trf.xlu0
        %v4444 = vpop.trf.xlu0
        %v4445 = vpop.trf.xlu0
        %v4446 = vpop.trf.xlu0
        %v4447 = vpop.trf.xlu0
        %v4448 = vpop.trf.xlu0
        %v4449 = vpop.trf.xlu0
        %v4450 = vpop.trf.xlu0
        %v4451 = vpop.trf.xlu0
        %v4452 = vpop.trf.xlu0
        %v4453 = vpop.trf.xlu0
        %v4454 = vpop.trf.xlu0
        %v4455 = vpop.trf.xlu0
        %v4456 = vpop.trf.xlu0
        %v4457 = vpop.trf.xlu0
        %4458 = vxpose.xlu0.b32.start [1/16] %v4229, 128
        %4459 = vxpose.xlu0.b32.cont [2/16] %v4232, 128
        %4460 = vxpose.xlu0.b32.cont [3/16] 0.0, 128
        %4461 = vxpose.xlu0.b32.cont [4/16] 0.0, 128
        %4462 = vxpose.xlu0.b32.cont [5/16] 0.0, 128
        %4463 = vxpose.xlu0.b32.cont [6/16] 0.0, 128
        %4464 = vxpose.xlu0.b32.cont [7/16] 0.0, 128
        %4465 = vxpose.xlu0.b32.cont [8/16] 0.0, 128
        %4466 = vxpose.xlu0.b32.cont [9/16] 0.0, 128
        %4467 = vxpose.xlu0.b32.cont [10/16] 0.0, 128
        %4468 = vxpose.xlu0.b32.cont [11/16] 0.0, 128
        %4469 = vxpose.xlu0.b32.cont [12/16] 0.0, 128
        %4470 = vxpose.xlu0.b32.cont [13/16] 0.0, 128
        %4471 = vxpose.xlu0.b32.cont [14/16] 0.0, 128
        %4472 = vxpose.xlu0.b32.cont [15/16] 0.0, 128
        %4473 = vxpose.xlu0.b32.end [16/16] 0.0, 128
        %v4474 = vpop.trf.xlu0
        %v4475 = vpop.trf.xlu0
        %v4476 = vpop.trf.xlu0
        %v4477 = vpop.trf.xlu0
        %v4478 = vpop.trf.xlu0
        %v4479 = vpop.trf.xlu0
        %v4480 = vpop.trf.xlu0
        %v4481 = vpop.trf.xlu0
        %v4482 = vpop.trf.xlu0
        %v4483 = vpop.trf.xlu0
        %v4484 = vpop.trf.xlu0
        %v4485 = vpop.trf.xlu0
        %v4486 = vpop.trf.xlu0
        %v4487 = vpop.trf.xlu0
        %v4488 = vpop.trf.xlu0
        %v4489 = vpop.trf.xlu0
        %4490 = vxpose.xlu0.b32.start [1/16] %v4261, 128
        %4491 = vxpose.xlu0.b32.cont [2/16] %v4264, 128
        %4492 = vxpose.xlu0.b32.cont [3/16] 0.0, 128
        %4493 = vxpose.xlu0.b32.cont [4/16] 0.0, 128
        %4494 = vxpose.xlu0.b32.cont [5/16] 0.0, 128
        %4495 = vxpose.xlu0.b32.cont [6/16] 0.0, 128
        %4496 = vxpose.xlu0.b32.cont [7/16] 0.0, 128
        %4497 = vxpose.xlu0.b32.cont [8/16] 0.0, 128
        %4498 = vxpose.xlu0.b32.cont [9/16] 0.0, 128
        %4499 = vxpose.xlu0.b32.cont [10/16] 0.0, 128
        %4500 = vxpose.xlu0.b32.cont [11/16] 0.0, 128
        %4501 = vxpose.xlu0.b32.cont [12/16] 0.0, 128
        %4502 = vxpose.xlu0.b32.cont [13/16] 0.0, 128
        %4503 = vxpose.xlu0.b32.cont [14/16] 0.0, 128
        %4504 = vxpose.xlu0.b32.cont [15/16] 0.0, 128
        %4505 = vxpose.xlu0.b32.end [16/16] 0.0, 128
        %v4506 = vpop.trf.xlu0
        %v4507 = vpop.trf.xlu0
        %v4508 = vpop.trf.xlu0
        %v4509 = vpop.trf.xlu0
        %v4510 = vpop.trf.xlu0
        %v4511 = vpop.trf.xlu0
        %v4512 = vpop.trf.xlu0
        %v4513 = vpop.trf.xlu0
        %v4514 = vpop.trf.xlu0
        %v4515 = vpop.trf.xlu0
        %v4516 = vpop.trf.xlu0
        %v4517 = vpop.trf.xlu0
        %v4518 = vpop.trf.xlu0
        %v4519 = vpop.trf.xlu0
        %v4520 = vpop.trf.xlu0
        %v4521 = vpop.trf.xlu0
        %v4522 = vrot.slane %v4346, 4
        %v4523 = vsel %vm2662, %v4522, %v4282
        %v4524 = vrot.slane %v4282, 4
        %v4525 = vsel %vm2662, %v4346, %v4524
        %v4527 = vunpack.c.l.s4 1983009808
        %v4528 = vunpack.c.0.s8 %v4527
        %v4529 = vperm.slane %v4523, %v4528
        %v4531 = vunpack.c.l.s4 1983009808
        %v4532 = vunpack.c.0.s8 %v4531
        %v4533 = vperm.slane %v4525, %v4532
        %v4534 = vrot.slane %v4378, 4
        %v4535 = vsel %vm2662, %v4534, %v4314
        %v4536 = vrot.slane %v4314, 4
        %v4537 = vsel %vm2662, %v4378, %v4536
        %v4539 = vunpack.c.l.s4 1983009808
        %v4540 = vunpack.c.0.s8 %v4539
        %v4541 = vperm.slane %v4535, %v4540
        %v4543 = vunpack.c.l.s4 1983009808
        %v4544 = vunpack.c.0.s8 %v4543
        %v4545 = vperm.slane %v4537, %v4544
        %v4546 = vrot.slane %v4474, 4
        %v4547 = vsel %vm2662, %v4546, %v4410
        %v4548 = vrot.slane %v4410, 4
        %v4549 = vsel %vm2662, %v4474, %v4548
        %v4551 = vunpack.c.l.s4 1983009808
        %v4552 = vunpack.c.0.s8 %v4551
        %v4553 = vperm.slane %v4547, %v4552
        %v4555 = vunpack.c.l.s4 1983009808
        %v4556 = vunpack.c.0.s8 %v4555
        %v4557 = vperm.slane %v4549, %v4556
        %v4558 = vrot.slane %v4506, 4
        %v4559 = vsel %vm2662, %v4558, %v4442
        %v4560 = vrot.slane %v4442, 4
        %v4561 = vsel %vm2662, %v4506, %v4560
        %v4563 = vunpack.c.l.s4 1983009808
        %v4564 = vunpack.c.0.s8 %v4563
        %v4565 = vperm.slane %v4559, %v4564
        %v4567 = vunpack.c.l.s4 1983009808
        %v4568 = vunpack.c.0.s8 %v4567
        %v4569 = vperm.slane %v4561, %v4568
        %v4570 = vrot.slane %v4541, 4
        %v4571 = vsel %vm2662, %v4570, %v4529
        %v4572 = vrot.slane %v4529, 4
        %v4573 = vsel %vm2662, %v4541, %v4572
        %v4575 = vunpack.c.l.s4 1934713408
        %v4576 = vunpack.c.0.s8 %v4575
        %v4577 = vperm.slane %v4571, %v4576
        %v4579 = vunpack.c.l.s4 1934713408
        %v4580 = vunpack.c.0.s8 %v4579
        %v4581 = vperm.slane %v4573, %v4580
        %v4582 = vrot.slane %v4545, 4
        %v4583 = vsel %vm2662, %v4582, %v4533
        %v4584 = vrot.slane %v4533, 4
        %v4585 = vsel %vm2662, %v4545, %v4584
        %v4587 = vunpack.c.l.s4 1934713408
        %v4588 = vunpack.c.0.s8 %v4587
        %v4589 = vperm.slane %v4583, %v4588
        %v4591 = vunpack.c.l.s4 1934713408
        %v4592 = vunpack.c.0.s8 %v4591
        %v4593 = vperm.slane %v4585, %v4592
        %v4594 = vrot.slane %v4565, 4
        %v4595 = vsel %vm2662, %v4594, %v4553
        %v4596 = vrot.slane %v4553, 4
        %v4597 = vsel %vm2662, %v4565, %v4596
        %v4599 = vunpack.c.l.s4 1934713408
        %v4600 = vunpack.c.0.s8 %v4599
        %v4601 = vperm.slane %v4595, %v4600
        %v4603 = vunpack.c.l.s4 1934713408
        %v4604 = vunpack.c.0.s8 %v4603
        %v4605 = vperm.slane %v4597, %v4604
        %v4606 = vrot.slane %v4569, 4
        %v4607 = vsel %vm2662, %v4606, %v4557
        %v4608 = vrot.slane %v4557, 4
        %v4609 = vsel %vm2662, %v4569, %v4608
        %v4611 = vunpack.c.l.s4 1934713408
        %v4612 = vunpack.c.0.s8 %v4611
        %v4613 = vperm.slane %v4607, %v4612
        %v4615 = vunpack.c.l.s4 1934713408
        %v4616 = vunpack.c.0.s8 %v4615
        %v4617 = vperm.slane %v4609, %v4616
        %v4618 = vrot.slane %v4601, 4
        %v4619 = vsel %vm2662, %v4618, %v4577
        %v4620 = vrot.slane %v4577, 4
        %v4621 = vsel %vm2662, %v4601, %v4620
        %v4622 = vrot.slane %v4605, 4
        %v4623 = vsel %vm2662, %v4622, %v4581
        %v4624 = vrot.slane %v4581, 4
        %v4625 = vsel %vm2662, %v4605, %v4624
        %v4626 = vrot.slane %v4613, 4
        %v4627 = vsel %vm2662, %v4626, %v4589
        %v4628 = vrot.slane %v4589, 4
        %v4629 = vsel %vm2662, %v4613, %v4628
        %v4630 = vrot.slane %v4617, 4
        %v4631 = vsel %vm2662, %v4630, %v4593
        %v4632 = vrot.slane %v4593, 4
        %v4633 = vsel %vm2662, %v4617, %v4632
        %v4634 = vrot.slane %v4623, 4
        %v4635 = vsel %vm2662, %v4634, %v4619
        %v4636 = vrot.slane %v4619, 4
        %v4637 = vsel %vm2662, %v4623, %v4636
        %v4639 = vunpack.c.l.s4 1983009808
        %v4640 = vunpack.c.0.s8 %v4639
        %v4641 = vperm.slane %v4635, %v4640
        %v4643 = vunpack.c.l.s4 1983009808
        %v4644 = vunpack.c.0.s8 %v4643
        %v4645 = vperm.slane %v4637, %v4644
        %v4646 = vrot.slane %v4625, 4
        %v4647 = vsel %vm2662, %v4646, %v4621
        %v4648 = vrot.slane %v4621, 4
        %v4649 = vsel %vm2662, %v4625, %v4648
        %v4651 = vunpack.c.l.s4 1983009808
        %v4652 = vunpack.c.0.s8 %v4651
        %v4653 = vperm.slane %v4647, %v4652
        %v4655 = vunpack.c.l.s4 1983009808
        %v4656 = vunpack.c.0.s8 %v4655
        %v4657 = vperm.slane %v4649, %v4656
        %v4658 = vrot.slane %v4631, 4
        %v4659 = vsel %vm2662, %v4658, %v4627
        %v4660 = vrot.slane %v4627, 4
        %v4661 = vsel %vm2662, %v4631, %v4660
        %v4663 = vunpack.c.l.s4 1983009808
        %v4664 = vunpack.c.0.s8 %v4663
        %v4665 = vperm.slane %v4659, %v4664
        %v4667 = vunpack.c.l.s4 1983009808
        %v4668 = vunpack.c.0.s8 %v4667
        %v4669 = vperm.slane %v4661, %v4668
        %v4670 = vrot.slane %v4633, 4
        %v4671 = vsel %vm2662, %v4670, %v4629
        %v4672 = vrot.slane %v4629, 4
        %v4673 = vsel %vm2662, %v4633, %v4672
        %v4675 = vunpack.c.l.s4 1983009808
        %v4676 = vunpack.c.0.s8 %v4675
        %v4677 = vperm.slane %v4671, %v4676
        %v4679 = vunpack.c.l.s4 1983009808
        %v4680 = vunpack.c.0.s8 %v4679
        %v4681 = vperm.slane %v4673, %v4680
        %v4682 = vrot.slane %v4653, 4
        %v4683 = vsel %vm2662, %v4682, %v4641
        %v4684 = vrot.slane %v4641, 4
        %v4685 = vsel %vm2662, %v4653, %v4684
        %v4687 = vunpack.c.l.s4 1934713408
        %v4688 = vunpack.c.0.s8 %v4687
        %v4689 = vperm.slane %v4683, %v4688
        %v4691 = vunpack.c.l.s4 1934713408
        %v4692 = vunpack.c.0.s8 %v4691
        %v4693 = vperm.slane %v4685, %v4692
        %v4694 = vrot.slane %v4657, 4
        %v4695 = vsel %vm2662, %v4694, %v4645
        %v4696 = vrot.slane %v4645, 4
        %v4697 = vsel %vm2662, %v4657, %v4696
        %v4699 = vunpack.c.l.s4 1934713408
        %v4700 = vunpack.c.0.s8 %v4699
        %v4701 = vperm.slane %v4695, %v4700
        %v4703 = vunpack.c.l.s4 1934713408
        %v4704 = vunpack.c.0.s8 %v4703
        %v4705 = vperm.slane %v4697, %v4704
        %v4706 = vrot.slane %v4677, 4
        %v4707 = vsel %vm2662, %v4706, %v4665
        %v4708 = vrot.slane %v4665, 4
        %v4709 = vsel %vm2662, %v4677, %v4708
        %v4711 = vunpack.c.l.s4 1934713408
        %v4712 = vunpack.c.0.s8 %v4711
        %v4713 = vperm.slane %v4707, %v4712
        %v4715 = vunpack.c.l.s4 1934713408
        %v4716 = vunpack.c.0.s8 %v4715
        %v4717 = vperm.slane %v4709, %v4716
        %v4718 = vrot.slane %v4681, 4
        %v4719 = vsel %vm2662, %v4718, %v4669
        %v4720 = vrot.slane %v4669, 4
        %v4721 = vsel %vm2662, %v4681, %v4720
        %v4723 = vunpack.c.l.s4 1934713408
        %v4724 = vunpack.c.0.s8 %v4723
        %v4725 = vperm.slane %v4719, %v4724
        %v4727 = vunpack.c.l.s4 1934713408
        %v4728 = vunpack.c.0.s8 %v4727
        %v4729 = vperm.slane %v4721, %v4728
        %v4730 = vrot.slane %v4713, 4
        %v4731 = vsel %vm2662, %v4730, %v4689
        %v4732 = vrot.slane %v4689, 4
        %v4733 = vsel %vm2662, %v4713, %v4732
        %v4734 = vrot.slane %v4717, 4
        %v4735 = vsel %vm2662, %v4734, %v4693
        %v4736 = vrot.slane %v4693, 4
        %v4737 = vsel %vm2662, %v4717, %v4736
        %v4738 = vrot.slane %v4725, 4
        %v4739 = vsel %vm2662, %v4738, %v4701
        %v4740 = vrot.slane %v4701, 4
        %v4741 = vsel %vm2662, %v4725, %v4740
        %v4742 = vrot.slane %v4729, 4
        %v4743 = vsel %vm2662, %v4742, %v4705
        %v4744 = vrot.slane %v4705, 4
        %v4745 = vsel %vm2662, %v4729, %v4744
        %4747 = vrot.lane.b32.xlu0 %v4733, 16
        %v4748 = vpop.permute.xlu0 %4747
        %4751 = vrot.lane.b32.xlu0 %v4735, 32
        %v4752 = vpop.permute.xlu0 %4751
        %4755 = vrot.lane.b32.xlu0 %v4737, 48
        %v4756 = vpop.permute.xlu0 %4755
        %4759 = vrot.lane.b32.xlu0 %v4739, 64
        %v4760 = vpop.permute.xlu0 %4759
        %4763 = vrot.lane.b32.xlu0 %v4741, 80
        %v4764 = vpop.permute.xlu0 %4763
        %4767 = vrot.lane.b32.xlu0 %v4743, 96
        %v4768 = vpop.permute.xlu0 %4767
        %4771 = vrot.lane.b32.xlu0 %v4745, 112
        %v4772 = vpop.permute.xlu0 %4771
        %v4774 = vsel %vm1619, %v4731, %v4748
        %v4775 = vsel %vm2915, %v4774, %v4752
        %v4776 = vsel %vm2917, %v4775, %v4756
        %v4777 = vsel %vm2919, %v4776, %v4760
        %v4778 = vsel %vm2921, %v4777, %v4764
        %v4779 = vsel %vm2923, %v4778, %v4768
        %v4780 = vsel %vm2925, %v4779, %v4772
        %v4781 = vld [vmem:[#allocation25] sm:$0xff]
        %v4782 = vld [vmem:[#allocation25 + $0x8] sm:$0xff]
        %v4783 = vld [vmem:[#allocation25 + $0x10] sm:$0xff]
        %v4784 = vld [vmem:[#allocation25 + $0x18] sm:$0xff]
        %v4785 = vld [vmem:[#allocation25 + $0x20] sm:$0xff]
        %v4786 = vld [vmem:[#allocation25 + $0x28] sm:$0xff]
        %v4787 = vld [vmem:[#allocation25 + $0x30] sm:$0xff]
        %v4788 = vld [vmem:[#allocation25 + $0x38] sm:$0xff]
        %v4789 = vld [vmem:[#allocation25 + $0x40] sm:$0xff]
        %v4790 = vld [vmem:[#allocation25 + $0x48] sm:$0xff]
        %v4791 = vld [vmem:[#allocation25 + $0x50] sm:$0xff]
        %v4792 = vld [vmem:[#allocation25 + $0x58] sm:$0xff]
        %v4793 = vld [vmem:[#allocation25 + $0x60] sm:$0xff]
        %v4794 = vld [vmem:[#allocation25 + $0x68] sm:$0xff]
        %v4795 = vld [vmem:[#allocation25 + $0x70] sm:$0xff]
        %v4796 = vld [vmem:[#allocation25 + $0x78] sm:$0xff]
        %4797 = vmatpush.msra.mxu0 %v4796
        %4798 = vmatpush.msra.mxu0 %v4795
        %4799 = vmatpush.msra.mxu0 %v4794
        %4800 = vmatpush.msra.mxu0 %v4793
        %4801 = vmatpush.msra.mxu0 %v4792
        %4802 = vmatpush.msra.mxu0 %v4791
        %4803 = vmatpush.msra.mxu0 %v4790
        %4804 = vmatpush.msra.mxu0 %v4789
        %4805 = vmatpush.msra.mxu0 %v4788
        %4806 = vmatpush.msra.mxu0 %v4787
        %4807 = vmatpush.msra.mxu0 %v4786
        %4808 = vmatpush.msra.mxu0 %v4785
        %4809 = vmatpush.msra.mxu0 %v4784
        %4810 = vmatpush.msra.mxu0 %v4783
        %4811 = vmatpush.msra.mxu0 %v4782
        %4812 = vmatpush.msra.mxu0 %v4781
        %4813 = vmatmul.f32.gmra.mxu0 %v4780
        %v4814 = vpop.f32.mrf.mxu0
        %v4815 = vadd.f32 0.0, %v4814
        %4816 = vdwg.mxu0
        %v4817 = vadd.f32 %v2968, %v4815
        %v4818 = vld [vmem:[%s17] sm:$0x1]
        %v4820 = vperm.slane %v4818, 0
        %v4822 = vadd.f32 %v4817, %v4820
        %v4823 = vld [vmem:[#allocation26] sm:$0x1]
        %v4824 = vld [vmem:[%s19] sm:$0x1]
        %4825 = vadd.xlane.f32.xlu0 %v4822
        %v4826 = vpop.xlane.xlu0 %4825
        %v4827 = vmul.f32 %v4826, %v1161
        %v4828 = vsub.f32 %v4822, %v4827
        %v4829 = vmul.f32 %v4828, %v4828
        %4830 = vadd.xlane.f32.xlu0 %v4829
        %v4831 = vpop.xlane.xlu0 %4830
        %v4832 = vmul.f32 %v4831, %v1161
        %v4833 = vadd.f32 %v4832, 1e-05
        %v4834 = vrsqrt.pop %v4833
        %v4835 = vmul.f32 %v4834, %v4833
        %v4836 = vmul.f32 %v4835, %v4834
        %v4837 = vmul.f32 0.5, %v4836
        %v4838 = vsub.f32 1.5, %v4837
        %v4839 = vmul.f32 %v4834, %v4838
        %vm4840 = vweird.f32 %v4833
        %vm4841 = vweird.f32 %v4834
        %vm4842 = vmor %vm4840, %vm4841
        %v4843 = vsel %vm4842, %v4834, %v4839
        %v4844 = vmul.f32 %v4828, %v4843
        %v4846 = vperm.slane %v4823, 0
        %v4848 = vmul.f32 %v4844, %v4846
        %v4850 = vperm.slane %v4824, 0
        %v4852 = vadd.f32 %v4848, %v4850
        %v4853 = vld [vmem:[#allocation28] sm:$0xff]
        %v4854 = vld [vmem:[#allocation28 + $0x8] sm:$0xff]
        %v4855 = vld [vmem:[#allocation28 + $0x10] sm:$0xff]
        %v4856 = vld [vmem:[#allocation28 + $0x18] sm:$0xff]
        %v4857 = vld [vmem:[#allocation28 + $0x20] sm:$0xff]
        %v4858 = vld [vmem:[#allocation28 + $0x28] sm:$0xff]
        %v4859 = vld [vmem:[#allocation28 + $0x30] sm:$0xff]
        %v4860 = vld [vmem:[#allocation28 + $0x38] sm:$0xff]
        %v4861 = vld [vmem:[#allocation28 + $0x40] sm:$0xff]
        %v4862 = vld [vmem:[#allocation28 + $0x48] sm:$0xff]
        %v4863 = vld [vmem:[#allocation28 + $0x50] sm:$0xff]
        %v4864 = vld [vmem:[#allocation28 + $0x58] sm:$0xff]
        %v4865 = vld [vmem:[#allocation28 + $0x60] sm:$0xff]
        %v4866 = vld [vmem:[#allocation28 + $0x68] sm:$0xff]
        %v4867 = vld [vmem:[#allocation28 + $0x70] sm:$0xff]
        %v4868 = vld [vmem:[#allocation28 + $0x78] sm:$0xff]
        %v4869 = vld [vmem:[#allocation28 + $0x80] sm:$0xff]
        %v4870 = vld [vmem:[#allocation28 + $0x88] sm:$0xff]
        %v4871 = vld [vmem:[#allocation28 + $0x90] sm:$0xff]
        %v4872 = vld [vmem:[#allocation28 + $0x98] sm:$0xff]
        %v4873 = vld [vmem:[#allocation28 + $0xa0] sm:$0xff]
        %v4874 = vld [vmem:[#allocation28 + $0xa8] sm:$0xff]
        %v4875 = vld [vmem:[#allocation28 + $0xb0] sm:$0xff]
        %v4876 = vld [vmem:[#allocation28 + $0xb8] sm:$0xff]
        %v4877 = vld [vmem:[#allocation28 + $0xc0] sm:$0xff]
        %v4878 = vld [vmem:[#allocation28 + $0xc8] sm:$0xff]
        %v4879 = vld [vmem:[#allocation28 + $0xd0] sm:$0xff]
        %v4880 = vld [vmem:[#allocation28 + $0xd8] sm:$0xff]
        %v4881 = vld [vmem:[#allocation28 + $0xe0] sm:$0xff]
        %v4882 = vld [vmem:[#allocation28 + $0xe8] sm:$0xff]
        %v4883 = vld [vmem:[#allocation28 + $0xf0] sm:$0xff]
        %v4884 = vld [vmem:[#allocation28 + $0xf8] sm:$0xff]
        %v4885 = vld [vmem:[%s21] sm:$0x3]
        %v4887 = vperm.slane %v4885, 0
        %v4888 = vperm.slane %v4885, 1
        %4891 = vmatpush.msra.mxu0 %v4883
        %4892 = vmatpush.msra.mxu0 %v4881
        %4893 = vmatpush.msra.mxu0 %v4879
        %4894 = vmatpush.msra.mxu0 %v4877
        %4895 = vmatpush.msra.mxu0 %v4875
        %4896 = vmatpush.msra.mxu0 %v4873
        %4897 = vmatpush.msra.mxu0 %v4871
        %4898 = vmatpush.msra.mxu0 %v4869
        %4899 = vmatpush.msra.mxu0 %v4867
        %4900 = vmatpush.msra.mxu0 %v4865
        %4901 = vmatpush.msra.mxu0 %v4863
        %4902 = vmatpush.msra.mxu0 %v4861
        %4903 = vmatpush.msra.mxu0 %v4859
        %4904 = vmatpush.msra.mxu0 %v4857
        %4905 = vmatpush.msra.mxu0 %v4855
        %4906 = vmatpush.msra.mxu0 %v4853
        %4907 = vmatmul.f32.gmra.mxu0 %v4852
        %v4908 = vpop.f32.mrf.mxu0
        %v4909 = vadd.f32 %v4887, %v4908
        %4910 = vdwg.mxu0
        %4911 = vmatpush.msra.mxu0 %v4884
        %4912 = vmatpush.msra.mxu0 %v4882
        %4913 = vmatpush.msra.mxu0 %v4880
        %4914 = vmatpush.msra.mxu0 %v4878
        %4915 = vmatpush.msra.mxu0 %v4876
        %4916 = vmatpush.msra.mxu0 %v4874
        %4917 = vmatpush.msra.mxu0 %v4872
        %4918 = vmatpush.msra.mxu0 %v4870
        %4919 = vmatpush.msra.mxu0 %v4868
        %4920 = vmatpush.msra.mxu0 %v4866
        %4921 = vmatpush.msra.mxu0 %v4864
        %4922 = vmatpush.msra.mxu0 %v4862
        %4923 = vmatpush.msra.mxu0 %v4860
        %4924 = vmatpush.msra.mxu0 %v4858
        %4925 = vmatpush.msra.mxu0 %v4856
        %4926 = vmatpush.msra.mxu0 %v4854
        %4927 = vmatmul.f32.gmra.mxu0 %v4852
        %v4928 = vpop.f32.mrf.mxu0
        %v4929 = vadd.f32 %v4888, %v4928
        %4930 = vdwg.mxu0
        %v4931 = vmul.f32 %v4909, 0.5
        %v4932 = vmul.f32 %v4929, 0.5
        %v4933 = vmul.f32 %v4909, 0.044715
        %v4934 = vmul.f32 %v4929, 0.044715
        %v4935 = vmul.f32 %v4933, %v4909
        %v4936 = vmul.f32 %v4934, %v4929
        %v4937 = vmul.f32 %v4935, %v4909
        %v4938 = vmul.f32 %v4936, %v4929
        %v4939 = vadd.f32 %v4909, %v4937
        %v4940 = vadd.f32 %v4929, %v4938
        %v4941 = vmul.f32 %v4939, 0.7978846
        %v4942 = vmul.f32 %v4940, 0.7978846
        %v4943 = vtanh.pop %v4941
        %v4944 = vtanh.pop %v4942
        %v4945 = vadd.f32 %v4943, 1.0
        %v4946 = vadd.f32 %v4944, 1.0
        %v4947 = vmul.f32 %v4931, %v4945
        %v4948 = vmul.f32 %v4932, %v4946
        %v4949 = vld [vmem:[#allocation29] sm:$0xff]
        %v4950 = vld [vmem:[#allocation29 + $0x8] sm:$0xff]
        %v4951 = vld [vmem:[#allocation29 + $0x10] sm:$0xff]
        %v4952 = vld [vmem:[#allocation29 + $0x18] sm:$0xff]
        %v4953 = vld [vmem:[#allocation29 + $0x20] sm:$0xff]
        %v4954 = vld [vmem:[#allocation29 + $0x28] sm:$0xff]
        %v4955 = vld [vmem:[#allocation29 + $0x30] sm:$0xff]
        %v4956 = vld [vmem:[#allocation29 + $0x38] sm:$0xff]
        %v4957 = vld [vmem:[#allocation29 + $0x40] sm:$0xff]
        %v4958 = vld [vmem:[#allocation29 + $0x48] sm:$0xff]
        %v4959 = vld [vmem:[#allocation29 + $0x50] sm:$0xff]
        %v4960 = vld [vmem:[#allocation29 + $0x58] sm:$0xff]
        %v4961 = vld [vmem:[#allocation29 + $0x60] sm:$0xff]
        %v4962 = vld [vmem:[#allocation29 + $0x68] sm:$0xff]
        %v4963 = vld [vmem:[#allocation29 + $0x70] sm:$0xff]
        %v4964 = vld [vmem:[#allocation29 + $0x78] sm:$0xff]
        %v4965 = vld [vmem:[#allocation29 + $0x80] sm:$0xff]
        %v4966 = vld [vmem:[#allocation29 + $0x88] sm:$0xff]
        %v4967 = vld [vmem:[#allocation29 + $0x90] sm:$0xff]
        %v4968 = vld [vmem:[#allocation29 + $0x98] sm:$0xff]
        %v4969 = vld [vmem:[#allocation29 + $0xa0] sm:$0xff]
        %v4970 = vld [vmem:[#allocation29 + $0xa8] sm:$0xff]
        %v4971 = vld [vmem:[#allocation29 + $0xb0] sm:$0xff]
        %v4972 = vld [vmem:[#allocation29 + $0xb8] sm:$0xff]
        %v4973 = vld [vmem:[#allocation29 + $0xc0] sm:$0xff]
        %v4974 = vld [vmem:[#allocation29 + $0xc8] sm:$0xff]
        %v4975 = vld [vmem:[#allocation29 + $0xd0] sm:$0xff]
        %v4976 = vld [vmem:[#allocation29 + $0xd8] sm:$0xff]
        %v4977 = vld [vmem:[#allocation29 + $0xe0] sm:$0xff]
        %v4978 = vld [vmem:[#allocation29 + $0xe8] sm:$0xff]
        %v4979 = vld [vmem:[#allocation29 + $0xf0] sm:$0xff]
        %v4980 = vld [vmem:[#allocation29 + $0xf8] sm:$0xff]
        %4981 = vmatpush.msra.mxu0 %v4964
        %4982 = vmatpush.msra.mxu0 %v4963
        %4983 = vmatpush.msra.mxu0 %v4962
        %4984 = vmatpush.msra.mxu0 %v4961
        %4985 = vmatpush.msra.mxu0 %v4960
        %4986 = vmatpush.msra.mxu0 %v4959
        %4987 = vmatpush.msra.mxu0 %v4958
        %4988 = vmatpush.msra.mxu0 %v4957
        %4989 = vmatpush.msra.mxu0 %v4956
        %4990 = vmatpush.msra.mxu0 %v4955
        %4991 = vmatpush.msra.mxu0 %v4954
        %4992 = vmatpush.msra.mxu0 %v4953
        %4993 = vmatpush.msra.mxu0 %v4952
        %4994 = vmatpush.msra.mxu0 %v4951
        %4995 = vmatpush.msra.mxu0 %v4950
        %4996 = vmatpush.msra.mxu0 %v4949
        %4997 = vmatmul.f32.gmra.mxu0 %v4947
        %v4998 = vpop.f32.mrf.mxu0
        %v4999 = vadd.f32 0.0, %v4998
        %5000 = vdwg.mxu0
        %5001 = vmatpush.msra.mxu0 %v4980
        %5002 = vmatpush.msra.mxu0 %v4979
        %5003 = vmatpush.msra.mxu0 %v4978
        %5004 = vmatpush.msra.mxu0 %v4977
        %5005 = vmatpush.msra.mxu0 %v4976
        %5006 = vmatpush.msra.mxu0 %v4975
        %5007 = vmatpush.msra.mxu0 %v4974
        %5008 = vmatpush.msra.mxu0 %v4973
        %5009 = vmatpush.msra.mxu0 %v4972
        %5010 = vmatpush.msra.mxu0 %v4971
        %5011 = vmatpush.msra.mxu0 %v4970
        %5012 = vmatpush.msra.mxu0 %v4969
        %5013 = vmatpush.msra.mxu0 %v4968
        %5014 = vmatpush.msra.mxu0 %v4967
        %5015 = vmatpush.msra.mxu0 %v4966
        %5016 = vmatpush.msra.mxu0 %v4965
        %5017 = vmatmul.f32.gmra.mxu0 %v4948
        %v5018 = vpop.f32.mrf.mxu0
        %v5019 = vadd.f32 %v4999, %v5018
        %5020 = vdwg.mxu0
        %v5021 = vadd.f32 %v4822, %v5019
        %v5022 = vld [vmem:[%s23] sm:$0x1]
        %v5024 = vperm.slane %v5022, 0
        %v5026 = vadd.f32 %v5021, %v5024
        %s5027 = scalar_lea.vmem [#allocation10], 1
        %v5028 = vld [vmem:[%s5027] sm:$0x1]
        %s5029 = scalar_lea.vmem [#allocation11], 1
        %v5030 = vld [vmem:[%s5029] sm:$0x1]
        %5031 = vadd.xlane.f32.xlu0 %v5026
        %v5032 = vpop.xlane.xlu0 %5031
        %v5033 = vmul.f32 %v5032, %v1161
        %v5034 = vsub.f32 %v5026, %v5033
        %v5035 = vmul.f32 %v5034, %v5034
        %5036 = vadd.xlane.f32.xlu0 %v5035
        %v5037 = vpop.xlane.xlu0 %5036
        %v5038 = vmul.f32 %v5037, %v1161
        %v5039 = vadd.f32 %v5038, 1e-05
        %v5040 = vrsqrt.pop %v5039
        %v5041 = vmul.f32 %v5040, %v5039
        %v5042 = vmul.f32 %v5041, %v5040
        %v5043 = vmul.f32 0.5, %v5042
        %v5044 = vsub.f32 1.5, %v5043
        %v5045 = vmul.f32 %v5040, %v5044
        %vm5046 = vweird.f32 %v5039
        %vm5047 = vweird.f32 %v5040
        %vm5048 = vmor %vm5046, %vm5047
        %v5049 = vsel %vm5048, %v5040, %v5045
        %v5050 = vmul.f32 %v5034, %v5049
        %v5052 = vperm.slane %v5028, 0
        %v5054 = vmul.f32 %v5050, %v5052
        %v5056 = vperm.slane %v5030, 0
        %v5058 = vadd.f32 %v5054, %v5056
        %s5059 = scalar_lea.vmem [#allocation13], 384
        %v5060 = vld [vmem:[%s5059] sm:$0xff]
        %v5061 = vld [vmem:[%s5059 + $0x8] sm:$0xff]
        %v5062 = vld [vmem:[%s5059 + $0x10] sm:$0xff]
        %v5063 = vld [vmem:[%s5059 + $0x18] sm:$0xff]
        %v5064 = vld [vmem:[%s5059 + $0x20] sm:$0xff]
        %v5065 = vld [vmem:[%s5059 + $0x28] sm:$0xff]
        %v5066 = vld [vmem:[%s5059 + $0x30] sm:$0xff]
        %v5067 = vld [vmem:[%s5059 + $0x38] sm:$0xff]
        %v5068 = vld [vmem:[%s5059 + $0x40] sm:$0xff]
        %v5069 = vld [vmem:[%s5059 + $0x48] sm:$0xff]
        %v5070 = vld [vmem:[%s5059 + $0x50] sm:$0xff]
        %v5071 = vld [vmem:[%s5059 + $0x58] sm:$0xff]
        %v5072 = vld [vmem:[%s5059 + $0x60] sm:$0xff]
        %v5073 = vld [vmem:[%s5059 + $0x68] sm:$0xff]
        %v5074 = vld [vmem:[%s5059 + $0x70] sm:$0xff]
        %v5075 = vld [vmem:[%s5059 + $0x78] sm:$0xff]
        %v5076 = vld [vmem:[%s5059 + $0x80] sm:$0xff]
        %v5077 = vld [vmem:[%s5059 + $0x88] sm:$0xff]
        %v5078 = vld [vmem:[%s5059 + $0x90] sm:$0xff]
        %v5079 = vld [vmem:[%s5059 + $0x98] sm:$0xff]
        %v5080 = vld [vmem:[%s5059 + $0xa0] sm:$0xff]
        %v5081 = vld [vmem:[%s5059 + $0xa8] sm:$0xff]
        %v5082 = vld [vmem:[%s5059 + $0xb0] sm:$0xff]
        %v5083 = vld [vmem:[%s5059 + $0xb8] sm:$0xff]
        %v5084 = vld [vmem:[%s5059 + $0xc0] sm:$0xff]
        %v5085 = vld [vmem:[%s5059 + $0xc8] sm:$0xff]
        %v5086 = vld [vmem:[%s5059 + $0xd0] sm:$0xff]
        %v5087 = vld [vmem:[%s5059 + $0xd8] sm:$0xff]
        %v5088 = vld [vmem:[%s5059 + $0xe0] sm:$0xff]
        %v5089 = vld [vmem:[%s5059 + $0xe8] sm:$0xff]
        %v5090 = vld [vmem:[%s5059 + $0xf0] sm:$0xff]
        %v5091 = vld [vmem:[%s5059 + $0xf8] sm:$0xff]
        %v5092 = vld [vmem:[%s5059 + $0x100] sm:$0xff]
        %v5093 = vld [vmem:[%s5059 + $0x108] sm:$0xff]
        %v5094 = vld [vmem:[%s5059 + $0x110] sm:$0xff]
        %v5095 = vld [vmem:[%s5059 + $0x118] sm:$0xff]
        %v5096 = vld [vmem:[%s5059 + $0x120] sm:$0xff]
        %v5097 = vld [vmem:[%s5059 + $0x128] sm:$0xff]
        %v5098 = vld [vmem:[%s5059 + $0x130] sm:$0xff]
        %v5099 = vld [vmem:[%s5059 + $0x138] sm:$0xff]
        %v5100 = vld [vmem:[%s5059 + $0x140] sm:$0xff]
        %v5101 = vld [vmem:[%s5059 + $0x148] sm:$0xff]
        %v5102 = vld [vmem:[%s5059 + $0x150] sm:$0xff]
        %v5103 = vld [vmem:[%s5059 + $0x158] sm:$0xff]
        %v5104 = vld [vmem:[%s5059 + $0x160] sm:$0xff]
        %v5105 = vld [vmem:[%s5059 + $0x168] sm:$0xff]
        %v5106 = vld [vmem:[%s5059 + $0x170] sm:$0xff]
        %v5107 = vld [vmem:[%s5059 + $0x178] sm:$0xff]
        %s5108 = scalar_lea.vmem %s7, 3
        %v5109 = vld [vmem:[%s5108] sm:$0x7]
        %v5111 = vperm.slane %v5109, 0
        %v5112 = vperm.slane %v5109, 1
        %v5113 = vperm.slane %v5109, 2
        %5117 = vmatpush.msra.mxu0 %v5105
        %5118 = vmatpush.msra.mxu0 %v5102
        %5119 = vmatpush.msra.mxu0 %v5099
        %5120 = vmatpush.msra.mxu0 %v5096
        %5121 = vmatpush.msra.mxu0 %v5093
        %5122 = vmatpush.msra.mxu0 %v5090
        %5123 = vmatpush.msra.mxu0 %v5087
        %5124 = vmatpush.msra.mxu0 %v5084
        %5125 = vmatpush.msra.mxu0 %v5081
        %5126 = vmatpush.msra.mxu0 %v5078
        %5127 = vmatpush.msra.mxu0 %v5075
        %5128 = vmatpush.msra.mxu0 %v5072
        %5129 = vmatpush.msra.mxu0 %v5069
        %5130 = vmatpush.msra.mxu0 %v5066
        %5131 = vmatpush.msra.mxu0 %v5063
        %5132 = vmatpush.msra.mxu0 %v5060
        %5133 = vmatmul.f32.gmra.mxu0 %v5058
        %v5134 = vpop.f32.mrf.mxu0
        %v5135 = vadd.f32 %v5111, %v5134
        %5136 = vdwg.mxu0
        %5137 = vmatpush.msra.mxu0 %v5106
        %5138 = vmatpush.msra.mxu0 %v5103
        %5139 = vmatpush.msra.mxu0 %v5100
        %5140 = vmatpush.msra.mxu0 %v5097
        %5141 = vmatpush.msra.mxu0 %v5094
        %5142 = vmatpush.msra.mxu0 %v5091
        %5143 = vmatpush.msra.mxu0 %v5088
        %5144 = vmatpush.msra.mxu0 %v5085
        %5145 = vmatpush.msra.mxu0 %v5082
        %5146 = vmatpush.msra.mxu0 %v5079
        %5147 = vmatpush.msra.mxu0 %v5076
        %5148 = vmatpush.msra.mxu0 %v5073
        %5149 = vmatpush.msra.mxu0 %v5070
        %5150 = vmatpush.msra.mxu0 %v5067
        %5151 = vmatpush.msra.mxu0 %v5064
        %5152 = vmatpush.msra.mxu0 %v5061
        %5153 = vmatmul.f32.gmra.mxu0 %v5058
        %v5154 = vpop.f32.mrf.mxu0
        %v5155 = vadd.f32 %v5112, %v5154
        %5156 = vdwg.mxu0
        %5157 = vmatpush.msra.mxu0 %v5107
        %5158 = vmatpush.msra.mxu0 %v5104
        %5159 = vmatpush.msra.mxu0 %v5101
        %5160 = vmatpush.msra.mxu0 %v5098
        %5161 = vmatpush.msra.mxu0 %v5095
        %5162 = vmatpush.msra.mxu0 %v5092
        %5163 = vmatpush.msra.mxu0 %v5089
        %5164 = vmatpush.msra.mxu0 %v5086
        %5165 = vmatpush.msra.mxu0 %v5083
        %5166 = vmatpush.msra.mxu0 %v5080
        %5167 = vmatpush.msra.mxu0 %v5077
        %5168 = vmatpush.msra.mxu0 %v5074
        %5169 = vmatpush.msra.mxu0 %v5071
        %5170 = vmatpush.msra.mxu0 %v5068
        %5171 = vmatpush.msra.mxu0 %v5065
        %5172 = vmatpush.msra.mxu0 %v5062
        %5173 = vmatmul.f32.gmra.mxu0 %v5058
        %v5174 = vpop.f32.mrf.mxu0
        %v5175 = vadd.f32 %v5113, %v5174
        %5176 = vdwg.mxu0
        %5178 = vrot.lane.b32.xlu0 %v5135, 112
        %v5179 = vpop.permute.xlu0 %5178
        %5180 = vrot.lane.b32.xlu0 %v5135, 96
        %v5181 = vpop.permute.xlu0 %5180
        %5182 = vrot.lane.b32.xlu0 %v5135, 80
        %v5183 = vpop.permute.xlu0 %5182
        %5184 = vrot.lane.b32.xlu0 %v5135, 64
        %v5185 = vpop.permute.xlu0 %5184
        %5186 = vrot.lane.b32.xlu0 %v5135, 48
        %v5187 = vpop.permute.xlu0 %5186
        %5188 = vrot.lane.b32.xlu0 %v5135, 32
        %v5189 = vpop.permute.xlu0 %5188
        %5190 = vrot.lane.b32.xlu0 %v5135, 16
        %v5191 = vpop.permute.xlu0 %5190
        %5193 = vrot.lane.b32.xlu0 %v5155, 112
        %v5194 = vpop.permute.xlu0 %5193
        %5196 = vrot.lane.b32.xlu0 %v5155, 96
        %v5197 = vpop.permute.xlu0 %5196
        %5199 = vrot.lane.b32.xlu0 %v5155, 80
        %v5200 = vpop.permute.xlu0 %5199
        %5202 = vrot.lane.b32.xlu0 %v5155, 64
        %v5203 = vpop.permute.xlu0 %5202
        %5205 = vrot.lane.b32.xlu0 %v5155, 48
        %v5206 = vpop.permute.xlu0 %5205
        %5208 = vrot.lane.b32.xlu0 %v5155, 32
        %v5209 = vpop.permute.xlu0 %5208
        %5211 = vrot.lane.b32.xlu0 %v5155, 16
        %v5212 = vpop.permute.xlu0 %5211
        %5215 = vrot.lane.b32.xlu0 %v5175, 112
        %v5216 = vpop.permute.xlu0 %5215
        %5218 = vrot.lane.b32.xlu0 %v5175, 96
        %v5219 = vpop.permute.xlu0 %5218
        %5221 = vrot.lane.b32.xlu0 %v5175, 80
        %v5222 = vpop.permute.xlu0 %5221
        %5224 = vrot.lane.b32.xlu0 %v5175, 64
        %v5225 = vpop.permute.xlu0 %5224
        %5227 = vrot.lane.b32.xlu0 %v5175, 48
        %v5228 = vpop.permute.xlu0 %5227
        %5230 = vrot.lane.b32.xlu0 %v5175, 32
        %v5231 = vpop.permute.xlu0 %5230
        %5233 = vrot.lane.b32.xlu0 %v5175, 16
        %v5234 = vpop.permute.xlu0 %5233
        %5236 = vxpose.xlu0.b32.start [1/16] %v5155, 128
        %5237 = vxpose.xlu0.b32.cont [2/16] 0.0, 128
        %5238 = vxpose.xlu0.b32.cont [3/16] 0.0, 128
        %5239 = vxpose.xlu0.b32.cont [4/16] 0.0, 128
        %5240 = vxpose.xlu0.b32.cont [5/16] 0.0, 128
        %5241 = vxpose.xlu0.b32.cont [6/16] 0.0, 128
        %5242 = vxpose.xlu0.b32.cont [7/16] 0.0, 128
        %5243 = vxpose.xlu0.b32.cont [8/16] 0.0, 128
        %5244 = vxpose.xlu0.b32.cont [9/16] 0.0, 128
        %5245 = vxpose.xlu0.b32.cont [10/16] 0.0, 128
        %5246 = vxpose.xlu0.b32.cont [11/16] 0.0, 128
        %5247 = vxpose.xlu0.b32.cont [12/16] 0.0, 128
        %5248 = vxpose.xlu0.b32.cont [13/16] 0.0, 128
        %5249 = vxpose.xlu0.b32.cont [14/16] 0.0, 128
        %5250 = vxpose.xlu0.b32.cont [15/16] 0.0, 128
        %5251 = vxpose.xlu0.b32.end [16/16] 0.0, 128
        %v5252 = vpop.trf.xlu0
        %v5253 = vpop.trf.xlu0
        %v5254 = vpop.trf.xlu0
        %v5255 = vpop.trf.xlu0
        %v5256 = vpop.trf.xlu0
        %v5257 = vpop.trf.xlu0
        %v5258 = vpop.trf.xlu0
        %v5259 = vpop.trf.xlu0
        %v5260 = vpop.trf.xlu0
        %v5261 = vpop.trf.xlu0
        %v5262 = vpop.trf.xlu0
        %v5263 = vpop.trf.xlu0
        %v5264 = vpop.trf.xlu0
        %v5265 = vpop.trf.xlu0
        %v5266 = vpop.trf.xlu0
        %v5267 = vpop.trf.xlu0
        %5268 = vxpose.xlu0.b32.start [1/16] %v5194, 128
        %5269 = vxpose.xlu0.b32.cont [2/16] 0.0, 128
        %5270 = vxpose.xlu0.b32.cont [3/16] 0.0, 128
        %5271 = vxpose.xlu0.b32.cont [4/16] 0.0, 128
        %5272 = vxpose.xlu0.b32.cont [5/16] 0.0, 128
        %5273 = vxpose.xlu0.b32.cont [6/16] 0.0, 128
        %5274 = vxpose.xlu0.b32.cont [7/16] 0.0, 128
        %5275 = vxpose.xlu0.b32.cont [8/16] 0.0, 128
        %5276 = vxpose.xlu0.b32.cont [9/16] 0.0, 128
        %5277 = vxpose.xlu0.b32.cont [10/16] 0.0, 128
        %5278 = vxpose.xlu0.b32.cont [11/16] 0.0, 128
        %5279 = vxpose.xlu0.b32.cont [12/16] 0.0, 128
        %5280 = vxpose.xlu0.b32.cont [13/16] 0.0, 128
        %5281 = vxpose.xlu0.b32.cont [14/16] 0.0, 128
        %5282 = vxpose.xlu0.b32.cont [15/16] 0.0, 128
        %5283 = vxpose.xlu0.b32.end [16/16] 0.0, 128
        %v5284 = vpop.trf.xlu0
        %v5285 = vpop.trf.xlu0
        %v5286 = vpop.trf.xlu0
        %v5287 = vpop.trf.xlu0
        %v5288 = vpop.trf.xlu0
        %v5289 = vpop.trf.xlu0
        %v5290 = vpop.trf.xlu0
        %v5291 = vpop.trf.xlu0
        %v5292 = vpop.trf.xlu0
        %v5293 = vpop.trf.xlu0
        %v5294 = vpop.trf.xlu0
        %v5295 = vpop.trf.xlu0
        %v5296 = vpop.trf.xlu0
        %v5297 = vpop.trf.xlu0
        %v5298 = vpop.trf.xlu0
        %v5299 = vpop.trf.xlu0
        %5300 = vxpose.xlu0.b32.start [1/16] %v5197, 128
        %5301 = vxpose.xlu0.b32.cont [2/16] 0.0, 128
        %5302 = vxpose.xlu0.b32.cont [3/16] 0.0, 128
        %5303 = vxpose.xlu0.b32.cont [4/16] 0.0, 128
        %5304 = vxpose.xlu0.b32.cont [5/16] 0.0, 128
        %5305 = vxpose.xlu0.b32.cont [6/16] 0.0, 128
        %5306 = vxpose.xlu0.b32.cont [7/16] 0.0, 128
        %5307 = vxpose.xlu0.b32.cont [8/16] 0.0, 128
        %5308 = vxpose.xlu0.b32.cont [9/16] 0.0, 128
        %5309 = vxpose.xlu0.b32.cont [10/16] 0.0, 128
        %5310 = vxpose.xlu0.b32.cont [11/16] 0.0, 128
        %5311 = vxpose.xlu0.b32.cont [12/16] 0.0, 128
        %5312 = vxpose.xlu0.b32.cont [13/16] 0.0, 128
        %5313 = vxpose.xlu0.b32.cont [14/16] 0.0, 128
        %5314 = vxpose.xlu0.b32.cont [15/16] 0.0, 128
        %5315 = vxpose.xlu0.b32.end [16/16] 0.0, 128
        %v5316 = vpop.trf.xlu0
        %v5317 = vpop.trf.xlu0
        %v5318 = vpop.trf.xlu0
        %v5319 = vpop.trf.xlu0
        %v5320 = vpop.trf.xlu0
        %v5321 = vpop.trf.xlu0
        %v5322 = vpop.trf.xlu0
        %v5323 = vpop.trf.xlu0
        %v5324 = vpop.trf.xlu0
        %v5325 = vpop.trf.xlu0
        %v5326 = vpop.trf.xlu0
        %v5327 = vpop.trf.xlu0
        %v5328 = vpop.trf.xlu0
        %v5329 = vpop.trf.xlu0
        %v5330 = vpop.trf.xlu0
        %v5331 = vpop.trf.xlu0
        %5332 = vxpose.xlu0.b32.start [1/16] %v5200, 128
        %5333 = vxpose.xlu0.b32.cont [2/16] 0.0, 128
        %5334 = vxpose.xlu0.b32.cont [3/16] 0.0, 128
        %5335 = vxpose.xlu0.b32.cont [4/16] 0.0, 128
        %5336 = vxpose.xlu0.b32.cont [5/16] 0.0, 128
        %5337 = vxpose.xlu0.b32.cont [6/16] 0.0, 128
        %5338 = vxpose.xlu0.b32.cont [7/16] 0.0, 128
        %5339 = vxpose.xlu0.b32.cont [8/16] 0.0, 128
        %5340 = vxpose.xlu0.b32.cont [9/16] 0.0, 128
        %5341 = vxpose.xlu0.b32.cont [10/16] 0.0, 128
        %5342 = vxpose.xlu0.b32.cont [11/16] 0.0, 128
        %5343 = vxpose.xlu0.b32.cont [12/16] 0.0, 128
        %5344 = vxpose.xlu0.b32.cont [13/16] 0.0, 128
        %5345 = vxpose.xlu0.b32.cont [14/16] 0.0, 128
        %5346 = vxpose.xlu0.b32.cont [15/16] 0.0, 128
        %5347 = vxpose.xlu0.b32.end [16/16] 0.0, 128
        %v5348 = vpop.trf.xlu0
        %v5349 = vpop.trf.xlu0
        %v5350 = vpop.trf.xlu0
        %v5351 = vpop.trf.xlu0
        %v5352 = vpop.trf.xlu0
        %v5353 = vpop.trf.xlu0
        %v5354 = vpop.trf.xlu0
        %v5355 = vpop.trf.xlu0
        %v5356 = vpop.trf.xlu0
        %v5357 = vpop.trf.xlu0
        %v5358 = vpop.trf.xlu0
        %v5359 = vpop.trf.xlu0
        %v5360 = vpop.trf.xlu0
        %v5361 = vpop.trf.xlu0
        %v5362 = vpop.trf.xlu0
        %v5363 = vpop.trf.xlu0
        %5364 = vxpose.xlu0.b32.start [1/16] %v5203, 128
        %5365 = vxpose.xlu0.b32.cont [2/16] 0.0, 128
        %5366 = vxpose.xlu0.b32.cont [3/16] 0.0, 128
        %5367 = vxpose.xlu0.b32.cont [4/16] 0.0, 128
        %5368 = vxpose.xlu0.b32.cont [5/16] 0.0, 128
        %5369 = vxpose.xlu0.b32.cont [6/16] 0.0, 128
        %5370 = vxpose.xlu0.b32.cont [7/16] 0.0, 128
        %5371 = vxpose.xlu0.b32.cont [8/16] 0.0, 128
        %5372 = vxpose.xlu0.b32.cont [9/16] 0.0, 128
        %5373 = vxpose.xlu0.b32.cont [10/16] 0.0, 128
        %5374 = vxpose.xlu0.b32.cont [11/16] 0.0, 128
        %5375 = vxpose.xlu0.b32.cont [12/16] 0.0, 128
        %5376 = vxpose.xlu0.b32.cont [13/16] 0.0, 128
        %5377 = vxpose.xlu0.b32.cont [14/16] 0.0, 128
        %5378 = vxpose.xlu0.b32.cont [15/16] 0.0, 128
        %5379 = vxpose.xlu0.b32.end [16/16] 0.0, 128
        %v5380 = vpop.trf.xlu0
        %v5381 = vpop.trf.xlu0
        %v5382 = vpop.trf.xlu0
        %v5383 = vpop.trf.xlu0
        %v5384 = vpop.trf.xlu0
        %v5385 = vpop.trf.xlu0
        %v5386 = vpop.trf.xlu0
        %v5387 = vpop.trf.xlu0
        %v5388 = vpop.trf.xlu0
        %v5389 = vpop.trf.xlu0
        %v5390 = vpop.trf.xlu0
        %v5391 = vpop.trf.xlu0
        %v5392 = vpop.trf.xlu0
        %v5393 = vpop.trf.xlu0
        %v5394 = vpop.trf.xlu0
        %v5395 = vpop.trf.xlu0
        %5396 = vxpose.xlu0.b32.start [1/16] %v5206, 128
        %5397 = vxpose.xlu0.b32.cont [2/16] 0.0, 128
        %5398 = vxpose.xlu0.b32.cont [3/16] 0.0, 128
        %5399 = vxpose.xlu0.b32.cont [4/16] 0.0, 128
        %5400 = vxpose.xlu0.b32.cont [5/16] 0.0, 128
        %5401 = vxpose.xlu0.b32.cont [6/16] 0.0, 128
        %5402 = vxpose.xlu0.b32.cont [7/16] 0.0, 128
        %5403 = vxpose.xlu0.b32.cont [8/16] 0.0, 128
        %5404 = vxpose.xlu0.b32.cont [9/16] 0.0, 128
        %5405 = vxpose.xlu0.b32.cont [10/16] 0.0, 128
        %5406 = vxpose.xlu0.b32.cont [11/16] 0.0, 128
        %5407 = vxpose.xlu0.b32.cont [12/16] 0.0, 128
        %5408 = vxpose.xlu0.b32.cont [13/16] 0.0, 128
        %5409 = vxpose.xlu0.b32.cont [14/16] 0.0, 128
        %5410 = vxpose.xlu0.b32.cont [15/16] 0.0, 128
        %5411 = vxpose.xlu0.b32.end [16/16] 0.0, 128
        %v5412 = vpop.trf.xlu0
        %v5413 = vpop.trf.xlu0
        %v5414 = vpop.trf.xlu0
        %v5415 = vpop.trf.xlu0
        %v5416 = vpop.trf.xlu0
        %v5417 = vpop.trf.xlu0
        %v5418 = vpop.trf.xlu0
        %v5419 = vpop.trf.xlu0
        %v5420 = vpop.trf.xlu0
        %v5421 = vpop.trf.xlu0
        %v5422 = vpop.trf.xlu0
        %v5423 = vpop.trf.xlu0
        %v5424 = vpop.trf.xlu0
        %v5425 = vpop.trf.xlu0
        %v5426 = vpop.trf.xlu0
        %v5427 = vpop.trf.xlu0
        %5428 = vxpose.xlu0.b32.start [1/16] %v5209, 128
        %5429 = vxpose.xlu0.b32.cont [2/16] 0.0, 128
        %5430 = vxpose.xlu0.b32.cont [3/16] 0.0, 128
        %5431 = vxpose.xlu0.b32.cont [4/16] 0.0, 128
        %5432 = vxpose.xlu0.b32.cont [5/16] 0.0, 128
        %5433 = vxpose.xlu0.b32.cont [6/16] 0.0, 128
        %5434 = vxpose.xlu0.b32.cont [7/16] 0.0, 128
        %5435 = vxpose.xlu0.b32.cont [8/16] 0.0, 128
        %5436 = vxpose.xlu0.b32.cont [9/16] 0.0, 128
        %5437 = vxpose.xlu0.b32.cont [10/16] 0.0, 128
        %5438 = vxpose.xlu0.b32.cont [11/16] 0.0, 128
        %5439 = vxpose.xlu0.b32.cont [12/16] 0.0, 128
        %5440 = vxpose.xlu0.b32.cont [13/16] 0.0, 128
        %5441 = vxpose.xlu0.b32.cont [14/16] 0.0, 128
        %5442 = vxpose.xlu0.b32.cont [15/16] 0.0, 128
        %5443 = vxpose.xlu0.b32.end [16/16] 0.0, 128
        %v5444 = vpop.trf.xlu0
        %v5445 = vpop.trf.xlu0
        %v5446 = vpop.trf.xlu0
        %v5447 = vpop.trf.xlu0
        %v5448 = vpop.trf.xlu0
        %v5449 = vpop.trf.xlu0
        %v5450 = vpop.trf.xlu0
        %v5451 = vpop.trf.xlu0
        %v5452 = vpop.trf.xlu0
        %v5453 = vpop.trf.xlu0
        %v5454 = vpop.trf.xlu0
        %v5455 = vpop.trf.xlu0
        %v5456 = vpop.trf.xlu0
        %v5457 = vpop.trf.xlu0
        %v5458 = vpop.trf.xlu0
        %v5459 = vpop.trf.xlu0
        %5460 = vxpose.xlu0.b32.start [1/16] %v5212, 128
        %5461 = vxpose.xlu0.b32.cont [2/16] 0.0, 128
        %5462 = vxpose.xlu0.b32.cont [3/16] 0.0, 128
        %5463 = vxpose.xlu0.b32.cont [4/16] 0.0, 128
        %5464 = vxpose.xlu0.b32.cont [5/16] 0.0, 128
        %5465 = vxpose.xlu0.b32.cont [6/16] 0.0, 128
        %5466 = vxpose.xlu0.b32.cont [7/16] 0.0, 128
        %5467 = vxpose.xlu0.b32.cont [8/16] 0.0, 128
        %5468 = vxpose.xlu0.b32.cont [9/16] 0.0, 128
        %5469 = vxpose.xlu0.b32.cont [10/16] 0.0, 128
        %5470 = vxpose.xlu0.b32.cont [11/16] 0.0, 128
        %5471 = vxpose.xlu0.b32.cont [12/16] 0.0, 128
        %5472 = vxpose.xlu0.b32.cont [13/16] 0.0, 128
        %5473 = vxpose.xlu0.b32.cont [14/16] 0.0, 128
        %5474 = vxpose.xlu0.b32.cont [15/16] 0.0, 128
        %5475 = vxpose.xlu0.b32.end [16/16] 0.0, 128
        %v5476 = vpop.trf.xlu0
        %v5477 = vpop.trf.xlu0
        %v5478 = vpop.trf.xlu0
        %v5479 = vpop.trf.xlu0
        %v5480 = vpop.trf.xlu0
        %v5481 = vpop.trf.xlu0
        %v5482 = vpop.trf.xlu0
        %v5483 = vpop.trf.xlu0
        %v5484 = vpop.trf.xlu0
        %v5485 = vpop.trf.xlu0
        %v5486 = vpop.trf.xlu0
        %v5487 = vpop.trf.xlu0
        %v5488 = vpop.trf.xlu0
        %v5489 = vpop.trf.xlu0
        %v5490 = vpop.trf.xlu0
        %v5491 = vpop.trf.xlu0
        %v5492 = vsel %vm1619, %v5135, 0
        %5494 = vmatpush.msra.mxu0 0.0
        %5495 = vmatpush.msra.mxu0 0.0
        %5496 = vmatpush.msra.mxu0 0.0
        %5497 = vmatpush.msra.mxu0 0.0
        %5498 = vmatpush.msra.mxu0 0.0
        %5499 = vmatpush.msra.mxu0 0.0
        %5500 = vmatpush.msra.mxu0 0.0
        %5501 = vmatpush.msra.mxu0 0.0
        %5502 = vmatpush.msra.mxu0 0.0
        %5503 = vmatpush.msra.mxu0 0.0
        %5504 = vmatpush.msra.mxu0 0.0
        %5505 = vmatpush.msra.mxu0 0.0
        %5506 = vmatpush.msra.mxu0 0.0
        %5507 = vmatpush.msra.mxu0 0.0
        %5508 = vmatpush.msra.mxu0 %v5253
        %5509 = vmatpush.msra.mxu0 %v5252
        %5510 = vmatmul.f32.gmra.mxu0 %v5492
        %v5511 = vpop.f32.mrf.mxu0
        %v5512 = vadd.f32 0.0, %v5511
        %5513 = vdwg.mxu0
        %v5514 = vsel %vm1619, %v5179, 0
        %5516 = vmatpush.msra.mxu0 0.0
        %5517 = vmatpush.msra.mxu0 0.0
        %5518 = vmatpush.msra.mxu0 0.0
        %5519 = vmatpush.msra.mxu0 0.0
        %5520 = vmatpush.msra.mxu0 0.0
        %5521 = vmatpush.msra.mxu0 0.0
        %5522 = vmatpush.msra.mxu0 0.0
        %5523 = vmatpush.msra.mxu0 0.0
        %5524 = vmatpush.msra.mxu0 0.0
        %5525 = vmatpush.msra.mxu0 0.0
        %5526 = vmatpush.msra.mxu0 0.0
        %5527 = vmatpush.msra.mxu0 0.0
        %5528 = vmatpush.msra.mxu0 0.0
        %5529 = vmatpush.msra.mxu0 0.0
        %5530 = vmatpush.msra.mxu0 %v5285
        %5531 = vmatpush.msra.mxu0 %v5284
        %5532 = vmatmul.f32.gmra.mxu0 %v5514
        %v5533 = vpop.f32.mrf.mxu0
        %v5534 = vadd.f32 0.0, %v5533
        %5535 = vdwg.mxu0
        %v5536 = vsel %vm1619, %v5181, 0
        %5538 = vmatpush.msra.mxu0 0.0
        %5539 = vmatpush.msra.mxu0 0.0
        %5540 = vmatpush.msra.mxu0 0.0
        %5541 = vmatpush.msra.mxu0 0.0
        %5542 = vmatpush.msra.mxu0 0.0
        %5543 = vmatpush.msra.mxu0 0.0
        %5544 = vmatpush.msra.mxu0 0.0
        %5545 = vmatpush.msra.mxu0 0.0
        %5546 = vmatpush.msra.mxu0 0.0
        %5547 = vmatpush.msra.mxu0 0.0
        %5548 = vmatpush.msra.mxu0 0.0
        %5549 = vmatpush.msra.mxu0 0.0
        %5550 = vmatpush.msra.mxu0 0.0
        %5551 = vmatpush.msra.mxu0 0.0
        %5552 = vmatpush.msra.mxu0 %v5317
        %5553 = vmatpush.msra.mxu0 %v5316
        %5554 = vmatmul.f32.gmra.mxu0 %v5536
        %v5555 = vpop.f32.mrf.mxu0
        %v5556 = vadd.f32 0.0, %v5555
        %5557 = vdwg.mxu0
        %v5558 = vsel %vm1619, %v5183, 0
        %5560 = vmatpush.msra.mxu0 0.0
        %5561 = vmatpush.msra.mxu0 0.0
        %5562 = vmatpush.msra.mxu0 0.0
        %5563 = vmatpush.msra.mxu0 0.0
        %5564 = vmatpush.msra.mxu0 0.0
        %5565 = vmatpush.msra.mxu0 0.0
        %5566 = vmatpush.msra.mxu0 0.0
        %5567 = vmatpush.msra.mxu0 0.0
        %5568 = vmatpush.msra.mxu0 0.0
        %5569 = vmatpush.msra.mxu0 0.0
        %5570 = vmatpush.msra.mxu0 0.0
        %5571 = vmatpush.msra.mxu0 0.0
        %5572 = vmatpush.msra.mxu0 0.0
        %5573 = vmatpush.msra.mxu0 0.0
        %5574 = vmatpush.msra.mxu0 %v5349
        %5575 = vmatpush.msra.mxu0 %v5348
        %5576 = vmatmul.f32.gmra.mxu0 %v5558
        %v5577 = vpop.f32.mrf.mxu0
        %v5578 = vadd.f32 0.0, %v5577
        %5579 = vdwg.mxu0
        %v5580 = vsel %vm1619, %v5185, 0
        %5582 = vmatpush.msra.mxu0 0.0
        %5583 = vmatpush.msra.mxu0 0.0
        %5584 = vmatpush.msra.mxu0 0.0
        %5585 = vmatpush.msra.mxu0 0.0
        %5586 = vmatpush.msra.mxu0 0.0
        %5587 = vmatpush.msra.mxu0 0.0
        %5588 = vmatpush.msra.mxu0 0.0
        %5589 = vmatpush.msra.mxu0 0.0
        %5590 = vmatpush.msra.mxu0 0.0
        %5591 = vmatpush.msra.mxu0 0.0
        %5592 = vmatpush.msra.mxu0 0.0
        %5593 = vmatpush.msra.mxu0 0.0
        %5594 = vmatpush.msra.mxu0 0.0
        %5595 = vmatpush.msra.mxu0 0.0
        %5596 = vmatpush.msra.mxu0 %v5381
        %5597 = vmatpush.msra.mxu0 %v5380
        %5598 = vmatmul.f32.gmra.mxu0 %v5580
        %v5599 = vpop.f32.mrf.mxu0
        %v5600 = vadd.f32 0.0, %v5599
        %5601 = vdwg.mxu0
        %v5602 = vsel %vm1619, %v5187, 0
        %5604 = vmatpush.msra.mxu0 0.0
        %5605 = vmatpush.msra.mxu0 0.0
        %5606 = vmatpush.msra.mxu0 0.0
        %5607 = vmatpush.msra.mxu0 0.0
        %5608 = vmatpush.msra.mxu0 0.0
        %5609 = vmatpush.msra.mxu0 0.0
        %5610 = vmatpush.msra.mxu0 0.0
        %5611 = vmatpush.msra.mxu0 0.0
        %5612 = vmatpush.msra.mxu0 0.0
        %5613 = vmatpush.msra.mxu0 0.0
        %5614 = vmatpush.msra.mxu0 0.0
        %5615 = vmatpush.msra.mxu0 0.0
        %5616 = vmatpush.msra.mxu0 0.0
        %5617 = vmatpush.msra.mxu0 0.0
        %5618 = vmatpush.msra.mxu0 %v5413
        %5619 = vmatpush.msra.mxu0 %v5412
        %5620 = vmatmul.f32.gmra.mxu0 %v5602
        %v5621 = vpop.f32.mrf.mxu0
        %v5622 = vadd.f32 0.0, %v5621
        %5623 = vdwg.mxu0
        %v5624 = vsel %vm1619, %v5189, 0
        %5626 = vmatpush.msra.mxu0 0.0
        %5627 = vmatpush.msra.mxu0 0.0
        %5628 = vmatpush.msra.mxu0 0.0
        %5629 = vmatpush.msra.mxu0 0.0
        %5630 = vmatpush.msra.mxu0 0.0
        %5631 = vmatpush.msra.mxu0 0.0
        %5632 = vmatpush.msra.mxu0 0.0
        %5633 = vmatpush.msra.mxu0 0.0
        %5634 = vmatpush.msra.mxu0 0.0
        %5635 = vmatpush.msra.mxu0 0.0
        %5636 = vmatpush.msra.mxu0 0.0
        %5637 = vmatpush.msra.mxu0 0.0
        %5638 = vmatpush.msra.mxu0 0.0
        %5639 = vmatpush.msra.mxu0 0.0
        %5640 = vmatpush.msra.mxu0 %v5445
        %5641 = vmatpush.msra.mxu0 %v5444
        %5642 = vmatmul.f32.gmra.mxu0 %v5624
        %v5643 = vpop.f32.mrf.mxu0
        %v5644 = vadd.f32 0.0, %v5643
        %5645 = vdwg.mxu0
        %v5646 = vsel %vm1619, %v5191, 0
        %5648 = vmatpush.msra.mxu0 0.0
        %5649 = vmatpush.msra.mxu0 0.0
        %5650 = vmatpush.msra.mxu0 0.0
        %5651 = vmatpush.msra.mxu0 0.0
        %5652 = vmatpush.msra.mxu0 0.0
        %5653 = vmatpush.msra.mxu0 0.0
        %5654 = vmatpush.msra.mxu0 0.0
        %5655 = vmatpush.msra.mxu0 0.0
        %5656 = vmatpush.msra.mxu0 0.0
        %5657 = vmatpush.msra.mxu0 0.0
        %5658 = vmatpush.msra.mxu0 0.0
        %5659 = vmatpush.msra.mxu0 0.0
        %5660 = vmatpush.msra.mxu0 0.0
        %5661 = vmatpush.msra.mxu0 0.0
        %5662 = vmatpush.msra.mxu0 %v5477
        %5663 = vmatpush.msra.mxu0 %v5476
        %5664 = vmatmul.f32.gmra.mxu0 %v5646
        %v5665 = vpop.f32.mrf.mxu0
        %v5666 = vadd.f32 0.0, %v5665
        %5667 = vdwg.mxu0
        %v5668 = vmul.f32 %v5512, 0.25
        %v5669 = vmul.f32 %v5534, 0.25
        %v5670 = vmul.f32 %v5556, 0.25
        %v5671 = vmul.f32 %v5578, 0.25
        %v5672 = vmul.f32 %v5600, 0.25
        %v5673 = vmul.f32 %v5622, 0.25
        %v5674 = vmul.f32 %v5644, 0.25
        %v5675 = vmul.f32 %v5666, 0.25
        %v5676 = vsel %vm1804, %v5668, -inf
        %5677 = vmax.xlane.f32.xlu0 %v5676
        %v5678 = vpop.xlane.xlu0 %5677
        %v5679 = vsel %vm1804, %v5669, -inf
        %5680 = vmax.xlane.f32.xlu0 %v5679
        %v5681 = vpop.xlane.xlu0 %5680
        %v5682 = vsel %vm1804, %v5670, -inf
        %5683 = vmax.xlane.f32.xlu0 %v5682
        %v5684 = vpop.xlane.xlu0 %5683
        %v5685 = vsel %vm1804, %v5671, -inf
        %5686 = vmax.xlane.f32.xlu0 %v5685
        %v5687 = vpop.xlane.xlu0 %5686
        %v5688 = vsel %vm1804, %v5672, -inf
        %5689 = vmax.xlane.f32.xlu0 %v5688
        %v5690 = vpop.xlane.xlu0 %5689
        %v5691 = vsel %vm1804, %v5673, -inf
        %5692 = vmax.xlane.f32.xlu0 %v5691
        %v5693 = vpop.xlane.xlu0 %5692
        %v5694 = vsel %vm1804, %v5674, -inf
        %5695 = vmax.xlane.f32.xlu0 %v5694
        %v5696 = vpop.xlane.xlu0 %5695
        %v5697 = vsel %vm1804, %v5675, -inf
        %5698 = vmax.xlane.f32.xlu0 %v5697
        %v5699 = vpop.xlane.xlu0 %5698
        %v5700 = vsub.f32 %v5668, %v5678
        %v5701 = vsub.f32 %v5669, %v5681
        %v5702 = vsub.f32 %v5670, %v5684
        %v5703 = vsub.f32 %v5671, %v5687
        %v5704 = vsub.f32 %v5672, %v5690
        %v5705 = vsub.f32 %v5673, %v5693
        %v5706 = vsub.f32 %v5674, %v5696
        %v5707 = vsub.f32 %v5675, %v5699
        %v5708 = vmul.f32 %v5700, 1.442695
        %v5709 = vpow.pop %v5708
        %v5710 = vmul.f32 %v5701, 1.442695
        %v5711 = vpow.pop %v5710
        %v5712 = vmul.f32 %v5702, 1.442695
        %v5713 = vpow.pop %v5712
        %v5714 = vmul.f32 %v5703, 1.442695
        %v5715 = vpow.pop %v5714
        %v5716 = vmul.f32 %v5704, 1.442695
        %v5717 = vpow.pop %v5716
        %v5718 = vmul.f32 %v5705, 1.442695
        %v5719 = vpow.pop %v5718
        %v5720 = vmul.f32 %v5706, 1.442695
        %v5721 = vpow.pop %v5720
        %v5722 = vmul.f32 %v5707, 1.442695
        %v5723 = vpow.pop %v5722
        %v5724 = vsel %vm1804, %v5709, 0.0
        %5725 = vadd.xlane.f32.xlu0 %v5724
        %v5726 = vpop.xlane.xlu0 %5725
        %v5727 = vsel %vm1804, %v5711, 0.0
        %5728 = vadd.xlane.f32.xlu0 %v5727
        %v5729 = vpop.xlane.xlu0 %5728
        %v5730 = vsel %vm1804, %v5713, 0.0
        %5731 = vadd.xlane.f32.xlu0 %v5730
        %v5732 = vpop.xlane.xlu0 %5731
        %v5733 = vsel %vm1804, %v5715, 0.0
        %5734 = vadd.xlane.f32.xlu0 %v5733
        %v5735 = vpop.xlane.xlu0 %5734
        %v5736 = vsel %vm1804, %v5717, 0.0
        %5737 = vadd.xlane.f32.xlu0 %v5736
        %v5738 = vpop.xlane.xlu0 %5737
        %v5739 = vsel %vm1804, %v5719, 0.0
        %5740 = vadd.xlane.f32.xlu0 %v5739
        %v5741 = vpop.xlane.xlu0 %5740
        %v5742 = vsel %vm1804, %v5721, 0.0
        %5743 = vadd.xlane.f32.xlu0 %v5742
        %v5744 = vpop.xlane.xlu0 %5743
        %v5745 = vsel %vm1804, %v5723, 0.0
        %5746 = vadd.xlane.f32.xlu0 %v5745
        %v5747 = vpop.xlane.xlu0 %5746
        %v5748 = vrcp.pop %v5726
        %v5749 = vrcp.pop %v5729
        %v5750 = vrcp.pop %v5732
        %v5751 = vrcp.pop %v5735
        %v5752 = vrcp.pop %v5738
        %v5753 = vrcp.pop %v5741
        %v5754 = vrcp.pop %v5744
        %v5755 = vrcp.pop %v5747
        %v5756 = vmul.f32 %v5709, %v5748
        %v5757 = vmul.f32 %v5711, %v5749
        %v5758 = vmul.f32 %v5713, %v5750
        %v5759 = vmul.f32 %v5715, %v5751
        %v5760 = vmul.f32 %v5717, %v5752
        %v5761 = vmul.f32 %v5719, %v5753
        %v5762 = vmul.f32 %v5721, %v5754
        %v5763 = vmul.f32 %v5723, %v5755
        %5764 = vxpose.xlu0.b32.start [1/16] %v5175, 128
        %5765 = vxpose.xlu0.b32.cont [2/16] 0.0, 128
        %5766 = vxpose.xlu0.b32.cont [3/16] 0.0, 128
        %5767 = vxpose.xlu0.b32.cont [4/16] 0.0, 128
        %5768 = vxpose.xlu0.b32.cont [5/16] 0.0, 128
        %5769 = vxpose.xlu0.b32.cont [6/16] 0.0, 128
        %5770 = vxpose.xlu0.b32.cont [7/16] 0.0, 128
        %5771 = vxpose.xlu0.b32.cont [8/16] 0.0, 128
        %5772 = vxpose.xlu0.b32.cont [9/16] 0.0, 128
        %5773 = vxpose.xlu0.b32.cont [10/16] 0.0, 128
        %5774 = vxpose.xlu0.b32.cont [11/16] 0.0, 128
        %5775 = vxpose.xlu0.b32.cont [12/16] 0.0, 128
        %5776 = vxpose.xlu0.b32.cont [13/16] 0.0, 128
        %5777 = vxpose.xlu0.b32.cont [14/16] 0.0, 128
        %5778 = vxpose.xlu0.b32.cont [15/16] 0.0, 128
        %5779 = vxpose.xlu0.b32.end [16/16] 0.0, 128
        %v5780 = vpop.trf.xlu0
        %v5781 = vpop.trf.xlu0
        %v5782 = vpop.trf.xlu0
        %v5783 = vpop.trf.xlu0
        %v5784 = vpop.trf.xlu0
        %v5785 = vpop.trf.xlu0
        %v5786 = vpop.trf.xlu0
        %v5787 = vpop.trf.xlu0
        %v5788 = vpop.trf.xlu0
        %v5789 = vpop.trf.xlu0
        %v5790 = vpop.trf.xlu0
        %v5791 = vpop.trf.xlu0
        %v5792 = vpop.trf.xlu0
        %v5793 = vpop.trf.xlu0
        %v5794 = vpop.trf.xlu0
        %v5795 = vpop.trf.xlu0
        %5796 = vxpose.xlu0.b32.start [1/16] %v5216, 128
        %5797 = vxpose.xlu0.b32.cont [2/16] 0.0, 128
        %5798 = vxpose.xlu0.b32.cont [3/16] 0.0, 128
        %5799 = vxpose.xlu0.b32.cont [4/16] 0.0, 128
        %5800 = vxpose.xlu0.b32.cont [5/16] 0.0, 128
        %5801 = vxpose.xlu0.b32.cont [6/16] 0.0, 128
        %5802 = vxpose.xlu0.b32.cont [7/16] 0.0, 128
        %5803 = vxpose.xlu0.b32.cont [8/16] 0.0, 128
        %5804 = vxpose.xlu0.b32.cont [9/16] 0.0, 128
        %5805 = vxpose.xlu0.b32.cont [10/16] 0.0, 128
        %5806 = vxpose.xlu0.b32.cont [11/16] 0.0, 128
        %5807 = vxpose.xlu0.b32.cont [12/16] 0.0, 128
        %5808 = vxpose.xlu0.b32.cont [13/16] 0.0, 128
        %5809 = vxpose.xlu0.b32.cont [14/16] 0.0, 128
        %5810 = vxpose.xlu0.b32.cont [15/16] 0.0, 128
        %5811 = vxpose.xlu0.b32.end [16/16] 0.0, 128
        %v5812 = vpop.trf.xlu0
        %v5813 = vpop.trf.xlu0
        %v5814 = vpop.trf.xlu0
        %v5815 = vpop.trf.xlu0
        %v5816 = vpop.trf.xlu0
        %v5817 = vpop.trf.xlu0
        %v5818 = vpop.trf.xlu0
        %v5819 = vpop.trf.xlu0
        %v5820 = vpop.trf.xlu0
        %v5821 = vpop.trf.xlu0
        %v5822 = vpop.trf.xlu0
        %v5823 = vpop.trf.xlu0
        %v5824 = vpop.trf.xlu0
        %v5825 = vpop.trf.xlu0
        %v5826 = vpop.trf.xlu0
        %v5827 = vpop.trf.xlu0
        %5828 = vxpose.xlu0.b32.start [1/16] %v5219, 128
        %5829 = vxpose.xlu0.b32.cont [2/16] 0.0, 128
        %5830 = vxpose.xlu0.b32.cont [3/16] 0.0, 128
        %5831 = vxpose.xlu0.b32.cont [4/16] 0.0, 128
        %5832 = vxpose.xlu0.b32.cont [5/16] 0.0, 128
        %5833 = vxpose.xlu0.b32.cont [6/16] 0.0, 128
        %5834 = vxpose.xlu0.b32.cont [7/16] 0.0, 128
        %5835 = vxpose.xlu0.b32.cont [8/16] 0.0, 128
        %5836 = vxpose.xlu0.b32.cont [9/16] 0.0, 128
        %5837 = vxpose.xlu0.b32.cont [10/16] 0.0, 128
        %5838 = vxpose.xlu0.b32.cont [11/16] 0.0, 128
        %5839 = vxpose.xlu0.b32.cont [12/16] 0.0, 128
        %5840 = vxpose.xlu0.b32.cont [13/16] 0.0, 128
        %5841 = vxpose.xlu0.b32.cont [14/16] 0.0, 128
        %5842 = vxpose.xlu0.b32.cont [15/16] 0.0, 128
        %5843 = vxpose.xlu0.b32.end [16/16] 0.0, 128
        %v5844 = vpop.trf.xlu0
        %v5845 = vpop.trf.xlu0
        %v5846 = vpop.trf.xlu0
        %v5847 = vpop.trf.xlu0
        %v5848 = vpop.trf.xlu0
        %v5849 = vpop.trf.xlu0
        %v5850 = vpop.trf.xlu0
        %v5851 = vpop.trf.xlu0
        %v5852 = vpop.trf.xlu0
        %v5853 = vpop.trf.xlu0
        %v5854 = vpop.trf.xlu0
        %v5855 = vpop.trf.xlu0
        %v5856 = vpop.trf.xlu0
        %v5857 = vpop.trf.xlu0
        %v5858 = vpop.trf.xlu0
        %v5859 = vpop.trf.xlu0
        %5860 = vxpose.xlu0.b32.start [1/16] %v5222, 128
        %5861 = vxpose.xlu0.b32.cont [2/16] 0.0, 128
        %5862 = vxpose.xlu0.b32.cont [3/16] 0.0, 128
        %5863 = vxpose.xlu0.b32.cont [4/16] 0.0, 128
        %5864 = vxpose.xlu0.b32.cont [5/16] 0.0, 128
        %5865 = vxpose.xlu0.b32.cont [6/16] 0.0, 128
        %5866 = vxpose.xlu0.b32.cont [7/16] 0.0, 128
        %5867 = vxpose.xlu0.b32.cont [8/16] 0.0, 128
        %5868 = vxpose.xlu0.b32.cont [9/16] 0.0, 128
        %5869 = vxpose.xlu0.b32.cont [10/16] 0.0, 128
        %5870 = vxpose.xlu0.b32.cont [11/16] 0.0, 128
        %5871 = vxpose.xlu0.b32.cont [12/16] 0.0, 128
        %5872 = vxpose.xlu0.b32.cont [13/16] 0.0, 128
        %5873 = vxpose.xlu0.b32.cont [14/16] 0.0, 128
        %5874 = vxpose.xlu0.b32.cont [15/16] 0.0, 128
        %5875 = vxpose.xlu0.b32.end [16/16] 0.0, 128
        %v5876 = vpop.trf.xlu0
        %v5877 = vpop.trf.xlu0
        %v5878 = vpop.trf.xlu0
        %v5879 = vpop.trf.xlu0
        %v5880 = vpop.trf.xlu0
        %v5881 = vpop.trf.xlu0
        %v5882 = vpop.trf.xlu0
        %v5883 = vpop.trf.xlu0
        %v5884 = vpop.trf.xlu0
        %v5885 = vpop.trf.xlu0
        %v5886 = vpop.trf.xlu0
        %v5887 = vpop.trf.xlu0
        %v5888 = vpop.trf.xlu0
        %v5889 = vpop.trf.xlu0
        %v5890 = vpop.trf.xlu0
        %v5891 = vpop.trf.xlu0
        %5892 = vxpose.xlu0.b32.start [1/16] %v5225, 128
        %5893 = vxpose.xlu0.b32.cont [2/16] 0.0, 128
        %5894 = vxpose.xlu0.b32.cont [3/16] 0.0, 128
        %5895 = vxpose.xlu0.b32.cont [4/16] 0.0, 128
        %5896 = vxpose.xlu0.b32.cont [5/16] 0.0, 128
        %5897 = vxpose.xlu0.b32.cont [6/16] 0.0, 128
        %5898 = vxpose.xlu0.b32.cont [7/16] 0.0, 128
        %5899 = vxpose.xlu0.b32.cont [8/16] 0.0, 128
        %5900 = vxpose.xlu0.b32.cont [9/16] 0.0, 128
        %5901 = vxpose.xlu0.b32.cont [10/16] 0.0, 128
        %5902 = vxpose.xlu0.b32.cont [11/16] 0.0, 128
        %5903 = vxpose.xlu0.b32.cont [12/16] 0.0, 128
        %5904 = vxpose.xlu0.b32.cont [13/16] 0.0, 128
        %5905 = vxpose.xlu0.b32.cont [14/16] 0.0, 128
        %5906 = vxpose.xlu0.b32.cont [15/16] 0.0, 128
        %5907 = vxpose.xlu0.b32.end [16/16] 0.0, 128
        %v5908 = vpop.trf.xlu0
        %v5909 = vpop.trf.xlu0
        %v5910 = vpop.trf.xlu0
        %v5911 = vpop.trf.xlu0
        %v5912 = vpop.trf.xlu0
        %v5913 = vpop.trf.xlu0
        %v5914 = vpop.trf.xlu0
        %v5915 = vpop.trf.xlu0
        %v5916 = vpop.trf.xlu0
        %v5917 = vpop.trf.xlu0
        %v5918 = vpop.trf.xlu0
        %v5919 = vpop.trf.xlu0
        %v5920 = vpop.trf.xlu0
        %v5921 = vpop.trf.xlu0
        %v5922 = vpop.trf.xlu0
        %v5923 = vpop.trf.xlu0
        %5924 = vxpose.xlu0.b32.start [1/16] %v5228, 128
        %5925 = vxpose.xlu0.b32.cont [2/16] 0.0, 128
        %5926 = vxpose.xlu0.b32.cont [3/16] 0.0, 128
        %5927 = vxpose.xlu0.b32.cont [4/16] 0.0, 128
        %5928 = vxpose.xlu0.b32.cont [5/16] 0.0, 128
        %5929 = vxpose.xlu0.b32.cont [6/16] 0.0, 128
        %5930 = vxpose.xlu0.b32.cont [7/16] 0.0, 128
        %5931 = vxpose.xlu0.b32.cont [8/16] 0.0, 128
        %5932 = vxpose.xlu0.b32.cont [9/16] 0.0, 128
        %5933 = vxpose.xlu0.b32.cont [10/16] 0.0, 128
        %5934 = vxpose.xlu0.b32.cont [11/16] 0.0, 128
        %5935 = vxpose.xlu0.b32.cont [12/16] 0.0, 128
        %5936 = vxpose.xlu0.b32.cont [13/16] 0.0, 128
        %5937 = vxpose.xlu0.b32.cont [14/16] 0.0, 128
        %5938 = vxpose.xlu0.b32.cont [15/16] 0.0, 128
        %5939 = vxpose.xlu0.b32.end [16/16] 0.0, 128
        %v5940 = vpop.trf.xlu0
        %v5941 = vpop.trf.xlu0
        %v5942 = vpop.trf.xlu0
        %v5943 = vpop.trf.xlu0
        %v5944 = vpop.trf.xlu0
        %v5945 = vpop.trf.xlu0
        %v5946 = vpop.trf.xlu0
        %v5947 = vpop.trf.xlu0
        %v5948 = vpop.trf.xlu0
        %v5949 = vpop.trf.xlu0
        %v5950 = vpop.trf.xlu0
        %v5951 = vpop.trf.xlu0
        %v5952 = vpop.trf.xlu0
        %v5953 = vpop.trf.xlu0
        %v5954 = vpop.trf.xlu0
        %v5955 = vpop.trf.xlu0
        %5956 = vxpose.xlu0.b32.start [1/16] %v5231, 128
        %5957 = vxpose.xlu0.b32.cont [2/16] 0.0, 128
        %5958 = vxpose.xlu0.b32.cont [3/16] 0.0, 128
        %5959 = vxpose.xlu0.b32.cont [4/16] 0.0, 128
        %5960 = vxpose.xlu0.b32.cont [5/16] 0.0, 128
        %5961 = vxpose.xlu0.b32.cont [6/16] 0.0, 128
        %5962 = vxpose.xlu0.b32.cont [7/16] 0.0, 128
        %5963 = vxpose.xlu0.b32.cont [8/16] 0.0, 128
        %5964 = vxpose.xlu0.b32.cont [9/16] 0.0, 128
        %5965 = vxpose.xlu0.b32.cont [10/16] 0.0, 128
        %5966 = vxpose.xlu0.b32.cont [11/16] 0.0, 128
        %5967 = vxpose.xlu0.b32.cont [12/16] 0.0, 128
        %5968 = vxpose.xlu0.b32.cont [13/16] 0.0, 128
        %5969 = vxpose.xlu0.b32.cont [14/16] 0.0, 128
        %5970 = vxpose.xlu0.b32.cont [15/16] 0.0, 128
        %5971 = vxpose.xlu0.b32.end [16/16] 0.0, 128
        %v5972 = vpop.trf.xlu0
        %v5973 = vpop.trf.xlu0
        %v5974 = vpop.trf.xlu0
        %v5975 = vpop.trf.xlu0
        %v5976 = vpop.trf.xlu0
        %v5977 = vpop.trf.xlu0
        %v5978 = vpop.trf.xlu0
        %v5979 = vpop.trf.xlu0
        %v5980 = vpop.trf.xlu0
        %v5981 = vpop.trf.xlu0
        %v5982 = vpop.trf.xlu0
        %v5983 = vpop.trf.xlu0
        %v5984 = vpop.trf.xlu0
        %v5985 = vpop.trf.xlu0
        %v5986 = vpop.trf.xlu0
        %v5987 = vpop.trf.xlu0
        %5988 = vxpose.xlu0.b32.start [1/16] %v5234, 128
        %5989 = vxpose.xlu0.b32.cont [2/16] 0.0, 128
        %5990 = vxpose.xlu0.b32.cont [3/16] 0.0, 128
        %5991 = vxpose.xlu0.b32.cont [4/16] 0.0, 128
        %5992 = vxpose.xlu0.b32.cont [5/16] 0.0, 128
        %5993 = vxpose.xlu0.b32.cont [6/16] 0.0, 128
        %5994 = vxpose.xlu0.b32.cont [7/16] 0.0, 128
        %5995 = vxpose.xlu0.b32.cont [8/16] 0.0, 128
        %5996 = vxpose.xlu0.b32.cont [9/16] 0.0, 128
        %5997 = vxpose.xlu0.b32.cont [10/16] 0.0, 128
        %5998 = vxpose.xlu0.b32.cont [11/16] 0.0, 128
        %5999 = vxpose.xlu0.b32.cont [12/16] 0.0, 128
        %6000 = vxpose.xlu0.b32.cont [13/16] 0.0, 128
        %6001 = vxpose.xlu0.b32.cont [14/16] 0.0, 128
        %6002 = vxpose.xlu0.b32.cont [15/16] 0.0, 128
        %6003 = vxpose.xlu0.b32.end [16/16] 0.0, 128
        %v6004 = vpop.trf.xlu0
        %v6005 = vpop.trf.xlu0
        %v6006 = vpop.trf.xlu0
        %v6007 = vpop.trf.xlu0
        %v6008 = vpop.trf.xlu0
        %v6009 = vpop.trf.xlu0
        %v6010 = vpop.trf.xlu0
        %v6011 = vpop.trf.xlu0
        %v6012 = vpop.trf.xlu0
        %v6013 = vpop.trf.xlu0
        %v6014 = vpop.trf.xlu0
        %v6015 = vpop.trf.xlu0
        %v6016 = vpop.trf.xlu0
        %v6017 = vpop.trf.xlu0
        %v6018 = vpop.trf.xlu0
        %v6019 = vpop.trf.xlu0
        %v6021 = vsel %vm1804, %v5780, 0
        %v6024 = vsel %vm1804, %v5781, 0
        %v6027 = vsel %vm1804, %v5756, 0
        %6029 = vmatpush.xpose.msra.mxu0 0.0
        %6030 = vmatpush.xpose.msra.mxu0 0.0
        %6031 = vmatpush.xpose.msra.mxu0 0.0
        %6032 = vmatpush.xpose.msra.mxu0 0.0
        %6033 = vmatpush.xpose.msra.mxu0 0.0
        %6034 = vmatpush.xpose.msra.mxu0 0.0
        %6035 = vmatpush.xpose.msra.mxu0 0.0
        %6036 = vmatpush.xpose.msra.mxu0 0.0
        %6037 = vmatpush.xpose.msra.mxu0 0.0
        %6038 = vmatpush.xpose.msra.mxu0 0.0
        %6039 = vmatpush.xpose.msra.mxu0 0.0
        %6040 = vmatpush.xpose.msra.mxu0 0.0
        %6041 = vmatpush.xpose.msra.mxu0 0.0
        %6042 = vmatpush.xpose.msra.mxu0 0.0
        %6043 = vmatpush.xpose.msra.mxu0 0.0
        %6044 = vmatpush.xpose.msra.mxu0 %v6027
        %6045 = vmatmul.f32.gmra.mxu0 %v6021
        %v6046 = vpop.f32.mrf.mxu0
        %v6047 = vadd.f32 0.0, %v6046
        %6048 = vmatmul.f32.gmra.mxu0 %v6024
        %v6049 = vpop.f32.mrf.mxu0
        %v6050 = vadd.f32 0.0, %v6049
        %6051 = vdwg.mxu0
        %v6053 = vsel %vm1804, %v5812, 0
        %v6056 = vsel %vm1804, %v5813, 0
        %v6059 = vsel %vm1804, %v5757, 0
        %6061 = vmatpush.xpose.msra.mxu0 0.0
        %6062 = vmatpush.xpose.msra.mxu0 0.0
        %6063 = vmatpush.xpose.msra.mxu0 0.0
        %6064 = vmatpush.xpose.msra.mxu0 0.0
        %6065 = vmatpush.xpose.msra.mxu0 0.0
        %6066 = vmatpush.xpose.msra.mxu0 0.0
        %6067 = vmatpush.xpose.msra.mxu0 0.0
        %6068 = vmatpush.xpose.msra.mxu0 0.0
        %6069 = vmatpush.xpose.msra.mxu0 0.0
        %6070 = vmatpush.xpose.msra.mxu0 0.0
        %6071 = vmatpush.xpose.msra.mxu0 0.0
        %6072 = vmatpush.xpose.msra.mxu0 0.0
        %6073 = vmatpush.xpose.msra.mxu0 0.0
        %6074 = vmatpush.xpose.msra.mxu0 0.0
        %6075 = vmatpush.xpose.msra.mxu0 0.0
        %6076 = vmatpush.xpose.msra.mxu0 %v6059
        %6077 = vmatmul.f32.gmra.mxu0 %v6053
        %v6078 = vpop.f32.mrf.mxu0
        %v6079 = vadd.f32 0.0, %v6078
        %6080 = vmatmul.f32.gmra.mxu0 %v6056
        %v6081 = vpop.f32.mrf.mxu0
        %v6082 = vadd.f32 0.0, %v6081
        %6083 = vdwg.mxu0
        %v6085 = vsel %vm1804, %v5844, 0
        %v6088 = vsel %vm1804, %v5845, 0
        %v6091 = vsel %vm1804, %v5758, 0
        %6093 = vmatpush.xpose.msra.mxu0 0.0
        %6094 = vmatpush.xpose.msra.mxu0 0.0
        %6095 = vmatpush.xpose.msra.mxu0 0.0
        %6096 = vmatpush.xpose.msra.mxu0 0.0
        %6097 = vmatpush.xpose.msra.mxu0 0.0
        %6098 = vmatpush.xpose.msra.mxu0 0.0
        %6099 = vmatpush.xpose.msra.mxu0 0.0
        %6100 = vmatpush.xpose.msra.mxu0 0.0
        %6101 = vmatpush.xpose.msra.mxu0 0.0
        %6102 = vmatpush.xpose.msra.mxu0 0.0
        %6103 = vmatpush.xpose.msra.mxu0 0.0
        %6104 = vmatpush.xpose.msra.mxu0 0.0
        %6105 = vmatpush.xpose.msra.mxu0 0.0
        %6106 = vmatpush.xpose.msra.mxu0 0.0
        %6107 = vmatpush.xpose.msra.mxu0 0.0
        %6108 = vmatpush.xpose.msra.mxu0 %v6091
        %6109 = vmatmul.f32.gmra.mxu0 %v6085
        %v6110 = vpop.f32.mrf.mxu0
        %v6111 = vadd.f32 0.0, %v6110
        %6112 = vmatmul.f32.gmra.mxu0 %v6088
        %v6113 = vpop.f32.mrf.mxu0
        %v6114 = vadd.f32 0.0, %v6113
        %6115 = vdwg.mxu0
        %v6117 = vsel %vm1804, %v5876, 0
        %v6120 = vsel %vm1804, %v5877, 0
        %v6123 = vsel %vm1804, %v5759, 0
        %6125 = vmatpush.xpose.msra.mxu0 0.0
        %6126 = vmatpush.xpose.msra.mxu0 0.0
        %6127 = vmatpush.xpose.msra.mxu0 0.0
        %6128 = vmatpush.xpose.msra.mxu0 0.0
        %6129 = vmatpush.xpose.msra.mxu0 0.0
        %6130 = vmatpush.xpose.msra.mxu0 0.0
        %6131 = vmatpush.xpose.msra.mxu0 0.0
        %6132 = vmatpush.xpose.msra.mxu0 0.0
        %6133 = vmatpush.xpose.msra.mxu0 0.0
        %6134 = vmatpush.xpose.msra.mxu0 0.0
        %6135 = vmatpush.xpose.msra.mxu0 0.0
        %6136 = vmatpush.xpose.msra.mxu0 0.0
        %6137 = vmatpush.xpose.msra.mxu0 0.0
        %6138 = vmatpush.xpose.msra.mxu0 0.0
        %6139 = vmatpush.xpose.msra.mxu0 0.0
        %6140 = vmatpush.xpose.msra.mxu0 %v6123
        %6141 = vmatmul.f32.gmra.mxu0 %v6117
        %v6142 = vpop.f32.mrf.mxu0
        %v6143 = vadd.f32 0.0, %v6142
        %6144 = vmatmul.f32.gmra.mxu0 %v6120
        %v6145 = vpop.f32.mrf.mxu0
        %v6146 = vadd.f32 0.0, %v6145
        %6147 = vdwg.mxu0
        %v6149 = vsel %vm1804, %v5908, 0
        %v6152 = vsel %vm1804, %v5909, 0
        %v6155 = vsel %vm1804, %v5760, 0
        %6157 = vmatpush.xpose.msra.mxu0 0.0
        %6158 = vmatpush.xpose.msra.mxu0 0.0
        %6159 = vmatpush.xpose.msra.mxu0 0.0
        %6160 = vmatpush.xpose.msra.mxu0 0.0
        %6161 = vmatpush.xpose.msra.mxu0 0.0
        %6162 = vmatpush.xpose.msra.mxu0 0.0
        %6163 = vmatpush.xpose.msra.mxu0 0.0
        %6164 = vmatpush.xpose.msra.mxu0 0.0
        %6165 = vmatpush.xpose.msra.mxu0 0.0
        %6166 = vmatpush.xpose.msra.mxu0 0.0
        %6167 = vmatpush.xpose.msra.mxu0 0.0
        %6168 = vmatpush.xpose.msra.mxu0 0.0
        %6169 = vmatpush.xpose.msra.mxu0 0.0
        %6170 = vmatpush.xpose.msra.mxu0 0.0
        %6171 = vmatpush.xpose.msra.mxu0 0.0
        %6172 = vmatpush.xpose.msra.mxu0 %v6155
        %6173 = vmatmul.f32.gmra.mxu0 %v6149
        %v6174 = vpop.f32.mrf.mxu0
        %v6175 = vadd.f32 0.0, %v6174
        %6176 = vmatmul.f32.gmra.mxu0 %v6152
        %v6177 = vpop.f32.mrf.mxu0
        %v6178 = vadd.f32 0.0, %v6177
        %6179 = vdwg.mxu0
        %v6181 = vsel %vm1804, %v5940, 0
        %v6184 = vsel %vm1804, %v5941, 0
        %v6187 = vsel %vm1804, %v5761, 0
        %6189 = vmatpush.xpose.msra.mxu0 0.0
        %6190 = vmatpush.xpose.msra.mxu0 0.0
        %6191 = vmatpush.xpose.msra.mxu0 0.0
        %6192 = vmatpush.xpose.msra.mxu0 0.0
        %6193 = vmatpush.xpose.msra.mxu0 0.0
        %6194 = vmatpush.xpose.msra.mxu0 0.0
        %6195 = vmatpush.xpose.msra.mxu0 0.0
        %6196 = vmatpush.xpose.msra.mxu0 0.0
        %6197 = vmatpush.xpose.msra.mxu0 0.0
        %6198 = vmatpush.xpose.msra.mxu0 0.0
        %6199 = vmatpush.xpose.msra.mxu0 0.0
        %6200 = vmatpush.xpose.msra.mxu0 0.0
        %6201 = vmatpush.xpose.msra.mxu0 0.0
        %6202 = vmatpush.xpose.msra.mxu0 0.0
        %6203 = vmatpush.xpose.msra.mxu0 0.0
        %6204 = vmatpush.xpose.msra.mxu0 %v6187
        %6205 = vmatmul.f32.gmra.mxu0 %v6181
        %v6206 = vpop.f32.mrf.mxu0
        %v6207 = vadd.f32 0.0, %v6206
        %6208 = vmatmul.f32.gmra.mxu0 %v6184
        %v6209 = vpop.f32.mrf.mxu0
        %v6210 = vadd.f32 0.0, %v6209
        %6211 = vdwg.mxu0
        %v6213 = vsel %vm1804, %v5972, 0
        %v6216 = vsel %vm1804, %v5973, 0
        %v6219 = vsel %vm1804, %v5762, 0
        %6221 = vmatpush.xpose.msra.mxu0 0.0
        %6222 = vmatpush.xpose.msra.mxu0 0.0
        %6223 = vmatpush.xpose.msra.mxu0 0.0
        %6224 = vmatpush.xpose.msra.mxu0 0.0
        %6225 = vmatpush.xpose.msra.mxu0 0.0
        %6226 = vmatpush.xpose.msra.mxu0 0.0
        %6227 = vmatpush.xpose.msra.mxu0 0.0
        %6228 = vmatpush.xpose.msra.mxu0 0.0
        %6229 = vmatpush.xpose.msra.mxu0 0.0
        %6230 = vmatpush.xpose.msra.mxu0 0.0
        %6231 = vmatpush.xpose.msra.mxu0 0.0
        %6232 = vmatpush.xpose.msra.mxu0 0.0
        %6233 = vmatpush.xpose.msra.mxu0 0.0
        %6234 = vmatpush.xpose.msra.mxu0 0.0
        %6235 = vmatpush.xpose.msra.mxu0 0.0
        %6236 = vmatpush.xpose.msra.mxu0 %v6219
        %6237 = vmatmul.f32.gmra.mxu0 %v6213
        %v6238 = vpop.f32.mrf.mxu0
        %v6239 = vadd.f32 0.0, %v6238
        %6240 = vmatmul.f32.gmra.mxu0 %v6216
        %v6241 = vpop.f32.mrf.mxu0
        %v6242 = vadd.f32 0.0, %v6241
        %6243 = vdwg.mxu0
        %v6245 = vsel %vm1804, %v6004, 0
        %v6248 = vsel %vm1804, %v6005, 0
        %v6251 = vsel %vm1804, %v5763, 0
        %6253 = vmatpush.xpose.msra.mxu0 0.0
        %6254 = vmatpush.xpose.msra.mxu0 0.0
        %6255 = vmatpush.xpose.msra.mxu0 0.0
        %6256 = vmatpush.xpose.msra.mxu0 0.0
        %6257 = vmatpush.xpose.msra.mxu0 0.0
        %6258 = vmatpush.xpose.msra.mxu0 0.0
        %6259 = vmatpush.xpose.msra.mxu0 0.0
        %6260 = vmatpush.xpose.msra.mxu0 0.0
        %6261 = vmatpush.xpose.msra.mxu0 0.0
        %6262 = vmatpush.xpose.msra.mxu0 0.0
        %6263 = vmatpush.xpose.msra.mxu0 0.0
        %6264 = vmatpush.xpose.msra.mxu0 0.0
        %6265 = vmatpush.xpose.msra.mxu0 0.0
        %6266 = vmatpush.xpose.msra.mxu0 0.0
        %6267 = vmatpush.xpose.msra.mxu0 0.0
        %6268 = vmatpush.xpose.msra.mxu0 %v6251
        %6269 = vmatmul.f32.gmra.mxu0 %v6245
        %v6270 = vpop.f32.mrf.mxu0
        %v6271 = vadd.f32 0.0, %v6270
        %6272 = vmatmul.f32.gmra.mxu0 %v6248
        %v6273 = vpop.f32.mrf.mxu0
        %v6274 = vadd.f32 0.0, %v6273
        %6275 = vdwg.mxu0
        %6276 = vxpose.xlu0.b32.start [1/16] %v6047, 128
        %6277 = vxpose.xlu0.b32.cont [2/16] %v6050, 128
        %6278 = vxpose.xlu0.b32.cont [3/16] 0.0, 128
        %6279 = vxpose.xlu0.b32.cont [4/16] 0.0, 128
        %6280 = vxpose.xlu0.b32.cont [5/16] 0.0, 128
        %6281 = vxpose.xlu0.b32.cont [6/16] 0.0, 128
        %6282 = vxpose.xlu0.b32.cont [7/16] 0.0, 128
        %6283 = vxpose.xlu0.b32.cont [8/16] 0.0, 128
        %6284 = vxpose.xlu0.b32.cont [9/16] 0.0, 128
        %6285 = vxpose.xlu0.b32.cont [10/16] 0.0, 128
        %6286 = vxpose.xlu0.b32.cont [11/16] 0.0, 128
        %6287 = vxpose.xlu0.b32.cont [12/16] 0.0, 128
        %6288 = vxpose.xlu0.b32.cont [13/16] 0.0, 128
        %6289 = vxpose.xlu0.b32.cont [14/16] 0.0, 128
        %6290 = vxpose.xlu0.b32.cont [15/16] 0.0, 128
        %6291 = vxpose.xlu0.b32.end [16/16] 0.0, 128
        %v6292 = vpop.trf.xlu0
        %v6293 = vpop.trf.xlu0
        %v6294 = vpop.trf.xlu0
        %v6295 = vpop.trf.xlu0
        %v6296 = vpop.trf.xlu0
        %v6297 = vpop.trf.xlu0
        %v6298 = vpop.trf.xlu0
        %v6299 = vpop.trf.xlu0
        %v6300 = vpop.trf.xlu0
        %v6301 = vpop.trf.xlu0
        %v6302 = vpop.trf.xlu0
        %v6303 = vpop.trf.xlu0
        %v6304 = vpop.trf.xlu0
        %v6305 = vpop.trf.xlu0
        %v6306 = vpop.trf.xlu0
        %v6307 = vpop.trf.xlu0
        %6308 = vxpose.xlu0.b32.start [1/16] %v6079, 128
        %6309 = vxpose.xlu0.b32.cont [2/16] %v6082, 128
        %6310 = vxpose.xlu0.b32.cont [3/16] 0.0, 128
        %6311 = vxpose.xlu0.b32.cont [4/16] 0.0, 128
        %6312 = vxpose.xlu0.b32.cont [5/16] 0.0, 128
        %6313 = vxpose.xlu0.b32.cont [6/16] 0.0, 128
        %6314 = vxpose.xlu0.b32.cont [7/16] 0.0, 128
        %6315 = vxpose.xlu0.b32.cont [8/16] 0.0, 128
        %6316 = vxpose.xlu0.b32.cont [9/16] 0.0, 128
        %6317 = vxpose.xlu0.b32.cont [10/16] 0.0, 128
        %6318 = vxpose.xlu0.b32.cont [11/16] 0.0, 128
        %6319 = vxpose.xlu0.b32.cont [12/16] 0.0, 128
        %6320 = vxpose.xlu0.b32.cont [13/16] 0.0, 128
        %6321 = vxpose.xlu0.b32.cont [14/16] 0.0, 128
        %6322 = vxpose.xlu0.b32.cont [15/16] 0.0, 128
        %6323 = vxpose.xlu0.b32.end [16/16] 0.0, 128
        %v6324 = vpop.trf.xlu0
        %v6325 = vpop.trf.xlu0
        %v6326 = vpop.trf.xlu0
        %v6327 = vpop.trf.xlu0
        %v6328 = vpop.trf.xlu0
        %v6329 = vpop.trf.xlu0
        %v6330 = vpop.trf.xlu0
        %v6331 = vpop.trf.xlu0
        %v6332 = vpop.trf.xlu0
        %v6333 = vpop.trf.xlu0
        %v6334 = vpop.trf.xlu0
        %v6335 = vpop.trf.xlu0
        %v6336 = vpop.trf.xlu0
        %v6337 = vpop.trf.xlu0
        %v6338 = vpop.trf.xlu0
        %v6339 = vpop.trf.xlu0
        %6340 = vxpose.xlu0.b32.start [1/16] %v6111, 128
        %6341 = vxpose.xlu0.b32.cont [2/16] %v6114, 128
        %6342 = vxpose.xlu0.b32.cont [3/16] 0.0, 128
        %6343 = vxpose.xlu0.b32.cont [4/16] 0.0, 128
        %6344 = vxpose.xlu0.b32.cont [5/16] 0.0, 128
        %6345 = vxpose.xlu0.b32.cont [6/16] 0.0, 128
        %6346 = vxpose.xlu0.b32.cont [7/16] 0.0, 128
        %6347 = vxpose.xlu0.b32.cont [8/16] 0.0, 128
        %6348 = vxpose.xlu0.b32.cont [9/16] 0.0, 128
        %6349 = vxpose.xlu0.b32.cont [10/16] 0.0, 128
        %6350 = vxpose.xlu0.b32.cont [11/16] 0.0, 128
        %6351 = vxpose.xlu0.b32.cont [12/16] 0.0, 128
        %6352 = vxpose.xlu0.b32.cont [13/16] 0.0, 128
        %6353 = vxpose.xlu0.b32.cont [14/16] 0.0, 128
        %6354 = vxpose.xlu0.b32.cont [15/16] 0.0, 128
        %6355 = vxpose.xlu0.b32.end [16/16] 0.0, 128
        %v6356 = vpop.trf.xlu0
        %v6357 = vpop.trf.xlu0
        %v6358 = vpop.trf.xlu0
        %v6359 = vpop.trf.xlu0
        %v6360 = vpop.trf.xlu0
        %v6361 = vpop.trf.xlu0
        %v6362 = vpop.trf.xlu0
        %v6363 = vpop.trf.xlu0
        %v6364 = vpop.trf.xlu0
        %v6365 = vpop.trf.xlu0
        %v6366 = vpop.trf.xlu0
        %v6367 = vpop.trf.xlu0
        %v6368 = vpop.trf.xlu0
        %v6369 = vpop.trf.xlu0
        %v6370 = vpop.trf.xlu0
        %v6371 = vpop.trf.xlu0
        %6372 = vxpose.xlu0.b32.start [1/16] %v6143, 128
        %6373 = vxpose.xlu0.b32.cont [2/16] %v6146, 128
        %6374 = vxpose.xlu0.b32.cont [3/16] 0.0, 128
        %6375 = vxpose.xlu0.b32.cont [4/16] 0.0, 128
        %6376 = vxpose.xlu0.b32.cont [5/16] 0.0, 128
        %6377 = vxpose.xlu0.b32.cont [6/16] 0.0, 128
        %6378 = vxpose.xlu0.b32.cont [7/16] 0.0, 128
        %6379 = vxpose.xlu0.b32.cont [8/16] 0.0, 128
        %6380 = vxpose.xlu0.b32.cont [9/16] 0.0, 128
        %6381 = vxpose.xlu0.b32.cont [10/16] 0.0, 128
        %6382 = vxpose.xlu0.b32.cont [11/16] 0.0, 128
        %6383 = vxpose.xlu0.b32.cont [12/16] 0.0, 128
        %6384 = vxpose.xlu0.b32.cont [13/16] 0.0, 128
        %6385 = vxpose.xlu0.b32.cont [14/16] 0.0, 128
        %6386 = vxpose.xlu0.b32.cont [15/16] 0.0, 128
        %6387 = vxpose.xlu0.b32.end [16/16] 0.0, 128
        %v6388 = vpop.trf.xlu0
        %v6389 = vpop.trf.xlu0
        %v6390 = vpop.trf.xlu0
        %v6391 = vpop.trf.xlu0
        %v6392 = vpop.trf.xlu0
        %v6393 = vpop.trf.xlu0
        %v6394 = vpop.trf.xlu0
        %v6395 = vpop.trf.xlu0
        %v6396 = vpop.trf.xlu0
        %v6397 = vpop.trf.xlu0
        %v6398 = vpop.trf.xlu0
        %v6399 = vpop.trf.xlu0
        %v6400 = vpop.trf.xlu0
        %v6401 = vpop.trf.xlu0
        %v6402 = vpop.trf.xlu0
        %v6403 = vpop.trf.xlu0
        %6404 = vxpose.xlu0.b32.start [1/16] %v6175, 128
        %6405 = vxpose.xlu0.b32.cont [2/16] %v6178, 128
        %6406 = vxpose.xlu0.b32.cont [3/16] 0.0, 128
        %6407 = vxpose.xlu0.b32.cont [4/16] 0.0, 128
        %6408 = vxpose.xlu0.b32.cont [5/16] 0.0, 128
        %6409 = vxpose.xlu0.b32.cont [6/16] 0.0, 128
        %6410 = vxpose.xlu0.b32.cont [7/16] 0.0, 128
        %6411 = vxpose.xlu0.b32.cont [8/16] 0.0, 128
        %6412 = vxpose.xlu0.b32.cont [9/16] 0.0, 128
        %6413 = vxpose.xlu0.b32.cont [10/16] 0.0, 128
        %6414 = vxpose.xlu0.b32.cont [11/16] 0.0, 128
        %6415 = vxpose.xlu0.b32.cont [12/16] 0.0, 128
        %6416 = vxpose.xlu0.b32.cont [13/16] 0.0, 128
        %6417 = vxpose.xlu0.b32.cont [14/16] 0.0, 128
        %6418 = vxpose.xlu0.b32.cont [15/16] 0.0, 128
        %6419 = vxpose.xlu0.b32.end [16/16] 0.0, 128
        %v6420 = vpop.trf.xlu0
        %v6421 = vpop.trf.xlu0
        %v6422 = vpop.trf.xlu0
        %v6423 = vpop.trf.xlu0
        %v6424 = vpop.trf.xlu0
        %v6425 = vpop.trf.xlu0
        %v6426 = vpop.trf.xlu0
        %v6427 = vpop.trf.xlu0
        %v6428 = vpop.trf.xlu0
        %v6429 = vpop.trf.xlu0
        %v6430 = vpop.trf.xlu0
        %v6431 = vpop.trf.xlu0
        %v6432 = vpop.trf.xlu0
        %v6433 = vpop.trf.xlu0
        %v6434 = vpop.trf.xlu0
        %v6435 = vpop.trf.xlu0
        %6436 = vxpose.xlu0.b32.start [1/16] %v6207, 128
        %6437 = vxpose.xlu0.b32.cont [2/16] %v6210, 128
        %6438 = vxpose.xlu0.b32.cont [3/16] 0.0, 128
        %6439 = vxpose.xlu0.b32.cont [4/16] 0.0, 128
        %6440 = vxpose.xlu0.b32.cont [5/16] 0.0, 128
        %6441 = vxpose.xlu0.b32.cont [6/16] 0.0, 128
        %6442 = vxpose.xlu0.b32.cont [7/16] 0.0, 128
        %6443 = vxpose.xlu0.b32.cont [8/16] 0.0, 128
        %6444 = vxpose.xlu0.b32.cont [9/16] 0.0, 128
        %6445 = vxpose.xlu0.b32.cont [10/16] 0.0, 128
        %6446 = vxpose.xlu0.b32.cont [11/16] 0.0, 128
        %6447 = vxpose.xlu0.b32.cont [12/16] 0.0, 128
        %6448 = vxpose.xlu0.b32.cont [13/16] 0.0, 128
        %6449 = vxpose.xlu0.b32.cont [14/16] 0.0, 128
        %6450 = vxpose.xlu0.b32.cont [15/16] 0.0, 128
        %6451 = vxpose.xlu0.b32.end [16/16] 0.0, 128
        %v6452 = vpop.trf.xlu0
        %v6453 = vpop.trf.xlu0
        %v6454 = vpop.trf.xlu0
        %v6455 = vpop.trf.xlu0
        %v6456 = vpop.trf.xlu0
        %v6457 = vpop.trf.xlu0
        %v6458 = vpop.trf.xlu0
        %v6459 = vpop.trf.xlu0
        %v6460 = vpop.trf.xlu0
        %v6461 = vpop.trf.xlu0
        %v6462 = vpop.trf.xlu0
        %v6463 = vpop.trf.xlu0
        %v6464 = vpop.trf.xlu0
        %v6465 = vpop.trf.xlu0
        %v6466 = vpop.trf.xlu0
        %v6467 = vpop.trf.xlu0
        %6468 = vxpose.xlu0.b32.start [1/16] %v6239, 128
        %6469 = vxpose.xlu0.b32.cont [2/16] %v6242, 128
        %6470 = vxpose.xlu0.b32.cont [3/16] 0.0, 128
        %6471 = vxpose.xlu0.b32.cont [4/16] 0.0, 128
        %6472 = vxpose.xlu0.b32.cont [5/16] 0.0, 128
        %6473 = vxpose.xlu0.b32.cont [6/16] 0.0, 128
        %6474 = vxpose.xlu0.b32.cont [7/16] 0.0, 128
        %6475 = vxpose.xlu0.b32.cont [8/16] 0.0, 128
        %6476 = vxpose.xlu0.b32.cont [9/16] 0.0, 128
        %6477 = vxpose.xlu0.b32.cont [10/16] 0.0, 128
        %6478 = vxpose.xlu0.b32.cont [11/16] 0.0, 128
        %6479 = vxpose.xlu0.b32.cont [12/16] 0.0, 128
        %6480 = vxpose.xlu0.b32.cont [13/16] 0.0, 128
        %6481 = vxpose.xlu0.b32.cont [14/16] 0.0, 128
        %6482 = vxpose.xlu0.b32.cont [15/16] 0.0, 128
        %6483 = vxpose.xlu0.b32.end [16/16] 0.0, 128
        %v6484 = vpop.trf.xlu0
        %v6485 = vpop.trf.xlu0
        %v6486 = vpop.trf.xlu0
        %v6487 = vpop.trf.xlu0
        %v6488 = vpop.trf.xlu0
        %v6489 = vpop.trf.xlu0
        %v6490 = vpop.trf.xlu0
        %v6491 = vpop.trf.xlu0
        %v6492 = vpop.trf.xlu0
        %v6493 = vpop.trf.xlu0
        %v6494 = vpop.trf.xlu0
        %v6495 = vpop.trf.xlu0
        %v6496 = vpop.trf.xlu0
        %v6497 = vpop.trf.xlu0
        %v6498 = vpop.trf.xlu0
        %v6499 = vpop.trf.xlu0
        %6500 = vxpose.xlu0.b32.start [1/16] %v6271, 128
        %6501 = vxpose.xlu0.b32.cont [2/16] %v6274, 128
        %6502 = vxpose.xlu0.b32.cont [3/16] 0.0, 128
        %6503 = vxpose.xlu0.b32.cont [4/16] 0.0, 128
        %6504 = vxpose.xlu0.b32.cont [5/16] 0.0, 128
        %6505 = vxpose.xlu0.b32.cont [6/16] 0.0, 128
        %6506 = vxpose.xlu0.b32.cont [7/16] 0.0, 128
        %6507 = vxpose.xlu0.b32.cont [8/16] 0.0, 128
        %6508 = vxpose.xlu0.b32.cont [9/16] 0.0, 128
        %6509 = vxpose.xlu0.b32.cont [10/16] 0.0, 128
        %6510 = vxpose.xlu0.b32.cont [11/16] 0.0, 128
        %6511 = vxpose.xlu0.b32.cont [12/16] 0.0, 128
        %6512 = vxpose.xlu0.b32.cont [13/16] 0.0, 128
        %6513 = vxpose.xlu0.b32.cont [14/16] 0.0, 128
        %6514 = vxpose.xlu0.b32.cont [15/16] 0.0, 128
        %6515 = vxpose.xlu0.b32.end [16/16] 0.0, 128
        %v6516 = vpop.trf.xlu0
        %v6517 = vpop.trf.xlu0
        %v6518 = vpop.trf.xlu0
        %v6519 = vpop.trf.xlu0
        %v6520 = vpop.trf.xlu0
        %v6521 = vpop.trf.xlu0
        %v6522 = vpop.trf.xlu0
        %v6523 = vpop.trf.xlu0
        %v6524 = vpop.trf.xlu0
        %v6525 = vpop.trf.xlu0
        %v6526 = vpop.trf.xlu0
        %v6527 = vpop.trf.xlu0
        %v6528 = vpop.trf.xlu0
        %v6529 = vpop.trf.xlu0
        %v6530 = vpop.trf.xlu0
        %v6531 = vpop.trf.xlu0
        %v6532 = vrot.slane %v6356, 4
        %v6533 = vsel %vm2662, %v6532, %v6292
        %v6534 = vrot.slane %v6292, 4
        %v6535 = vsel %vm2662, %v6356, %v6534
        %v6537 = vunpack.c.l.s4 1983009808
        %v6538 = vunpack.c.0.s8 %v6537
        %v6539 = vperm.slane %v6533, %v6538
        %v6541 = vunpack.c.l.s4 1983009808
        %v6542 = vunpack.c.0.s8 %v6541
        %v6543 = vperm.slane %v6535, %v6542
        %v6544 = vrot.slane %v6388, 4
        %v6545 = vsel %vm2662, %v6544, %v6324
        %v6546 = vrot.slane %v6324, 4
        %v6547 = vsel %vm2662, %v6388, %v6546
        %v6549 = vunpack.c.l.s4 1983009808
        %v6550 = vunpack.c.0.s8 %v6549
        %v6551 = vperm.slane %v6545, %v6550
        %v6553 = vunpack.c.l.s4 1983009808
        %v6554 = vunpack.c.0.s8 %v6553
        %v6555 = vperm.slane %v6547, %v6554
        %v6556 = vrot.slane %v6484, 4
        %v6557 = vsel %vm2662, %v6556, %v6420
        %v6558 = vrot.slane %v6420, 4
        %v6559 = vsel %vm2662, %v6484, %v6558
        %v6561 = vunpack.c.l.s4 1983009808
        %v6562 = vunpack.c.0.s8 %v6561
        %v6563 = vperm.slane %v6557, %v6562
        %v6565 = vunpack.c.l.s4 1983009808
        %v6566 = vunpack.c.0.s8 %v6565
        %v6567 = vperm.slane %v6559, %v6566
        %v6568 = vrot.slane %v6516, 4
        %v6569 = vsel %vm2662, %v6568, %v6452
        %v6570 = vrot.slane %v6452, 4
        %v6571 = vsel %vm2662, %v6516, %v6570
        %v6573 = vunpack.c.l.s4 1983009808
        %v6574 = vunpack.c.0.s8 %v6573
        %v6575 = vperm.slane %v6569, %v6574
        %v6577 = vunpack.c.l.s4 1983009808
        %v6578 = vunpack.c.0.s8 %v6577
        %v6579 = vperm.slane %v6571, %v6578
        %v6580 = vrot.slane %v6551, 4
        %v6581 = vsel %vm2662, %v6580, %v6539
        %v6582 = vrot.slane %v6539, 4
        %v6583 = vsel %vm2662, %v6551, %v6582
        %v6585 = vunpack.c.l.s4 1934713408
        %v6586 = vunpack.c.0.s8 %v6585
        %v6587 = vperm.slane %v6581, %v6586
        %v6589 = vunpack.c.l.s4 1934713408
        %v6590 = vunpack.c.0.s8 %v6589
        %v6591 = vperm.slane %v6583, %v6590
        %v6592 = vrot.slane %v6555, 4
        %v6593 = vsel %vm2662, %v6592, %v6543
        %v6594 = vrot.slane %v6543, 4
        %v6595 = vsel %vm2662, %v6555, %v6594
        %v6597 = vunpack.c.l.s4 1934713408
        %v6598 = vunpack.c.0.s8 %v6597
        %v6599 = vperm.slane %v6593, %v6598
        %v6601 = vunpack.c.l.s4 1934713408
        %v6602 = vunpack.c.0.s8 %v6601
        %v6603 = vperm.slane %v6595, %v6602
        %v6604 = vrot.slane %v6575, 4
        %v6605 = vsel %vm2662, %v6604, %v6563
        %v6606 = vrot.slane %v6563, 4
        %v6607 = vsel %vm2662, %v6575, %v6606
        %v6609 = vunpack.c.l.s4 1934713408
        %v6610 = vunpack.c.0.s8 %v6609
        %v6611 = vperm.slane %v6605, %v6610
        %v6613 = vunpack.c.l.s4 1934713408
        %v6614 = vunpack.c.0.s8 %v6613
        %v6615 = vperm.slane %v6607, %v6614
        %v6616 = vrot.slane %v6579, 4
        %v6617 = vsel %vm2662, %v6616, %v6567
        %v6618 = vrot.slane %v6567, 4
        %v6619 = vsel %vm2662, %v6579, %v6618
        %v6621 = vunpack.c.l.s4 1934713408
        %v6622 = vunpack.c.0.s8 %v6621
        %v6623 = vperm.slane %v6617, %v6622
        %v6625 = vunpack.c.l.s4 1934713408
        %v6626 = vunpack.c.0.s8 %v6625
        %v6627 = vperm.slane %v6619, %v6626
        %v6628 = vrot.slane %v6611, 4
        %v6629 = vsel %vm2662, %v6628, %v6587
        %v6630 = vrot.slane %v6587, 4
        %v6631 = vsel %vm2662, %v6611, %v6630
        %v6632 = vrot.slane %v6615, 4
        %v6633 = vsel %vm2662, %v6632, %v6591
        %v6634 = vrot.slane %v6591, 4
        %v6635 = vsel %vm2662, %v6615, %v6634
        %v6636 = vrot.slane %v6623, 4
        %v6637 = vsel %vm2662, %v6636, %v6599
        %v6638 = vrot.slane %v6599, 4
        %v6639 = vsel %vm2662, %v6623, %v6638
        %v6640 = vrot.slane %v6627, 4
        %v6641 = vsel %vm2662, %v6640, %v6603
        %v6642 = vrot.slane %v6603, 4
        %v6643 = vsel %vm2662, %v6627, %v6642
        %v6644 = vrot.slane %v6633, 4
        %v6645 = vsel %vm2662, %v6644, %v6629
        %v6646 = vrot.slane %v6629, 4
        %v6647 = vsel %vm2662, %v6633, %v6646
        %v6649 = vunpack.c.l.s4 1983009808
        %v6650 = vunpack.c.0.s8 %v6649
        %v6651 = vperm.slane %v6645, %v6650
        %v6653 = vunpack.c.l.s4 1983009808
        %v6654 = vunpack.c.0.s8 %v6653
        %v6655 = vperm.slane %v6647, %v6654
        %v6656 = vrot.slane %v6635, 4
        %v6657 = vsel %vm2662, %v6656, %v6631
        %v6658 = vrot.slane %v6631, 4
        %v6659 = vsel %vm2662, %v6635, %v6658
        %v6661 = vunpack.c.l.s4 1983009808
        %v6662 = vunpack.c.0.s8 %v6661
        %v6663 = vperm.slane %v6657, %v6662
        %v6665 = vunpack.c.l.s4 1983009808
        %v6666 = vunpack.c.0.s8 %v6665
        %v6667 = vperm.slane %v6659, %v6666
        %v6668 = vrot.slane %v6641, 4
        %v6669 = vsel %vm2662, %v6668, %v6637
        %v6670 = vrot.slane %v6637, 4
        %v6671 = vsel %vm2662, %v6641, %v6670
        %v6673 = vunpack.c.l.s4 1983009808
        %v6674 = vunpack.c.0.s8 %v6673
        %v6675 = vperm.slane %v6669, %v6674
        %v6677 = vunpack.c.l.s4 1983009808
        %v6678 = vunpack.c.0.s8 %v6677
        %v6679 = vperm.slane %v6671, %v6678
        %v6680 = vrot.slane %v6643, 4
        %v6681 = vsel %vm2662, %v6680, %v6639
        %v6682 = vrot.slane %v6639, 4
        %v6683 = vsel %vm2662, %v6643, %v6682
        %v6685 = vunpack.c.l.s4 1983009808
        %v6686 = vunpack.c.0.s8 %v6685
        %v6687 = vperm.slane %v6681, %v6686
        %v6689 = vunpack.c.l.s4 1983009808
        %v6690 = vunpack.c.0.s8 %v6689
        %v6691 = vperm.slane %v6683, %v6690
        %v6692 = vrot.slane %v6663, 4
        %v6693 = vsel %vm2662, %v6692, %v6651
        %v6694 = vrot.slane %v6651, 4
        %v6695 = vsel %vm2662, %v6663, %v6694
        %v6697 = vunpack.c.l.s4 1934713408
        %v6698 = vunpack.c.0.s8 %v6697
        %v6699 = vperm.slane %v6693, %v6698
        %v6701 = vunpack.c.l.s4 1934713408
        %v6702 = vunpack.c.0.s8 %v6701
        %v6703 = vperm.slane %v6695, %v6702
        %v6704 = vrot.slane %v6667, 4
        %v6705 = vsel %vm2662, %v6704, %v6655
        %v6706 = vrot.slane %v6655, 4
        %v6707 = vsel %vm2662, %v6667, %v6706
        %v6709 = vunpack.c.l.s4 1934713408
        %v6710 = vunpack.c.0.s8 %v6709
        %v6711 = vperm.slane %v6705, %v6710
        %v6713 = vunpack.c.l.s4 1934713408
        %v6714 = vunpack.c.0.s8 %v6713
        %v6715 = vperm.slane %v6707, %v6714
        %v6716 = vrot.slane %v6687, 4
        %v6717 = vsel %vm2662, %v6716, %v6675
        %v6718 = vrot.slane %v6675, 4
        %v6719 = vsel %vm2662, %v6687, %v6718
        %v6721 = vunpack.c.l.s4 1934713408
        %v6722 = vunpack.c.0.s8 %v6721
        %v6723 = vperm.slane %v6717, %v6722
        %v6725 = vunpack.c.l.s4 1934713408
        %v6726 = vunpack.c.0.s8 %v6725
        %v6727 = vperm.slane %v6719, %v6726
        %v6728 = vrot.slane %v6691, 4
        %v6729 = vsel %vm2662, %v6728, %v6679
        %v6730 = vrot.slane %v6679, 4
        %v6731 = vsel %vm2662, %v6691, %v6730
        %v6733 = vunpack.c.l.s4 1934713408
        %v6734 = vunpack.c.0.s8 %v6733
        %v6735 = vperm.slane %v6729, %v6734
        %v6737 = vunpack.c.l.s4 1934713408
        %v6738 = vunpack.c.0.s8 %v6737
        %v6739 = vperm.slane %v6731, %v6738
        %v6740 = vrot.slane %v6723, 4
        %v6741 = vsel %vm2662, %v6740, %v6699
        %v6742 = vrot.slane %v6699, 4
        %v6743 = vsel %vm2662, %v6723, %v6742
        %v6744 = vrot.slane %v6727, 4
        %v6745 = vsel %vm2662, %v6744, %v6703
        %v6746 = vrot.slane %v6703, 4
        %v6747 = vsel %vm2662, %v6727, %v6746
        %v6748 = vrot.slane %v6735, 4
        %v6749 = vsel %vm2662, %v6748, %v6711
        %v6750 = vrot.slane %v6711, 4
        %v6751 = vsel %vm2662, %v6735, %v6750
        %v6752 = vrot.slane %v6739, 4
        %v6753 = vsel %vm2662, %v6752, %v6715
        %v6754 = vrot.slane %v6715, 4
        %v6755 = vsel %vm2662, %v6739, %v6754
        %6757 = vrot.lane.b32.xlu0 %v6743, 16
        %v6758 = vpop.permute.xlu0 %6757
        %6761 = vrot.lane.b32.xlu0 %v6745, 32
        %v6762 = vpop.permute.xlu0 %6761
        %6765 = vrot.lane.b32.xlu0 %v6747, 48
        %v6766 = vpop.permute.xlu0 %6765
        %6769 = vrot.lane.b32.xlu0 %v6749, 64
        %v6770 = vpop.permute.xlu0 %6769
        %6773 = vrot.lane.b32.xlu0 %v6751, 80
        %v6774 = vpop.permute.xlu0 %6773
        %6777 = vrot.lane.b32.xlu0 %v6753, 96
        %v6778 = vpop.permute.xlu0 %6777
        %6781 = vrot.lane.b32.xlu0 %v6755, 112
        %v6782 = vpop.permute.xlu0 %6781
        %v6784 = vsel %vm1619, %v6741, %v6758
        %v6785 = vsel %vm2915, %v6784, %v6762
        %v6786 = vsel %vm2917, %v6785, %v6766
        %v6787 = vsel %vm2919, %v6786, %v6770
        %v6788 = vsel %vm2921, %v6787, %v6774
        %v6789 = vsel %vm2923, %v6788, %v6778
        %v6790 = vsel %vm2925, %v6789, %v6782
        %s6791 = scalar_lea.vmem [#allocation14], 128
        %v6792 = vld [vmem:[%s6791] sm:$0xff]
        %v6793 = vld [vmem:[%s6791 + $0x8] sm:$0xff]
        %v6794 = vld [vmem:[%s6791 + $0x10] sm:$0xff]
        %v6795 = vld [vmem:[%s6791 + $0x18] sm:$0xff]
        %v6796 = vld [vmem:[%s6791 + $0x20] sm:$0xff]
        %v6797 = vld [vmem:[%s6791 + $0x28] sm:$0xff]
        %v6798 = vld [vmem:[%s6791 + $0x30] sm:$0xff]
        %v6799 = vld [vmem:[%s6791 + $0x38] sm:$0xff]
        %v6800 = vld [vmem:[%s6791 + $0x40] sm:$0xff]
        %v6801 = vld [vmem:[%s6791 + $0x48] sm:$0xff]
        %v6802 = vld [vmem:[%s6791 + $0x50] sm:$0xff]
        %v6803 = vld [vmem:[%s6791 + $0x58] sm:$0xff]
        %v6804 = vld [vmem:[%s6791 + $0x60] sm:$0xff]
        %v6805 = vld [vmem:[%s6791 + $0x68] sm:$0xff]
        %v6806 = vld [vmem:[%s6791 + $0x70] sm:$0xff]
        %v6807 = vld [vmem:[%s6791 + $0x78] sm:$0xff]
        %6808 = vmatpush.msra.mxu0 %v6807
        %6809 = vmatpush.msra.mxu0 %v6806
        %6810 = vmatpush.msra.mxu0 %v6805
        %6811 = vmatpush.msra.mxu0 %v6804
        %6812 = vmatpush.msra.mxu0 %v6803
        %6813 = vmatpush.msra.mxu0 %v6802
        %6814 = vmatpush.msra.mxu0 %v6801
        %6815 = vmatpush.msra.mxu0 %v6800
        %6816 = vmatpush.msra.mxu0 %v6799
        %6817 = vmatpush.msra.mxu0 %v6798
        %6818 = vmatpush.msra.mxu0 %v6797
        %6819 = vmatpush.msra.mxu0 %v6796
        %6820 = vmatpush.msra.mxu0 %v6795
        %6821 = vmatpush.msra.mxu0 %v6794
        %6822 = vmatpush.msra.mxu0 %v6793
        %6823 = vmatpush.msra.mxu0 %v6792
        %6824 = vmatmul.f32.gmra.mxu0 %v6790
        %v6825 = vpop.f32.mrf.mxu0
        %v6826 = vadd.f32 0.0, %v6825
        %6827 = vdwg.mxu0
        %v6828 = vadd.f32 %v5026, %v6826
        %s6829 = scalar_lea.vmem [#allocation16], 1
        %v6830 = vld [vmem:[%s6829] sm:$0x1]
        %v6832 = vperm.slane %v6830, 0
        %v6834 = vadd.f32 %v6828, %v6832
        %s6835 = scalar_lea.vmem [#allocation17], 1
        %v6836 = vld [vmem:[%s6835] sm:$0x1]
        %s6837 = scalar_lea.vmem [#allocation19], 1
        %v6838 = vld [vmem:[%s6837] sm:$0x1]
        %6839 = vadd.xlane.f32.xlu0 %v6834
        %v6840 = vpop.xlane.xlu0 %6839
        %v6841 = vmul.f32 %v6840, %v1161
        %v6842 = vsub.f32 %v6834, %v6841
        %v6843 = vmul.f32 %v6842, %v6842
        %6844 = vadd.xlane.f32.xlu0 %v6843
        %v6845 = vpop.xlane.xlu0 %6844
        %v6846 = vmul.f32 %v6845, %v1161
        %v6847 = vadd.f32 %v6846, 1e-05
        %v6848 = vrsqrt.pop %v6847
        %v6849 = vmul.f32 %v6848, %v6847
        %v6850 = vmul.f32 %v6849, %v6848
        %v6851 = vmul.f32 0.5, %v6850
        %v6852 = vsub.f32 1.5, %v6851
        %v6853 = vmul.f32 %v6848, %v6852
        %vm6854 = vweird.f32 %v6847
        %vm6855 = vweird.f32 %v6848
        %vm6856 = vmor %vm6854, %vm6855
        %v6857 = vsel %vm6856, %v6848, %v6853
        %v6858 = vmul.f32 %v6842, %v6857
        %v6860 = vperm.slane %v6836, 0
        %v6862 = vmul.f32 %v6858, %v6860
        %v6864 = vperm.slane %v6838, 0
        %v6866 = vadd.f32 %v6862, %v6864
        %s6867 = scalar_lea.vmem [#allocation20], 128
        %v6868 = vld [vmem:[%s6867] sm:$0xff]
        %v6869 = vld [vmem:[%s6867 + $0x8] sm:$0xff]
        %v6870 = vld [vmem:[%s6867 + $0x10] sm:$0xff]
        %v6871 = vld [vmem:[%s6867 + $0x18] sm:$0xff]
        %v6872 = vld [vmem:[%s6867 + $0x20] sm:$0xff]
        %v6873 = vld [vmem:[%s6867 + $0x28] sm:$0xff]
        %v6874 = vld [vmem:[%s6867 + $0x30] sm:$0xff]
        %v6875 = vld [vmem:[%s6867 + $0x38] sm:$0xff]
        %v6876 = vld [vmem:[%s6867 + $0x40] sm:$0xff]
        %v6877 = vld [vmem:[%s6867 + $0x48] sm:$0xff]
        %v6878 = vld [vmem:[%s6867 + $0x50] sm:$0xff]
        %v6879 = vld [vmem:[%s6867 + $0x58] sm:$0xff]
        %v6880 = vld [vmem:[%s6867 + $0x60] sm:$0xff]
        %v6881 = vld [vmem:[%s6867 + $0x68] sm:$0xff]
        %v6882 = vld [vmem:[%s6867 + $0x70] sm:$0xff]
        %v6883 = vld [vmem:[%s6867 + $0x78] sm:$0xff]
        %s6884 = scalar_lea.vmem [#allocation22], 1
        %v6885 = vld [vmem:[%s6884] sm:$0x1]
        %v6887 = vperm.slane %v6885, 0
        %6889 = vmatpush.msra.mxu0 %v6883
        %6890 = vmatpush.msra.mxu0 %v6882
        %6891 = vmatpush.msra.mxu0 %v6881
        %6892 = vmatpush.msra.mxu0 %v6880
        %6893 = vmatpush.msra.mxu0 %v6879
        %6894 = vmatpush.msra.mxu0 %v6878
        %6895 = vmatpush.msra.mxu0 %v6877
        %6896 = vmatpush.msra.mxu0 %v6876
        %6897 = vmatpush.msra.mxu0 %v6875
        %6898 = vmatpush.msra.mxu0 %v6874
        %6899 = vmatpush.msra.mxu0 %v6873
        %6900 = vmatpush.msra.mxu0 %v6872
        %6901 = vmatpush.msra.mxu0 %v6871
        %6902 = vmatpush.msra.mxu0 %v6870
        %6903 = vmatpush.msra.mxu0 %v6869
        %6904 = vmatpush.msra.mxu0 %v6868
        %6905 = vmatmul.f32.gmra.mxu0 %v6866
        %v6906 = vpop.f32.mrf.mxu0
        %v6907 = vadd.f32 %v6887, %v6906
        %6908 = vdwg.mxu0
        %s6909 = scalar_lea.vmem [#allocation23], 256
        %v6910 = vld [vmem:[%s6909] sm:$0xff]
        %v6911 = vld [vmem:[%s6909 + $0x8] sm:$0xff]
        %v6912 = vld [vmem:[%s6909 + $0x10] sm:$0xff]
        %v6913 = vld [vmem:[%s6909 + $0x18] sm:$0xff]
        %v6914 = vld [vmem:[%s6909 + $0x20] sm:$0xff]
        %v6915 = vld [vmem:[%s6909 + $0x28] sm:$0xff]
        %v6916 = vld [vmem:[%s6909 + $0x30] sm:$0xff]
        %v6917 = vld [vmem:[%s6909 + $0x38] sm:$0xff]
        %v6918 = vld [vmem:[%s6909 + $0x40] sm:$0xff]
        %v6919 = vld [vmem:[%s6909 + $0x48] sm:$0xff]
        %v6920 = vld [vmem:[%s6909 + $0x50] sm:$0xff]
        %v6921 = vld [vmem:[%s6909 + $0x58] sm:$0xff]
        %v6922 = vld [vmem:[%s6909 + $0x60] sm:$0xff]
        %v6923 = vld [vmem:[%s6909 + $0x68] sm:$0xff]
        %v6924 = vld [vmem:[%s6909 + $0x70] sm:$0xff]
        %v6925 = vld [vmem:[%s6909 + $0x78] sm:$0xff]
        %v6926 = vld [vmem:[%s6909 + $0x80] sm:$0xff]
        %v6927 = vld [vmem:[%s6909 + $0x88] sm:$0xff]
        %v6928 = vld [vmem:[%s6909 + $0x90] sm:$0xff]
        %v6929 = vld [vmem:[%s6909 + $0x98] sm:$0xff]
        %v6930 = vld [vmem:[%s6909 + $0xa0] sm:$0xff]
        %v6931 = vld [vmem:[%s6909 + $0xa8] sm:$0xff]
        %v6932 = vld [vmem:[%s6909 + $0xb0] sm:$0xff]
        %v6933 = vld [vmem:[%s6909 + $0xb8] sm:$0xff]
        %v6934 = vld [vmem:[%s6909 + $0xc0] sm:$0xff]
        %v6935 = vld [vmem:[%s6909 + $0xc8] sm:$0xff]
        %v6936 = vld [vmem:[%s6909 + $0xd0] sm:$0xff]
        %v6937 = vld [vmem:[%s6909 + $0xd8] sm:$0xff]
        %v6938 = vld [vmem:[%s6909 + $0xe0] sm:$0xff]
        %v6939 = vld [vmem:[%s6909 + $0xe8] sm:$0xff]
        %v6940 = vld [vmem:[%s6909 + $0xf0] sm:$0xff]
        %v6941 = vld [vmem:[%s6909 + $0xf8] sm:$0xff]
        %s6942 = scalar_lea.vmem %s15, 2
        %v6943 = vld [vmem:[%s6942] sm:$0x3]
        %v6945 = vperm.slane %v6943, 0
        %v6946 = vperm.slane %v6943, 1
        %6949 = vmatpush.msra.mxu0 %v6940
        %6950 = vmatpush.msra.mxu0 %v6938
        %6951 = vmatpush.msra.mxu0 %v6936
        %6952 = vmatpush.msra.mxu0 %v6934
        %6953 = vmatpush.msra.mxu0 %v6932
        %6954 = vmatpush.msra.mxu0 %v6930
        %6955 = vmatpush.msra.mxu0 %v6928
        %6956 = vmatpush.msra.mxu0 %v6926
        %6957 = vmatpush.msra.mxu0 %v6924
        %6958 = vmatpush.msra.mxu0 %v6922
        %6959 = vmatpush.msra.mxu0 %v6920
        %6960 = vmatpush.msra.mxu0 %v6918
        %6961 = vmatpush.msra.mxu0 %v6916
        %6962 = vmatpush.msra.mxu0 %v6914
        %6963 = vmatpush.msra.mxu0 %v6912
        %6964 = vmatpush.msra.mxu0 %v6910
        %6965 = vmatmul.f32.gmra.mxu0 %v1145
        %v6966 = vpop.f32.mrf.mxu0
        %v6967 = vadd.f32 %v6945, %v6966
        %6968 = vmatmul.f32.gmra.mxu0 %v1148
        %v6969 = vpop.f32.mrf.mxu0
        %v6970 = vadd.f32 %v6945, %v6969
        %6971 = vdwg.mxu0
        %6972 = vmatpush.msra.mxu0 %v6941
        %6973 = vmatpush.msra.mxu0 %v6939
        %6974 = vmatpush.msra.mxu0 %v6937
        %6975 = vmatpush.msra.mxu0 %v6935
        %6976 = vmatpush.msra.mxu0 %v6933
        %6977 = vmatpush.msra.mxu0 %v6931
        %6978 = vmatpush.msra.mxu0 %v6929
        %6979 = vmatpush.msra.mxu0 %v6927
        %6980 = vmatpush.msra.mxu0 %v6925
        %6981 = vmatpush.msra.mxu0 %v6923
        %6982 = vmatpush.msra.mxu0 %v6921
        %6983 = vmatpush.msra.mxu0 %v6919
        %6984 = vmatpush.msra.mxu0 %v6917
        %6985 = vmatpush.msra.mxu0 %v6915
        %6986 = vmatpush.msra.mxu0 %v6913
        %6987 = vmatpush.msra.mxu0 %v6911
        %6988 = vmatmul.f32.gmra.mxu0 %v1145
        %v6989 = vpop.f32.mrf.mxu0
        %v6990 = vadd.f32 %v6946, %v6989
        %6991 = vmatmul.f32.gmra.mxu0 %v1148
        %v6992 = vpop.f32.mrf.mxu0
        %v6993 = vadd.f32 %v6946, %v6992
        %6994 = vdwg.mxu0
        %6996 = vrot.lane.b32.xlu0 %v6907, 112
        %v6997 = vpop.permute.xlu0 %6996
        %6998 = vrot.lane.b32.xlu0 %v6907, 96
        %v6999 = vpop.permute.xlu0 %6998
        %7000 = vrot.lane.b32.xlu0 %v6907, 80
        %v7001 = vpop.permute.xlu0 %7000
        %7002 = vrot.lane.b32.xlu0 %v6907, 64
        %v7003 = vpop.permute.xlu0 %7002
        %7004 = vrot.lane.b32.xlu0 %v6907, 48
        %v7005 = vpop.permute.xlu0 %7004
        %7006 = vrot.lane.b32.xlu0 %v6907, 32
        %v7007 = vpop.permute.xlu0 %7006
        %7008 = vrot.lane.b32.xlu0 %v6907, 16
        %v7009 = vpop.permute.xlu0 %7008
        %7012 = vrot.lane.b32.xlu0 %v6967, 112
        %v7013 = vpop.permute.xlu0 %7012
        %7014 = vrot.lane.b32.xlu0 %v6970, 112
        %v7015 = vpop.permute.xlu0 %7014
        %7018 = vrot.lane.b32.xlu0 %v6967, 96
        %v7019 = vpop.permute.xlu0 %7018
        %7020 = vrot.lane.b32.xlu0 %v6970, 96
        %v7021 = vpop.permute.xlu0 %7020
        %7024 = vrot.lane.b32.xlu0 %v6967, 80
        %v7025 = vpop.permute.xlu0 %7024
        %7026 = vrot.lane.b32.xlu0 %v6970, 80
        %v7027 = vpop.permute.xlu0 %7026
        %7030 = vrot.lane.b32.xlu0 %v6967, 64
        %v7031 = vpop.permute.xlu0 %7030
        %7032 = vrot.lane.b32.xlu0 %v6970, 64
        %v7033 = vpop.permute.xlu0 %7032
        %7036 = vrot.lane.b32.xlu0 %v6967, 48
        %v7037 = vpop.permute.xlu0 %7036
        %7038 = vrot.lane.b32.xlu0 %v6970, 48
        %v7039 = vpop.permute.xlu0 %7038
        %7042 = vrot.lane.b32.xlu0 %v6967, 32
        %v7043 = vpop.permute.xlu0 %7042
        %7044 = vrot.lane.b32.xlu0 %v6970, 32
        %v7045 = vpop.permute.xlu0 %7044
        %7048 = vrot.lane.b32.xlu0 %v6967, 16
        %v7049 = vpop.permute.xlu0 %7048
        %7050 = vrot.lane.b32.xlu0 %v6970, 16
        %v7051 = vpop.permute.xlu0 %7050
        %7056 = vrot.lane.b32.xlu0 %v6990, 112
        %v7057 = vpop.permute.xlu0 %7056
        %7058 = vrot.lane.b32.xlu0 %v6993, 112
        %v7059 = vpop.permute.xlu0 %7058
        %7062 = vrot.lane.b32.xlu0 %v6990, 96
        %v7063 = vpop.permute.xlu0 %7062
        %7064 = vrot.lane.b32.xlu0 %v6993, 96
        %v7065 = vpop.permute.xlu0 %7064
        %7068 = vrot.lane.b32.xlu0 %v6990, 80
        %v7069 = vpop.permute.xlu0 %7068
        %7070 = vrot.lane.b32.xlu0 %v6993, 80
        %v7071 = vpop.permute.xlu0 %7070
        %7074 = vrot.lane.b32.xlu0 %v6990, 64
        %v7075 = vpop.permute.xlu0 %7074
        %7076 = vrot.lane.b32.xlu0 %v6993, 64
        %v7077 = vpop.permute.xlu0 %7076
        %7080 = vrot.lane.b32.xlu0 %v6990, 48
        %v7081 = vpop.permute.xlu0 %7080
        %7082 = vrot.lane.b32.xlu0 %v6993, 48
        %v7083 = vpop.permute.xlu0 %7082
        %7086 = vrot.lane.b32.xlu0 %v6990, 32
        %v7087 = vpop.permute.xlu0 %7086
        %7088 = vrot.lane.b32.xlu0 %v6993, 32
        %v7089 = vpop.permute.xlu0 %7088
        %7092 = vrot.lane.b32.xlu0 %v6990, 16
        %v7093 = vpop.permute.xlu0 %7092
        %7094 = vrot.lane.b32.xlu0 %v6993, 16
        %v7095 = vpop.permute.xlu0 %7094
        %7098 = vxpose.xlu0.b32.start [1/16] %v6967, 128
        %7099 = vxpose.xlu0.b32.cont [2/16] %v6970, 128
        %7100 = vxpose.xlu0.b32.cont [3/16] 0.0, 128
        %7101 = vxpose.xlu0.b32.cont [4/16] 0.0, 128
        %7102 = vxpose.xlu0.b32.cont [5/16] 0.0, 128
        %7103 = vxpose.xlu0.b32.cont [6/16] 0.0, 128
        %7104 = vxpose.xlu0.b32.cont [7/16] 0.0, 128
        %7105 = vxpose.xlu0.b32.cont [8/16] 0.0, 128
        %7106 = vxpose.xlu0.b32.cont [9/16] 0.0, 128
        %7107 = vxpose.xlu0.b32.cont [10/16] 0.0, 128
        %7108 = vxpose.xlu0.b32.cont [11/16] 0.0, 128
        %7109 = vxpose.xlu0.b32.cont [12/16] 0.0, 128
        %7110 = vxpose.xlu0.b32.cont [13/16] 0.0, 128
        %7111 = vxpose.xlu0.b32.cont [14/16] 0.0, 128
        %7112 = vxpose.xlu0.b32.cont [15/16] 0.0, 128
        %7113 = vxpose.xlu0.b32.end [16/16] 0.0, 128
        %v7114 = vpop.trf.xlu0
        %v7115 = vpop.trf.xlu0
        %v7116 = vpop.trf.xlu0
        %v7117 = vpop.trf.xlu0
        %v7118 = vpop.trf.xlu0
        %v7119 = vpop.trf.xlu0
        %v7120 = vpop.trf.xlu0
        %v7121 = vpop.trf.xlu0
        %v7122 = vpop.trf.xlu0
        %v7123 = vpop.trf.xlu0
        %v7124 = vpop.trf.xlu0
        %v7125 = vpop.trf.xlu0
        %v7126 = vpop.trf.xlu0
        %v7127 = vpop.trf.xlu0
        %v7128 = vpop.trf.xlu0
        %v7129 = vpop.trf.xlu0
        %7130 = vxpose.xlu0.b32.start [1/16] %v7013, 128
        %7131 = vxpose.xlu0.b32.cont [2/16] %v7015, 128
        %7132 = vxpose.xlu0.b32.cont [3/16] 0.0, 128
        %7133 = vxpose.xlu0.b32.cont [4/16] 0.0, 128
        %7134 = vxpose.xlu0.b32.cont [5/16] 0.0, 128
        %7135 = vxpose.xlu0.b32.cont [6/16] 0.0, 128
        %7136 = vxpose.xlu0.b32.cont [7/16] 0.0, 128
        %7137 = vxpose.xlu0.b32.cont [8/16] 0.0, 128
        %7138 = vxpose.xlu0.b32.cont [9/16] 0.0, 128
        %7139 = vxpose.xlu0.b32.cont [10/16] 0.0, 128
        %7140 = vxpose.xlu0.b32.cont [11/16] 0.0, 128
        %7141 = vxpose.xlu0.b32.cont [12/16] 0.0, 128
        %7142 = vxpose.xlu0.b32.cont [13/16] 0.0, 128
        %7143 = vxpose.xlu0.b32.cont [14/16] 0.0, 128
        %7144 = vxpose.xlu0.b32.cont [15/16] 0.0, 128
        %7145 = vxpose.xlu0.b32.end [16/16] 0.0, 128
        %v7146 = vpop.trf.xlu0
        %v7147 = vpop.trf.xlu0
        %v7148 = vpop.trf.xlu0
        %v7149 = vpop.trf.xlu0
        %v7150 = vpop.trf.xlu0
        %v7151 = vpop.trf.xlu0
        %v7152 = vpop.trf.xlu0
        %v7153 = vpop.trf.xlu0
        %v7154 = vpop.trf.xlu0
        %v7155 = vpop.trf.xlu0
        %v7156 = vpop.trf.xlu0
        %v7157 = vpop.trf.xlu0
        %v7158 = vpop.trf.xlu0
        %v7159 = vpop.trf.xlu0
        %v7160 = vpop.trf.xlu0
        %v7161 = vpop.trf.xlu0
        %7162 = vxpose.xlu0.b32.start [1/16] %v7019, 128
        %7163 = vxpose.xlu0.b32.cont [2/16] %v7021, 128
        %7164 = vxpose.xlu0.b32.cont [3/16] 0.0, 128
        %7165 = vxpose.xlu0.b32.cont [4/16] 0.0, 128
        %7166 = vxpose.xlu0.b32.cont [5/16] 0.0, 128
        %7167 = vxpose.xlu0.b32.cont [6/16] 0.0, 128
        %7168 = vxpose.xlu0.b32.cont [7/16] 0.0, 128
        %7169 = vxpose.xlu0.b32.cont [8/16] 0.0, 128
        %7170 = vxpose.xlu0.b32.cont [9/16] 0.0, 128
        %7171 = vxpose.xlu0.b32.cont [10/16] 0.0, 128
        %7172 = vxpose.xlu0.b32.cont [11/16] 0.0, 128
        %7173 = vxpose.xlu0.b32.cont [12/16] 0.0, 128
        %7174 = vxpose.xlu0.b32.cont [13/16] 0.0, 128
        %7175 = vxpose.xlu0.b32.cont [14/16] 0.0, 128
        %7176 = vxpose.xlu0.b32.cont [15/16] 0.0, 128
        %7177 = vxpose.xlu0.b32.end [16/16] 0.0, 128
        %v7178 = vpop.trf.xlu0
        %v7179 = vpop.trf.xlu0
        %v7180 = vpop.trf.xlu0
        %v7181 = vpop.trf.xlu0
        %v7182 = vpop.trf.xlu0
        %v7183 = vpop.trf.xlu0
        %v7184 = vpop.trf.xlu0
        %v7185 = vpop.trf.xlu0
        %v7186 = vpop.trf.xlu0
        %v7187 = vpop.trf.xlu0
        %v7188 = vpop.trf.xlu0
        %v7189 = vpop.trf.xlu0
        %v7190 = vpop.trf.xlu0
        %v7191 = vpop.trf.xlu0
        %v7192 = vpop.trf.xlu0
        %v7193 = vpop.trf.xlu0
        %7194 = vxpose.xlu0.b32.start [1/16] %v7025, 128
        %7195 = vxpose.xlu0.b32.cont [2/16] %v7027, 128
        %7196 = vxpose.xlu0.b32.cont [3/16] 0.0, 128
        %7197 = vxpose.xlu0.b32.cont [4/16] 0.0, 128
        %7198 = vxpose.xlu0.b32.cont [5/16] 0.0, 128
        %7199 = vxpose.xlu0.b32.cont [6/16] 0.0, 128
        %7200 = vxpose.xlu0.b32.cont [7/16] 0.0, 128
        %7201 = vxpose.xlu0.b32.cont [8/16] 0.0, 128
        %7202 = vxpose.xlu0.b32.cont [9/16] 0.0, 128
        %7203 = vxpose.xlu0.b32.cont [10/16] 0.0, 128
        %7204 = vxpose.xlu0.b32.cont [11/16] 0.0, 128
        %7205 = vxpose.xlu0.b32.cont [12/16] 0.0, 128
        %7206 = vxpose.xlu0.b32.cont [13/16] 0.0, 128
        %7207 = vxpose.xlu0.b32.cont [14/16] 0.0, 128
        %7208 = vxpose.xlu0.b32.cont [15/16] 0.0, 128
        %7209 = vxpose.xlu0.b32.end [16/16] 0.0, 128
        %v7210 = vpop.trf.xlu0
        %v7211 = vpop.trf.xlu0
        %v7212 = vpop.trf.xlu0
        %v7213 = vpop.trf.xlu0
        %v7214 = vpop.trf.xlu0
        %v7215 = vpop.trf.xlu0
        %v7216 = vpop.trf.xlu0
        %v7217 = vpop.trf.xlu0
        %v7218 = vpop.trf.xlu0
        %v7219 = vpop.trf.xlu0
        %v7220 = vpop.trf.xlu0
        %v7221 = vpop.trf.xlu0
        %v7222 = vpop.trf.xlu0
        %v7223 = vpop.trf.xlu0
        %v7224 = vpop.trf.xlu0
        %v7225 = vpop.trf.xlu0
        %7226 = vxpose.xlu0.b32.start [1/16] %v7031, 128
        %7227 = vxpose.xlu0.b32.cont [2/16] %v7033, 128
        %7228 = vxpose.xlu0.b32.cont [3/16] 0.0, 128
        %7229 = vxpose.xlu0.b32.cont [4/16] 0.0, 128
        %7230 = vxpose.xlu0.b32.cont [5/16] 0.0, 128
        %7231 = vxpose.xlu0.b32.cont [6/16] 0.0, 128
        %7232 = vxpose.xlu0.b32.cont [7/16] 0.0, 128
        %7233 = vxpose.xlu0.b32.cont [8/16] 0.0, 128
        %7234 = vxpose.xlu0.b32.cont [9/16] 0.0, 128
        %7235 = vxpose.xlu0.b32.cont [10/16] 0.0, 128
        %7236 = vxpose.xlu0.b32.cont [11/16] 0.0, 128
        %7237 = vxpose.xlu0.b32.cont [12/16] 0.0, 128
        %7238 = vxpose.xlu0.b32.cont [13/16] 0.0, 128
        %7239 = vxpose.xlu0.b32.cont [14/16] 0.0, 128
        %7240 = vxpose.xlu0.b32.cont [15/16] 0.0, 128
        %7241 = vxpose.xlu0.b32.end [16/16] 0.0, 128
        %v7242 = vpop.trf.xlu0
        %v7243 = vpop.trf.xlu0
        %v7244 = vpop.trf.xlu0
        %v7245 = vpop.trf.xlu0
        %v7246 = vpop.trf.xlu0
        %v7247 = vpop.trf.xlu0
        %v7248 = vpop.trf.xlu0
        %v7249 = vpop.trf.xlu0
        %v7250 = vpop.trf.xlu0
        %v7251 = vpop.trf.xlu0
        %v7252 = vpop.trf.xlu0
        %v7253 = vpop.trf.xlu0
        %v7254 = vpop.trf.xlu0
        %v7255 = vpop.trf.xlu0
        %v7256 = vpop.trf.xlu0
        %v7257 = vpop.trf.xlu0
        %7258 = vxpose.xlu0.b32.start [1/16] %v7037, 128
        %7259 = vxpose.xlu0.b32.cont [2/16] %v7039, 128
        %7260 = vxpose.xlu0.b32.cont [3/16] 0.0, 128
        %7261 = vxpose.xlu0.b32.cont [4/16] 0.0, 128
        %7262 = vxpose.xlu0.b32.cont [5/16] 0.0, 128
        %7263 = vxpose.xlu0.b32.cont [6/16] 0.0, 128
        %7264 = vxpose.xlu0.b32.cont [7/16] 0.0, 128
        %7265 = vxpose.xlu0.b32.cont [8/16] 0.0, 128
        %7266 = vxpose.xlu0.b32.cont [9/16] 0.0, 128
        %7267 = vxpose.xlu0.b32.cont [10/16] 0.0, 128
        %7268 = vxpose.xlu0.b32.cont [11/16] 0.0, 128
        %7269 = vxpose.xlu0.b32.cont [12/16] 0.0, 128
        %7270 = vxpose.xlu0.b32.cont [13/16] 0.0, 128
        %7271 = vxpose.xlu0.b32.cont [14/16] 0.0, 128
        %7272 = vxpose.xlu0.b32.cont [15/16] 0.0, 128
        %7273 = vxpose.xlu0.b32.end [16/16] 0.0, 128
        %v7274 = vpop.trf.xlu0
        %v7275 = vpop.trf.xlu0
        %v7276 = vpop.trf.xlu0
        %v7277 = vpop.trf.xlu0
        %v7278 = vpop.trf.xlu0
        %v7279 = vpop.trf.xlu0
        %v7280 = vpop.trf.xlu0
        %v7281 = vpop.trf.xlu0
        %v7282 = vpop.trf.xlu0
        %v7283 = vpop.trf.xlu0
        %v7284 = vpop.trf.xlu0
        %v7285 = vpop.trf.xlu0
        %v7286 = vpop.trf.xlu0
        %v7287 = vpop.trf.xlu0
        %v7288 = vpop.trf.xlu0
        %v7289 = vpop.trf.xlu0
        %7290 = vxpose.xlu0.b32.start [1/16] %v7043, 128
        %7291 = vxpose.xlu0.b32.cont [2/16] %v7045, 128
        %7292 = vxpose.xlu0.b32.cont [3/16] 0.0, 128
        %7293 = vxpose.xlu0.b32.cont [4/16] 0.0, 128
        %7294 = vxpose.xlu0.b32.cont [5/16] 0.0, 128
        %7295 = vxpose.xlu0.b32.cont [6/16] 0.0, 128
        %7296 = vxpose.xlu0.b32.cont [7/16] 0.0, 128
        %7297 = vxpose.xlu0.b32.cont [8/16] 0.0, 128
        %7298 = vxpose.xlu0.b32.cont [9/16] 0.0, 128
        %7299 = vxpose.xlu0.b32.cont [10/16] 0.0, 128
        %7300 = vxpose.xlu0.b32.cont [11/16] 0.0, 128
        %7301 = vxpose.xlu0.b32.cont [12/16] 0.0, 128
        %7302 = vxpose.xlu0.b32.cont [13/16] 0.0, 128
        %7303 = vxpose.xlu0.b32.cont [14/16] 0.0, 128
        %7304 = vxpose.xlu0.b32.cont [15/16] 0.0, 128
        %7305 = vxpose.xlu0.b32.end [16/16] 0.0, 128
        %v7306 = vpop.trf.xlu0
        %v7307 = vpop.trf.xlu0
        %v7308 = vpop.trf.xlu0
        %v7309 = vpop.trf.xlu0
        %v7310 = vpop.trf.xlu0
        %v7311 = vpop.trf.xlu0
        %v7312 = vpop.trf.xlu0
        %v7313 = vpop.trf.xlu0
        %v7314 = vpop.trf.xlu0
        %v7315 = vpop.trf.xlu0
        %v7316 = vpop.trf.xlu0
        %v7317 = vpop.trf.xlu0
        %v7318 = vpop.trf.xlu0
        %v7319 = vpop.trf.xlu0
        %v7320 = vpop.trf.xlu0
        %v7321 = vpop.trf.xlu0
        %7322 = vxpose.xlu0.b32.start [1/16] %v7049, 128
        %7323 = vxpose.xlu0.b32.cont [2/16] %v7051, 128
        %7324 = vxpose.xlu0.b32.cont [3/16] 0.0, 128
        %7325 = vxpose.xlu0.b32.cont [4/16] 0.0, 128
        %7326 = vxpose.xlu0.b32.cont [5/16] 0.0, 128
        %7327 = vxpose.xlu0.b32.cont [6/16] 0.0, 128
        %7328 = vxpose.xlu0.b32.cont [7/16] 0.0, 128
        %7329 = vxpose.xlu0.b32.cont [8/16] 0.0, 128
        %7330 = vxpose.xlu0.b32.cont [9/16] 0.0, 128
        %7331 = vxpose.xlu0.b32.cont [10/16] 0.0, 128
        %7332 = vxpose.xlu0.b32.cont [11/16] 0.0, 128
        %7333 = vxpose.xlu0.b32.cont [12/16] 0.0, 128
        %7334 = vxpose.xlu0.b32.cont [13/16] 0.0, 128
        %7335 = vxpose.xlu0.b32.cont [14/16] 0.0, 128
        %7336 = vxpose.xlu0.b32.cont [15/16] 0.0, 128
        %7337 = vxpose.xlu0.b32.end [16/16] 0.0, 128
        %v7338 = vpop.trf.xlu0
        %v7339 = vpop.trf.xlu0
        %v7340 = vpop.trf.xlu0
        %v7341 = vpop.trf.xlu0
        %v7342 = vpop.trf.xlu0
        %v7343 = vpop.trf.xlu0
        %v7344 = vpop.trf.xlu0
        %v7345 = vpop.trf.xlu0
        %v7346 = vpop.trf.xlu0
        %v7347 = vpop.trf.xlu0
        %v7348 = vpop.trf.xlu0
        %v7349 = vpop.trf.xlu0
        %v7350 = vpop.trf.xlu0
        %v7351 = vpop.trf.xlu0
        %v7352 = vpop.trf.xlu0
        %v7353 = vpop.trf.xlu0
        %v7354 = vsel %vm1619, %v6907, 0
        %7356 = vmatpush.msra.mxu0 0.0
        %7357 = vmatpush.msra.mxu0 0.0
        %7358 = vmatpush.msra.mxu0 0.0
        %7359 = vmatpush.msra.mxu0 0.0
        %7360 = vmatpush.msra.mxu0 0.0
        %7361 = vmatpush.msra.mxu0 0.0
        %7362 = vmatpush.msra.mxu0 0.0
        %7363 = vmatpush.msra.mxu0 0.0
        %7364 = vmatpush.msra.mxu0 0.0
        %7365 = vmatpush.msra.mxu0 0.0
        %7366 = vmatpush.msra.mxu0 0.0
        %7367 = vmatpush.msra.mxu0 0.0
        %7368 = vmatpush.msra.mxu0 0.0
        %7369 = vmatpush.msra.mxu0 0.0
        %7370 = vmatpush.msra.mxu0 %v7115
        %7371 = vmatpush.msra.mxu0 %v7114
        %7372 = vmatmul.f32.gmra.mxu0 %v7354
        %v7373 = vpop.f32.mrf.mxu0
        %v7374 = vadd.f32 0.0, %v7373
        %7375 = vdwg.mxu0
        %v7376 = vsel %vm1619, %v6997, 0
        %7378 = vmatpush.msra.mxu0 0.0
        %7379 = vmatpush.msra.mxu0 0.0
        %7380 = vmatpush.msra.mxu0 0.0
        %7381 = vmatpush.msra.mxu0 0.0
        %7382 = vmatpush.msra.mxu0 0.0
        %7383 = vmatpush.msra.mxu0 0.0
        %7384 = vmatpush.msra.mxu0 0.0
        %7385 = vmatpush.msra.mxu0 0.0
        %7386 = vmatpush.msra.mxu0 0.0
        %7387 = vmatpush.msra.mxu0 0.0
        %7388 = vmatpush.msra.mxu0 0.0
        %7389 = vmatpush.msra.mxu0 0.0
        %7390 = vmatpush.msra.mxu0 0.0
        %7391 = vmatpush.msra.mxu0 0.0
        %7392 = vmatpush.msra.mxu0 %v7147
        %7393 = vmatpush.msra.mxu0 %v7146
        %7394 = vmatmul.f32.gmra.mxu0 %v7376
        %v7395 = vpop.f32.mrf.mxu0
        %v7396 = vadd.f32 0.0, %v7395
        %7397 = vdwg.mxu0
        %v7398 = vsel %vm1619, %v6999, 0
        %7400 = vmatpush.msra.mxu0 0.0
        %7401 = vmatpush.msra.mxu0 0.0
        %7402 = vmatpush.msra.mxu0 0.0
        %7403 = vmatpush.msra.mxu0 0.0
        %7404 = vmatpush.msra.mxu0 0.0
        %7405 = vmatpush.msra.mxu0 0.0
        %7406 = vmatpush.msra.mxu0 0.0
        %7407 = vmatpush.msra.mxu0 0.0
        %7408 = vmatpush.msra.mxu0 0.0
        %7409 = vmatpush.msra.mxu0 0.0
        %7410 = vmatpush.msra.mxu0 0.0
        %7411 = vmatpush.msra.mxu0 0.0
        %7412 = vmatpush.msra.mxu0 0.0
        %7413 = vmatpush.msra.mxu0 0.0
        %7414 = vmatpush.msra.mxu0 %v7179
        %7415 = vmatpush.msra.mxu0 %v7178
        %7416 = vmatmul.f32.gmra.mxu0 %v7398
        %v7417 = vpop.f32.mrf.mxu0
        %v7418 = vadd.f32 0.0, %v7417
        %7419 = vdwg.mxu0
        %v7420 = vsel %vm1619, %v7001, 0
        %7422 = vmatpush.msra.mxu0 0.0
        %7423 = vmatpush.msra.mxu0 0.0
        %7424 = vmatpush.msra.mxu0 0.0
        %7425 = vmatpush.msra.mxu0 0.0
        %7426 = vmatpush.msra.mxu0 0.0
        %7427 = vmatpush.msra.mxu0 0.0
        %7428 = vmatpush.msra.mxu0 0.0
        %7429 = vmatpush.msra.mxu0 0.0
        %7430 = vmatpush.msra.mxu0 0.0
        %7431 = vmatpush.msra.mxu0 0.0
        %7432 = vmatpush.msra.mxu0 0.0
        %7433 = vmatpush.msra.mxu0 0.0
        %7434 = vmatpush.msra.mxu0 0.0
        %7435 = vmatpush.msra.mxu0 0.0
        %7436 = vmatpush.msra.mxu0 %v7211
        %7437 = vmatpush.msra.mxu0 %v7210
        %7438 = vmatmul.f32.gmra.mxu0 %v7420
        %v7439 = vpop.f32.mrf.mxu0
        %v7440 = vadd.f32 0.0, %v7439
        %7441 = vdwg.mxu0
        %v7442 = vsel %vm1619, %v7003, 0
        %7444 = vmatpush.msra.mxu0 0.0
        %7445 = vmatpush.msra.mxu0 0.0
        %7446 = vmatpush.msra.mxu0 0.0
        %7447 = vmatpush.msra.mxu0 0.0
        %7448 = vmatpush.msra.mxu0 0.0
        %7449 = vmatpush.msra.mxu0 0.0
        %7450 = vmatpush.msra.mxu0 0.0
        %7451 = vmatpush.msra.mxu0 0.0
        %7452 = vmatpush.msra.mxu0 0.0
        %7453 = vmatpush.msra.mxu0 0.0
        %7454 = vmatpush.msra.mxu0 0.0
        %7455 = vmatpush.msra.mxu0 0.0
        %7456 = vmatpush.msra.mxu0 0.0
        %7457 = vmatpush.msra.mxu0 0.0
        %7458 = vmatpush.msra.mxu0 %v7243
        %7459 = vmatpush.msra.mxu0 %v7242
        %7460 = vmatmul.f32.gmra.mxu0 %v7442
        %v7461 = vpop.f32.mrf.mxu0
        %v7462 = vadd.f32 0.0, %v7461
        %7463 = vdwg.mxu0
        %v7464 = vsel %vm1619, %v7005, 0
        %7466 = vmatpush.msra.mxu0 0.0
        %7467 = vmatpush.msra.mxu0 0.0
        %7468 = vmatpush.msra.mxu0 0.0
        %7469 = vmatpush.msra.mxu0 0.0
        %7470 = vmatpush.msra.mxu0 0.0
        %7471 = vmatpush.msra.mxu0 0.0
        %7472 = vmatpush.msra.mxu0 0.0
        %7473 = vmatpush.msra.mxu0 0.0
        %7474 = vmatpush.msra.mxu0 0.0
        %7475 = vmatpush.msra.mxu0 0.0
        %7476 = vmatpush.msra.mxu0 0.0
        %7477 = vmatpush.msra.mxu0 0.0
        %7478 = vmatpush.msra.mxu0 0.0
        %7479 = vmatpush.msra.mxu0 0.0
        %7480 = vmatpush.msra.mxu0 %v7275
        %7481 = vmatpush.msra.mxu0 %v7274
        %7482 = vmatmul.f32.gmra.mxu0 %v7464
        %v7483 = vpop.f32.mrf.mxu0
        %v7484 = vadd.f32 0.0, %v7483
        %7485 = vdwg.mxu0
        %v7486 = vsel %vm1619, %v7007, 0
        %7488 = vmatpush.msra.mxu0 0.0
        %7489 = vmatpush.msra.mxu0 0.0
        %7490 = vmatpush.msra.mxu0 0.0
        %7491 = vmatpush.msra.mxu0 0.0
        %7492 = vmatpush.msra.mxu0 0.0
        %7493 = vmatpush.msra.mxu0 0.0
        %7494 = vmatpush.msra.mxu0 0.0
        %7495 = vmatpush.msra.mxu0 0.0
        %7496 = vmatpush.msra.mxu0 0.0
        %7497 = vmatpush.msra.mxu0 0.0
        %7498 = vmatpush.msra.mxu0 0.0
        %7499 = vmatpush.msra.mxu0 0.0
        %7500 = vmatpush.msra.mxu0 0.0
        %7501 = vmatpush.msra.mxu0 0.0
        %7502 = vmatpush.msra.mxu0 %v7307
        %7503 = vmatpush.msra.mxu0 %v7306
        %7504 = vmatmul.f32.gmra.mxu0 %v7486
        %v7505 = vpop.f32.mrf.mxu0
        %v7506 = vadd.f32 0.0, %v7505
        %7507 = vdwg.mxu0
        %v7508 = vsel %vm1619, %v7009, 0
        %7510 = vmatpush.msra.mxu0 0.0
        %7511 = vmatpush.msra.mxu0 0.0
        %7512 = vmatpush.msra.mxu0 0.0
        %7513 = vmatpush.msra.mxu0 0.0
        %7514 = vmatpush.msra.mxu0 0.0
        %7515 = vmatpush.msra.mxu0 0.0
        %7516 = vmatpush.msra.mxu0 0.0
        %7517 = vmatpush.msra.mxu0 0.0
        %7518 = vmatpush.msra.mxu0 0.0
        %7519 = vmatpush.msra.mxu0 0.0
        %7520 = vmatpush.msra.mxu0 0.0
        %7521 = vmatpush.msra.mxu0 0.0
        %7522 = vmatpush.msra.mxu0 0.0
        %7523 = vmatpush.msra.mxu0 0.0
        %7524 = vmatpush.msra.mxu0 %v7339
        %7525 = vmatpush.msra.mxu0 %v7338
        %7526 = vmatmul.f32.gmra.mxu0 %v7508
        %v7527 = vpop.f32.mrf.mxu0
        %v7528 = vadd.f32 0.0, %v7527
        %7529 = vdwg.mxu0
        %v7530 = vmul.f32 %v7374, 0.25
        %v7531 = vmul.f32 %v7396, 0.25
        %v7532 = vmul.f32 %v7418, 0.25
        %v7533 = vmul.f32 %v7440, 0.25
        %v7534 = vmul.f32 %v7462, 0.25
        %v7535 = vmul.f32 %v7484, 0.25
        %v7536 = vmul.f32 %v7506, 0.25
        %v7537 = vmul.f32 %v7528, 0.25
        %v7538 = vsel %vm1619, %v7530, -inf
        %7539 = vmax.xlane.f32.xlu0 %v7538
        %v7540 = vpop.xlane.xlu0 %7539
        %v7541 = vsel %vm1619, %v7531, -inf
        %7542 = vmax.xlane.f32.xlu0 %v7541
        %v7543 = vpop.xlane.xlu0 %7542
        %v7544 = vsel %vm1619, %v7532, -inf
        %7545 = vmax.xlane.f32.xlu0 %v7544
        %v7546 = vpop.xlane.xlu0 %7545
        %v7547 = vsel %vm1619, %v7533, -inf
        %7548 = vmax.xlane.f32.xlu0 %v7547
        %v7549 = vpop.xlane.xlu0 %7548
        %v7550 = vsel %vm1619, %v7534, -inf
        %7551 = vmax.xlane.f32.xlu0 %v7550
        %v7552 = vpop.xlane.xlu0 %7551
        %v7553 = vsel %vm1619, %v7535, -inf
        %7554 = vmax.xlane.f32.xlu0 %v7553
        %v7555 = vpop.xlane.xlu0 %7554
        %v7556 = vsel %vm1619, %v7536, -inf
        %7557 = vmax.xlane.f32.xlu0 %v7556
        %v7558 = vpop.xlane.xlu0 %7557
        %v7559 = vsel %vm1619, %v7537, -inf
        %7560 = vmax.xlane.f32.xlu0 %v7559
        %v7561 = vpop.xlane.xlu0 %7560
        %v7562 = vsub.f32 %v7530, %v7540
        %v7563 = vsub.f32 %v7531, %v7543
        %v7564 = vsub.f32 %v7532, %v7546
        %v7565 = vsub.f32 %v7533, %v7549
        %v7566 = vsub.f32 %v7534, %v7552
        %v7567 = vsub.f32 %v7535, %v7555
        %v7568 = vsub.f32 %v7536, %v7558
        %v7569 = vsub.f32 %v7537, %v7561
        %v7570 = vmul.f32 %v7562, 1.442695
        %v7571 = vpow.pop %v7570
        %v7572 = vmul.f32 %v7563, 1.442695
        %v7573 = vpow.pop %v7572
        %v7574 = vmul.f32 %v7564, 1.442695
        %v7575 = vpow.pop %v7574
        %v7576 = vmul.f32 %v7565, 1.442695
        %v7577 = vpow.pop %v7576
        %v7578 = vmul.f32 %v7566, 1.442695
        %v7579 = vpow.pop %v7578
        %v7580 = vmul.f32 %v7567, 1.442695
        %v7581 = vpow.pop %v7580
        %v7582 = vmul.f32 %v7568, 1.442695
        %v7583 = vpow.pop %v7582
        %v7584 = vmul.f32 %v7569, 1.442695
        %v7585 = vpow.pop %v7584
        %v7586 = vsel %vm1619, %v7571, 0.0
        %7587 = vadd.xlane.f32.xlu0 %v7586
        %v7588 = vpop.xlane.xlu0 %7587
        %v7589 = vsel %vm1619, %v7573, 0.0
        %7590 = vadd.xlane.f32.xlu0 %v7589
        %v7591 = vpop.xlane.xlu0 %7590
        %v7592 = vsel %vm1619, %v7575, 0.0
        %7593 = vadd.xlane.f32.xlu0 %v7592
        %v7594 = vpop.xlane.xlu0 %7593
        %v7595 = vsel %vm1619, %v7577, 0.0
        %7596 = vadd.xlane.f32.xlu0 %v7595
        %v7597 = vpop.xlane.xlu0 %7596
        %v7598 = vsel %vm1619, %v7579, 0.0
        %7599 = vadd.xlane.f32.xlu0 %v7598
        %v7600 = vpop.xlane.xlu0 %7599
        %v7601 = vsel %vm1619, %v7581, 0.0
        %7602 = vadd.xlane.f32.xlu0 %v7601
        %v7603 = vpop.xlane.xlu0 %7602
        %v7604 = vsel %vm1619, %v7583, 0.0
        %7605 = vadd.xlane.f32.xlu0 %v7604
        %v7606 = vpop.xlane.xlu0 %7605
        %v7607 = vsel %vm1619, %v7585, 0.0
        %7608 = vadd.xlane.f32.xlu0 %v7607
        %v7609 = vpop.xlane.xlu0 %7608
        %v7610 = vrcp.pop %v7588
        %v7611 = vrcp.pop %v7591
        %v7612 = vrcp.pop %v7594
        %v7613 = vrcp.pop %v7597
        %v7614 = vrcp.pop %v7600
        %v7615 = vrcp.pop %v7603
        %v7616 = vrcp.pop %v7606
        %v7617 = vrcp.pop %v7609
        %v7618 = vmul.f32 %v7571, %v7610
        %v7619 = vmul.f32 %v7573, %v7611
        %v7620 = vmul.f32 %v7575, %v7612
        %v7621 = vmul.f32 %v7577, %v7613
        %v7622 = vmul.f32 %v7579, %v7614
        %v7623 = vmul.f32 %v7581, %v7615
        %v7624 = vmul.f32 %v7583, %v7616
        %v7625 = vmul.f32 %v7585, %v7617
        %7626 = vxpose.xlu0.b32.start [1/16] %v6990, 128
        %7627 = vxpose.xlu0.b32.cont [2/16] %v6993, 128
        %7628 = vxpose.xlu0.b32.cont [3/16] 0.0, 128
        %7629 = vxpose.xlu0.b32.cont [4/16] 0.0, 128
        %7630 = vxpose.xlu0.b32.cont [5/16] 0.0, 128
        %7631 = vxpose.xlu0.b32.cont [6/16] 0.0, 128
        %7632 = vxpose.xlu0.b32.cont [7/16] 0.0, 128
        %7633 = vxpose.xlu0.b32.cont [8/16] 0.0, 128
        %7634 = vxpose.xlu0.b32.cont [9/16] 0.0, 128
        %7635 = vxpose.xlu0.b32.cont [10/16] 0.0, 128
        %7636 = vxpose.xlu0.b32.cont [11/16] 0.0, 128
        %7637 = vxpose.xlu0.b32.cont [12/16] 0.0, 128
        %7638 = vxpose.xlu0.b32.cont [13/16] 0.0, 128
        %7639 = vxpose.xlu0.b32.cont [14/16] 0.0, 128
        %7640 = vxpose.xlu0.b32.cont [15/16] 0.0, 128
        %7641 = vxpose.xlu0.b32.end [16/16] 0.0, 128
        %v7642 = vpop.trf.xlu0
        %v7643 = vpop.trf.xlu0
        %v7644 = vpop.trf.xlu0
        %v7645 = vpop.trf.xlu0
        %v7646 = vpop.trf.xlu0
        %v7647 = vpop.trf.xlu0
        %v7648 = vpop.trf.xlu0
        %v7649 = vpop.trf.xlu0
        %v7650 = vpop.trf.xlu0
        %v7651 = vpop.trf.xlu0
        %v7652 = vpop.trf.xlu0
        %v7653 = vpop.trf.xlu0
        %v7654 = vpop.trf.xlu0
        %v7655 = vpop.trf.xlu0
        %v7656 = vpop.trf.xlu0
        %v7657 = vpop.trf.xlu0
        %7658 = vxpose.xlu0.b32.start [1/16] %v7057, 128
        %7659 = vxpose.xlu0.b32.cont [2/16] %v7059, 128
        %7660 = vxpose.xlu0.b32.cont [3/16] 0.0, 128
        %7661 = vxpose.xlu0.b32.cont [4/16] 0.0, 128
        %7662 = vxpose.xlu0.b32.cont [5/16] 0.0, 128
        %7663 = vxpose.xlu0.b32.cont [6/16] 0.0, 128
        %7664 = vxpose.xlu0.b32.cont [7/16] 0.0, 128
        %7665 = vxpose.xlu0.b32.cont [8/16] 0.0, 128
        %7666 = vxpose.xlu0.b32.cont [9/16] 0.0, 128
        %7667 = vxpose.xlu0.b32.cont [10/16] 0.0, 128
        %7668 = vxpose.xlu0.b32.cont [11/16] 0.0, 128
        %7669 = vxpose.xlu0.b32.cont [12/16] 0.0, 128
        %7670 = vxpose.xlu0.b32.cont [13/16] 0.0, 128
        %7671 = vxpose.xlu0.b32.cont [14/16] 0.0, 128
        %7672 = vxpose.xlu0.b32.cont [15/16] 0.0, 128
        %7673 = vxpose.xlu0.b32.end [16/16] 0.0, 128
        %v7674 = vpop.trf.xlu0
        %v7675 = vpop.trf.xlu0
        %v7676 = vpop.trf.xlu0
        %v7677 = vpop.trf.xlu0
        %v7678 = vpop.trf.xlu0
        %v7679 = vpop.trf.xlu0
        %v7680 = vpop.trf.xlu0
        %v7681 = vpop.trf.xlu0
        %v7682 = vpop.trf.xlu0
        %v7683 = vpop.trf.xlu0
        %v7684 = vpop.trf.xlu0
        %v7685 = vpop.trf.xlu0
        %v7686 = vpop.trf.xlu0
        %v7687 = vpop.trf.xlu0
        %v7688 = vpop.trf.xlu0
        %v7689 = vpop.trf.xlu0
        %7690 = vxpose.xlu0.b32.start [1/16] %v7063, 128
        %7691 = vxpose.xlu0.b32.cont [2/16] %v7065, 128
        %7692 = vxpose.xlu0.b32.cont [3/16] 0.0, 128
        %7693 = vxpose.xlu0.b32.cont [4/16] 0.0, 128
        %7694 = vxpose.xlu0.b32.cont [5/16] 0.0, 128
        %7695 = vxpose.xlu0.b32.cont [6/16] 0.0, 128
        %7696 = vxpose.xlu0.b32.cont [7/16] 0.0, 128
        %7697 = vxpose.xlu0.b32.cont [8/16] 0.0, 128
        %7698 = vxpose.xlu0.b32.cont [9/16] 0.0, 128
        %7699 = vxpose.xlu0.b32.cont [10/16] 0.0, 128
        %7700 = vxpose.xlu0.b32.cont [11/16] 0.0, 128
        %7701 = vxpose.xlu0.b32.cont [12/16] 0.0, 128
        %7702 = vxpose.xlu0.b32.cont [13/16] 0.0, 128
        %7703 = vxpose.xlu0.b32.cont [14/16] 0.0, 128
        %7704 = vxpose.xlu0.b32.cont [15/16] 0.0, 128
        %7705 = vxpose.xlu0.b32.end [16/16] 0.0, 128
        %v7706 = vpop.trf.xlu0
        %v7707 = vpop.trf.xlu0
        %v7708 = vpop.trf.xlu0
        %v7709 = vpop.trf.xlu0
        %v7710 = vpop.trf.xlu0
        %v7711 = vpop.trf.xlu0
        %v7712 = vpop.trf.xlu0
        %v7713 = vpop.trf.xlu0
        %v7714 = vpop.trf.xlu0
        %v7715 = vpop.trf.xlu0
        %v7716 = vpop.trf.xlu0
        %v7717 = vpop.trf.xlu0
        %v7718 = vpop.trf.xlu0
        %v7719 = vpop.trf.xlu0
        %v7720 = vpop.trf.xlu0
        %v7721 = vpop.trf.xlu0
        %7722 = vxpose.xlu0.b32.start [1/16] %v7069, 128
        %7723 = vxpose.xlu0.b32.cont [2/16] %v7071, 128
        %7724 = vxpose.xlu0.b32.cont [3/16] 0.0, 128
        %7725 = vxpose.xlu0.b32.cont [4/16] 0.0, 128
        %7726 = vxpose.xlu0.b32.cont [5/16] 0.0, 128
        %7727 = vxpose.xlu0.b32.cont [6/16] 0.0, 128
        %7728 = vxpose.xlu0.b32.cont [7/16] 0.0, 128
        %7729 = vxpose.xlu0.b32.cont [8/16] 0.0, 128
        %7730 = vxpose.xlu0.b32.cont [9/16] 0.0, 128
        %7731 = vxpose.xlu0.b32.cont [10/16] 0.0, 128
        %7732 = vxpose.xlu0.b32.cont [11/16] 0.0, 128
        %7733 = vxpose.xlu0.b32.cont [12/16] 0.0, 128
        %7734 = vxpose.xlu0.b32.cont [13/16] 0.0, 128
        %7735 = vxpose.xlu0.b32.cont [14/16] 0.0, 128
        %7736 = vxpose.xlu0.b32.cont [15/16] 0.0, 128
        %7737 = vxpose.xlu0.b32.end [16/16] 0.0, 128
        %v7738 = vpop.trf.xlu0
        %v7739 = vpop.trf.xlu0
        %v7740 = vpop.trf.xlu0
        %v7741 = vpop.trf.xlu0
        %v7742 = vpop.trf.xlu0
        %v7743 = vpop.trf.xlu0
        %v7744 = vpop.trf.xlu0
        %v7745 = vpop.trf.xlu0
        %v7746 = vpop.trf.xlu0
        %v7747 = vpop.trf.xlu0
        %v7748 = vpop.trf.xlu0
        %v7749 = vpop.trf.xlu0
        %v7750 = vpop.trf.xlu0
        %v7751 = vpop.trf.xlu0
        %v7752 = vpop.trf.xlu0
        %v7753 = vpop.trf.xlu0
        %7754 = vxpose.xlu0.b32.start [1/16] %v7075, 128
        %7755 = vxpose.xlu0.b32.cont [2/16] %v7077, 128
        %7756 = vxpose.xlu0.b32.cont [3/16] 0.0, 128
        %7757 = vxpose.xlu0.b32.cont [4/16] 0.0, 128
        %7758 = vxpose.xlu0.b32.cont [5/16] 0.0, 128
        %7759 = vxpose.xlu0.b32.cont [6/16] 0.0, 128
        %7760 = vxpose.xlu0.b32.cont [7/16] 0.0, 128
        %7761 = vxpose.xlu0.b32.cont [8/16] 0.0, 128
        %7762 = vxpose.xlu0.b32.cont [9/16] 0.0, 128
        %7763 = vxpose.xlu0.b32.cont [10/16] 0.0, 128
        %7764 = vxpose.xlu0.b32.cont [11/16] 0.0, 128
        %7765 = vxpose.xlu0.b32.cont [12/16] 0.0, 128
        %7766 = vxpose.xlu0.b32.cont [13/16] 0.0, 128
        %7767 = vxpose.xlu0.b32.cont [14/16] 0.0, 128
        %7768 = vxpose.xlu0.b32.cont [15/16] 0.0, 128
        %7769 = vxpose.xlu0.b32.end [16/16] 0.0, 128
        %v7770 = vpop.trf.xlu0
        %v7771 = vpop.trf.xlu0
        %v7772 = vpop.trf.xlu0
        %v7773 = vpop.trf.xlu0
        %v7774 = vpop.trf.xlu0
        %v7775 = vpop.trf.xlu0
        %v7776 = vpop.trf.xlu0
        %v7777 = vpop.trf.xlu0
        %v7778 = vpop.trf.xlu0
        %v7779 = vpop.trf.xlu0
        %v7780 = vpop.trf.xlu0
        %v7781 = vpop.trf.xlu0
        %v7782 = vpop.trf.xlu0
        %v7783 = vpop.trf.xlu0
        %v7784 = vpop.trf.xlu0
        %v7785 = vpop.trf.xlu0
        %7786 = vxpose.xlu0.b32.start [1/16] %v7081, 128
        %7787 = vxpose.xlu0.b32.cont [2/16] %v7083, 128
        %7788 = vxpose.xlu0.b32.cont [3/16] 0.0, 128
        %7789 = vxpose.xlu0.b32.cont [4/16] 0.0, 128
        %7790 = vxpose.xlu0.b32.cont [5/16] 0.0, 128
        %7791 = vxpose.xlu0.b32.cont [6/16] 0.0, 128
        %7792 = vxpose.xlu0.b32.cont [7/16] 0.0, 128
        %7793 = vxpose.xlu0.b32.cont [8/16] 0.0, 128
        %7794 = vxpose.xlu0.b32.cont [9/16] 0.0, 128
        %7795 = vxpose.xlu0.b32.cont [10/16] 0.0, 128
        %7796 = vxpose.xlu0.b32.cont [11/16] 0.0, 128
        %7797 = vxpose.xlu0.b32.cont [12/16] 0.0, 128
        %7798 = vxpose.xlu0.b32.cont [13/16] 0.0, 128
        %7799 = vxpose.xlu0.b32.cont [14/16] 0.0, 128
        %7800 = vxpose.xlu0.b32.cont [15/16] 0.0, 128
        %7801 = vxpose.xlu0.b32.end [16/16] 0.0, 128
        %v7802 = vpop.trf.xlu0
        %v7803 = vpop.trf.xlu0
        %v7804 = vpop.trf.xlu0
        %v7805 = vpop.trf.xlu0
        %v7806 = vpop.trf.xlu0
        %v7807 = vpop.trf.xlu0
        %v7808 = vpop.trf.xlu0
        %v7809 = vpop.trf.xlu0
        %v7810 = vpop.trf.xlu0
        %v7811 = vpop.trf.xlu0
        %v7812 = vpop.trf.xlu0
        %v7813 = vpop.trf.xlu0
        %v7814 = vpop.trf.xlu0
        %v7815 = vpop.trf.xlu0
        %v7816 = vpop.trf.xlu0
        %v7817 = vpop.trf.xlu0
        %7818 = vxpose.xlu0.b32.start [1/16] %v7087, 128
        %7819 = vxpose.xlu0.b32.cont [2/16] %v7089, 128
        %7820 = vxpose.xlu0.b32.cont [3/16] 0.0, 128
        %7821 = vxpose.xlu0.b32.cont [4/16] 0.0, 128
        %7822 = vxpose.xlu0.b32.cont [5/16] 0.0, 128
        %7823 = vxpose.xlu0.b32.cont [6/16] 0.0, 128
        %7824 = vxpose.xlu0.b32.cont [7/16] 0.0, 128
        %7825 = vxpose.xlu0.b32.cont [8/16] 0.0, 128
        %7826 = vxpose.xlu0.b32.cont [9/16] 0.0, 128
        %7827 = vxpose.xlu0.b32.cont [10/16] 0.0, 128
        %7828 = vxpose.xlu0.b32.cont [11/16] 0.0, 128
        %7829 = vxpose.xlu0.b32.cont [12/16] 0.0, 128
        %7830 = vxpose.xlu0.b32.cont [13/16] 0.0, 128
        %7831 = vxpose.xlu0.b32.cont [14/16] 0.0, 128
        %7832 = vxpose.xlu0.b32.cont [15/16] 0.0, 128
        %7833 = vxpose.xlu0.b32.end [16/16] 0.0, 128
        %v7834 = vpop.trf.xlu0
        %v7835 = vpop.trf.xlu0
        %v7836 = vpop.trf.xlu0
        %v7837 = vpop.trf.xlu0
        %v7838 = vpop.trf.xlu0
        %v7839 = vpop.trf.xlu0
        %v7840 = vpop.trf.xlu0
        %v7841 = vpop.trf.xlu0
        %v7842 = vpop.trf.xlu0
        %v7843 = vpop.trf.xlu0
        %v7844 = vpop.trf.xlu0
        %v7845 = vpop.trf.xlu0
        %v7846 = vpop.trf.xlu0
        %v7847 = vpop.trf.xlu0
        %v7848 = vpop.trf.xlu0
        %v7849 = vpop.trf.xlu0
        %7850 = vxpose.xlu0.b32.start [1/16] %v7093, 128
        %7851 = vxpose.xlu0.b32.cont [2/16] %v7095, 128
        %7852 = vxpose.xlu0.b32.cont [3/16] 0.0, 128
        %7853 = vxpose.xlu0.b32.cont [4/16] 0.0, 128
        %7854 = vxpose.xlu0.b32.cont [5/16] 0.0, 128
        %7855 = vxpose.xlu0.b32.cont [6/16] 0.0, 128
        %7856 = vxpose.xlu0.b32.cont [7/16] 0.0, 128
        %7857 = vxpose.xlu0.b32.cont [8/16] 0.0, 128
        %7858 = vxpose.xlu0.b32.cont [9/16] 0.0, 128
        %7859 = vxpose.xlu0.b32.cont [10/16] 0.0, 128
        %7860 = vxpose.xlu0.b32.cont [11/16] 0.0, 128
        %7861 = vxpose.xlu0.b32.cont [12/16] 0.0, 128
        %7862 = vxpose.xlu0.b32.cont [13/16] 0.0, 128
        %7863 = vxpose.xlu0.b32.cont [14/16] 0.0, 128
        %7864 = vxpose.xlu0.b32.cont [15/16] 0.0, 128
        %7865 = vxpose.xlu0.b32.end [16/16] 0.0, 128
        %v7866 = vpop.trf.xlu0
        %v7867 = vpop.trf.xlu0
        %v7868 = vpop.trf.xlu0
        %v7869 = vpop.trf.xlu0
        %v7870 = vpop.trf.xlu0
        %v7871 = vpop.trf.xlu0
        %v7872 = vpop.trf.xlu0
        %v7873 = vpop.trf.xlu0
        %v7874 = vpop.trf.xlu0
        %v7875 = vpop.trf.xlu0
        %v7876 = vpop.trf.xlu0
        %v7877 = vpop.trf.xlu0
        %v7878 = vpop.trf.xlu0
        %v7879 = vpop.trf.xlu0
        %v7880 = vpop.trf.xlu0
        %v7881 = vpop.trf.xlu0
        %v7883 = vsel %vm1619, %v7642, 0
        %v7886 = vsel %vm1619, %v7643, 0
        %v7889 = vsel %vm1619, %v7618, 0
        %7891 = vmatpush.xpose.msra.mxu0 0.0
        %7892 = vmatpush.xpose.msra.mxu0 0.0
        %7893 = vmatpush.xpose.msra.mxu0 0.0
        %7894 = vmatpush.xpose.msra.mxu0 0.0
        %7895 = vmatpush.xpose.msra.mxu0 0.0
        %7896 = vmatpush.xpose.msra.mxu0 0.0
        %7897 = vmatpush.xpose.msra.mxu0 0.0
        %7898 = vmatpush.xpose.msra.mxu0 0.0
        %7899 = vmatpush.xpose.msra.mxu0 0.0
        %7900 = vmatpush.xpose.msra.mxu0 0.0
        %7901 = vmatpush.xpose.msra.mxu0 0.0
        %7902 = vmatpush.xpose.msra.mxu0 0.0
        %7903 = vmatpush.xpose.msra.mxu0 0.0
        %7904 = vmatpush.xpose.msra.mxu0 0.0
        %7905 = vmatpush.xpose.msra.mxu0 0.0
        %7906 = vmatpush.xpose.msra.mxu0 %v7889
        %7907 = vmatmul.f32.gmra.mxu0 %v7883
        %v7908 = vpop.f32.mrf.mxu0
        %v7909 = vadd.f32 0.0, %v7908
        %7910 = vmatmul.f32.gmra.mxu0 %v7886
        %v7911 = vpop.f32.mrf.mxu0
        %v7912 = vadd.f32 0.0, %v7911
        %7913 = vdwg.mxu0
        %v7915 = vsel %vm1619, %v7674, 0
        %v7918 = vsel %vm1619, %v7675, 0
        %v7921 = vsel %vm1619, %v7619, 0
        %7923 = vmatpush.xpose.msra.mxu0 0.0
        %7924 = vmatpush.xpose.msra.mxu0 0.0
        %7925 = vmatpush.xpose.msra.mxu0 0.0
        %7926 = vmatpush.xpose.msra.mxu0 0.0
        %7927 = vmatpush.xpose.msra.mxu0 0.0
        %7928 = vmatpush.xpose.msra.mxu0 0.0
        %7929 = vmatpush.xpose.msra.mxu0 0.0
        %7930 = vmatpush.xpose.msra.mxu0 0.0
        %7931 = vmatpush.xpose.msra.mxu0 0.0
        %7932 = vmatpush.xpose.msra.mxu0 0.0
        %7933 = vmatpush.xpose.msra.mxu0 0.0
        %7934 = vmatpush.xpose.msra.mxu0 0.0
        %7935 = vmatpush.xpose.msra.mxu0 0.0
        %7936 = vmatpush.xpose.msra.mxu0 0.0
        %7937 = vmatpush.xpose.msra.mxu0 0.0
        %7938 = vmatpush.xpose.msra.mxu0 %v7921
        %7939 = vmatmul.f32.gmra.mxu0 %v7915
        %v7940 = vpop.f32.mrf.mxu0
        %v7941 = vadd.f32 0.0, %v7940
        %7942 = vmatmul.f32.gmra.mxu0 %v7918
        %v7943 = vpop.f32.mrf.mxu0
        %v7944 = vadd.f32 0.0, %v7943
        %7945 = vdwg.mxu0
        %v7947 = vsel %vm1619, %v7706, 0
        %v7950 = vsel %vm1619, %v7707, 0
        %v7953 = vsel %vm1619, %v7620, 0
        %7955 = vmatpush.xpose.msra.mxu0 0.0
        %7956 = vmatpush.xpose.msra.mxu0 0.0
        %7957 = vmatpush.xpose.msra.mxu0 0.0
        %7958 = vmatpush.xpose.msra.mxu0 0.0
        %7959 = vmatpush.xpose.msra.mxu0 0.0
        %7960 = vmatpush.xpose.msra.mxu0 0.0
        %7961 = vmatpush.xpose.msra.mxu0 0.0
        %7962 = vmatpush.xpose.msra.mxu0 0.0
        %7963 = vmatpush.xpose.msra.mxu0 0.0
        %7964 = vmatpush.xpose.msra.mxu0 0.0
        %7965 = vmatpush.xpose.msra.mxu0 0.0
        %7966 = vmatpush.xpose.msra.mxu0 0.0
        %7967 = vmatpush.xpose.msra.mxu0 0.0
        %7968 = vmatpush.xpose.msra.mxu0 0.0
        %7969 = vmatpush.xpose.msra.mxu0 0.0
        %7970 = vmatpush.xpose.msra.mxu0 %v7953
        %7971 = vmatmul.f32.gmra.mxu0 %v7947
        %v7972 = vpop.f32.mrf.mxu0
        %v7973 = vadd.f32 0.0, %v7972
        %7974 = vmatmul.f32.gmra.mxu0 %v7950
        %v7975 = vpop.f32.mrf.mxu0
        %v7976 = vadd.f32 0.0, %v7975
        %7977 = vdwg.mxu0
        %v7979 = vsel %vm1619, %v7738, 0
        %v7982 = vsel %vm1619, %v7739, 0
        %v7985 = vsel %vm1619, %v7621, 0
        %7987 = vmatpush.xpose.msra.mxu0 0.0
        %7988 = vmatpush.xpose.msra.mxu0 0.0
        %7989 = vmatpush.xpose.msra.mxu0 0.0
        %7990 = vmatpush.xpose.msra.mxu0 0.0
        %7991 = vmatpush.xpose.msra.mxu0 0.0
        %7992 = vmatpush.xpose.msra.mxu0 0.0
        %7993 = vmatpush.xpose.msra.mxu0 0.0
        %7994 = vmatpush.xpose.msra.mxu0 0.0
        %7995 = vmatpush.xpose.msra.mxu0 0.0
        %7996 = vmatpush.xpose.msra.mxu0 0.0
        %7997 = vmatpush.xpose.msra.mxu0 0.0
        %7998 = vmatpush.xpose.msra.mxu0 0.0
        %7999 = vmatpush.xpose.msra.mxu0 0.0
        %8000 = vmatpush.xpose.msra.mxu0 0.0
        %8001 = vmatpush.xpose.msra.mxu0 0.0
        %8002 = vmatpush.xpose.msra.mxu0 %v7985
        %8003 = vmatmul.f32.gmra.mxu0 %v7979
        %v8004 = vpop.f32.mrf.mxu0
        %v8005 = vadd.f32 0.0, %v8004
        %8006 = vmatmul.f32.gmra.mxu0 %v7982
        %v8007 = vpop.f32.mrf.mxu0
        %v8008 = vadd.f32 0.0, %v8007
        %8009 = vdwg.mxu0
        %v8011 = vsel %vm1619, %v7770, 0
        %v8014 = vsel %vm1619, %v7771, 0
        %v8017 = vsel %vm1619, %v7622, 0
        %8019 = vmatpush.xpose.msra.mxu0 0.0
        %8020 = vmatpush.xpose.msra.mxu0 0.0
        %8021 = vmatpush.xpose.msra.mxu0 0.0
        %8022 = vmatpush.xpose.msra.mxu0 0.0
        %8023 = vmatpush.xpose.msra.mxu0 0.0
        %8024 = vmatpush.xpose.msra.mxu0 0.0
        %8025 = vmatpush.xpose.msra.mxu0 0.0
        %8026 = vmatpush.xpose.msra.mxu0 0.0
        %8027 = vmatpush.xpose.msra.mxu0 0.0
        %8028 = vmatpush.xpose.msra.mxu0 0.0
        %8029 = vmatpush.xpose.msra.mxu0 0.0
        %8030 = vmatpush.xpose.msra.mxu0 0.0
        %8031 = vmatpush.xpose.msra.mxu0 0.0
        %8032 = vmatpush.xpose.msra.mxu0 0.0
        %8033 = vmatpush.xpose.msra.mxu0 0.0
        %8034 = vmatpush.xpose.msra.mxu0 %v8017
        %8035 = vmatmul.f32.gmra.mxu0 %v8011
        %v8036 = vpop.f32.mrf.mxu0
        %v8037 = vadd.f32 0.0, %v8036
        %8038 = vmatmul.f32.gmra.mxu0 %v8014
        %v8039 = vpop.f32.mrf.mxu0
        %v8040 = vadd.f32 0.0, %v8039
        %8041 = vdwg.mxu0
        %v8043 = vsel %vm1619, %v7802, 0
        %v8046 = vsel %vm1619, %v7803, 0
        %v8049 = vsel %vm1619, %v7623, 0
        %8051 = vmatpush.xpose.msra.mxu0 0.0
        %8052 = vmatpush.xpose.msra.mxu0 0.0
        %8053 = vmatpush.xpose.msra.mxu0 0.0
        %8054 = vmatpush.xpose.msra.mxu0 0.0
        %8055 = vmatpush.xpose.msra.mxu0 0.0
        %8056 = vmatpush.xpose.msra.mxu0 0.0
        %8057 = vmatpush.xpose.msra.mxu0 0.0
        %8058 = vmatpush.xpose.msra.mxu0 0.0
        %8059 = vmatpush.xpose.msra.mxu0 0.0
        %8060 = vmatpush.xpose.msra.mxu0 0.0
        %8061 = vmatpush.xpose.msra.mxu0 0.0
        %8062 = vmatpush.xpose.msra.mxu0 0.0
        %8063 = vmatpush.xpose.msra.mxu0 0.0
        %8064 = vmatpush.xpose.msra.mxu0 0.0
        %8065 = vmatpush.xpose.msra.mxu0 0.0
        %8066 = vmatpush.xpose.msra.mxu0 %v8049
        %8067 = vmatmul.f32.gmra.mxu0 %v8043
        %v8068 = vpop.f32.mrf.mxu0
        %v8069 = vadd.f32 0.0, %v8068
        %8070 = vmatmul.f32.gmra.mxu0 %v8046
        %v8071 = vpop.f32.mrf.mxu0
        %v8072 = vadd.f32 0.0, %v8071
        %8073 = vdwg.mxu0
        %v8075 = vsel %vm1619, %v7834, 0
        %v8078 = vsel %vm1619, %v7835, 0
        %v8081 = vsel %vm1619, %v7624, 0
        %8083 = vmatpush.xpose.msra.mxu0 0.0
        %8084 = vmatpush.xpose.msra.mxu0 0.0
        %8085 = vmatpush.xpose.msra.mxu0 0.0
        %8086 = vmatpush.xpose.msra.mxu0 0.0
        %8087 = vmatpush.xpose.msra.mxu0 0.0
        %8088 = vmatpush.xpose.msra.mxu0 0.0
        %8089 = vmatpush.xpose.msra.mxu0 0.0
        %8090 = vmatpush.xpose.msra.mxu0 0.0
        %8091 = vmatpush.xpose.msra.mxu0 0.0
        %8092 = vmatpush.xpose.msra.mxu0 0.0
        %8093 = vmatpush.xpose.msra.mxu0 0.0
        %8094 = vmatpush.xpose.msra.mxu0 0.0
        %8095 = vmatpush.xpose.msra.mxu0 0.0
        %8096 = vmatpush.xpose.msra.mxu0 0.0
        %8097 = vmatpush.xpose.msra.mxu0 0.0
        %8098 = vmatpush.xpose.msra.mxu0 %v8081
        %8099 = vmatmul.f32.gmra.mxu0 %v8075
        %v8100 = vpop.f32.mrf.mxu0
        %v8101 = vadd.f32 0.0, %v8100
        %8102 = vmatmul.f32.gmra.mxu0 %v8078
        %v8103 = vpop.f32.mrf.mxu0
        %v8104 = vadd.f32 0.0, %v8103
        %8105 = vdwg.mxu0
        %v8107 = vsel %vm1619, %v7866, 0
        %v8110 = vsel %vm1619, %v7867, 0
        %v8113 = vsel %vm1619, %v7625, 0
        %8115 = vmatpush.xpose.msra.mxu0 0.0
        %8116 = vmatpush.xpose.msra.mxu0 0.0
        %8117 = vmatpush.xpose.msra.mxu0 0.0
        %8118 = vmatpush.xpose.msra.mxu0 0.0
        %8119 = vmatpush.xpose.msra.mxu0 0.0
        %8120 = vmatpush.xpose.msra.mxu0 0.0
        %8121 = vmatpush.xpose.msra.mxu0 0.0
        %8122 = vmatpush.xpose.msra.mxu0 0.0
        %8123 = vmatpush.xpose.msra.mxu0 0.0
        %8124 = vmatpush.xpose.msra.mxu0 0.0
        %8125 = vmatpush.xpose.msra.mxu0 0.0
        %8126 = vmatpush.xpose.msra.mxu0 0.0
        %8127 = vmatpush.xpose.msra.mxu0 0.0
        %8128 = vmatpush.xpose.msra.mxu0 0.0
        %8129 = vmatpush.xpose.msra.mxu0 0.0
        %8130 = vmatpush.xpose.msra.mxu0 %v8113
        %8131 = vmatmul.f32.gmra.mxu0 %v8107
        %v8132 = vpop.f32.mrf.mxu0
        %v8133 = vadd.f32 0.0, %v8132
        %8134 = vmatmul.f32.gmra.mxu0 %v8110
        %v8135 = vpop.f32.mrf.mxu0
        %v8136 = vadd.f32 0.0, %v8135
        %8137 = vdwg.mxu0
        %8138 = vxpose.xlu0.b32.start [1/16] %v7909, 128
        %8139 = vxpose.xlu0.b32.cont [2/16] %v7912, 128
        %8140 = vxpose.xlu0.b32.cont [3/16] 0.0, 128
        %8141 = vxpose.xlu0.b32.cont [4/16] 0.0, 128
        %8142 = vxpose.xlu0.b32.cont [5/16] 0.0, 128
        %8143 = vxpose.xlu0.b32.cont [6/16] 0.0, 128
        %8144 = vxpose.xlu0.b32.cont [7/16] 0.0, 128
        %8145 = vxpose.xlu0.b32.cont [8/16] 0.0, 128
        %8146 = vxpose.xlu0.b32.cont [9/16] 0.0, 128
        %8147 = vxpose.xlu0.b32.cont [10/16] 0.0, 128
        %8148 = vxpose.xlu0.b32.cont [11/16] 0.0, 128
        %8149 = vxpose.xlu0.b32.cont [12/16] 0.0, 128
        %8150 = vxpose.xlu0.b32.cont [13/16] 0.0, 128
        %8151 = vxpose.xlu0.b32.cont [14/16] 0.0, 128
        %8152 = vxpose.xlu0.b32.cont [15/16] 0.0, 128
        %8153 = vxpose.xlu0.b32.end [16/16] 0.0, 128
        %v8154 = vpop.trf.xlu0
        %v8155 = vpop.trf.xlu0
        %v8156 = vpop.trf.xlu0
        %v8157 = vpop.trf.xlu0
        %v8158 = vpop.trf.xlu0
        %v8159 = vpop.trf.xlu0
        %v8160 = vpop.trf.xlu0
        %v8161 = vpop.trf.xlu0
        %v8162 = vpop.trf.xlu0
        %v8163 = vpop.trf.xlu0
        %v8164 = vpop.trf.xlu0
        %v8165 = vpop.trf.xlu0
        %v8166 = vpop.trf.xlu0
        %v8167 = vpop.trf.xlu0
        %v8168 = vpop.trf.xlu0
        %v8169 = vpop.trf.xlu0
        %8170 = vxpose.xlu0.b32.start [1/16] %v7941, 128
        %8171 = vxpose.xlu0.b32.cont [2/16] %v7944, 128
        %8172 = vxpose.xlu0.b32.cont [3/16] 0.0, 128
        %8173 = vxpose.xlu0.b32.cont [4/16] 0.0, 128
        %8174 = vxpose.xlu0.b32.cont [5/16] 0.0, 128
        %8175 = vxpose.xlu0.b32.cont [6/16] 0.0, 128
        %8176 = vxpose.xlu0.b32.cont [7/16] 0.0, 128
        %8177 = vxpose.xlu0.b32.cont [8/16] 0.0, 128
        %8178 = vxpose.xlu0.b32.cont [9/16] 0.0, 128
        %8179 = vxpose.xlu0.b32.cont [10/16] 0.0, 128
        %8180 = vxpose.xlu0.b32.cont [11/16] 0.0, 128
        %8181 = vxpose.xlu0.b32.cont [12/16] 0.0, 128
        %8182 = vxpose.xlu0.b32.cont [13/16] 0.0, 128
        %8183 = vxpose.xlu0.b32.cont [14/16] 0.0, 128
        %8184 = vxpose.xlu0.b32.cont [15/16] 0.0, 128
        %8185 = vxpose.xlu0.b32.end [16/16] 0.0, 128
        %v8186 = vpop.trf.xlu0
        %v8187 = vpop.trf.xlu0
        %v8188 = vpop.trf.xlu0
        %v8189 = vpop.trf.xlu0
        %v8190 = vpop.trf.xlu0
        %v8191 = vpop.trf.xlu0
        %v8192 = vpop.trf.xlu0
        %v8193 = vpop.trf.xlu0
        %v8194 = vpop.trf.xlu0
        %v8195 = vpop.trf.xlu0
        %v8196 = vpop.trf.xlu0
        %v8197 = vpop.trf.xlu0
        %v8198 = vpop.trf.xlu0
        %v8199 = vpop.trf.xlu0
        %v8200 = vpop.trf.xlu0
        %v8201 = vpop.trf.xlu0
        %8202 = vxpose.xlu0.b32.start [1/16] %v7973, 128
        %8203 = vxpose.xlu0.b32.cont [2/16] %v7976, 128
        %8204 = vxpose.xlu0.b32.cont [3/16] 0.0, 128
        %8205 = vxpose.xlu0.b32.cont [4/16] 0.0, 128
        %8206 = vxpose.xlu0.b32.cont [5/16] 0.0, 128
        %8207 = vxpose.xlu0.b32.cont [6/16] 0.0, 128
        %8208 = vxpose.xlu0.b32.cont [7/16] 0.0, 128
        %8209 = vxpose.xlu0.b32.cont [8/16] 0.0, 128
        %8210 = vxpose.xlu0.b32.cont [9/16] 0.0, 128
        %8211 = vxpose.xlu0.b32.cont [10/16] 0.0, 128
        %8212 = vxpose.xlu0.b32.cont [11/16] 0.0, 128
        %8213 = vxpose.xlu0.b32.cont [12/16] 0.0, 128
        %8214 = vxpose.xlu0.b32.cont [13/16] 0.0, 128
        %8215 = vxpose.xlu0.b32.cont [14/16] 0.0, 128
        %8216 = vxpose.xlu0.b32.cont [15/16] 0.0, 128
        %8217 = vxpose.xlu0.b32.end [16/16] 0.0, 128
        %v8218 = vpop.trf.xlu0
        %v8219 = vpop.trf.xlu0
        %v8220 = vpop.trf.xlu0
        %v8221 = vpop.trf.xlu0
        %v8222 = vpop.trf.xlu0
        %v8223 = vpop.trf.xlu0
        %v8224 = vpop.trf.xlu0
        %v8225 = vpop.trf.xlu0
        %v8226 = vpop.trf.xlu0
        %v8227 = vpop.trf.xlu0
        %v8228 = vpop.trf.xlu0
        %v8229 = vpop.trf.xlu0
        %v8230 = vpop.trf.xlu0
        %v8231 = vpop.trf.xlu0
        %v8232 = vpop.trf.xlu0
        %v8233 = vpop.trf.xlu0
        %8234 = vxpose.xlu0.b32.start [1/16] %v8005, 128
        %8235 = vxpose.xlu0.b32.cont [2/16] %v8008, 128
        %8236 = vxpose.xlu0.b32.cont [3/16] 0.0, 128
        %8237 = vxpose.xlu0.b32.cont [4/16] 0.0, 128
        %8238 = vxpose.xlu0.b32.cont [5/16] 0.0, 128
        %8239 = vxpose.xlu0.b32.cont [6/16] 0.0, 128
        %8240 = vxpose.xlu0.b32.cont [7/16] 0.0, 128
        %8241 = vxpose.xlu0.b32.cont [8/16] 0.0, 128
        %8242 = vxpose.xlu0.b32.cont [9/16] 0.0, 128
        %8243 = vxpose.xlu0.b32.cont [10/16] 0.0, 128
        %8244 = vxpose.xlu0.b32.cont [11/16] 0.0, 128
        %8245 = vxpose.xlu0.b32.cont [12/16] 0.0, 128
        %8246 = vxpose.xlu0.b32.cont [13/16] 0.0, 128
        %8247 = vxpose.xlu0.b32.cont [14/16] 0.0, 128
        %8248 = vxpose.xlu0.b32.cont [15/16] 0.0, 128
        %8249 = vxpose.xlu0.b32.end [16/16] 0.0, 128
        %v8250 = vpop.trf.xlu0
        %v8251 = vpop.trf.xlu0
        %v8252 = vpop.trf.xlu0
        %v8253 = vpop.trf.xlu0
        %v8254 = vpop.trf.xlu0
        %v8255 = vpop.trf.xlu0
        %v8256 = vpop.trf.xlu0
        %v8257 = vpop.trf.xlu0
        %v8258 = vpop.trf.xlu0
        %v8259 = vpop.trf.xlu0
        %v8260 = vpop.trf.xlu0
        %v8261 = vpop.trf.xlu0
        %v8262 = vpop.trf.xlu0
        %v8263 = vpop.trf.xlu0
        %v8264 = vpop.trf.xlu0
        %v8265 = vpop.trf.xlu0
        %8266 = vxpose.xlu0.b32.start [1/16] %v8037, 128
        %8267 = vxpose.xlu0.b32.cont [2/16] %v8040, 128
        %8268 = vxpose.xlu0.b32.cont [3/16] 0.0, 128
        %8269 = vxpose.xlu0.b32.cont [4/16] 0.0, 128
        %8270 = vxpose.xlu0.b32.cont [5/16] 0.0, 128
        %8271 = vxpose.xlu0.b32.cont [6/16] 0.0, 128
        %8272 = vxpose.xlu0.b32.cont [7/16] 0.0, 128
        %8273 = vxpose.xlu0.b32.cont [8/16] 0.0, 128
        %8274 = vxpose.xlu0.b32.cont [9/16] 0.0, 128
        %8275 = vxpose.xlu0.b32.cont [10/16] 0.0, 128
        %8276 = vxpose.xlu0.b32.cont [11/16] 0.0, 128
        %8277 = vxpose.xlu0.b32.cont [12/16] 0.0, 128
        %8278 = vxpose.xlu0.b32.cont [13/16] 0.0, 128
        %8279 = vxpose.xlu0.b32.cont [14/16] 0.0, 128
        %8280 = vxpose.xlu0.b32.cont [15/16] 0.0, 128
        %8281 = vxpose.xlu0.b32.end [16/16] 0.0, 128
        %v8282 = vpop.trf.xlu0
        %v8283 = vpop.trf.xlu0
        %v8284 = vpop.trf.xlu0
        %v8285 = vpop.trf.xlu0
        %v8286 = vpop.trf.xlu0
        %v8287 = vpop.trf.xlu0
        %v8288 = vpop.trf.xlu0
        %v8289 = vpop.trf.xlu0
        %v8290 = vpop.trf.xlu0
        %v8291 = vpop.trf.xlu0
        %v8292 = vpop.trf.xlu0
        %v8293 = vpop.trf.xlu0
        %v8294 = vpop.trf.xlu0
        %v8295 = vpop.trf.xlu0
        %v8296 = vpop.trf.xlu0
        %v8297 = vpop.trf.xlu0
        %8298 = vxpose.xlu0.b32.start [1/16] %v8069, 128
        %8299 = vxpose.xlu0.b32.cont [2/16] %v8072, 128
        %8300 = vxpose.xlu0.b32.cont [3/16] 0.0, 128
        %8301 = vxpose.xlu0.b32.cont [4/16] 0.0, 128
        %8302 = vxpose.xlu0.b32.cont [5/16] 0.0, 128
        %8303 = vxpose.xlu0.b32.cont [6/16] 0.0, 128
        %8304 = vxpose.xlu0.b32.cont [7/16] 0.0, 128
        %8305 = vxpose.xlu0.b32.cont [8/16] 0.0, 128
        %8306 = vxpose.xlu0.b32.cont [9/16] 0.0, 128
        %8307 = vxpose.xlu0.b32.cont [10/16] 0.0, 128
        %8308 = vxpose.xlu0.b32.cont [11/16] 0.0, 128
        %8309 = vxpose.xlu0.b32.cont [12/16] 0.0, 128
        %8310 = vxpose.xlu0.b32.cont [13/16] 0.0, 128
        %8311 = vxpose.xlu0.b32.cont [14/16] 0.0, 128
        %8312 = vxpose.xlu0.b32.cont [15/16] 0.0, 128
        %8313 = vxpose.xlu0.b32.end [16/16] 0.0, 128
        %v8314 = vpop.trf.xlu0
        %v8315 = vpop.trf.xlu0
        %v8316 = vpop.trf.xlu0
        %v8317 = vpop.trf.xlu0
        %v8318 = vpop.trf.xlu0
        %v8319 = vpop.trf.xlu0
        %v8320 = vpop.trf.xlu0
        %v8321 = vpop.trf.xlu0
        %v8322 = vpop.trf.xlu0
        %v8323 = vpop.trf.xlu0
        %v8324 = vpop.trf.xlu0
        %v8325 = vpop.trf.xlu0
        %v8326 = vpop.trf.xlu0
        %v8327 = vpop.trf.xlu0
        %v8328 = vpop.trf.xlu0
        %v8329 = vpop.trf.xlu0
        %8330 = vxpose.xlu0.b32.start [1/16] %v8101, 128
        %8331 = vxpose.xlu0.b32.cont [2/16] %v8104, 128
        %8332 = vxpose.xlu0.b32.cont [3/16] 0.0, 128
        %8333 = vxpose.xlu0.b32.cont [4/16] 0.0, 128
        %8334 = vxpose.xlu0.b32.cont [5/16] 0.0, 128
        %8335 = vxpose.xlu0.b32.cont [6/16] 0.0, 128
        %8336 = vxpose.xlu0.b32.cont [7/16] 0.0, 128
        %8337 = vxpose.xlu0.b32.cont [8/16] 0.0, 128
        %8338 = vxpose.xlu0.b32.cont [9/16] 0.0, 128
        %8339 = vxpose.xlu0.b32.cont [10/16] 0.0, 128
        %8340 = vxpose.xlu0.b32.cont [11/16] 0.0, 128
        %8341 = vxpose.xlu0.b32.cont [12/16] 0.0, 128
        %8342 = vxpose.xlu0.b32.cont [13/16] 0.0, 128
        %8343 = vxpose.xlu0.b32.cont [14/16] 0.0, 128
        %8344 = vxpose.xlu0.b32.cont [15/16] 0.0, 128
        %8345 = vxpose.xlu0.b32.end [16/16] 0.0, 128
        %v8346 = vpop.trf.xlu0
        %v8347 = vpop.trf.xlu0
        %v8348 = vpop.trf.xlu0
        %v8349 = vpop.trf.xlu0
        %v8350 = vpop.trf.xlu0
        %v8351 = vpop.trf.xlu0
        %v8352 = vpop.trf.xlu0
        %v8353 = vpop.trf.xlu0
        %v8354 = vpop.trf.xlu0
        %v8355 = vpop.trf.xlu0
        %v8356 = vpop.trf.xlu0
        %v8357 = vpop.trf.xlu0
        %v8358 = vpop.trf.xlu0
        %v8359 = vpop.trf.xlu0
        %v8360 = vpop.trf.xlu0
        %v8361 = vpop.trf.xlu0
        %8362 = vxpose.xlu0.b32.start [1/16] %v8133, 128
        %8363 = vxpose.xlu0.b32.cont [2/16] %v8136, 128
        %8364 = vxpose.xlu0.b32.cont [3/16] 0.0, 128
        %8365 = vxpose.xlu0.b32.cont [4/16] 0.0, 128
        %8366 = vxpose.xlu0.b32.cont [5/16] 0.0, 128
        %8367 = vxpose.xlu0.b32.cont [6/16] 0.0, 128
        %8368 = vxpose.xlu0.b32.cont [7/16] 0.0, 128
        %8369 = vxpose.xlu0.b32.cont [8/16] 0.0, 128
        %8370 = vxpose.xlu0.b32.cont [9/16] 0.0, 128
        %8371 = vxpose.xlu0.b32.cont [10/16] 0.0, 128
        %8372 = vxpose.xlu0.b32.cont [11/16] 0.0, 128
        %8373 = vxpose.xlu0.b32.cont [12/16] 0.0, 128
        %8374 = vxpose.xlu0.b32.cont [13/16] 0.0, 128
        %8375 = vxpose.xlu0.b32.cont [14/16] 0.0, 128
        %8376 = vxpose.xlu0.b32.cont [15/16] 0.0, 128
        %8377 = vxpose.xlu0.b32.end [16/16] 0.0, 128
        %v8378 = vpop.trf.xlu0
        %v8379 = vpop.trf.xlu0
        %v8380 = vpop.trf.xlu0
        %v8381 = vpop.trf.xlu0
        %v8382 = vpop.trf.xlu0
        %v8383 = vpop.trf.xlu0
        %v8384 = vpop.trf.xlu0
        %v8385 = vpop.trf.xlu0
        %v8386 = vpop.trf.xlu0
        %v8387 = vpop.trf.xlu0
        %v8388 = vpop.trf.xlu0
        %v8389 = vpop.trf.xlu0
        %v8390 = vpop.trf.xlu0
        %v8391 = vpop.trf.xlu0
        %v8392 = vpop.trf.xlu0
        %v8393 = vpop.trf.xlu0
        %v8394 = vrot.slane %v8218, 4
        %v8395 = vsel %vm2662, %v8394, %v8154
        %v8396 = vrot.slane %v8154, 4
        %v8397 = vsel %vm2662, %v8218, %v8396
        %v8399 = vunpack.c.l.s4 1983009808
        %v8400 = vunpack.c.0.s8 %v8399
        %v8401 = vperm.slane %v8395, %v8400
        %v8403 = vunpack.c.l.s4 1983009808
        %v8404 = vunpack.c.0.s8 %v8403
        %v8405 = vperm.slane %v8397, %v8404
        %v8406 = vrot.slane %v8250, 4
        %v8407 = vsel %vm2662, %v8406, %v8186
        %v8408 = vrot.slane %v8186, 4
        %v8409 = vsel %vm2662, %v8250, %v8408
        %v8411 = vunpack.c.l.s4 1983009808
        %v8412 = vunpack.c.0.s8 %v8411
        %v8413 = vperm.slane %v8407, %v8412
        %v8415 = vunpack.c.l.s4 1983009808
        %v8416 = vunpack.c.0.s8 %v8415
        %v8417 = vperm.slane %v8409, %v8416
        %v8418 = vrot.slane %v8346, 4
        %v8419 = vsel %vm2662, %v8418, %v8282
        %v8420 = vrot.slane %v8282, 4
        %v8421 = vsel %vm2662, %v8346, %v8420
        %v8423 = vunpack.c.l.s4 1983009808
        %v8424 = vunpack.c.0.s8 %v8423
        %v8425 = vperm.slane %v8419, %v8424
        %v8427 = vunpack.c.l.s4 1983009808
        %v8428 = vunpack.c.0.s8 %v8427
        %v8429 = vperm.slane %v8421, %v8428
        %v8430 = vrot.slane %v8378, 4
        %v8431 = vsel %vm2662, %v8430, %v8314
        %v8432 = vrot.slane %v8314, 4
        %v8433 = vsel %vm2662, %v8378, %v8432
        %v8435 = vunpack.c.l.s4 1983009808
        %v8436 = vunpack.c.0.s8 %v8435
        %v8437 = vperm.slane %v8431, %v8436
        %v8439 = vunpack.c.l.s4 1983009808
        %v8440 = vunpack.c.0.s8 %v8439
        %v8441 = vperm.slane %v8433, %v8440
        %v8442 = vrot.slane %v8413, 4
        %v8443 = vsel %vm2662, %v8442, %v8401
        %v8444 = vrot.slane %v8401, 4
        %v8445 = vsel %vm2662, %v8413, %v8444
        %v8447 = vunpack.c.l.s4 1934713408
        %v8448 = vunpack.c.0.s8 %v8447
        %v8449 = vperm.slane %v8443, %v8448
        %v8451 = vunpack.c.l.s4 1934713408
        %v8452 = vunpack.c.0.s8 %v8451
        %v8453 = vperm.slane %v8445, %v8452
        %v8454 = vrot.slane %v8417, 4
        %v8455 = vsel %vm2662, %v8454, %v8405
        %v8456 = vrot.slane %v8405, 4
        %v8457 = vsel %vm2662, %v8417, %v8456
        %v8459 = vunpack.c.l.s4 1934713408
        %v8460 = vunpack.c.0.s8 %v8459
        %v8461 = vperm.slane %v8455, %v8460
        %v8463 = vunpack.c.l.s4 1934713408
        %v8464 = vunpack.c.0.s8 %v8463
        %v8465 = vperm.slane %v8457, %v8464
        %v8466 = vrot.slane %v8437, 4
        %v8467 = vsel %vm2662, %v8466, %v8425
        %v8468 = vrot.slane %v8425, 4
        %v8469 = vsel %vm2662, %v8437, %v8468
        %v8471 = vunpack.c.l.s4 1934713408
        %v8472 = vunpack.c.0.s8 %v8471
        %v8473 = vperm.slane %v8467, %v8472
        %v8475 = vunpack.c.l.s4 1934713408
        %v8476 = vunpack.c.0.s8 %v8475
        %v8477 = vperm.slane %v8469, %v8476
        %v8478 = vrot.slane %v8441, 4
        %v8479 = vsel %vm2662, %v8478, %v8429
        %v8480 = vrot.slane %v8429, 4
        %v8481 = vsel %vm2662, %v8441, %v8480
        %v8483 = vunpack.c.l.s4 1934713408
        %v8484 = vunpack.c.0.s8 %v8483
        %v8485 = vperm.slane %v8479, %v8484
        %v8487 = vunpack.c.l.s4 1934713408
        %v8488 = vunpack.c.0.s8 %v8487
        %v8489 = vperm.slane %v8481, %v8488
        %v8490 = vrot.slane %v8473, 4
        %v8491 = vsel %vm2662, %v8490, %v8449
        %v8492 = vrot.slane %v8449, 4
        %v8493 = vsel %vm2662, %v8473, %v8492
        %v8494 = vrot.slane %v8477, 4
        %v8495 = vsel %vm2662, %v8494, %v8453
        %v8496 = vrot.slane %v8453, 4
        %v8497 = vsel %vm2662, %v8477, %v8496
        %v8498 = vrot.slane %v8485, 4
        %v8499 = vsel %vm2662, %v8498, %v8461
        %v8500 = vrot.slane %v8461, 4
        %v8501 = vsel %vm2662, %v8485, %v8500
        %v8502 = vrot.slane %v8489, 4
        %v8503 = vsel %vm2662, %v8502, %v8465
        %v8504 = vrot.slane %v8465, 4
        %v8505 = vsel %vm2662, %v8489, %v8504
        %v8506 = vrot.slane %v8495, 4
        %v8507 = vsel %vm2662, %v8506, %v8491
        %v8508 = vrot.slane %v8491, 4
        %v8509 = vsel %vm2662, %v8495, %v8508
        %v8511 = vunpack.c.l.s4 1983009808
        %v8512 = vunpack.c.0.s8 %v8511
        %v8513 = vperm.slane %v8507, %v8512
        %v8515 = vunpack.c.l.s4 1983009808
        %v8516 = vunpack.c.0.s8 %v8515
        %v8517 = vperm.slane %v8509, %v8516
        %v8518 = vrot.slane %v8497, 4
        %v8519 = vsel %vm2662, %v8518, %v8493
        %v8520 = vrot.slane %v8493, 4
        %v8521 = vsel %vm2662, %v8497, %v8520
        %v8523 = vunpack.c.l.s4 1983009808
        %v8524 = vunpack.c.0.s8 %v8523
        %v8525 = vperm.slane %v8519, %v8524
        %v8527 = vunpack.c.l.s4 1983009808
        %v8528 = vunpack.c.0.s8 %v8527
        %v8529 = vperm.slane %v8521, %v8528
        %v8530 = vrot.slane %v8503, 4
        %v8531 = vsel %vm2662, %v8530, %v8499
        %v8532 = vrot.slane %v8499, 4
        %v8533 = vsel %vm2662, %v8503, %v8532
        %v8535 = vunpack.c.l.s4 1983009808
        %v8536 = vunpack.c.0.s8 %v8535
        %v8537 = vperm.slane %v8531, %v8536
        %v8539 = vunpack.c.l.s4 1983009808
        %v8540 = vunpack.c.0.s8 %v8539
        %v8541 = vperm.slane %v8533, %v8540
        %v8542 = vrot.slane %v8505, 4
        %v8543 = vsel %vm2662, %v8542, %v8501
        %v8544 = vrot.slane %v8501, 4
        %v8545 = vsel %vm2662, %v8505, %v8544
        %v8547 = vunpack.c.l.s4 1983009808
        %v8548 = vunpack.c.0.s8 %v8547
        %v8549 = vperm.slane %v8543, %v8548
        %v8551 = vunpack.c.l.s4 1983009808
        %v8552 = vunpack.c.0.s8 %v8551
        %v8553 = vperm.slane %v8545, %v8552
        %v8554 = vrot.slane %v8525, 4
        %v8555 = vsel %vm2662, %v8554, %v8513
        %v8556 = vrot.slane %v8513, 4
        %v8557 = vsel %vm2662, %v8525, %v8556
        %v8559 = vunpack.c.l.s4 1934713408
        %v8560 = vunpack.c.0.s8 %v8559
        %v8561 = vperm.slane %v8555, %v8560
        %v8563 = vunpack.c.l.s4 1934713408
        %v8564 = vunpack.c.0.s8 %v8563
        %v8565 = vperm.slane %v8557, %v8564
        %v8566 = vrot.slane %v8529, 4
        %v8567 = vsel %vm2662, %v8566, %v8517
        %v8568 = vrot.slane %v8517, 4
        %v8569 = vsel %vm2662, %v8529, %v8568
        %v8571 = vunpack.c.l.s4 1934713408
        %v8572 = vunpack.c.0.s8 %v8571
        %v8573 = vperm.slane %v8567, %v8572
        %v8575 = vunpack.c.l.s4 1934713408
        %v8576 = vunpack.c.0.s8 %v8575
        %v8577 = vperm.slane %v8569, %v8576
        %v8578 = vrot.slane %v8549, 4
        %v8579 = vsel %vm2662, %v8578, %v8537
        %v8580 = vrot.slane %v8537, 4
        %v8581 = vsel %vm2662, %v8549, %v8580
        %v8583 = vunpack.c.l.s4 1934713408
        %v8584 = vunpack.c.0.s8 %v8583
        %v8585 = vperm.slane %v8579, %v8584
        %v8587 = vunpack.c.l.s4 1934713408
        %v8588 = vunpack.c.0.s8 %v8587
        %v8589 = vperm.slane %v8581, %v8588
        %v8590 = vrot.slane %v8553, 4
        %v8591 = vsel %vm2662, %v8590, %v8541
        %v8592 = vrot.slane %v8541, 4
        %v8593 = vsel %vm2662, %v8553, %v8592
        %v8595 = vunpack.c.l.s4 1934713408
        %v8596 = vunpack.c.0.s8 %v8595
        %v8597 = vperm.slane %v8591, %v8596
        %v8599 = vunpack.c.l.s4 1934713408
        %v8600 = vunpack.c.0.s8 %v8599
        %v8601 = vperm.slane %v8593, %v8600
        %v8602 = vrot.slane %v8585, 4
        %v8603 = vsel %vm2662, %v8602, %v8561
        %v8604 = vrot.slane %v8561, 4
        %v8605 = vsel %vm2662, %v8585, %v8604
        %v8606 = vrot.slane %v8589, 4
        %v8607 = vsel %vm2662, %v8606, %v8565
        %v8608 = vrot.slane %v8565, 4
        %v8609 = vsel %vm2662, %v8589, %v8608
        %v8610 = vrot.slane %v8597, 4
        %v8611 = vsel %vm2662, %v8610, %v8573
        %v8612 = vrot.slane %v8573, 4
        %v8613 = vsel %vm2662, %v8597, %v8612
        %v8614 = vrot.slane %v8601, 4
        %v8615 = vsel %vm2662, %v8614, %v8577
        %v8616 = vrot.slane %v8577, 4
        %v8617 = vsel %vm2662, %v8601, %v8616
        %8619 = vrot.lane.b32.xlu0 %v8605, 16
        %v8620 = vpop.permute.xlu0 %8619
        %8623 = vrot.lane.b32.xlu0 %v8607, 32
        %v8624 = vpop.permute.xlu0 %8623
        %8627 = vrot.lane.b32.xlu0 %v8609, 48
        %v8628 = vpop.permute.xlu0 %8627
        %8631 = vrot.lane.b32.xlu0 %v8611, 64
        %v8632 = vpop.permute.xlu0 %8631
        %8635 = vrot.lane.b32.xlu0 %v8613, 80
        %v8636 = vpop.permute.xlu0 %8635
        %8639 = vrot.lane.b32.xlu0 %v8615, 96
        %v8640 = vpop.permute.xlu0 %8639
        %8643 = vrot.lane.b32.xlu0 %v8617, 112
        %v8644 = vpop.permute.xlu0 %8643
        %v8646 = vsel %vm1619, %v8603, %v8620
        %v8647 = vsel %vm2915, %v8646, %v8624
        %v8648 = vsel %vm2917, %v8647, %v8628
        %v8649 = vsel %vm2919, %v8648, %v8632
        %v8650 = vsel %vm2921, %v8649, %v8636
        %v8651 = vsel %vm2923, %v8650, %v8640
        %v8652 = vsel %vm2925, %v8651, %v8644
        %s8653 = scalar_lea.vmem [#allocation25], 128
        %v8654 = vld [vmem:[%s8653] sm:$0xff]
        %v8655 = vld [vmem:[%s8653 + $0x8] sm:$0xff]
        %v8656 = vld [vmem:[%s8653 + $0x10] sm:$0xff]
        %v8657 = vld [vmem:[%s8653 + $0x18] sm:$0xff]
        %v8658 = vld [vmem:[%s8653 + $0x20] sm:$0xff]
        %v8659 = vld [vmem:[%s8653 + $0x28] sm:$0xff]
        %v8660 = vld [vmem:[%s8653 + $0x30] sm:$0xff]
        %v8661 = vld [vmem:[%s8653 + $0x38] sm:$0xff]
        %v8662 = vld [vmem:[%s8653 + $0x40] sm:$0xff]
        %v8663 = vld [vmem:[%s8653 + $0x48] sm:$0xff]
        %v8664 = vld [vmem:[%s8653 + $0x50] sm:$0xff]
        %v8665 = vld [vmem:[%s8653 + $0x58] sm:$0xff]
        %v8666 = vld [vmem:[%s8653 + $0x60] sm:$0xff]
        %v8667 = vld [vmem:[%s8653 + $0x68] sm:$0xff]
        %v8668 = vld [vmem:[%s8653 + $0x70] sm:$0xff]
        %v8669 = vld [vmem:[%s8653 + $0x78] sm:$0xff]
        %8670 = vmatpush.msra.mxu0 %v8669
        %8671 = vmatpush.msra.mxu0 %v8668
        %8672 = vmatpush.msra.mxu0 %v8667
        %8673 = vmatpush.msra.mxu0 %v8666
        %8674 = vmatpush.msra.mxu0 %v8665
        %8675 = vmatpush.msra.mxu0 %v8664
        %8676 = vmatpush.msra.mxu0 %v8663
        %8677 = vmatpush.msra.mxu0 %v8662
        %8678 = vmatpush.msra.mxu0 %v8661
        %8679 = vmatpush.msra.mxu0 %v8660
        %8680 = vmatpush.msra.mxu0 %v8659
        %8681 = vmatpush.msra.mxu0 %v8658
        %8682 = vmatpush.msra.mxu0 %v8657
        %8683 = vmatpush.msra.mxu0 %v8656
        %8684 = vmatpush.msra.mxu0 %v8655
        %8685 = vmatpush.msra.mxu0 %v8654
        %8686 = vmatmul.f32.gmra.mxu0 %v8652
        %v8687 = vpop.f32.mrf.mxu0
        %v8688 = vadd.f32 0.0, %v8687
        %8689 = vdwg.mxu0
        %v8690 = vadd.f32 %v6834, %v8688
        %s8691 = scalar_lea.vmem %s17, 1
        %v8692 = vld [vmem:[%s8691] sm:$0x1]
        %v8694 = vperm.slane %v8692, 0
        %v8696 = vadd.f32 %v8690, %v8694
        %s8697 = scalar_lea.vmem [#allocation26], 1
        %v8698 = vld [vmem:[%s8697] sm:$0x1]
        %s8699 = scalar_lea.vmem %s19, 1
        %v8700 = vld [vmem:[%s8699] sm:$0x1]
        %8701 = vadd.xlane.f32.xlu0 %v8696
        %v8702 = vpop.xlane.xlu0 %8701
        %v8703 = vmul.f32 %v8702, %v1161
        %v8704 = vsub.f32 %v8696, %v8703
        %v8705 = vmul.f32 %v8704, %v8704
        %8706 = vadd.xlane.f32.xlu0 %v8705
        %v8707 = vpop.xlane.xlu0 %8706
        %v8708 = vmul.f32 %v8707, %v1161
        %v8709 = vadd.f32 %v8708, 1e-05
        %v8710 = vrsqrt.pop %v8709
        %v8711 = vmul.f32 %v8710, %v8709
        %v8712 = vmul.f32 %v8711, %v8710
        %v8713 = vmul.f32 0.5, %v8712
        %v8714 = vsub.f32 1.5, %v8713
        %v8715 = vmul.f32 %v8710, %v8714
        %vm8716 = vweird.f32 %v8709
        %vm8717 = vweird.f32 %v8710
        %vm8718 = vmor %vm8716, %vm8717
        %v8719 = vsel %vm8718, %v8710, %v8715
        %v8720 = vmul.f32 %v8704, %v8719
        %v8722 = vperm.slane %v8698, 0
        %v8724 = vmul.f32 %v8720, %v8722
        %v8726 = vperm.slane %v8700, 0
        %v8728 = vadd.f32 %v8724, %v8726
        %s8729 = scalar_lea.vmem [#allocation28], 256
        %v8730 = vld [vmem:[%s8729] sm:$0xff]
        %v8731 = vld [vmem:[%s8729 + $0x8] sm:$0xff]
        %v8732 = vld [vmem:[%s8729 + $0x10] sm:$0xff]
        %v8733 = vld [vmem:[%s8729 + $0x18] sm:$0xff]
        %v8734 = vld [vmem:[%s8729 + $0x20] sm:$0xff]
        %v8735 = vld [vmem:[%s8729 + $0x28] sm:$0xff]
        %v8736 = vld [vmem:[%s8729 + $0x30] sm:$0xff]
        %v8737 = vld [vmem:[%s8729 + $0x38] sm:$0xff]
        %v8738 = vld [vmem:[%s8729 + $0x40] sm:$0xff]
        %v8739 = vld [vmem:[%s8729 + $0x48] sm:$0xff]
        %v8740 = vld [vmem:[%s8729 + $0x50] sm:$0xff]
        %v8741 = vld [vmem:[%s8729 + $0x58] sm:$0xff]
        %v8742 = vld [vmem:[%s8729 + $0x60] sm:$0xff]
        %v8743 = vld [vmem:[%s8729 + $0x68] sm:$0xff]
        %v8744 = vld [vmem:[%s8729 + $0x70] sm:$0xff]
        %v8745 = vld [vmem:[%s8729 + $0x78] sm:$0xff]
        %v8746 = vld [vmem:[%s8729 + $0x80] sm:$0xff]
        %v8747 = vld [vmem:[%s8729 + $0x88] sm:$0xff]
        %v8748 = vld [vmem:[%s8729 + $0x90] sm:$0xff]
        %v8749 = vld [vmem:[%s8729 + $0x98] sm:$0xff]
        %v8750 = vld [vmem:[%s8729 + $0xa0] sm:$0xff]
        %v8751 = vld [vmem:[%s8729 + $0xa8] sm:$0xff]
        %v8752 = vld [vmem:[%s8729 + $0xb0] sm:$0xff]
        %v8753 = vld [vmem:[%s8729 + $0xb8] sm:$0xff]
        %v8754 = vld [vmem:[%s8729 + $0xc0] sm:$0xff]
        %v8755 = vld [vmem:[%s8729 + $0xc8] sm:$0xff]
        %v8756 = vld [vmem:[%s8729 + $0xd0] sm:$0xff]
        %v8757 = vld [vmem:[%s8729 + $0xd8] sm:$0xff]
        %v8758 = vld [vmem:[%s8729 + $0xe0] sm:$0xff]
        %v8759 = vld [vmem:[%s8729 + $0xe8] sm:$0xff]
        %v8760 = vld [vmem:[%s8729 + $0xf0] sm:$0xff]
        %v8761 = vld [vmem:[%s8729 + $0xf8] sm:$0xff]
        %s8762 = scalar_lea.vmem %s21, 2
        %v8763 = vld [vmem:[%s8762] sm:$0x3]
        %v8765 = vperm.slane %v8763, 0
        %v8766 = vperm.slane %v8763, 1
        %8769 = vmatpush.msra.mxu0 %v8760
        %8770 = vmatpush.msra.mxu0 %v8758
        %8771 = vmatpush.msra.mxu0 %v8756
        %8772 = vmatpush.msra.mxu0 %v8754
        %8773 = vmatpush.msra.mxu0 %v8752
        %8774 = vmatpush.msra.mxu0 %v8750
        %8775 = vmatpush.msra.mxu0 %v8748
        %8776 = vmatpush.msra.mxu0 %v8746
        %8777 = vmatpush.msra.mxu0 %v8744
        %8778 = vmatpush.msra.mxu0 %v8742
        %8779 = vmatpush.msra.mxu0 %v8740
        %8780 = vmatpush.msra.mxu0 %v8738
        %8781 = vmatpush.msra.mxu0 %v8736
        %8782 = vmatpush.msra.mxu0 %v8734
        %8783 = vmatpush.msra.mxu0 %v8732
        %8784 = vmatpush.msra.mxu0 %v8730
        %8785 = vmatmul.f32.gmra.mxu0 %v8728
        %v8786 = vpop.f32.mrf.mxu0
        %v8787 = vadd.f32 %v8765, %v8786
        %8788 = vdwg.mxu0
        %8789 = vmatpush.msra.mxu0 %v8761
        %8790 = vmatpush.msra.mxu0 %v8759
        %8791 = vmatpush.msra.mxu0 %v8757
        %8792 = vmatpush.msra.mxu0 %v8755
        %8793 = vmatpush.msra.mxu0 %v8753
        %8794 = vmatpush.msra.mxu0 %v8751
        %8795 = vmatpush.msra.mxu0 %v8749
        %8796 = vmatpush.msra.mxu0 %v8747
        %8797 = vmatpush.msra.mxu0 %v8745
        %8798 = vmatpush.msra.mxu0 %v8743
        %8799 = vmatpush.msra.mxu0 %v8741
        %8800 = vmatpush.msra.mxu0 %v8739
        %8801 = vmatpush.msra.mxu0 %v8737
        %8802 = vmatpush.msra.mxu0 %v8735
        %8803 = vmatpush.msra.mxu0 %v8733
        %8804 = vmatpush.msra.mxu0 %v8731
        %8805 = vmatmul.f32.gmra.mxu0 %v8728
        %v8806 = vpop.f32.mrf.mxu0
        %v8807 = vadd.f32 %v8766, %v8806
        %8808 = vdwg.mxu0
        %v8809 = vmul.f32 %v8787, 0.5
        %v8810 = vmul.f32 %v8807, 0.5
        %v8811 = vmul.f32 %v8787, 0.044715
        %v8812 = vmul.f32 %v8807, 0.044715
        %v8813 = vmul.f32 %v8811, %v8787
        %v8814 = vmul.f32 %v8812, %v8807
        %v8815 = vmul.f32 %v8813, %v8787
        %v8816 = vmul.f32 %v8814, %v8807
        %v8817 = vadd.f32 %v8787, %v8815
        %v8818 = vadd.f32 %v8807, %v8816
        %v8819 = vmul.f32 %v8817, 0.7978846
        %v8820 = vmul.f32 %v8818, 0.7978846
        %v8821 = vtanh.pop %v8819
        %v8822 = vtanh.pop %v8820
        %v8823 = vadd.f32 %v8821, 1.0
        %v8824 = vadd.f32 %v8822, 1.0
        %v8825 = vmul.f32 %v8809, %v8823
        %v8826 = vmul.f32 %v8810, %v8824
        %s8827 = scalar_lea.vmem [#allocation29], 256
        %v8828 = vld [vmem:[%s8827] sm:$0xff]
        %v8829 = vld [vmem:[%s8827 + $0x8] sm:$0xff]
        %v8830 = vld [vmem:[%s8827 + $0x10] sm:$0xff]
        %v8831 = vld [vmem:[%s8827 + $0x18] sm:$0xff]
        %v8832 = vld [vmem:[%s8827 + $0x20] sm:$0xff]
        %v8833 = vld [vmem:[%s8827 + $0x28] sm:$0xff]
        %v8834 = vld [vmem:[%s8827 + $0x30] sm:$0xff]
        %v8835 = vld [vmem:[%s8827 + $0x38] sm:$0xff]
        %v8836 = vld [vmem:[%s8827 + $0x40] sm:$0xff]
        %v8837 = vld [vmem:[%s8827 + $0x48] sm:$0xff]
        %v8838 = vld [vmem:[%s8827 + $0x50] sm:$0xff]
        %v8839 = vld [vmem:[%s8827 + $0x58] sm:$0xff]
        %v8840 = vld [vmem:[%s8827 + $0x60] sm:$0xff]
        %v8841 = vld [vmem:[%s8827 + $0x68] sm:$0xff]
        %v8842 = vld [vmem:[%s8827 + $0x70] sm:$0xff]
        %v8843 = vld [vmem:[%s8827 + $0x78] sm:$0xff]
        %v8844 = vld [vmem:[%s8827 + $0x80] sm:$0xff]
        %v8845 = vld [vmem:[%s8827 + $0x88] sm:$0xff]
        %v8846 = vld [vmem:[%s8827 + $0x90] sm:$0xff]
        %v8847 = vld [vmem:[%s8827 + $0x98] sm:$0xff]
        %v8848 = vld [vmem:[%s8827 + $0xa0] sm:$0xff]
        %v8849 = vld [vmem:[%s8827 + $0xa8] sm:$0xff]
        %v8850 = vld [vmem:[%s8827 + $0xb0] sm:$0xff]
        %v8851 = vld [vmem:[%s8827 + $0xb8] sm:$0xff]
        %v8852 = vld [vmem:[%s8827 + $0xc0] sm:$0xff]
        %v8853 = vld [vmem:[%s8827 + $0xc8] sm:$0xff]
        %v8854 = vld [vmem:[%s8827 + $0xd0] sm:$0xff]
        %v8855 = vld [vmem:[%s8827 + $0xd8] sm:$0xff]
        %v8856 = vld [vmem:[%s8827 + $0xe0] sm:$0xff]
        %v8857 = vld [vmem:[%s8827 + $0xe8] sm:$0xff]
        %v8858 = vld [vmem:[%s8827 + $0xf0] sm:$0xff]
        %v8859 = vld [vmem:[%s8827 + $0xf8] sm:$0xff]
        %8860 = vmatpush.msra.mxu0 %v8843
        %8861 = vmatpush.msra.mxu0 %v8842
        %8862 = vmatpush.msra.mxu0 %v8841
        %8863 = vmatpush.msra.mxu0 %v8840
        %8864 = vmatpush.msra.mxu0 %v8839
        %8865 = vmatpush.msra.mxu0 %v8838
        %8866 = vmatpush.msra.mxu0 %v8837
        %8867 = vmatpush.msra.mxu0 %v8836
        %8868 = vmatpush.msra.mxu0 %v8835
        %8869 = vmatpush.msra.mxu0 %v8834
        %8870 = vmatpush.msra.mxu0 %v8833
        %8871 = vmatpush.msra.mxu0 %v8832
        %8872 = vmatpush.msra.mxu0 %v8831
        %8873 = vmatpush.msra.mxu0 %v8830
        %8874 = vmatpush.msra.mxu0 %v8829
        %8875 = vmatpush.msra.mxu0 %v8828
        %8876 = vmatmul.f32.gmra.mxu0 %v8825
        %v8877 = vpop.f32.mrf.mxu0
        %v8878 = vadd.f32 0.0, %v8877
        %8879 = vdwg.mxu0
        %8880 = vmatpush.msra.mxu0 %v8859
        %8881 = vmatpush.msra.mxu0 %v8858
        %8882 = vmatpush.msra.mxu0 %v8857
        %8883 = vmatpush.msra.mxu0 %v8856
        %8884 = vmatpush.msra.mxu0 %v8855
        %8885 = vmatpush.msra.mxu0 %v8854
        %8886 = vmatpush.msra.mxu0 %v8853
        %8887 = vmatpush.msra.mxu0 %v8852
        %8888 = vmatpush.msra.mxu0 %v8851
        %8889 = vmatpush.msra.mxu0 %v8850
        %8890 = vmatpush.msra.mxu0 %v8849
        %8891 = vmatpush.msra.mxu0 %v8848
        %8892 = vmatpush.msra.mxu0 %v8847
        %8893 = vmatpush.msra.mxu0 %v8846
        %8894 = vmatpush.msra.mxu0 %v8845
        %8895 = vmatpush.msra.mxu0 %v8844
        %8896 = vmatmul.f32.gmra.mxu0 %v8826
        %v8897 = vpop.f32.mrf.mxu0
        %v8898 = vadd.f32 %v8878, %v8897
        %8899 = vdwg.mxu0
        %v8900 = vadd.f32 %v8696, %v8898
        %s8901 = scalar_lea.vmem %s23, 1
        %v8902 = vld [vmem:[%s8901] sm:$0x1]
        %v8904 = vperm.slane %v8902, 0
        %v8906 = vadd.f32 %v8900, %v8904
        %v8907 = vld [vmem:[#allocation31] sm:$0xff]
        %v8908 = vld [vmem:[#allocation31 + $0x8] sm:$0xff]
        %v8909 = vld [vmem:[#allocation31 + $0x10] sm:$0xff]
        %v8910 = vld [vmem:[#allocation31 + $0x18] sm:$0xff]
        %v8911 = vld [vmem:[#allocation31 + $0x20] sm:$0xff]
        %v8912 = vld [vmem:[#allocation31 + $0x28] sm:$0xff]
        %v8913 = vld [vmem:[#allocation31 + $0x30] sm:$0xff]
        %v8914 = vld [vmem:[#allocation31 + $0x38] sm:$0xff]
        %v8915 = vld [vmem:[#allocation31 + $0x40] sm:$0xff]
        %v8916 = vld [vmem:[#allocation31 + $0x48] sm:$0xff]
        %v8917 = vld [vmem:[#allocation31 + $0x50] sm:$0xff]
        %v8918 = vld [vmem:[#allocation31 + $0x58] sm:$0xff]
        %v8919 = vld [vmem:[#allocation31 + $0x60] sm:$0xff]
        %v8920 = vld [vmem:[#allocation31 + $0x68] sm:$0xff]
        %v8921 = vld [vmem:[#allocation31 + $0x70] sm:$0xff]
        %v8922 = vld [vmem:[#allocation31 + $0x78] sm:$0xff]
        %v8923 = vld [vmem:[%s25] sm:$0x1]
        %v8925 = vperm.slane %v8923, 0
        %8927 = vmatpush.msra.mxu0 %v8922
        %8928 = vmatpush.msra.mxu0 %v8921
        %8929 = vmatpush.msra.mxu0 %v8920
        %8930 = vmatpush.msra.mxu0 %v8919
        %8931 = vmatpush.msra.mxu0 %v8918
        %8932 = vmatpush.msra.mxu0 %v8917
        %8933 = vmatpush.msra.mxu0 %v8916
        %8934 = vmatpush.msra.mxu0 %v8915
        %8935 = vmatpush.msra.mxu0 %v8914
        %8936 = vmatpush.msra.mxu0 %v8913
        %8937 = vmatpush.msra.mxu0 %v8912
        %8938 = vmatpush.msra.mxu0 %v8911
        %8939 = vmatpush.msra.mxu0 %v8910
        %8940 = vmatpush.msra.mxu0 %v8909
        %8941 = vmatpush.msra.mxu0 %v8908
        %8942 = vmatpush.msra.mxu0 %v8907
        %8943 = vmatmul.f32.gmra.mxu0 %v8906
        %v8944 = vpop.f32.mrf.mxu0
        %v8945 = vadd.f32 %v8925, %v8944
        %8946 = vdwg.mxu0
        %8947 = vst [vmem:[%s1104] sm:$0xff] %v8945
        %s8948 = sand.u32 %s611, 1
        %s8949 = scalar_lea.sflag [#allocation4], %s8948
        %s8950 = sand.u32 %s611, 1
        %s8951 = smul.addr %s8950, 8
        %s8952 = scalar_lea.vmem [#allocation32], %s8951
        // Predicated region
        $region201: #{tpu_custom_call.1} parent=123 // pred_check
          %p8953 = pneg %p621
        $region202: #{tpu_custom_call.1} parent=123 // pred_check_branch
          %8955 = sbr.rel (%p8953) target = $region204
        $region203: #{tpu_custom_call.1} parent=123 // pred_region
          %8957 = vsyncadd %s8949, 0
          %s8958 = smul.addr %s52, 8
          %s8959 = scalar_lea.hbm %s26, %s8958
          %s8961 = sshll.u32 %s8952, 4
          %s8962 = int_to_ptr.vmem [resolvable:$true] %s8961
          %s8963 = sshll.u32 %s8959, 4
          %s8964 = int_to_ptr.hbm [resolvable:$true] %s8963
          %8966 = dma.vmem_to_hbm [thread:$0]  %s8962, 128, %s8964, %s8949
        $region204: #{tpu_custom_call.1} parent=123 // pred_fallthru
          _
      $region124: #{tpu_custom_call.1} parent=5 // pred_fallthru
        _
      %p8967 = scmp.le.s32.totalorder 2, %s47
      // Predicated region
      $region205: #{tpu_custom_call.1} parent=5 // pred_check
        %p8968 = pneg %p8967
      $region206: #{tpu_custom_call.1} parent=5 // pred_check_branch
        %8970 = sbr.rel (%p8968) target = $region208
      $region207: #{tpu_custom_call.1} parent=5 // pred_region
        %s8971 = ssub.s32 %s47, 2
        // Predicated region
        $region209: #{tpu_custom_call.1} parent=207 // pred_check
          %p8972 = pneg %p627
        $region210: #{tpu_custom_call.1} parent=207 // pred_check_branch
          %8974 = sbr.rel (%p8972) target = $region212
        $region211: #{tpu_custom_call.1} parent=207 // pred_region
          %s8975 = sand.u32 %s612, 1
          %s8976 = scalar_lea.sflag [#allocation4], %s8975
          %s8977 = sand.u32 %s612, 1
          %s8978 = smul.addr %s8977, 8
          %s8979 = scalar_lea.vmem [#allocation32], %s8978
          %8981 = dma.done %s8976, 128
        $region212: #{tpu_custom_call.1} parent=207 // pred_fallthru
          _
      $region208: #{tpu_custom_call.1} parent=5 // pred_fallthru
        _
    $region6: #{tpu_custom_call.1} parent=1 // loop_footer
      %s51 = sadd.s32 1, %s47
    $region7: #{tpu_custom_call.1} parent=1 // loop_footer_branch
      %46 = sbr.rel target = $region3
    $region8: #{tpu_custom_call.1} parent=1 // loop_exit
      _
    %8982 = vsyncpa [#allocation3], 1
    %s8983 = scalar_lea.sflag [#allocation3], 1
    %8984 = vsyncpa %s8983, 1
    %8985 = vsyncpa [#allocation6], 1
    %8986 = vsyncpa [#allocation9], 1
    %8987 = vsyncpa [#allocation12], 1
    %8988 = vsyncpa [#allocation15], 1
    %8989 = vsyncpa [#allocation18], 1
    %8990 = vsyncpa [#allocation21], 1
    %8991 = vsyncpa [#allocation24], 1
    %8992 = vsyncpa [#allocation27], 1
    %8993 = vsyncpa [#allocation30], 1
    %8994 = vsyncpa [#allocation4], 1
    %s8995 = scalar_lea.sflag [#allocation4], 1
    %8996 = vsyncpa %s8995, 1

</llo_original>
